<compile_context>
chip_gen: v5e
topology: v5e:2x2
jax: 0.10.0
libtpu: 0.0.40
codegen_flags: <defaults>
</compile_context>

<pallas_src>
import functools

import jax
import jax.numpy as jnp
from jax.experimental import pallas as pl
from jax.experimental.pallas import tpu as pltpu


ACT_DTYPE = jnp.bfloat16          # inter-layer activation dtype in HBM
VMEM_LIMIT = 32 * 1024 * 1024     # safe on v5e/v6e/v7x


def _round_up(x, m):
    return -(-x // m) * m


# ----------------------------------------------------------------------------
# Tiled matmul (+ optional fused bias / tanh epilogue) -- MXU hot path
# ----------------------------------------------------------------------------

def _mm_kernel(a_ref, w_ref, o_ref, acc_ref, *, activation):
    @pl.when(pl.program_id(2) == 0)
    def _():
        acc_ref[...] = jnp.zeros_like(acc_ref)

    acc_ref[...] += jnp.dot(a_ref[...], w_ref[...],
                            preferred_element_type=jnp.float32)

    @pl.when(pl.program_id(2) == pl.num_programs(2) - 1)
    def _():
        y = acc_ref[...]
        if activation == "tanh":
            y = jnp.tanh(y)
        o_ref[...] = y.astype(o_ref.dtype)


def _mm_bias_kernel(a_ref, w_ref, b_ref, o_ref, acc_ref, *, activation):
    @pl.when(pl.program_id(2) == 0)
    def _():
        acc_ref[...] = jnp.zeros_like(acc_ref)

    acc_ref[...] += jnp.dot(a_ref[...], w_ref[...],
                            preferred_element_type=jnp.float32)

    @pl.when(pl.program_id(2) == pl.num_programs(2) - 1)
    def _():
        y = acc_ref[...] + b_ref[...]
        if activation == "tanh":
            y = jnp.tanh(y)
        o_ref[...] = y.astype(o_ref.dtype)


def matmul(a, w, bias=None, activation=None, out_dtype=ACT_DTYPE,
           tm=256, tn=256, tk=256):
    """out = a @ w (+ bias) (+ tanh), tiled over (M, N, K) on the MXU."""
    M, K = a.shape
    K2, N = w.shape
    assert K == K2
    # shrink tiles for small problems; keep everything 128-aligned (MXU/lane).
    tm = min(tm, _round_up(M, 128))
    tn = min(tn, _round_up(N, 128))
    tk = min(tk, _round_up(K, 128))
    Mp, Np, Kp = _round_up(M, tm), _round_up(N, tn), _round_up(K, tk)

    a_p = jnp.pad(a.astype(jnp.bfloat16), ((0, Mp - M), (0, Kp - K)))
    w_p = jnp.pad(w.astype(jnp.bfloat16), ((0, Kp - K), (0, Np - N)))

    in_specs = [pl.BlockSpec((tm, tk), lambda i, j, k: (i, k)),
                pl.BlockSpec((tk, tn), lambda i, j, k: (k, j))]
    args = [a_p, w_p]
    if bias is not None:
        b_p = jnp.pad(bias.reshape(1, N).astype(jnp.float32),
                      ((0, 0), (0, Np - N)))
        in_specs.append(pl.BlockSpec((1, tn), lambda i, j, k: (0, j)))
        args.append(b_p)
        kernel = functools.partial(_mm_bias_kernel, activation=activation)
    else:
        kernel = functools.partial(_mm_kernel, activation=activation)

    out_bytes = Mp * Np * jnp.dtype(out_dtype).itemsize
    cost = pl.CostEstimate(
        flops=2 * Mp * Np * Kp,
        transcendentals=(Mp * Np if activation == "tanh" else 0),
        bytes_accessed=a_p.size * 2 + w_p.size * 2 + out_bytes)

    out = pl.pallas_call(
        kernel,
        grid=(Mp // tm, Np // tn, Kp // tk),
        in_specs=in_specs,
        out_specs=pl.BlockSpec((tm, tn), lambda i, j, k: (i, j)),
        out_shape=jax.ShapeDtypeStruct((Mp, Np), out_dtype),
        scratch_shapes=[pltpu.VMEM((tm, tn), jnp.float32)],
        compiler_params=pltpu.CompilerParams(
            dimension_semantics=("parallel", "parallel", "arbitrary"),
            vmem_limit_bytes=VMEM_LIMIT),
        cost_estimate=cost,
    )(*args)
    return out[:M, :N]


# ----------------------------------------------------------------------------
# InstanceNorm2d (affine, eps=1e-5, biased var), HW-chunked, fused ReLU / residual
# ----------------------------------------------------------------------------

def _pick_chunk(hw, target):
    """Largest multiple-of-8 divisor of hw that is <= target (or hw itself)."""
    if hw <= target:
        return hw
    t = (target // 8) * 8
    while t >= 8:
        if hw % t == 0:
            return t
        t -= 8
    return hw


def _in_stats_kernel(x_ref, mean_ref, rstd_ref, *, hw, eps):
    c = pl.program_id(1)

    @pl.when(c == 0)
    def _():
        mean_ref[...] = jnp.zeros_like(mean_ref)   # accumulates sum(x)
        rstd_ref[...] = jnp.zeros_like(rstd_ref)   # accumulates sum(x^2)

    xf = x_ref[...].astype(jnp.float32)            # (1, th, C)
    mean_ref[...] += jnp.sum(xf, axis=1, keepdims=True)
    rstd_ref[...] += jnp.sum(xf * xf, axis=1, keepdims=True)

    @pl.when(c == pl.num_programs(1) - 1)
    def _():
        m = mean_ref[...] * (1.0 / hw)
        var = rstd_ref[...] * (1.0 / hw) - m * m           # biased, as PyTorch
        mean_ref[...] = m
        rstd_ref[...] = jax.lax.rsqrt(jnp.maximum(var, 0.0) + eps)


def _in_apply_kernel(*refs, relu, has_res):
    if has_res:
        x_ref, mean_ref, rstd_ref, g_ref, b_ref, res_ref, o_ref = refs
    else:
        x_ref, mean_ref, rstd_ref, g_ref, b_ref, o_ref = refs
    y = (x_ref[...].astype(jnp.float32) - mean_ref[...]) * rstd_ref[...]
    y = y * g_ref[...] + b_ref[...]
    if relu:
        y = jnp.maximum(y, 0.0)
    if has_res:
        y = y + res_ref[...].astype(jnp.float32)   # ResnetBlock: x + conv_block(x)
    o_ref[...] = y.astype(o_ref.dtype)


def instance_norm(x_nhwc, gamma, beta, relu, residual=None,
                  eps=1e-5, chunk_target=2048):
    N, H, W, C = x_nhwc.shape
    HW = H * W
    th = _pick_chunk(HW, chunk_target)
    nchunks = HW // th
    x = x_nhwc.reshape(N, HW, C)

    # ---- pass 1: per-(sample, channel) mean / rstd over HW chunks ----------
    mean, rstd = pl.pallas_call(
        functools.partial(_in_stats_kernel, hw=HW, eps=eps),
        grid=(N, nchunks),
        in_specs=[pl.BlockSpec((1, th, C), lambda n, c: (n, c, 0))],
        out_specs=[pl.BlockSpec((1, 1, C), lambda n, c: (n, 0, 0)),
                   pl.BlockSpec((1, 1, C), lambda n, c: (n, 0, 0))],
        out_shape=[jax.ShapeDtypeStruct((N, 1, C), jnp.float32),
                   jax.ShapeDtypeStruct((N, 1, C), jnp.float32)],
        compiler_params=pltpu.CompilerParams(
            dimension_semantics=("parallel", "arbitrary"),
            vmem_limit_bytes=VMEM_LIMIT),
    )(x)

    # ---- pass 2: normalize + affine (+ ReLU) (+ residual add) --------------
    g = gamma.reshape(1, 1, C).astype(jnp.float32)
    b = beta.reshape(1, 1, C).astype(jnp.float32)
    in_specs = [
        pl.BlockSpec((1, th, C), lambda n, c: (n, c, 0)),
        pl.BlockSpec((1, 1, C), lambda n, c: (n, 0, 0)),
        pl.BlockSpec((1, 1, C), lambda n, c: (n, 0, 0)),
        pl.BlockSpec((1, 1, C), lambda n, c: (0, 0, 0)),
        pl.BlockSpec((1, 1, C), lambda n, c: (0, 0, 0)),
    ]
    args = [x, mean, rstd, g, b]
    if residual is not None:
        in_specs.append(pl.BlockSpec((1, th, C), lambda n, c: (n, c, 0)))
        args.append(residual.reshape(N, HW, C))

    out = pl.pallas_call(
        functools.partial(_in_apply_kernel, relu=relu,
                          has_res=residual is not None),
        grid=(N, nchunks),
        in_specs=in_specs,
        out_specs=pl.BlockSpec((1, th, C), lambda n, c: (n, c, 0)),
        out_shape=jax.ShapeDtypeStruct((N, HW, C), ACT_DTYPE),
        compiler_params=pltpu.CompilerParams(
            dimension_semantics=("parallel", "parallel"),
            vmem_limit_bytes=VMEM_LIMIT),
    )(*args)
    return out.reshape(N, H, W, C)


# ----------------------------------------------------------------------------
# Convolutions (im2col glue at JAX level in bf16; matmuls are Pallas kernels)
# ----------------------------------------------------------------------------

def _extract_patches(x, k, stride, pad_lo, pad_hi):
    # x: (N, H, W, C) -> (N, Ho, Wo, k*k*C); patch element order = (di, dj, cin)
    N, H, W, C = x.shape
    xp = jnp.pad(x, ((0, 0), (pad_lo, pad_hi), (pad_lo, pad_hi), (0, 0)))
    Ho = (H + pad_lo + pad_hi - k) // stride + 1
    Wo = (W + pad_lo + pad_hi - k) // stride + 1
    cols = []
    for di in range(k):
        for dj in range(k):
            cols.append(
                xp[:, di:di + Ho * stride:stride, dj:dj + Wo * stride:stride, :])
    return jnp.concatenate(cols, axis=-1), Ho, Wo


def conv2d(x, w, b=None, stride=1, padding=0, activation=None,
           out_dtype=ACT_DTYPE):
    # x: NHWC; w: PyTorch Conv2d layout (Cout, Cin, kH, kW); b: (Cout,) or None
    Cout, Cin, kH, kW = w.shape
    N = x.shape[0]
    patches, Ho, Wo = _extract_patches(x, kH, stride, padding, padding)
    a = patches.reshape(N * Ho * Wo, kH * kW * Cin)
    w_mat = jnp.transpose(w, (2, 3, 1, 0)).reshape(kH * kW * Cin, Cout)
    out = matmul(a, w_mat, bias=b, activation=activation, out_dtype=out_dtype)
    return out.reshape(N, Ho, Wo, Cout)


def conv_transpose2d_s2(x, w):
    """ConvTranspose2d(k=3, stride=2, padding=1, output_padding=1), no bias.

    Sub-pixel decomposition: out[2m+pi, 2q+pj] is a small conv of the
    un-dilated input (no 75%-zero dilation, 4x fewer MACs / bytes).
    Derived from oh = 2*ih - 1 + kh  (kh in {0,1,2}).
    """
    Cin, Cout, kH, kW = w.shape          # PyTorch ConvTranspose2d layout
    N, H, W, C = x.shape
    assert C == Cin and kH == 3 and kW == 3
    xe = jnp.pad(x, ((0, 0), (0, 1), (0, 1), (0, 0)))   # zero row/col bottom-right

    def view(dh, dw):
        return xe[:, dh:dh + H, dw:dw + W, :]

    def phase(taps):
        # taps: list of ((dh, dw) input shift, (kh, kw) weight tap)
        a = jnp.concatenate([view(dh, dw) for (dh, dw), _ in taps], axis=-1)
        wm = jnp.concatenate([w[:, :, kh, kw] for _, (kh, kw) in taps], axis=0)
        y = matmul(a.reshape(N * H * W, len(taps) * Cin), wm, bias=None)
        return y.reshape(N, H, W, Cout)

    y00 = phase([((0, 0), (1, 1))])
    y01 = phase([((0, 0), (1, 2)), ((0, 1), (1, 0))])
    y10 = phase([((0, 0), (2, 1)), ((1, 0), (0, 1))])
    y11 = phase([((0, 0), (2, 2)), ((0, 1), (2, 0)),
                 ((1, 0), (0, 2)), ((1, 1), (0, 0))])

    row0 = jnp.stack([y00, y01], axis=3)          # (N, H, W, 2, Cout)  pj
    row1 = jnp.stack([y10, y11], axis=3)
    yy = jnp.stack([row0, row1], axis=3)          # (N, H, W, pi, pj, Cout)
    out = jnp.transpose(yy, (0, 1, 3, 2, 4, 5)).reshape(N, 2 * H, 2 * W, Cout)
    return out


# ----------------------------------------------------------------------------
# ResnetGenerator: params + forward
# ----------------------------------------------------------------------------

def build_params(key, input_nc, output_nc, ngf, n_blocks):
    keys = iter(jax.random.split(key, 64))

    def conv_w(cout, cin, k):
        return 0.02 * jax.random.normal(next(keys), (cout, cin, k, k), jnp.float32)

    zeros = lambda n: jnp.zeros((n,), jnp.float32)
    ones = lambda n: jnp.ones((n,), jnp.float32)

    p = {}
    # stem conv 7x7 (bias exists in the module but is cancelled by InstanceNorm)
    p["c0_w"], p["c0_b"] = conv_w(ngf, input_nc, 7), zeros(ngf)
    p["c0_g"], p["c0_be"] = ones(ngf), zeros(ngf)
    # 2x downsampling
    for i in range(2):
        cin = ngf * (2 ** i)
        cout = cin * 2
        p[f"d{i}_w"], p[f"d{i}_b"] = conv_w(cout, cin, 3), zeros(cout)
        p[f"d{i}_g"], p[f"d{i}_be"] = ones(cout), zeros(cout)
    # resnet blocks at dim = ngf * 4
    dim = ngf * 4
    blocks = []
    for _ in range(n_blocks):
        blocks.append(dict(
            w1=conv_w(dim, dim, 3), b1=zeros(dim), g1=ones(dim), be1=zeros(dim),
            w2=conv_w(dim, dim, 3), b2=zeros(dim), g2=ones(dim), be2=zeros(dim),
        ))
    p["blocks"] = blocks
    # 2x upsampling (ConvTranspose2d weight layout: (Cin, Cout, kH, kW))
    for i in range(2):
        cin = ngf * (2 ** (2 - i))
        cout = cin // 2
        p[f"u{i}_w"] = 0.02 * jax.random.normal(next(keys), (cin, cout, 3, 3),
                                                jnp.float32)
        p[f"u{i}_b"] = zeros(cout)
        p[f"u{i}_g"], p[f"u{i}_be"] = ones(cout), zeros(cout)
    # output conv 7x7 + tanh (bias kept here)
    p["co_w"], p["co_b"] = conv_w(output_nc, ngf, 7), zeros(output_nc)
    return p


def resnet_generator_forward(params, x_nchw):
    p = params
    x = jnp.transpose(x_nchw, (0, 2, 3, 1)).astype(ACT_DTYPE)   # NCHW -> NHWC

    # stem: conv7x7 -> IN -> ReLU   (conv bias cancelled by IN -> dropped)
    h = conv2d(x, p["c0_w"], None, stride=1, padding=3)
    h = instance_norm(h, p["c0_g"], p["c0_be"], relu=True)

    # 2x downsample: conv3x3 s2 -> IN -> ReLU
    for i in range(2):
        h = conv2d(h, p[f"d{i}_w"], None, stride=2, padding=1)
        h = instance_norm(h, p[f"d{i}_g"], p[f"d{i}_be"], relu=True)

    # resnet blocks (use_dropout=False -> no Dropout); residual add fused
    # into the second InstanceNorm's epilogue.
    for blk in p["blocks"]:
        r = conv2d(h, blk["w1"], None, stride=1, padding=1)
        r = instance_norm(r, blk["g1"], blk["be1"], relu=True)
        r = conv2d(r, blk["w2"], None, stride=1, padding=1)
        h = instance_norm(r, blk["g2"], blk["be2"], relu=False, residual=h)

    # 2x upsample: convT3x3 s2 (sub-pixel) -> IN -> ReLU
    for i in range(2):
        h = conv_transpose2d_s2(h, p[f"u{i}_w"])
        h = instance_norm(h, p[f"u{i}_g"], p[f"u{i}_be"], relu=True)

    # output conv 7x7 with bias + tanh fused into the matmul epilogue
    h = conv2d(h, p["co_w"], p["co_b"], stride=1, padding=3,
               activation="tanh", out_dtype=jnp.float32)

    return jnp.transpose(h, (0, 3, 1, 2))   # NHWC -> NCHW


# ----------------------------------------------------------------------------

if __name__ == "__main__":
    key = jax.random.PRNGKey(0)
    kp, kx = jax.random.split(key)

    # small, module-consistent shapes
    input_nc, output_nc, ngf, n_blocks = 4, 3, 8, 2
    N, H, W = 2, 16, 16                    # spatial must be divisible by 4

    params = build_params(kp, input_nc, output_nc, ngf, n_blocks)
    x = jax.random.normal(kx, (N, input_nc, H, W), jnp.float32)

    fwd = jax.jit(resnet_generator_forward)
    out = fwd(params, x)
    out = jax.block_until_ready(out)

    assert out.shape == (N, output_nc, H, W), out.shape
    assert jnp.all(jnp.isfinite(out))
    assert jnp.all(jnp.abs(out) <= 1.0)    # tanh output range
    print("KERNEL_OK")
</pallas_src>

<mosaic_0001>
module attributes {stable_mosaic.version = 11 : i64} {
  func.func @_mm_kernel(%arg0: i32, %arg1: i32, %arg2: i32, %arg3: memref<256x256xbf16, #tpu.memory_space<vmem>>, %arg4: memref<256x128xbf16, #tpu.memory_space<vmem>>, %arg5: memref<256x128xbf16, #tpu.memory_space<vmem>>, %arg6: memref<256x128xf32, #tpu.memory_space<vmem>>) attributes {dimension_semantics = [#tpu.dimension_semantics<parallel>, #tpu.dimension_semantics<parallel>, #tpu.dimension_semantics<arbitrary>], iteration_bounds = array<i64: 2, 1, 1>, scalar_prefetch = 0 : i64, scratch_operands = 1 : i64, tpu.core_type = #tpu.core_type<tc>, window_params = [{transform_indices = @transform_0, window_bounds = array<i64: 256, 256>}, {transform_indices = @transform_1, window_bounds = array<i64: 256, 128>}, {transform_indices = @transform_2, window_bounds = array<i64: 256, 128>}]} {
    %c0_i32 = arith.constant 0 : i32
    %0 = arith.cmpi eq, %arg2, %c0_i32 : i32
    %1 = arith.extui %0 : i1 to i32
    %c0_i32_0 = arith.constant 0 : i32
    %2 = arith.cmpi ne, %1, %c0_i32_0 : i32
    scf.if %2 {
      %cst_10 = arith.constant 0.000000e+00 : f32
      %12 = vector.broadcast %cst_10 : f32 to vector<256x128xf32>
      %c0_11 = arith.constant 0 : index
      %c0_12 = arith.constant 0 : index
      %13 = vector.load %arg6[%c0_11, %c0_12] : memref<256x128xf32, #tpu.memory_space<vmem>>, vector<256x128xf32>
      tpu.vector_store %arg6[%c0_11, %c0_12], %12 {strides = array<i32>} : memref<256x128xf32, #tpu.memory_space<vmem>>, vector<256x128xf32>,
    } else {
    }
    %c0 = arith.constant 0 : index
    %c0_1 = arith.constant 0 : index
    %3 = vector.load %arg6[%c0, %c0_1] : memref<256x128xf32, #tpu.memory_space<vmem>>, vector<256x128xf32>
    %c0_2 = arith.constant 0 : index
    %c0_3 = arith.constant 0 : index
    %4 = vector.load %arg3[%c0_2, %c0_3] : memref<256x256xbf16, #tpu.memory_space<vmem>>, vector<256x256xbf16>
    %c0_4 = arith.constant 0 : index
    %c0_5 = arith.constant 0 : index
    %5 = vector.load %arg4[%c0_4, %c0_5] : memref<256x128xbf16, #tpu.memory_space<vmem>>, vector<256x128xbf16>
    %cst = arith.constant dense<0.000000e+00> : vector<256x128xf32>
    %6 = tpu.matmul %4, %5, %cst {dimension_numbers = #tpu.dot_dimension_numbers<[1], [0], [0], [1], [0, 0, 1, 1], [], []>} : vector<256x256xbf16>, vector<256x128xbf16>, vector<256x128xf32> -> vector<256x128xf32>
    %7 = arith.addf %3, %6 : vector<256x128xf32>
    %c0_6 = arith.constant 0 : index
    %c0_7 = arith.constant 0 : index
    %8 = vector.load %arg6[%c0_6, %c0_7] : memref<256x128xf32, #tpu.memory_space<vmem>>, vector<256x128xf32>
    tpu.vector_store %arg6[%c0_6, %c0_7], %7 {strides = array<i32>} : memref<256x128xf32, #tpu.memory_space<vmem>>, vector<256x128xf32>,
    %c0_i32_8 = arith.constant 0 : i32
    %9 = arith.cmpi eq, %arg2, %c0_i32_8 : i32
    %10 = arith.extui %9 : i1 to i32
    %c0_i32_9 = arith.constant 0 : i32
    %11 = arith.cmpi ne, %10, %c0_i32_9 : i32
    scf.if %11 {
      %c0_10 = arith.constant 0 : index
      %c0_11 = arith.constant 0 : index
      %12 = vector.load %arg6[%c0_10, %c0_11] : memref<256x128xf32, #tpu.memory_space<vmem>>, vector<256x128xf32>
      %13 = arith.truncf %12 : vector<256x128xf32> to vector<256x128xbf16>
      %c0_12 = arith.constant 0 : index
      %c0_13 = arith.constant 0 : index
      %14 = vector.load %arg5[%c0_12, %c0_13] : memref<256x128xbf16, #tpu.memory_space<vmem>>, vector<256x128xbf16>
      tpu.vector_store %arg5[%c0_12, %c0_13], %13 {strides = array<i32>} : memref<256x128xbf16, #tpu.memory_space<vmem>>, vector<256x128xbf16>,
    } else {
    }
    return
  }
  func.func @transform_0(%arg0: i32, %arg1: i32, %arg2: i32) -> (i32, i32) {
    %c0_i32 = arith.constant 0 : i32
    return %arg0, %arg2 : i32, i32
  }
  func.func @transform_1(%arg0: i32, %arg1: i32, %arg2: i32) -> (i32, i32) {
    %c0_i32 = arith.constant 0 : i32
    return %arg2, %arg1 : i32, i32
  }
  func.func @transform_2(%arg0: i32, %arg1: i32, %arg2: i32) -> (i32, i32) {
    %c0_i32 = arith.constant 0 : i32
    return %arg0, %arg1 : i32, i32
  }
}

module attributes {stable_mosaic.version = 11 : i64} {
  func.func @_in_apply_kernel(%arg0: i32, %arg1: i32, %arg2: memref<1x256x8xbf16, #tpu.memory_space<vmem>>, %arg3: memref<1x1x8xf32, #tpu.memory_space<vmem>>, %arg4: memref<1x1x8xf32, #tpu.memory_space<vmem>>, %arg5: memref<1x1x8xf32, #tpu.memory_space<vmem>>, %arg6: memref<1x1x8xf32, #tpu.memory_space<vmem>>, %arg7: memref<1x256x8xbf16, #tpu.memory_space<vmem>>) attributes {dimension_semantics = [#tpu.dimension_semantics<parallel>, #tpu.dimension_semantics<parallel>], iteration_bounds = array<i64: 2, 1>, scalar_prefetch = 0 : i64, scratch_operands = 0 : i64, tpu.core_type = #tpu.core_type<tc>, window_params = [{transform_indices = @transform_0, window_bounds = array<i64: 1, 256, 8>}, {transform_indices = @transform_1, window_bounds = array<i64: 1, 1, 8>}, {transform_indices = @transform_2, window_bounds = array<i64: 1, 1, 8>}, {pipeline_mode = #tpu.pipeline_mode<synchronous>, transform_indices = @transform_3, window_bounds = array<i64: 1, 1, 8>}, {pipeline_mode = #tpu.pipeline_mode<synchronous>, transform_indices = @transform_4, window_bounds = array<i64: 1, 1, 8>}, {transform_indices = @transform_5, window_bounds = array<i64: 1, 256, 8>}]} {
    %c0 = arith.constant 0 : index
    %c0_0 = arith.constant 0 : index
    %c0_1 = arith.constant 0 : index
    %0 = vector.load %arg2[%c0, %c0_0, %c0_1] : memref<1x256x8xbf16, #tpu.memory_space<vmem>>, vector<1x256x8xbf16>
    %1 = arith.extf %0 : vector<1x256x8xbf16> to vector<1x256x8xf32>
    %c0_2 = arith.constant 0 : index
    %c0_3 = arith.constant 0 : index
    %c0_4 = arith.constant 0 : index
    %2 = vector.load %arg3[%c0_2, %c0_3, %c0_4] : memref<1x1x8xf32, #tpu.memory_space<vmem>>, vector<1x1x8xf32>
    %3 = vector.broadcast %2 : vector<1x1x8xf32> to vector<1x256x8xf32>
    %4 = arith.subf %1, %3 : vector<1x256x8xf32>
    %c0_5 = arith.constant 0 : index
    %c0_6 = arith.constant 0 : index
    %c0_7 = arith.constant 0 : index
    %5 = vector.load %arg4[%c0_5, %c0_6, %c0_7] : memref<1x1x8xf32, #tpu.memory_space<vmem>>, vector<1x1x8xf32>
    %6 = vector.broadcast %5 : vector<1x1x8xf32> to vector<1x256x8xf32>
    %7 = arith.mulf %4, %6 : vector<1x256x8xf32>
    %c0_8 = arith.constant 0 : index
    %c0_9 = arith.constant 0 : index
    %c0_10 = arith.constant 0 : index
    %8 = vector.load %arg5[%c0_8, %c0_9, %c0_10] : memref<1x1x8xf32, #tpu.memory_space<vmem>>, vector<1x1x8xf32>
    %9 = vector.broadcast %8 : vector<1x1x8xf32> to vector<1x256x8xf32>
    %10 = arith.mulf %7, %9 : vector<1x256x8xf32>
    %c0_11 = arith.constant 0 : index
    %c0_12 = arith.constant 0 : index
    %c0_13 = arith.constant 0 : index
    %11 = vector.load %arg6[%c0_11, %c0_12, %c0_13] : memref<1x1x8xf32, #tpu.memory_space<vmem>>, vector<1x1x8xf32>
    %12 = vector.broadcast %11 : vector<1x1x8xf32> to vector<1x256x8xf32>
    %13 = arith.addf %10, %12 : vector<1x256x8xf32>
    %cst = arith.constant 0.000000e+00 : f32
    %14 = vector.broadcast %cst : f32 to vector<1x256x8xf32>
    %15 = arith.maximumf %13, %14 : vector<1x256x8xf32>
    %16 = arith.truncf %15 : vector<1x256x8xf32> to vector<1x256x8xbf16>
    %c0_14 = arith.constant 0 : index
    %c0_15 = arith.constant 0 : index
    %c0_16 = arith.constant 0 : index
    %17 = vector.load %arg7[%c0_14, %c0_15, %c0_16] : memref<1x256x8xbf16, #tpu.memory_space<vmem>>, vector<1x256x8xbf16>
    tpu.vector_store %arg7[%c0_14, %c0_15, %c0_16], %16 {strides = array<i32>} : memref<1x256x8xbf16, #tpu.memory_space<vmem>>, vector<1x256x8xbf16>,
    return
  }
  func.func @transform_0(%arg0: i32, %arg1: i32) -> (i32, i32, i32) {
    %c0_i32 = arith.constant 0 : i32
    %c0_i32_0 = arith.constant 0 : i32
    return %arg0, %arg1, %c0_i32 : i32, i32, i32
  }
  func.func @transform_1(%arg0: i32, %arg1: i32) -> (i32, i32, i32) {
    %c0_i32 = arith.constant 0 : i32
    %c0_i32_0 = arith.constant 0 : i32
    %c0_i32_1 = arith.constant 0 : i32
    return %arg0, %c0_i32, %c0_i32_0 : i32, i32, i32
  }
  func.func @transform_2(%arg0: i32, %arg1: i32) -> (i32, i32, i32) {
    %c0_i32 = arith.constant 0 : i32
    %c0_i32_0 = arith.constant 0 : i32
    %c0_i32_1 = arith.constant 0 : i32
    return %arg0, %c0_i32, %c0_i32_0 : i32, i32, i32
  }
  func.func @transform_3(%arg0: i32, %arg1: i32) -> (i32, i32, i32) {
    %c0_i32 = arith.constant 0 : i32
    %c0_i32_0 = arith.constant 0 : i32
    %c0_i32_1 = arith.constant 0 : i32
    %c0_i32_2 = arith.constant 0 : i32
    return %c0_i32, %c0_i32_0, %c0_i32_1 : i32, i32, i32
  }
  func.func @transform_4(%arg0: i32, %arg1: i32) -> (i32, i32, i32) {
    %c0_i32 = arith.constant 0 : i32
    %c0_i32_0 = arith.constant 0 : i32
    %c0_i32_1 = arith.constant 0 : i32
    %c0_i32_2 = arith.constant 0 : i32
    return %c0_i32, %c0_i32_0, %c0_i32_1 : i32, i32, i32
  }
  func.func @transform_5(%arg0: i32, %arg1: i32) -> (i32, i32, i32) {
    %c0_i32 = arith.constant 0 : i32
    %c0_i32_0 = arith.constant 0 : i32
    return %arg0, %arg1, %c0_i32 : i32, i32, i32
  }
}

module attributes {stable_mosaic.version = 11 : i64} {
  func.func @_in_stats_kernel(%arg0: i32, %arg1: i32, %arg2: memref<1x256x8xbf16, #tpu.memory_space<vmem>>, %arg3: memref<1x1x8xf32, #tpu.memory_space<vmem>>, %arg4: memref<1x1x8xf32, #tpu.memory_space<vmem>>) attributes {dimension_semantics = [#tpu.dimension_semantics<parallel>, #tpu.dimension_semantics<arbitrary>], iteration_bounds = array<i64: 2, 1>, scalar_prefetch = 0 : i64, scratch_operands = 0 : i64, tpu.core_type = #tpu.core_type<tc>, window_params = [{transform_indices = @transform_0, window_bounds = array<i64: 1, 256, 8>}, {transform_indices = @transform_1, window_bounds = array<i64: 1, 1, 8>}, {transform_indices = @transform_2, window_bounds = array<i64: 1, 1, 8>}]} {
    %c0_i32 = arith.constant 0 : i32
    %0 = arith.cmpi eq, %arg1, %c0_i32 : i32
    %1 = arith.extui %0 : i1 to i32
    %c0_i32_0 = arith.constant 0 : i32
    %2 = arith.cmpi ne, %1, %c0_i32_0 : i32
    scf.if %2 {
      %cst_18 = arith.constant 0.000000e+00 : f32
      %19 = vector.broadcast %cst_18 : f32 to vector<1x1x8xf32>
      %c0_19 = arith.constant 0 : index
      %c0_20 = arith.constant 0 : index
      %c0_21 = arith.constant 0 : index
      %20 = vector.load %arg3[%c0_19, %c0_20, %c0_21] : memref<1x1x8xf32, #tpu.memory_space<vmem>>, vector<1x1x8xf32>
      tpu.vector_store %arg3[%c0_19, %c0_20, %c0_21], %19 {strides = array<i32>} : memref<1x1x8xf32, #tpu.memory_space<vmem>>, vector<1x1x8xf32>,
      %cst_22 = arith.constant 0.000000e+00 : f32
      %21 = vector.broadcast %cst_22 : f32 to vector<1x1x8xf32>
      %c0_23 = arith.constant 0 : index
      %c0_24 = arith.constant 0 : index
      %c0_25 = arith.constant 0 : index
      %22 = vector.load %arg4[%c0_23, %c0_24, %c0_25] : memref<1x1x8xf32, #tpu.memory_space<vmem>>, vector<1x1x8xf32>
      tpu.vector_store %arg4[%c0_23, %c0_24, %c0_25], %21 {strides = array<i32>} : memref<1x1x8xf32, #tpu.memory_space<vmem>>, vector<1x1x8xf32>,
    } else {
    }
    %c0 = arith.constant 0 : index
    %c0_1 = arith.constant 0 : index
    %c0_2 = arith.constant 0 : index
    %3 = vector.load %arg2[%c0, %c0_1, %c0_2] : memref<1x256x8xbf16, #tpu.memory_space<vmem>>, vector<1x256x8xbf16>
    %4 = arith.extf %3 : vector<1x256x8xbf16> to vector<1x256x8xf32>
    %c0_3 = arith.constant 0 : index
    %c0_4 = arith.constant 0 : index
    %c0_5 = arith.constant 0 : index
    %5 = vector.load %arg3[%c0_3, %c0_4, %c0_5] : memref<1x1x8xf32, #tpu.memory_space<vmem>>, vector<1x1x8xf32>
    %cst = arith.constant dense<0.000000e+00> : vector<1x8xf32>
    %6 = vector.multi_reduction <add>, %4, %cst [1] : vector<1x256x8xf32> to vector<1x8xf32>
    %7 = vector.shape_cast %6 : vector<1x8xf32> to vector<1x1x8xf32>
    %8 = arith.addf %5, %7 : vector<1x1x8xf32>
    %c0_6 = arith.constant 0 : index
    %c0_7 = arith.constant 0 : index
    %c0_8 = arith.constant 0 : index
    %9 = vector.load %arg3[%c0_6, %c0_7, %c0_8] : memref<1x1x8xf32, #tpu.memory_space<vmem>>, vector<1x1x8xf32>
    tpu.vector_store %arg3[%c0_6, %c0_7, %c0_8], %8 {strides = array<i32>} : memref<1x1x8xf32, #tpu.memory_space<vmem>>, vector<1x1x8xf32>,
    %c0_9 = arith.constant 0 : index
    %c0_10 = arith.constant 0 : index
    %c0_11 = arith.constant 0 : index
    %10 = vector.load %arg4[%c0_9, %c0_10, %c0_11] : memref<1x1x8xf32, #tpu.memory_space<vmem>>, vector<1x1x8xf32>
    %11 = arith.mulf %4, %4 : vector<1x256x8xf32>
    %cst_12 = arith.constant dense<0.000000e+00> : vector<1x8xf32>
    %12 = vector.multi_reduction <add>, %11, %cst_12 [1] : vector<1x256x8xf32> to vector<1x8xf32>
    %13 = vector.shape_cast %12 : vector<1x8xf32> to vector<1x1x8xf32>
    %14 = arith.addf %10, %13 : vector<1x1x8xf32>
    %c0_13 = arith.constant 0 : index
    %c0_14 = arith.constant 0 : index
    %c0_15 = arith.constant 0 : index
    %15 = vector.load %arg4[%c0_13, %c0_14, %c0_15] : memref<1x1x8xf32, #tpu.memory_space<vmem>>, vector<1x1x8xf32>
    tpu.vector_store %arg4[%c0_13, %c0_14, %c0_15], %14 {strides = array<i32>} : memref<1x1x8xf32, #tpu.memory_space<vmem>>, vector<1x1x8xf32>,
    %c0_i32_16 = arith.constant 0 : i32
    %16 = arith.cmpi eq, %arg1, %c0_i32_16 : i32
    %17 = arith.extui %16 : i1 to i32
    %c0_i32_17 = arith.constant 0 : i32
    %18 = arith.cmpi ne, %17, %c0_i32_17 : i32
    scf.if %18 {
      %c0_18 = arith.constant 0 : index
      %c0_19 = arith.constant 0 : index
      %c0_20 = arith.constant 0 : index
      %19 = vector.load %arg3[%c0_18, %c0_19, %c0_20] : memref<1x1x8xf32, #tpu.memory_space<vmem>>, vector<1x1x8xf32>
      %cst_21 = arith.constant 3.906250e-03 : f32
      %20 = vector.broadcast %cst_21 : f32 to vector<1x1x8xf32>
      %21 = arith.mulf %19, %20 : vector<1x1x8xf32>
      %c0_22 = arith.constant 0 : index
      %c0_23 = arith.constant 0 : index
      %c0_24 = arith.constant 0 : index
      %22 = vector.load %arg4[%c0_22, %c0_23, %c0_24] : memref<1x1x8xf32, #tpu.memory_space<vmem>>, vector<1x1x8xf32>
      %cst_25 = arith.constant 3.906250e-03 : f32
      %23 = vector.broadcast %cst_25 : f32 to vector<1x1x8xf32>
      %24 = arith.mulf %22, %23 : vector<1x1x8xf32>
      %25 = arith.mulf %21, %21 : vector<1x1x8xf32>
      %26 = arith.subf %24, %25 : vector<1x1x8xf32>
      %c0_26 = arith.constant 0 : index
      %c0_27 = arith.constant 0 : index
      %c0_28 = arith.constant 0 : index
      %27 = vector.load %arg3[%c0_26, %c0_27, %c0_28] : memref<1x1x8xf32, #tpu.memory_space<vmem>>, vector<1x1x8xf32>
      tpu.vector_store %arg3[%c0_26, %c0_27, %c0_28], %21 {strides = array<i32>} : memref<1x1x8xf32, #tpu.memory_space<vmem>>, vector<1x1x8xf32>,
      %cst_29 = arith.constant 0.000000e+00 : f32
      %28 = vector.broadcast %cst_29 : f32 to vector<1x1x8xf32>
      %29 = arith.maximumf %26, %28 : vector<1x1x8xf32>
      %cst_30 = arith.constant 9.99999974E-6 : f32
      %30 = vector.broadcast %cst_30 : f32 to vector<1x1x8xf32>
      %31 = arith.addf %29, %30 : vector<1x1x8xf32>
      %32 = math.rsqrt %31 : vector<1x1x8xf32>
      %c0_31 = arith.constant 0 : index
      %c0_32 = arith.constant 0 : index
      %c0_33 = arith.constant 0 : index
      %33 = vector.load %arg4[%c0_31, %c0_32, %c0_33] : memref<1x1x8xf32, #tpu.memory_space<vmem>>, vector<1x1x8xf32>
      tpu.vector_store %arg4[%c0_31, %c0_32, %c0_33], %32 {strides = array<i32>} : memref<1x1x8xf32, #tpu.memory_space<vmem>>, vector<1x1x8xf32>,
    } else {
    }
    return
  }
  func.func @transform_0(%arg0: i32, %arg1: i32) -> (i32, i32, i32) {
    %c0_i32 = arith.constant 0 : i32
    %c0_i32_0 = arith.constant 0 : i32
    return %arg0, %arg1, %c0_i32 : i32, i32, i32
  }
  func.func @transform_1(%arg0: i32, %arg1: i32) -> (i32, i32, i32) {
    %c0_i32 = arith.constant 0 : i32
    %c0_i32_0 = arith.constant 0 : i32
    %c0_i32_1 = arith.constant 0 : i32
    return %arg0, %c0_i32, %c0_i32_0 : i32, i32, i32
  }
  func.func @transform_2(%arg0: i32, %arg1: i32) -> (i32, i32, i32) {
    %c0_i32 = arith.constant 0 : i32
    %c0_i32_0 = arith.constant 0 : i32
    %c0_i32_1 = arith.constant 0 : i32
    return %arg0, %c0_i32, %c0_i32_0 : i32, i32, i32
  }
}

module attributes {stable_mosaic.version = 11 : i64} {
  func.func @_mm_kernel(%arg0: i32, %arg1: i32, %arg2: i32, %arg3: memref<128x128xbf16, #tpu.memory_space<vmem>>, %arg4: memref<128x128xbf16, #tpu.memory_space<vmem>>, %arg5: memref<128x128xbf16, #tpu.memory_space<vmem>>, %arg6: memref<128x128xf32, #tpu.memory_space<vmem>>) attributes {dimension_semantics = [#tpu.dimension_semantics<parallel>, #tpu.dimension_semantics<parallel>, #tpu.dimension_semantics<arbitrary>], iteration_bounds = array<i64: 1, 1, 1>, scalar_prefetch = 0 : i64, scratch_operands = 1 : i64, tpu.core_type = #tpu.core_type<tc>, window_params = [{transform_indices = @transform_0, window_bounds = array<i64: 128, 128>}, {transform_indices = @transform_1, window_bounds = array<i64: 128, 128>}, {transform_indices = @transform_2, window_bounds = array<i64: 128, 128>}]} {
    %c0_i32 = arith.constant 0 : i32
    %0 = arith.cmpi eq, %arg2, %c0_i32 : i32
    %1 = arith.extui %0 : i1 to i32
    %c0_i32_0 = arith.constant 0 : i32
    %2 = arith.cmpi ne, %1, %c0_i32_0 : i32
    scf.if %2 {
      %cst_10 = arith.constant 0.000000e+00 : f32
      %12 = vector.broadcast %cst_10 : f32 to vector<128x128xf32>
      %c0_11 = arith.constant 0 : index
      %c0_12 = arith.constant 0 : index
      %13 = vector.load %arg6[%c0_11, %c0_12] : memref<128x128xf32, #tpu.memory_space<vmem>>, vector<128x128xf32>
      tpu.vector_store %arg6[%c0_11, %c0_12], %12 {strides = array<i32>} : memref<128x128xf32, #tpu.memory_space<vmem>>, vector<128x128xf32>,
    } else {
    }
    %c0 = arith.constant 0 : index
    %c0_1 = arith.constant 0 : index
    %3 = vector.load %arg6[%c0, %c0_1] : memref<128x128xf32, #tpu.memory_space<vmem>>, vector<128x128xf32>
    %c0_2 = arith.constant 0 : index
    %c0_3 = arith.constant 0 : index
    %4 = vector.load %arg3[%c0_2, %c0_3] : memref<128x128xbf16, #tpu.memory_space<vmem>>, vector<128x128xbf16>
    %c0_4 = arith.constant 0 : index
    %c0_5 = arith.constant 0 : index
    %5 = vector.load %arg4[%c0_4, %c0_5] : memref<128x128xbf16, #tpu.memory_space<vmem>>, vector<128x128xbf16>
    %cst = arith.constant dense<0.000000e+00> : vector<128x128xf32>
    %6 = tpu.matmul %4, %5, %cst {dimension_numbers = #tpu.dot_dimension_numbers<[1], [0], [0], [1], [0, 0, 1, 1], [], []>} : vector<128x128xbf16>, vector<128x128xbf16>, vector<128x128xf32> -> vector<128x128xf32>
    %7 = arith.addf %3, %6 : vector<128x128xf32>
    %c0_6 = arith.constant 0 : index
    %c0_7 = arith.constant 0 : index
    %8 = vector.load %arg6[%c0_6, %c0_7] : memref<128x128xf32, #tpu.memory_space<vmem>>, vector<128x128xf32>
    tpu.vector_store %arg6[%c0_6, %c0_7], %7 {strides = array<i32>} : memref<128x128xf32, #tpu.memory_space<vmem>>, vector<128x128xf32>,
    %c0_i32_8 = arith.constant 0 : i32
    %9 = arith.cmpi eq, %arg2, %c0_i32_8 : i32
    %10 = arith.extui %9 : i1 to i32
    %c0_i32_9 = arith.constant 0 : i32
    %11 = arith.cmpi ne, %10, %c0_i32_9 : i32
    scf.if %11 {
      %c0_10 = arith.constant 0 : index
      %c0_11 = arith.constant 0 : index
      %12 = vector.load %arg6[%c0_10, %c0_11] : memref<128x128xf32, #tpu.memory_space<vmem>>, vector<128x128xf32>
      %13 = arith.truncf %12 : vector<128x128xf32> to vector<128x128xbf16>
      %c0_12 = arith.constant 0 : index
      %c0_13 = arith.constant 0 : index
      %14 = vector.load %arg5[%c0_12, %c0_13] : memref<128x128xbf16, #tpu.memory_space<vmem>>, vector<128x128xbf16>
      tpu.vector_store %arg5[%c0_12, %c0_13], %13 {strides = array<i32>} : memref<128x128xbf16, #tpu.memory_space<vmem>>, vector<128x128xbf16>,
    } else {
    }
    return
  }
  func.func @transform_0(%arg0: i32, %arg1: i32, %arg2: i32) -> (i32, i32) {
    %c0_i32 = arith.constant 0 : i32
    return %arg0, %arg2 : i32, i32
  }
  func.func @transform_1(%arg0: i32, %arg1: i32, %arg2: i32) -> (i32, i32) {
    %c0_i32 = arith.constant 0 : i32
    return %arg2, %arg1 : i32, i32
  }
  func.func @transform_2(%arg0: i32, %arg1: i32, %arg2: i32) -> (i32, i32) {
    %c0_i32 = arith.constant 0 : i32
    return %arg0, %arg1 : i32, i32
  }
}

module attributes {stable_mosaic.version = 11 : i64} {
  func.func @_in_stats_kernel(%arg0: i32, %arg1: i32, %arg2: memref<1x64x16xbf16, #tpu.memory_space<vmem>>, %arg3: memref<1x1x16xf32, #tpu.memory_space<vmem>>, %arg4: memref<1x1x16xf32, #tpu.memory_space<vmem>>) attributes {dimension_semantics = [#tpu.dimension_semantics<parallel>, #tpu.dimension_semantics<arbitrary>], iteration_bounds = array<i64: 2, 1>, scalar_prefetch = 0 : i64, scratch_operands = 0 : i64, tpu.core_type = #tpu.core_type<tc>, window_params = [{transform_indices = @transform_0, window_bounds = array<i64: 1, 64, 16>}, {transform_indices = @transform_1, window_bounds = array<i64: 1, 1, 16>}, {transform_indices = @transform_2, window_bounds = array<i64: 1, 1, 16>}]} {
    %c0_i32 = arith.constant 0 : i32
    %0 = arith.cmpi eq, %arg1, %c0_i32 : i32
    %1 = arith.extui %0 : i1 to i32
    %c0_i32_0 = arith.constant 0 : i32
    %2 = arith.cmpi ne, %1, %c0_i32_0 : i32
    scf.if %2 {
      %cst_18 = arith.constant 0.000000e+00 : f32
      %19 = vector.broadcast %cst_18 : f32 to vector<1x1x16xf32>
      %c0_19 = arith.constant 0 : index
      %c0_20 = arith.constant 0 : index
      %c0_21 = arith.constant 0 : index
      %20 = vector.load %arg3[%c0_19, %c0_20, %c0_21] : memref<1x1x16xf32, #tpu.memory_space<vmem>>, vector<1x1x16xf32>
      tpu.vector_store %arg3[%c0_19, %c0_20, %c0_21], %19 {strides = array<i32>} : memref<1x1x16xf32, #tpu.memory_space<vmem>>, vector<1x1x16xf32>,
      %cst_22 = arith.constant 0.000000e+00 : f32
      %21 = vector.broadcast %cst_22 : f32 to vector<1x1x16xf32>
      %c0_23 = arith.constant 0 : index
      %c0_24 = arith.constant 0 : index
      %c0_25 = arith.constant 0 : index
      %22 = vector.load %arg4[%c0_23, %c0_24, %c0_25] : memref<1x1x16xf32, #tpu.memory_space<vmem>>, vector<1x1x16xf32>
      tpu.vector_store %arg4[%c0_23, %c0_24, %c0_25], %21 {strides = array<i32>} : memref<1x1x16xf32, #tpu.memory_space<vmem>>, vector<1x1x16xf32>,
    } else {
    }
    %c0 = arith.constant 0 : index
    %c0_1 = arith.constant 0 : index
    %c0_2 = arith.constant 0 : index
    %3 = vector.load %arg2[%c0, %c0_1, %c0_2] : memref<1x64x16xbf16, #tpu.memory_space<vmem>>, vector<1x64x16xbf16>
    %4 = arith.extf %3 : vector<1x64x16xbf16> to vector<1x64x16xf32>
    %c0_3 = arith.constant 0 : index
    %c0_4 = arith.constant 0 : index
    %c0_5 = arith.constant 0 : index
    %5 = vector.load %arg3[%c0_3, %c0_4, %c0_5] : memref<1x1x16xf32, #tpu.memory_space<vmem>>, vector<1x1x16xf32>
    %cst = arith.constant dense<0.000000e+00> : vector<1x16xf32>
    %6 = vector.multi_reduction <add>, %4, %cst [1] : vector<1x64x16xf32> to vector<1x16xf32>
    %7 = vector.shape_cast %6 : vector<1x16xf32> to vector<1x1x16xf32>
    %8 = arith.addf %5, %7 : vector<1x1x16xf32>
    %c0_6 = arith.constant 0 : index
    %c0_7 = arith.constant 0 : index
    %c0_8 = arith.constant 0 : index
    %9 = vector.load %arg3[%c0_6, %c0_7, %c0_8] : memref<1x1x16xf32, #tpu.memory_space<vmem>>, vector<1x1x16xf32>
    tpu.vector_store %arg3[%c0_6, %c0_7, %c0_8], %8 {strides = array<i32>} : memref<1x1x16xf32, #tpu.memory_space<vmem>>, vector<1x1x16xf32>,
    %c0_9 = arith.constant 0 : index
    %c0_10 = arith.constant 0 : index
    %c0_11 = arith.constant 0 : index
    %10 = vector.load %arg4[%c0_9, %c0_10, %c0_11] : memref<1x1x16xf32, #tpu.memory_space<vmem>>, vector<1x1x16xf32>
    %11 = arith.mulf %4, %4 : vector<1x64x16xf32>
    %cst_12 = arith.constant dense<0.000000e+00> : vector<1x16xf32>
    %12 = vector.multi_reduction <add>, %11, %cst_12 [1] : vector<1x64x16xf32> to vector<1x16xf32>
    %13 = vector.shape_cast %12 : vector<1x16xf32> to vector<1x1x16xf32>
    %14 = arith.addf %10, %13 : vector<1x1x16xf32>
    %c0_13 = arith.constant 0 : index
    %c0_14 = arith.constant 0 : index
    %c0_15 = arith.constant 0 : index
    %15 = vector.load %arg4[%c0_13, %c0_14, %c0_15] : memref<1x1x16xf32, #tpu.memory_space<vmem>>, vector<1x1x16xf32>
    tpu.vector_store %arg4[%c0_13, %c0_14, %c0_15], %14 {strides = array<i32>} : memref<1x1x16xf32, #tpu.memory_space<vmem>>, vector<1x1x16xf32>,
    %c0_i32_16 = arith.constant 0 : i32
    %16 = arith.cmpi eq, %arg1, %c0_i32_16 : i32
    %17 = arith.extui %16 : i1 to i32
    %c0_i32_17 = arith.constant 0 : i32
    %18 = arith.cmpi ne, %17, %c0_i32_17 : i32
    scf.if %18 {
      %c0_18 = arith.constant 0 : index
      %c0_19 = arith.constant 0 : index
      %c0_20 = arith.constant 0 : index
      %19 = vector.load %arg3[%c0_18, %c0_19, %c0_20] : memref<1x1x16xf32, #tpu.memory_space<vmem>>, vector<1x1x16xf32>
      %cst_21 = arith.constant 1.562500e-02 : f32
      %20 = vector.broadcast %cst_21 : f32 to vector<1x1x16xf32>
      %21 = arith.mulf %19, %20 : vector<1x1x16xf32>
      %c0_22 = arith.constant 0 : index
      %c0_23 = arith.constant 0 : index
      %c0_24 = arith.constant 0 : index
      %22 = vector.load %arg4[%c0_22, %c0_23, %c0_24] : memref<1x1x16xf32, #tpu.memory_space<vmem>>, vector<1x1x16xf32>
      %cst_25 = arith.constant 1.562500e-02 : f32
      %23 = vector.broadcast %cst_25 : f32 to vector<1x1x16xf32>
      %24 = arith.mulf %22, %23 : vector<1x1x16xf32>
      %25 = arith.mulf %21, %21 : vector<1x1x16xf32>
      %26 = arith.subf %24, %25 : vector<1x1x16xf32>
      %c0_26 = arith.constant 0 : index
      %c0_27 = arith.constant 0 : index
      %c0_28 = arith.constant 0 : index
      %27 = vector.load %arg3[%c0_26, %c0_27, %c0_28] : memref<1x1x16xf32, #tpu.memory_space<vmem>>, vector<1x1x16xf32>
      tpu.vector_store %arg3[%c0_26, %c0_27, %c0_28], %21 {strides = array<i32>} : memref<1x1x16xf32, #tpu.memory_space<vmem>>, vector<1x1x16xf32>,
      %cst_29 = arith.constant 0.000000e+00 : f32
      %28 = vector.broadcast %cst_29 : f32 to vector<1x1x16xf32>
      %29 = arith.maximumf %26, %28 : vector<1x1x16xf32>
      %cst_30 = arith.constant 9.99999974E-6 : f32
      %30 = vector.broadcast %cst_30 : f32 to vector<1x1x16xf32>
      %31 = arith.addf %29, %30 : vector<1x1x16xf32>
      %32 = math.rsqrt %31 : vector<1x1x16xf32>
      %c0_31 = arith.constant 0 : index
      %c0_32 = arith.constant 0 : index
      %c0_33 = arith.constant 0 : index
      %33 = vector.load %arg4[%c0_31, %c0_32, %c0_33] : memref<1x1x16xf32, #tpu.memory_space<vmem>>, vector<1x1x16xf32>
      tpu.vector_store %arg4[%c0_31, %c0_32, %c0_33], %32 {strides = array<i32>} : memref<1x1x16xf32, #tpu.memory_space<vmem>>, vector<1x1x16xf32>,
    } else {
    }
    return
  }
  func.func @transform_0(%arg0: i32, %arg1: i32) -> (i32, i32, i32) {
    %c0_i32 = arith.constant 0 : i32
    %c0_i32_0 = arith.constant 0 : i32
    return %arg0, %arg1, %c0_i32 : i32, i32, i32
  }
  func.func @transform_1(%arg0: i32, %arg1: i32) -> (i32, i32, i32) {
    %c0_i32 = arith.constant 0 : i32
    %c0_i32_0 = arith.constant 0 : i32
    %c0_i32_1 = arith.constant 0 : i32
    return %arg0, %c0_i32, %c0_i32_0 : i32, i32, i32
  }
  func.func @transform_2(%arg0: i32, %arg1: i32) -> (i32, i32, i32) {
    %c0_i32 = arith.constant 0 : i32
    %c0_i32_0 = arith.constant 0 : i32
    %c0_i32_1 = arith.constant 0 : i32
    return %arg0, %c0_i32, %c0_i32_0 : i32, i32, i32
  }
}

module attributes {stable_mosaic.version = 11 : i64} {
  func.func @_in_apply_kernel(%arg0: i32, %arg1: i32, %arg2: memref<1x64x16xbf16, #tpu.memory_space<vmem>>, %arg3: memref<1x1x16xf32, #tpu.memory_space<vmem>>, %arg4: memref<1x1x16xf32, #tpu.memory_space<vmem>>, %arg5: memref<1x1x16xf32, #tpu.memory_space<vmem>>, %arg6: memref<1x1x16xf32, #tpu.memory_space<vmem>>, %arg7: memref<1x64x16xbf16, #tpu.memory_space<vmem>>) attributes {dimension_semantics = [#tpu.dimension_semantics<parallel>, #tpu.dimension_semantics<parallel>], iteration_bounds = array<i64: 2, 1>, scalar_prefetch = 0 : i64, scratch_operands = 0 : i64, tpu.core_type = #tpu.core_type<tc>, window_params = [{transform_indices = @transform_0, window_bounds = array<i64: 1, 64, 16>}, {transform_indices = @transform_1, window_bounds = array<i64: 1, 1, 16>}, {transform_indices = @transform_2, window_bounds = array<i64: 1, 1, 16>}, {pipeline_mode = #tpu.pipeline_mode<synchronous>, transform_indices = @transform_3, window_bounds = array<i64: 1, 1, 16>}, {pipeline_mode = #tpu.pipeline_mode<synchronous>, transform_indices = @transform_4, window_bounds = array<i64: 1, 1, 16>}, {transform_indices = @transform_5, window_bounds = array<i64: 1, 64, 16>}]} {
    %c0 = arith.constant 0 : index
    %c0_0 = arith.constant 0 : index
    %c0_1 = arith.constant 0 : index
    %0 = vector.load %arg2[%c0, %c0_0, %c0_1] : memref<1x64x16xbf16, #tpu.memory_space<vmem>>, vector<1x64x16xbf16>
    %1 = arith.extf %0 : vector<1x64x16xbf16> to vector<1x64x16xf32>
    %c0_2 = arith.constant 0 : index
    %c0_3 = arith.constant 0 : index
    %c0_4 = arith.constant 0 : index
    %2 = vector.load %arg3[%c0_2, %c0_3, %c0_4] : memref<1x1x16xf32, #tpu.memory_space<vmem>>, vector<1x1x16xf32>
    %3 = vector.broadcast %2 : vector<1x1x16xf32> to vector<1x64x16xf32>
    %4 = arith.subf %1, %3 : vector<1x64x16xf32>
    %c0_5 = arith.constant 0 : index
    %c0_6 = arith.constant 0 : index
    %c0_7 = arith.constant 0 : index
    %5 = vector.load %arg4[%c0_5, %c0_6, %c0_7] : memref<1x1x16xf32, #tpu.memory_space<vmem>>, vector<1x1x16xf32>
    %6 = vector.broadcast %5 : vector<1x1x16xf32> to vector<1x64x16xf32>
    %7 = arith.mulf %4, %6 : vector<1x64x16xf32>
    %c0_8 = arith.constant 0 : index
    %c0_9 = arith.constant 0 : index
    %c0_10 = arith.constant 0 : index
    %8 = vector.load %arg5[%c0_8, %c0_9, %c0_10] : memref<1x1x16xf32, #tpu.memory_space<vmem>>, vector<1x1x16xf32>
    %9 = vector.broadcast %8 : vector<1x1x16xf32> to vector<1x64x16xf32>
    %10 = arith.mulf %7, %9 : vector<1x64x16xf32>
    %c0_11 = arith.constant 0 : index
    %c0_12 = arith.constant 0 : index
    %c0_13 = arith.constant 0 : index
    %11 = vector.load %arg6[%c0_11, %c0_12, %c0_13] : memref<1x1x16xf32, #tpu.memory_space<vmem>>, vector<1x1x16xf32>
    %12 = vector.broadcast %11 : vector<1x1x16xf32> to vector<1x64x16xf32>
    %13 = arith.addf %10, %12 : vector<1x64x16xf32>
    %cst = arith.constant 0.000000e+00 : f32
    %14 = vector.broadcast %cst : f32 to vector<1x64x16xf32>
    %15 = arith.maximumf %13, %14 : vector<1x64x16xf32>
    %16 = arith.truncf %15 : vector<1x64x16xf32> to vector<1x64x16xbf16>
    %c0_14 = arith.constant 0 : index
    %c0_15 = arith.constant 0 : index
    %c0_16 = arith.constant 0 : index
    %17 = vector.load %arg7[%c0_14, %c0_15, %c0_16] : memref<1x64x16xbf16, #tpu.memory_space<vmem>>, vector<1x64x16xbf16>
    tpu.vector_store %arg7[%c0_14, %c0_15, %c0_16], %16 {strides = array<i32>} : memref<1x64x16xbf16, #tpu.memory_space<vmem>>, vector<1x64x16xbf16>,
    return
  }
  func.func @transform_0(%arg0: i32, %arg1: i32) -> (i32, i32, i32) {
    %c0_i32 = arith.constant 0 : i32
    %c0_i32_0 = arith.constant 0 : i32
    return %arg0, %arg1, %c0_i32 : i32, i32, i32
  }
  func.func @transform_1(%arg0: i32, %arg1: i32) -> (i32, i32, i32) {
    %c0_i32 = arith.constant 0 : i32
    %c0_i32_0 = arith.constant 0 : i32
    %c0_i32_1 = arith.constant 0 : i32
    return %arg0, %c0_i32, %c0_i32_0 : i32, i32, i32
  }
  func.func @transform_2(%arg0: i32, %arg1: i32) -> (i32, i32, i32) {
    %c0_i32 = arith.constant 0 : i32
    %c0_i32_0 = arith.constant 0 : i32
    %c0_i32_1 = arith.constant 0 : i32
    return %arg0, %c0_i32, %c0_i32_0 : i32, i32, i32
  }
  func.func @transform_3(%arg0: i32, %arg1: i32) -> (i32, i32, i32) {
    %c0_i32 = arith.constant 0 : i32
    %c0_i32_0 = arith.constant 0 : i32
    %c0_i32_1 = arith.constant 0 : i32
    %c0_i32_2 = arith.constant 0 : i32
    return %c0_i32, %c0_i32_0, %c0_i32_1 : i32, i32, i32
  }
  func.func @transform_4(%arg0: i32, %arg1: i32) -> (i32, i32, i32) {
    %c0_i32 = arith.constant 0 : i32
    %c0_i32_0 = arith.constant 0 : i32
    %c0_i32_1 = arith.constant 0 : i32
    %c0_i32_2 = arith.constant 0 : i32
    return %c0_i32, %c0_i32_0, %c0_i32_1 : i32, i32, i32
  }
  func.func @transform_5(%arg0: i32, %arg1: i32) -> (i32, i32, i32) {
    %c0_i32 = arith.constant 0 : i32
    %c0_i32_0 = arith.constant 0 : i32
    return %arg0, %arg1, %c0_i32 : i32, i32, i32
  }
}

module attributes {stable_mosaic.version = 11 : i64} {
  func.func @_mm_kernel(%arg0: i32, %arg1: i32, %arg2: i32, %arg3: memref<128x256xbf16, #tpu.memory_space<vmem>>, %arg4: memref<256x128xbf16, #tpu.memory_space<vmem>>, %arg5: memref<128x128xbf16, #tpu.memory_space<vmem>>, %arg6: memref<128x128xf32, #tpu.memory_space<vmem>>) attributes {dimension_semantics = [#tpu.dimension_semantics<parallel>, #tpu.dimension_semantics<parallel>, #tpu.dimension_semantics<arbitrary>], iteration_bounds = array<i64: 1, 1, 1>, scalar_prefetch = 0 : i64, scratch_operands = 1 : i64, tpu.core_type = #tpu.core_type<tc>, window_params = [{transform_indices = @transform_0, window_bounds = array<i64: 128, 256>}, {transform_indices = @transform_1, window_bounds = array<i64: 256, 128>}, {transform_indices = @transform_2, window_bounds = array<i64: 128, 128>}]} {
    %c0_i32 = arith.constant 0 : i32
    %0 = arith.cmpi eq, %arg2, %c0_i32 : i32
    %1 = arith.extui %0 : i1 to i32
    %c0_i32_0 = arith.constant 0 : i32
    %2 = arith.cmpi ne, %1, %c0_i32_0 : i32
    scf.if %2 {
      %cst_10 = arith.constant 0.000000e+00 : f32
      %12 = vector.broadcast %cst_10 : f32 to vector<128x128xf32>
      %c0_11 = arith.constant 0 : index
      %c0_12 = arith.constant 0 : index
      %13 = vector.load %arg6[%c0_11, %c0_12] : memref<128x128xf32, #tpu.memory_space<vmem>>, vector<128x128xf32>
      tpu.vector_store %arg6[%c0_11, %c0_12], %12 {strides = array<i32>} : memref<128x128xf32, #tpu.memory_space<vmem>>, vector<128x128xf32>,
    } else {
    }
    %c0 = arith.constant 0 : index
    %c0_1 = arith.constant 0 : index
    %3 = vector.load %arg6[%c0, %c0_1] : memref<128x128xf32, #tpu.memory_space<vmem>>, vector<128x128xf32>
    %c0_2 = arith.constant 0 : index
    %c0_3 = arith.constant 0 : index
    %4 = vector.load %arg3[%c0_2, %c0_3] : memref<128x256xbf16, #tpu.memory_space<vmem>>, vector<128x256xbf16>
    %c0_4 = arith.constant 0 : index
    %c0_5 = arith.constant 0 : index
    %5 = vector.load %arg4[%c0_4, %c0_5] : memref<256x128xbf16, #tpu.memory_space<vmem>>, vector<256x128xbf16>
    %cst = arith.constant dense<0.000000e+00> : vector<128x128xf32>
    %6 = tpu.matmul %4, %5, %cst {dimension_numbers = #tpu.dot_dimension_numbers<[1], [0], [0], [1], [0, 0, 1, 1], [], []>} : vector<128x256xbf16>, vector<256x128xbf16>, vector<128x128xf32> -> vector<128x128xf32>
    %7 = arith.addf %3, %6 : vector<128x128xf32>
    %c0_6 = arith.constant 0 : index
    %c0_7 = arith.constant 0 : index
    %8 = vector.load %arg6[%c0_6, %c0_7] : memref<128x128xf32, #tpu.memory_space<vmem>>, vector<128x128xf32>
    tpu.vector_store %arg6[%c0_6, %c0_7], %7 {strides = array<i32>} : memref<128x128xf32, #tpu.memory_space<vmem>>, vector<128x128xf32>,
    %c0_i32_8 = arith.constant 0 : i32
    %9 = arith.cmpi eq, %arg2, %c0_i32_8 : i32
    %10 = arith.extui %9 : i1 to i32
    %c0_i32_9 = arith.constant 0 : i32
    %11 = arith.cmpi ne, %10, %c0_i32_9 : i32
    scf.if %11 {
      %c0_10 = arith.constant 0 : index
      %c0_11 = arith.constant 0 : index
      %12 = vector.load %arg6[%c0_10, %c0_11] : memref<128x128xf32, #tpu.memory_space<vmem>>, vector<128x128xf32>
      %13 = arith.truncf %12 : vector<128x128xf32> to vector<128x128xbf16>
      %c0_12 = arith.constant 0 : index
      %c0_13 = arith.constant 0 : index
      %14 = vector.load %arg5[%c0_12, %c0_13] : memref<128x128xbf16, #tpu.memory_space<vmem>>, vector<128x128xbf16>
      tpu.vector_store %arg5[%c0_12, %c0_13], %13 {strides = array<i32>} : memref<128x128xbf16, #tpu.memory_space<vmem>>, vector<128x128xbf16>,
    } else {
    }
    return
  }
  func.func @transform_0(%arg0: i32, %arg1: i32, %arg2: i32) -> (i32, i32) {
    %c0_i32 = arith.constant 0 : i32
    return %arg0, %arg2 : i32, i32
  }
  func.func @transform_1(%arg0: i32, %arg1: i32, %arg2: i32) -> (i32, i32) {
    %c0_i32 = arith.constant 0 : i32
    return %arg2, %arg1 : i32, i32
  }
  func.func @transform_2(%arg0: i32, %arg1: i32, %arg2: i32) -> (i32, i32) {
    %c0_i32 = arith.constant 0 : i32
    return %arg0, %arg1 : i32, i32
  }
}

module attributes {stable_mosaic.version = 11 : i64} {
  func.func @_in_apply_kernel(%arg0: i32, %arg1: i32, %arg2: memref<1x16x32xbf16, #tpu.memory_space<vmem>>, %arg3: memref<1x1x32xf32, #tpu.memory_space<vmem>>, %arg4: memref<1x1x32xf32, #tpu.memory_space<vmem>>, %arg5: memref<1x1x32xf32, #tpu.memory_space<vmem>>, %arg6: memref<1x1x32xf32, #tpu.memory_space<vmem>>, %arg7: memref<1x16x32xbf16, #tpu.memory_space<vmem>>) attributes {dimension_semantics = [#tpu.dimension_semantics<parallel>, #tpu.dimension_semantics<parallel>], iteration_bounds = array<i64: 2, 1>, scalar_prefetch = 0 : i64, scratch_operands = 0 : i64, tpu.core_type = #tpu.core_type<tc>, window_params = [{transform_indices = @transform_0, window_bounds = array<i64: 1, 16, 32>}, {transform_indices = @transform_1, window_bounds = array<i64: 1, 1, 32>}, {transform_indices = @transform_2, window_bounds = array<i64: 1, 1, 32>}, {pipeline_mode = #tpu.pipeline_mode<synchronous>, transform_indices = @transform_3, window_bounds = array<i64: 1, 1, 32>}, {pipeline_mode = #tpu.pipeline_mode<synchronous>, transform_indices = @transform_4, window_bounds = array<i64: 1, 1, 32>}, {transform_indices = @transform_5, window_bounds = array<i64: 1, 16, 32>}]} {
    %c0 = arith.constant 0 : index
    %c0_0 = arith.constant 0 : index
    %c0_1 = arith.constant 0 : index
    %0 = vector.load %arg2[%c0, %c0_0, %c0_1] : memref<1x16x32xbf16, #tpu.memory_space<vmem>>, vector<1x16x32xbf16>
    %1 = arith.extf %0 : vector<1x16x32xbf16> to vector<1x16x32xf32>
    %c0_2 = arith.constant 0 : index
    %c0_3 = arith.constant 0 : index
    %c0_4 = arith.constant 0 : index
    %2 = vector.load %arg3[%c0_2, %c0_3, %c0_4] : memref<1x1x32xf32, #tpu.memory_space<vmem>>, vector<1x1x32xf32>
    %3 = vector.broadcast %2 : vector<1x1x32xf32> to vector<1x16x32xf32>
    %4 = arith.subf %1, %3 : vector<1x16x32xf32>
    %c0_5 = arith.constant 0 : index
    %c0_6 = arith.constant 0 : index
    %c0_7 = arith.constant 0 : index
    %5 = vector.load %arg4[%c0_5, %c0_6, %c0_7] : memref<1x1x32xf32, #tpu.memory_space<vmem>>, vector<1x1x32xf32>
    %6 = vector.broadcast %5 : vector<1x1x32xf32> to vector<1x16x32xf32>
    %7 = arith.mulf %4, %6 : vector<1x16x32xf32>
    %c0_8 = arith.constant 0 : index
    %c0_9 = arith.constant 0 : index
    %c0_10 = arith.constant 0 : index
    %8 = vector.load %arg5[%c0_8, %c0_9, %c0_10] : memref<1x1x32xf32, #tpu.memory_space<vmem>>, vector<1x1x32xf32>
    %9 = vector.broadcast %8 : vector<1x1x32xf32> to vector<1x16x32xf32>
    %10 = arith.mulf %7, %9 : vector<1x16x32xf32>
    %c0_11 = arith.constant 0 : index
    %c0_12 = arith.constant 0 : index
    %c0_13 = arith.constant 0 : index
    %11 = vector.load %arg6[%c0_11, %c0_12, %c0_13] : memref<1x1x32xf32, #tpu.memory_space<vmem>>, vector<1x1x32xf32>
    %12 = vector.broadcast %11 : vector<1x1x32xf32> to vector<1x16x32xf32>
    %13 = arith.addf %10, %12 : vector<1x16x32xf32>
    %cst = arith.constant 0.000000e+00 : f32
    %14 = vector.broadcast %cst : f32 to vector<1x16x32xf32>
    %15 = arith.maximumf %13, %14 : vector<1x16x32xf32>
    %16 = arith.truncf %15 : vector<1x16x32xf32> to vector<1x16x32xbf16>
    %c0_14 = arith.constant 0 : index
    %c0_15 = arith.constant 0 : index
    %c0_16 = arith.constant 0 : index
    %17 = vector.load %arg7[%c0_14, %c0_15, %c0_16] : memref<1x16x32xbf16, #tpu.memory_space<vmem>>, vector<1x16x32xbf16>
    tpu.vector_store %arg7[%c0_14, %c0_15, %c0_16], %16 {strides = array<i32>} : memref<1x16x32xbf16, #tpu.memory_space<vmem>>, vector<1x16x32xbf16>,
    return
  }
  func.func @transform_0(%arg0: i32, %arg1: i32) -> (i32, i32, i32) {
    %c0_i32 = arith.constant 0 : i32
    %c0_i32_0 = arith.constant 0 : i32
    return %arg0, %arg1, %c0_i32 : i32, i32, i32
  }
  func.func @transform_1(%arg0: i32, %arg1: i32) -> (i32, i32, i32) {
    %c0_i32 = arith.constant 0 : i32
    %c0_i32_0 = arith.constant 0 : i32
    %c0_i32_1 = arith.constant 0 : i32
    return %arg0, %c0_i32, %c0_i32_0 : i32, i32, i32
  }
  func.func @transform_2(%arg0: i32, %arg1: i32) -> (i32, i32, i32) {
    %c0_i32 = arith.constant 0 : i32
    %c0_i32_0 = arith.constant 0 : i32
    %c0_i32_1 = arith.constant 0 : i32
    return %arg0, %c0_i32, %c0_i32_0 : i32, i32, i32
  }
  func.func @transform_3(%arg0: i32, %arg1: i32) -> (i32, i32, i32) {
    %c0_i32 = arith.constant 0 : i32
    %c0_i32_0 = arith.constant 0 : i32
    %c0_i32_1 = arith.constant 0 : i32
    %c0_i32_2 = arith.constant 0 : i32
    return %c0_i32, %c0_i32_0, %c0_i32_1 : i32, i32, i32
  }
  func.func @transform_4(%arg0: i32, %arg1: i32) -> (i32, i32, i32) {
    %c0_i32 = arith.constant 0 : i32
    %c0_i32_0 = arith.constant 0 : i32
    %c0_i32_1 = arith.constant 0 : i32
    %c0_i32_2 = arith.constant 0 : i32
    return %c0_i32, %c0_i32_0, %c0_i32_1 : i32, i32, i32
  }
  func.func @transform_5(%arg0: i32, %arg1: i32) -> (i32, i32, i32) {
    %c0_i32 = arith.constant 0 : i32
    %c0_i32_0 = arith.constant 0 : i32
    return %arg0, %arg1, %c0_i32 : i32, i32, i32
  }
}

module attributes {stable_mosaic.version = 11 : i64} {
  func.func @_in_stats_kernel(%arg0: i32, %arg1: i32, %arg2: memref<1x16x32xbf16, #tpu.memory_space<vmem>>, %arg3: memref<1x1x32xf32, #tpu.memory_space<vmem>>, %arg4: memref<1x1x32xf32, #tpu.memory_space<vmem>>) attributes {dimension_semantics = [#tpu.dimension_semantics<parallel>, #tpu.dimension_semantics<arbitrary>], iteration_bounds = array<i64: 2, 1>, scalar_prefetch = 0 : i64, scratch_operands = 0 : i64, tpu.core_type = #tpu.core_type<tc>, window_params = [{transform_indices = @transform_0, window_bounds = array<i64: 1, 16, 32>}, {transform_indices = @transform_1, window_bounds = array<i64: 1, 1, 32>}, {transform_indices = @transform_2, window_bounds = array<i64: 1, 1, 32>}]} {
    %c0_i32 = arith.constant 0 : i32
    %0 = arith.cmpi eq, %arg1, %c0_i32 : i32
    %1 = arith.extui %0 : i1 to i32
    %c0_i32_0 = arith.constant 0 : i32
    %2 = arith.cmpi ne, %1, %c0_i32_0 : i32
    scf.if %2 {
      %cst_18 = arith.constant 0.000000e+00 : f32
      %19 = vector.broadcast %cst_18 : f32 to vector<1x1x32xf32>
      %c0_19 = arith.constant 0 : index
      %c0_20 = arith.constant 0 : index
      %c0_21 = arith.constant 0 : index
      %20 = vector.load %arg3[%c0_19, %c0_20, %c0_21] : memref<1x1x32xf32, #tpu.memory_space<vmem>>, vector<1x1x32xf32>
      tpu.vector_store %arg3[%c0_19, %c0_20, %c0_21], %19 {strides = array<i32>} : memref<1x1x32xf32, #tpu.memory_space<vmem>>, vector<1x1x32xf32>,
      %cst_22 = arith.constant 0.000000e+00 : f32
      %21 = vector.broadcast %cst_22 : f32 to vector<1x1x32xf32>
      %c0_23 = arith.constant 0 : index
      %c0_24 = arith.constant 0 : index
      %c0_25 = arith.constant 0 : index
      %22 = vector.load %arg4[%c0_23, %c0_24, %c0_25] : memref<1x1x32xf32, #tpu.memory_space<vmem>>, vector<1x1x32xf32>
      tpu.vector_store %arg4[%c0_23, %c0_24, %c0_25], %21 {strides = array<i32>} : memref<1x1x32xf32, #tpu.memory_space<vmem>>, vector<1x1x32xf32>,
    } else {
    }
    %c0 = arith.constant 0 : index
    %c0_1 = arith.constant 0 : index
    %c0_2 = arith.constant 0 : index
    %3 = vector.load %arg2[%c0, %c0_1, %c0_2] : memref<1x16x32xbf16, #tpu.memory_space<vmem>>, vector<1x16x32xbf16>
    %4 = arith.extf %3 : vector<1x16x32xbf16> to vector<1x16x32xf32>
    %c0_3 = arith.constant 0 : index
    %c0_4 = arith.constant 0 : index
    %c0_5 = arith.constant 0 : index
    %5 = vector.load %arg3[%c0_3, %c0_4, %c0_5] : memref<1x1x32xf32, #tpu.memory_space<vmem>>, vector<1x1x32xf32>
    %cst = arith.constant dense<0.000000e+00> : vector<1x32xf32>
    %6 = vector.multi_reduction <add>, %4, %cst [1] : vector<1x16x32xf32> to vector<1x32xf32>
    %7 = vector.shape_cast %6 : vector<1x32xf32> to vector<1x1x32xf32>
    %8 = arith.addf %5, %7 : vector<1x1x32xf32>
    %c0_6 = arith.constant 0 : index
    %c0_7 = arith.constant 0 : index
    %c0_8 = arith.constant 0 : index
    %9 = vector.load %arg3[%c0_6, %c0_7, %c0_8] : memref<1x1x32xf32, #tpu.memory_space<vmem>>, vector<1x1x32xf32>
    tpu.vector_store %arg3[%c0_6, %c0_7, %c0_8], %8 {strides = array<i32>} : memref<1x1x32xf32, #tpu.memory_space<vmem>>, vector<1x1x32xf32>,
    %c0_9 = arith.constant 0 : index
    %c0_10 = arith.constant 0 : index
    %c0_11 = arith.constant 0 : index
    %10 = vector.load %arg4[%c0_9, %c0_10, %c0_11] : memref<1x1x32xf32, #tpu.memory_space<vmem>>, vector<1x1x32xf32>
    %11 = arith.mulf %4, %4 : vector<1x16x32xf32>
    %cst_12 = arith.constant dense<0.000000e+00> : vector<1x32xf32>
    %12 = vector.multi_reduction <add>, %11, %cst_12 [1] : vector<1x16x32xf32> to vector<1x32xf32>
    %13 = vector.shape_cast %12 : vector<1x32xf32> to vector<1x1x32xf32>
    %14 = arith.addf %10, %13 : vector<1x1x32xf32>
    %c0_13 = arith.constant 0 : index
    %c0_14 = arith.constant 0 : index
    %c0_15 = arith.constant 0 : index
    %15 = vector.load %arg4[%c0_13, %c0_14, %c0_15] : memref<1x1x32xf32, #tpu.memory_space<vmem>>, vector<1x1x32xf32>
    tpu.vector_store %arg4[%c0_13, %c0_14, %c0_15], %14 {strides = array<i32>} : memref<1x1x32xf32, #tpu.memory_space<vmem>>, vector<1x1x32xf32>,
    %c0_i32_16 = arith.constant 0 : i32
    %16 = arith.cmpi eq, %arg1, %c0_i32_16 : i32
    %17 = arith.extui %16 : i1 to i32
    %c0_i32_17 = arith.constant 0 : i32
    %18 = arith.cmpi ne, %17, %c0_i32_17 : i32
    scf.if %18 {
      %c0_18 = arith.constant 0 : index
      %c0_19 = arith.constant 0 : index
      %c0_20 = arith.constant 0 : index
      %19 = vector.load %arg3[%c0_18, %c0_19, %c0_20] : memref<1x1x32xf32, #tpu.memory_space<vmem>>, vector<1x1x32xf32>
      %cst_21 = arith.constant 6.250000e-02 : f32
      %20 = vector.broadcast %cst_21 : f32 to vector<1x1x32xf32>
      %21 = arith.mulf %19, %20 : vector<1x1x32xf32>
      %c0_22 = arith.constant 0 : index
      %c0_23 = arith.constant 0 : index
      %c0_24 = arith.constant 0 : index
      %22 = vector.load %arg4[%c0_22, %c0_23, %c0_24] : memref<1x1x32xf32, #tpu.memory_space<vmem>>, vector<1x1x32xf32>
      %cst_25 = arith.constant 6.250000e-02 : f32
      %23 = vector.broadcast %cst_25 : f32 to vector<1x1x32xf32>
      %24 = arith.mulf %22, %23 : vector<1x1x32xf32>
      %25 = arith.mulf %21, %21 : vector<1x1x32xf32>
      %26 = arith.subf %24, %25 : vector<1x1x32xf32>
      %c0_26 = arith.constant 0 : index
      %c0_27 = arith.constant 0 : index
      %c0_28 = arith.constant 0 : index
      %27 = vector.load %arg3[%c0_26, %c0_27, %c0_28] : memref<1x1x32xf32, #tpu.memory_space<vmem>>, vector<1x1x32xf32>
      tpu.vector_store %arg3[%c0_26, %c0_27, %c0_28], %21 {strides = array<i32>} : memref<1x1x32xf32, #tpu.memory_space<vmem>>, vector<1x1x32xf32>,
      %cst_29 = arith.constant 0.000000e+00 : f32
      %28 = vector.broadcast %cst_29 : f32 to vector<1x1x32xf32>
      %29 = arith.maximumf %26, %28 : vector<1x1x32xf32>
      %cst_30 = arith.constant 9.99999974E-6 : f32
      %30 = vector.broadcast %cst_30 : f32 to vector<1x1x32xf32>
      %31 = arith.addf %29, %30 : vector<1x1x32xf32>
      %32 = math.rsqrt %31 : vector<1x1x32xf32>
      %c0_31 = arith.constant 0 : index
      %c0_32 = arith.constant 0 : index
      %c0_33 = arith.constant 0 : index
      %33 = vector.load %arg4[%c0_31, %c0_32, %c0_33] : memref<1x1x32xf32, #tpu.memory_space<vmem>>, vector<1x1x32xf32>
      tpu.vector_store %arg4[%c0_31, %c0_32, %c0_33], %32 {strides = array<i32>} : memref<1x1x32xf32, #tpu.memory_space<vmem>>, vector<1x1x32xf32>,
    } else {
    }
    return
  }
  func.func @transform_0(%arg0: i32, %arg1: i32) -> (i32, i32, i32) {
    %c0_i32 = arith.constant 0 : i32
    %c0_i32_0 = arith.constant 0 : i32
    return %arg0, %arg1, %c0_i32 : i32, i32, i32
  }
  func.func @transform_1(%arg0: i32, %arg1: i32) -> (i32, i32, i32) {
    %c0_i32 = arith.constant 0 : i32
    %c0_i32_0 = arith.constant 0 : i32
    %c0_i32_1 = arith.constant 0 : i32
    return %arg0, %c0_i32, %c0_i32_0 : i32, i32, i32
  }
  func.func @transform_2(%arg0: i32, %arg1: i32) -> (i32, i32, i32) {
    %c0_i32 = arith.constant 0 : i32
    %c0_i32_0 = arith.constant 0 : i32
    %c0_i32_1 = arith.constant 0 : i32
    return %arg0, %c0_i32, %c0_i32_0 : i32, i32, i32
  }
}

module attributes {stable_mosaic.version = 11 : i64} {
  func.func @_mm_kernel(%arg0: i32, %arg1: i32, %arg2: i32, %arg3: memref<128x256xbf16, #tpu.memory_space<vmem>>, %arg4: memref<256x128xbf16, #tpu.memory_space<vmem>>, %arg5: memref<128x128xbf16, #tpu.memory_space<vmem>>, %arg6: memref<128x128xf32, #tpu.memory_space<vmem>>) attributes {dimension_semantics = [#tpu.dimension_semantics<parallel>, #tpu.dimension_semantics<parallel>, #tpu.dimension_semantics<arbitrary>], iteration_bounds = array<i64: 1, 1, 2>, scalar_prefetch = 0 : i64, scratch_operands = 1 : i64, tpu.core_type = #tpu.core_type<tc>, window_params = [{transform_indices = @transform_0, window_bounds = array<i64: 128, 256>}, {transform_indices = @transform_1, window_bounds = array<i64: 256, 128>}, {transform_indices = @transform_2, window_bounds = array<i64: 128, 128>}]} {
    %c0_i32 = arith.constant 0 : i32
    %0 = arith.cmpi eq, %arg2, %c0_i32 : i32
    %1 = arith.extui %0 : i1 to i32
    %c0_i32_0 = arith.constant 0 : i32
    %2 = arith.cmpi ne, %1, %c0_i32_0 : i32
    scf.if %2 {
      %cst_9 = arith.constant 0.000000e+00 : f32
      %12 = vector.broadcast %cst_9 : f32 to vector<128x128xf32>
      %c0_10 = arith.constant 0 : index
      %c0_11 = arith.constant 0 : index
      %13 = vector.load %arg6[%c0_10, %c0_11] : memref<128x128xf32, #tpu.memory_space<vmem>>, vector<128x128xf32>
      tpu.vector_store %arg6[%c0_10, %c0_11], %12 {strides = array<i32>} : memref<128x128xf32, #tpu.memory_space<vmem>>, vector<128x128xf32>,
    } else {
    }
    %c0 = arith.constant 0 : index
    %c0_1 = arith.constant 0 : index
    %3 = vector.load %arg6[%c0, %c0_1] : memref<128x128xf32, #tpu.memory_space<vmem>>, vector<128x128xf32>
    %c0_2 = arith.constant 0 : index
    %c0_3 = arith.constant 0 : index
    %4 = vector.load %arg3[%c0_2, %c0_3] : memref<128x256xbf16, #tpu.memory_space<vmem>>, vector<128x256xbf16>
    %c0_4 = arith.constant 0 : index
    %c0_5 = arith.constant 0 : index
    %5 = vector.load %arg4[%c0_4, %c0_5] : memref<256x128xbf16, #tpu.memory_space<vmem>>, vector<256x128xbf16>
    %cst = arith.constant dense<0.000000e+00> : vector<128x128xf32>
    %6 = tpu.matmul %4, %5, %cst {dimension_numbers = #tpu.dot_dimension_numbers<[1], [0], [0], [1], [0, 0, 1, 1], [], []>} : vector<128x256xbf16>, vector<256x128xbf16>, vector<128x128xf32> -> vector<128x128xf32>
    %7 = arith.addf %3, %6 : vector<128x128xf32>
    %c0_6 = arith.constant 0 : index
    %c0_7 = arith.constant 0 : index
    %8 = vector.load %arg6[%c0_6, %c0_7] : memref<128x128xf32, #tpu.memory_space<vmem>>, vector<128x128xf32>
    tpu.vector_store %arg6[%c0_6, %c0_7], %7 {strides = array<i32>} : memref<128x128xf32, #tpu.memory_space<vmem>>, vector<128x128xf32>,
    %c1_i32 = arith.constant 1 : i32
    %9 = arith.cmpi eq, %arg2, %c1_i32 : i32
    %10 = arith.extui %9 : i1 to i32
    %c0_i32_8 = arith.constant 0 : i32
    %11 = arith.cmpi ne, %10, %c0_i32_8 : i32
    scf.if %11 {
      %c0_9 = arith.constant 0 : index
      %c0_10 = arith.constant 0 : index
      %12 = vector.load %arg6[%c0_9, %c0_10] : memref<128x128xf32, #tpu.memory_space<vmem>>, vector<128x128xf32>
      %13 = arith.truncf %12 : vector<128x128xf32> to vector<128x128xbf16>
      %c0_11 = arith.constant 0 : index
      %c0_12 = arith.constant 0 : index
      %14 = vector.load %arg5[%c0_11, %c0_12] : memref<128x128xbf16, #tpu.memory_space<vmem>>, vector<128x128xbf16>
      tpu.vector_store %arg5[%c0_11, %c0_12], %13 {strides = array<i32>} : memref<128x128xbf16, #tpu.memory_space<vmem>>, vector<128x128xbf16>,
    } else {
    }
    return
  }
  func.func @transform_0(%arg0: i32, %arg1: i32, %arg2: i32) -> (i32, i32) {
    %c0_i32 = arith.constant 0 : i32
    return %arg0, %arg2 : i32, i32
  }
  func.func @transform_1(%arg0: i32, %arg1: i32, %arg2: i32) -> (i32, i32) {
    %c0_i32 = arith.constant 0 : i32
    return %arg2, %arg1 : i32, i32
  }
  func.func @transform_2(%arg0: i32, %arg1: i32, %arg2: i32) -> (i32, i32) {
    %c0_i32 = arith.constant 0 : i32
    return %arg0, %arg1 : i32, i32
  }
}

module attributes {stable_mosaic.version = 11 : i64} {
  func.func @_in_apply_kernel(%arg0: i32, %arg1: i32, %arg2: memref<1x16x32xbf16, #tpu.memory_space<vmem>>, %arg3: memref<1x1x32xf32, #tpu.memory_space<vmem>>, %arg4: memref<1x1x32xf32, #tpu.memory_space<vmem>>, %arg5: memref<1x1x32xf32, #tpu.memory_space<vmem>>, %arg6: memref<1x1x32xf32, #tpu.memory_space<vmem>>, %arg7: memref<1x16x32xbf16, #tpu.memory_space<vmem>>, %arg8: memref<1x16x32xbf16, #tpu.memory_space<vmem>>) attributes {dimension_semantics = [#tpu.dimension_semantics<parallel>, #tpu.dimension_semantics<parallel>], iteration_bounds = array<i64: 2, 1>, scalar_prefetch = 0 : i64, scratch_operands = 0 : i64, tpu.core_type = #tpu.core_type<tc>, window_params = [{transform_indices = @transform_0, window_bounds = array<i64: 1, 16, 32>}, {transform_indices = @transform_1, window_bounds = array<i64: 1, 1, 32>}, {transform_indices = @transform_2, window_bounds = array<i64: 1, 1, 32>}, {pipeline_mode = #tpu.pipeline_mode<synchronous>, transform_indices = @transform_3, window_bounds = array<i64: 1, 1, 32>}, {pipeline_mode = #tpu.pipeline_mode<synchronous>, transform_indices = @transform_4, window_bounds = array<i64: 1, 1, 32>}, {transform_indices = @transform_5, window_bounds = array<i64: 1, 16, 32>}, {transform_indices = @transform_6, window_bounds = array<i64: 1, 16, 32>}]} {
    %c0 = arith.constant 0 : index
    %c0_0 = arith.constant 0 : index
    %c0_1 = arith.constant 0 : index
    %0 = vector.load %arg2[%c0, %c0_0, %c0_1] : memref<1x16x32xbf16, #tpu.memory_space<vmem>>, vector<1x16x32xbf16>
    %1 = arith.extf %0 : vector<1x16x32xbf16> to vector<1x16x32xf32>
    %c0_2 = arith.constant 0 : index
    %c0_3 = arith.constant 0 : index
    %c0_4 = arith.constant 0 : index
    %2 = vector.load %arg3[%c0_2, %c0_3, %c0_4] : memref<1x1x32xf32, #tpu.memory_space<vmem>>, vector<1x1x32xf32>
    %3 = vector.broadcast %2 : vector<1x1x32xf32> to vector<1x16x32xf32>
    %4 = arith.subf %1, %3 : vector<1x16x32xf32>
    %c0_5 = arith.constant 0 : index
    %c0_6 = arith.constant 0 : index
    %c0_7 = arith.constant 0 : index
    %5 = vector.load %arg4[%c0_5, %c0_6, %c0_7] : memref<1x1x32xf32, #tpu.memory_space<vmem>>, vector<1x1x32xf32>
    %6 = vector.broadcast %5 : vector<1x1x32xf32> to vector<1x16x32xf32>
    %7 = arith.mulf %4, %6 : vector<1x16x32xf32>
    %c0_8 = arith.constant 0 : index
    %c0_9 = arith.constant 0 : index
    %c0_10 = arith.constant 0 : index
    %8 = vector.load %arg5[%c0_8, %c0_9, %c0_10] : memref<1x1x32xf32, #tpu.memory_space<vmem>>, vector<1x1x32xf32>
    %9 = vector.broadcast %8 : vector<1x1x32xf32> to vector<1x16x32xf32>
    %10 = arith.mulf %7, %9 : vector<1x16x32xf32>
    %c0_11 = arith.constant 0 : index
    %c0_12 = arith.constant 0 : index
    %c0_13 = arith.constant 0 : index
    %11 = vector.load %arg6[%c0_11, %c0_12, %c0_13] : memref<1x1x32xf32, #tpu.memory_space<vmem>>, vector<1x1x32xf32>
    %12 = vector.broadcast %11 : vector<1x1x32xf32> to vector<1x16x32xf32>
    %13 = arith.addf %10, %12 : vector<1x16x32xf32>
    %c0_14 = arith.constant 0 : index
    %c0_15 = arith.constant 0 : index
    %c0_16 = arith.constant 0 : index
    %14 = vector.load %arg7[%c0_14, %c0_15, %c0_16] : memref<1x16x32xbf16, #tpu.memory_space<vmem>>, vector<1x16x32xbf16>
    %15 = arith.extf %14 : vector<1x16x32xbf16> to vector<1x16x32xf32>
    %16 = arith.addf %13, %15 : vector<1x16x32xf32>
    %17 = arith.truncf %16 : vector<1x16x32xf32> to vector<1x16x32xbf16>
    %c0_17 = arith.constant 0 : index
    %c0_18 = arith.constant 0 : index
    %c0_19 = arith.constant 0 : index
    %18 = vector.load %arg8[%c0_17, %c0_18, %c0_19] : memref<1x16x32xbf16, #tpu.memory_space<vmem>>, vector<1x16x32xbf16>
    tpu.vector_store %arg8[%c0_17, %c0_18, %c0_19], %17 {strides = array<i32>} : memref<1x16x32xbf16, #tpu.memory_space<vmem>>, vector<1x16x32xbf16>,
    return
  }
  func.func @transform_0(%arg0: i32, %arg1: i32) -> (i32, i32, i32) {
    %c0_i32 = arith.constant 0 : i32
    %c0_i32_0 = arith.constant 0 : i32
    return %arg0, %arg1, %c0_i32 : i32, i32, i32
  }
  func.func @transform_1(%arg0: i32, %arg1: i32) -> (i32, i32, i32) {
    %c0_i32 = arith.constant 0 : i32
    %c0_i32_0 = arith.constant 0 : i32
    %c0_i32_1 = arith.constant 0 : i32
    return %arg0, %c0_i32, %c0_i32_0 : i32, i32, i32
  }
  func.func @transform_2(%arg0: i32, %arg1: i32) -> (i32, i32, i32) {
    %c0_i32 = arith.constant 0 : i32
    %c0_i32_0 = arith.constant 0 : i32
    %c0_i32_1 = arith.constant 0 : i32
    return %arg0, %c0_i32, %c0_i32_0 : i32, i32, i32
  }
  func.func @transform_3(%arg0: i32, %arg1: i32) -> (i32, i32, i32) {
    %c0_i32 = arith.constant 0 : i32
    %c0_i32_0 = arith.constant 0 : i32
    %c0_i32_1 = arith.constant 0 : i32
    %c0_i32_2 = arith.constant 0 : i32
    return %c0_i32, %c0_i32_0, %c0_i32_1 : i32, i32, i32
  }
  func.func @transform_4(%arg0: i32, %arg1: i32) -> (i32, i32, i32) {
    %c0_i32 = arith.constant 0 : i32
    %c0_i32_0 = arith.constant 0 : i32
    %c0_i32_1 = arith.constant 0 : i32
    %c0_i32_2 = arith.constant 0 : i32
    return %c0_i32, %c0_i32_0, %c0_i32_1 : i32, i32, i32
  }
  func.func @transform_5(%arg0: i32, %arg1: i32) -> (i32, i32, i32) {
    %c0_i32 = arith.constant 0 : i32
    %c0_i32_0 = arith.constant 0 : i32
    return %arg0, %arg1, %c0_i32 : i32, i32, i32
  }
  func.func @transform_6(%arg0: i32, %arg1: i32) -> (i32, i32, i32) {
    %c0_i32 = arith.constant 0 : i32
    %c0_i32_0 = arith.constant 0 : i32
    return %arg0, %arg1, %c0_i32 : i32, i32, i32
  }
}

module attributes {stable_mosaic.version = 11 : i64} {
  func.func @_mm_bias_kernel(%arg0: i32, %arg1: i32, %arg2: i32, %arg3: memref<256x256xbf16, #tpu.memory_space<vmem>>, %arg4: memref<256x128xbf16, #tpu.memory_space<vmem>>, %arg5: memref<1x128xf32, #tpu.memory_space<vmem>>, %arg6: memref<256x128xf32, #tpu.memory_space<vmem>>, %arg7: memref<256x128xf32, #tpu.memory_space<vmem>>) attributes {dimension_semantics = [#tpu.dimension_semantics<parallel>, #tpu.dimension_semantics<parallel>, #tpu.dimension_semantics<arbitrary>], iteration_bounds = array<i64: 2, 1, 2>, scalar_prefetch = 0 : i64, scratch_operands = 1 : i64, tpu.core_type = #tpu.core_type<tc>, window_params = [{transform_indices = @transform_0, window_bounds = array<i64: 256, 256>}, {transform_indices = @transform_1, window_bounds = array<i64: 256, 128>}, {transform_indices = @transform_2, window_bounds = array<i64: 1, 128>}, {transform_indices = @transform_3, window_bounds = array<i64: 256, 128>}]} {
    %c0_i32 = arith.constant 0 : i32
    %0 = arith.cmpi eq, %arg2, %c0_i32 : i32
    %1 = arith.extui %0 : i1 to i32
    %c0_i32_0 = arith.constant 0 : i32
    %2 = arith.cmpi ne, %1, %c0_i32_0 : i32
    scf.if %2 {
      %cst_9 = arith.constant 0.000000e+00 : f32
      %12 = vector.broadcast %cst_9 : f32 to vector<256x128xf32>
      %c0_10 = arith.constant 0 : index
      %c0_11 = arith.constant 0 : index
      %13 = vector.load %arg7[%c0_10, %c0_11] : memref<256x128xf32, #tpu.memory_space<vmem>>, vector<256x128xf32>
      tpu.vector_store %arg7[%c0_10, %c0_11], %12 {strides = array<i32>} : memref<256x128xf32, #tpu.memory_space<vmem>>, vector<256x128xf32>,
    } else {
    }
    %c0 = arith.constant 0 : index
    %c0_1 = arith.constant 0 : index
    %3 = vector.load %arg7[%c0, %c0_1] : memref<256x128xf32, #tpu.memory_space<vmem>>, vector<256x128xf32>
    %c0_2 = arith.constant 0 : index
    %c0_3 = arith.constant 0 : index
    %4 = vector.load %arg3[%c0_2, %c0_3] : memref<256x256xbf16, #tpu.memory_space<vmem>>, vector<256x256xbf16>
    %c0_4 = arith.constant 0 : index
    %c0_5 = arith.constant 0 : index
    %5 = vector.load %arg4[%c0_4, %c0_5] : memref<256x128xbf16, #tpu.memory_space<vmem>>, vector<256x128xbf16>
    %cst = arith.constant dense<0.000000e+00> : vector<256x128xf32>
    %6 = tpu.matmul %4, %5, %cst {dimension_numbers = #tpu.dot_dimension_numbers<[1], [0], [0], [1], [0, 0, 1, 1], [], []>} : vector<256x256xbf16>, vector<256x128xbf16>, vector<256x128xf32> -> vector<256x128xf32>
    %7 = arith.addf %3, %6 : vector<256x128xf32>
    %c0_6 = arith.constant 0 : index
    %c0_7 = arith.constant 0 : index
    %8 = vector.load %arg7[%c0_6, %c0_7] : memref<256x128xf32, #tpu.memory_space<vmem>>, vector<256x128xf32>
    tpu.vector_store %arg7[%c0_6, %c0_7], %7 {strides = array<i32>} : memref<256x128xf32, #tpu.memory_space<vmem>>, vector<256x128xf32>,
    %c1_i32 = arith.constant 1 : i32
    %9 = arith.cmpi eq, %arg2, %c1_i32 : i32
    %10 = arith.extui %9 : i1 to i32
    %c0_i32_8 = arith.constant 0 : i32
    %11 = arith.cmpi ne, %10, %c0_i32_8 : i32
    scf.if %11 {
      %c0_9 = arith.constant 0 : index
      %c0_10 = arith.constant 0 : index
      %12 = vector.load %arg7[%c0_9, %c0_10] : memref<256x128xf32, #tpu.memory_space<vmem>>, vector<256x128xf32>
      %c0_11 = arith.constant 0 : index
      %c0_12 = arith.constant 0 : index
      %13 = vector.load %arg5[%c0_11, %c0_12] : memref<1x128xf32, #tpu.memory_space<vmem>>, vector<1x128xf32>
      %14 = vector.broadcast %13 : vector<1x128xf32> to vector<256x128xf32>
      %15 = arith.addf %12, %14 : vector<256x128xf32>
      %16 = math.tanh %15 : vector<256x128xf32>
      %c0_13 = arith.constant 0 : index
      %c0_14 = arith.constant 0 : index
      %17 = vector.load %arg6[%c0_13, %c0_14] : memref<256x128xf32, #tpu.memory_space<vmem>>, vector<256x128xf32>
      tpu.vector_store %arg6[%c0_13, %c0_14], %16 {strides = array<i32>} : memref<256x128xf32, #tpu.memory_space<vmem>>, vector<256x128xf32>,
    } else {
    }
    return
  }
  func.func @transform_0(%arg0: i32, %arg1: i32, %arg2: i32) -> (i32, i32) {
    %c0_i32 = arith.constant 0 : i32
    return %arg0, %arg2 : i32, i32
  }
  func.func @transform_1(%arg0: i32, %arg1: i32, %arg2: i32) -> (i32, i32) {
    %c0_i32 = arith.constant 0 : i32
    return %arg2, %arg1 : i32, i32
  }
  func.func @transform_2(%arg0: i32, %arg1: i32, %arg2: i32) -> (i32, i32) {
    %c0_i32 = arith.constant 0 : i32
    %c0_i32_0 = arith.constant 0 : i32
    return %c0_i32, %arg1 : i32, i32
  }
  func.func @transform_3(%arg0: i32, %arg1: i32, %arg2: i32) -> (i32, i32) {
    %c0_i32 = arith.constant 0 : i32
    return %arg0, %arg1 : i32, i32
  }
}

</mosaic_0001>

<llo_original>
// kernel: resnet_generator_forward.36
$region0: #{resnet_generator_forward.36}
  #allocation0 [shape = 'u32[]', space=smem, size = 0x4, offset = 0x4, fixed_abs, tag = 'smem constant byte address 0x4 - core index']
  #allocation1 [shape = 'u32[72,128]{1,0:T(1,128)}', space=vmem, size = 0x9000, scoped, tag = 'internal scratch']
  %s0 = inlined_call_operand.vmem [shape: bf16[2,256,8], index: 0, kind: input, shape index: {}]
  %s1 = inlined_call_operand.vmem [shape: f32[2,1,8], index: 1, kind: input, shape index: {}]
  %s2 = inlined_call_operand.vmem [shape: f32[2,1,8], index: 2, kind: input, shape index: {}]
  %s3 = inlined_call_operand.vmem [shape: f32[1,1,8], index: 3, kind: input, shape index: {}]
  %s4 = inlined_call_operand.vmem [shape: f32[1,1,8], index: 4, kind: input, shape index: {}]
  %s5 = inlined_call_operand.vmem [shape: bf16[2,256,8], index: 5, kind: output, shape index: {}]
  %s6 = sld [smem:[#allocation0]]
  $region53: #{resnet_generator_forward.36} parent=0
    _
  %s8 = ssub.s32 1, %s6
  %s9 = scalar_select 0, %s8, %s6
  loop: start=0, step=1, limit=4
  $region2: #{resnet_generator_forward.36} parent=0 // loop_pre_header
    _
  $region3: #{resnet_generator_forward.36} parent=0 // loop_header
    %s11 = sphi 0, %s15
    %p12 = scmp.ge.s32.totalorder %s11, 4
    %s18 = sphi 0, %s30
    %s19 = sphi 0, %s26
    %s20 = sphi 0, %s18
    %s21 = sphi 0, %s19
    %s22 = sphi 0, %s20
    %s23 = sphi 0, %s21
    %s35 = sphi 0, %s37
    %s38 = sphi 0, %s35
    %s39 = sphi 0, %s38
    %s55 = sphi 0, %s39
    %s61 = sphi 0, %s63
    %s64 = sphi 0, %s61
    %s65 = sphi 0, %s64
    %s81 = sphi 0, %s65
    %s87 = sphi 0, %s89
    %s90 = sphi 0, %s87
    %s91 = sphi 0, %s90
    %s107 = sphi 0, %s91
    %s111 = sphi 0, %s111
    %s113 = sphi 0, %s111
    %s114 = sphi 0, %s113
    %s128 = sphi 0, %s114
    %s132 = sphi 0, %s132
    %s134 = sphi 0, %s132
    %s135 = sphi 0, %s134
    %s149 = sphi 0, %s135
    %s157 = sphi 0, %s159
    %s160 = sphi 0, %s157
    %s161 = sphi 0, %s160
    %s177 = sphi 0, %s161
  $region4: #{resnet_generator_forward.36} parent=0 // loop_header_branch
    %14 = sbr.rel (%p12) target = $region8
  $region5: #{resnet_generator_forward.36} parent=0 // loop_body
    %s16 = ssub.s32 %s11, 1
    %s17 = ssub.s32 %s11, 2
    %s24 = sadd.s32 1, %s19
    %p25 = scmp.ge.s32.totalorder %s24, 1
    %s26 = scalar_select %p25, 0, %s24
    %s27 = sadd.s32 1, %s18
    %s28 = scalar_select %p25, %s27, %s18
    %p29 = scmp.ge.s32.totalorder %s28, 2
    %s30 = scalar_select %p29, 0, %s28
    %s31 = ssub.s32 %s18, %s30
    %s32 = ssub.s32 %s19, %s26
    %s33 = sor.u32 %s31, %s32
    %p34 = scmp.eq.s32.totalorder %s33, 0
    %s36 = sadd.s32 %s35, 1
    %s37 = scalar_select %p34, %s35, %s36
    %p40 = pneg %p34
    %p41 = scmp.eq.s32.totalorder %s11, 1
    %p42 = por %p40, %p41
    %p43 = scmp.ne.s32.totalorder %s35, %s38
    %p44 = scmp.eq.s32.totalorder %s11, 0
    %p45 = por %p43, %p44
    %p46 = scmp.ne.s32.totalorder %s35, %s38
    %p47 = scmp.eq.s32.totalorder %s16, 1
    %p48 = por %p46, %p47
    %p49 = scmp.ne.s32.totalorder %s38, %s39
    %p50 = scmp.eq.s32.totalorder %s16, 0
    %p51 = por %p49, %p50
    %p52 = scmp.ne.s32.totalorder %s38, %s39
    %p53 = scmp.eq.s32.totalorder %s17, 1
    %p54 = por %p52, %p53
    %p56 = scmp.ne.s32.totalorder %s39, %s55
    %p57 = scmp.eq.s32.totalorder %s17, 0
    %p58 = por %p56, %p57
    %s59 = ssub.s32 %s18, %s30
    %p60 = scmp.eq.s32.totalorder %s59, 0
    %s62 = sadd.s32 %s61, 1
    %s63 = scalar_select %p60, %s61, %s62
    %p66 = pneg %p60
    %p67 = scmp.eq.s32.totalorder %s11, 1
    %p68 = por %p66, %p67
    %p69 = scmp.ne.s32.totalorder %s61, %s64
    %p70 = scmp.eq.s32.totalorder %s11, 0
    %p71 = por %p69, %p70
    %p72 = scmp.ne.s32.totalorder %s61, %s64
    %p73 = scmp.eq.s32.totalorder %s16, 1
    %p74 = por %p72, %p73
    %p75 = scmp.ne.s32.totalorder %s64, %s65
    %p76 = scmp.eq.s32.totalorder %s16, 0
    %p77 = por %p75, %p76
    %p78 = scmp.ne.s32.totalorder %s64, %s65
    %p79 = scmp.eq.s32.totalorder %s17, 1
    %p80 = por %p78, %p79
    %p82 = scmp.ne.s32.totalorder %s65, %s81
    %p83 = scmp.eq.s32.totalorder %s17, 0
    %p84 = por %p82, %p83
    %s85 = ssub.s32 %s18, %s30
    %p86 = scmp.eq.s32.totalorder %s85, 0
    %s88 = sadd.s32 %s87, 1
    %s89 = scalar_select %p86, %s87, %s88
    %p92 = pneg %p86
    %p93 = scmp.eq.s32.totalorder %s11, 1
    %p94 = por %p92, %p93
    %p95 = scmp.ne.s32.totalorder %s87, %s90
    %p96 = scmp.eq.s32.totalorder %s11, 0
    %p97 = por %p95, %p96
    %p98 = scmp.ne.s32.totalorder %s87, %s90
    %p99 = scmp.eq.s32.totalorder %s16, 1
    %p100 = por %p98, %p99
    %p101 = scmp.ne.s32.totalorder %s90, %s91
    %p102 = scmp.eq.s32.totalorder %s16, 0
    %p103 = por %p101, %p102
    %p104 = scmp.ne.s32.totalorder %s90, %s91
    %p105 = scmp.eq.s32.totalorder %s17, 1
    %p106 = por %p104, %p105
    %p108 = scmp.ne.s32.totalorder %s91, %s107
    %p109 = scmp.eq.s32.totalorder %s17, 0
    %p110 = por %p108, %p109
    %s112 = sadd.s32 %s111, 1
    %p115 = scmp.eq.s32.totalorder %s11, 1
    %p116 = scmp.ne.s32.totalorder %s111, %s113
    %p117 = scmp.eq.s32.totalorder %s11, 0
    %p118 = por %p116, %p117
    %p119 = scmp.ne.s32.totalorder %s111, %s113
    %p120 = scmp.eq.s32.totalorder %s16, 1
    %p121 = por %p119, %p120
    %p122 = scmp.ne.s32.totalorder %s113, %s114
    %p123 = scmp.eq.s32.totalorder %s16, 0
    %p124 = por %p122, %p123
    %p125 = scmp.ne.s32.totalorder %s113, %s114
    %p126 = scmp.eq.s32.totalorder %s17, 1
    %p127 = por %p125, %p126
    %p129 = scmp.ne.s32.totalorder %s114, %s128
    %p130 = scmp.eq.s32.totalorder %s17, 0
    %p131 = por %p129, %p130
    %s133 = sadd.s32 %s132, 1
    %p136 = scmp.eq.s32.totalorder %s11, 1
    %p137 = scmp.ne.s32.totalorder %s132, %s134
    %p138 = scmp.eq.s32.totalorder %s11, 0
    %p139 = por %p137, %p138
    %p140 = scmp.ne.s32.totalorder %s132, %s134
    %p141 = scmp.eq.s32.totalorder %s16, 1
    %p142 = por %p140, %p141
    %p143 = scmp.ne.s32.totalorder %s134, %s135
    %p144 = scmp.eq.s32.totalorder %s16, 0
    %p145 = por %p143, %p144
    %p146 = scmp.ne.s32.totalorder %s134, %s135
    %p147 = scmp.eq.s32.totalorder %s17, 1
    %p148 = por %p146, %p147
    %p150 = scmp.ne.s32.totalorder %s135, %s149
    %p151 = scmp.eq.s32.totalorder %s17, 0
    %p152 = por %p150, %p151
    %s153 = ssub.s32 %s18, %s30
    %s154 = ssub.s32 %s19, %s26
    %s155 = sor.u32 %s153, %s154
    %p156 = scmp.eq.s32.totalorder %s155, 0
    %s158 = sadd.s32 %s157, 1
    %s159 = scalar_select %p156, %s157, %s158
    %p162 = pneg %p156
    %p163 = scmp.eq.s32.totalorder %s11, 1
    %p164 = por %p162, %p163
    %p165 = scmp.ne.s32.totalorder %s157, %s160
    %p166 = scmp.eq.s32.totalorder %s11, 0
    %p167 = por %p165, %p166
    %p168 = scmp.ne.s32.totalorder %s157, %s160
    %p169 = scmp.eq.s32.totalorder %s16, 1
    %p170 = por %p168, %p169
    %p171 = scmp.ne.s32.totalorder %s160, %s161
    %p172 = scmp.eq.s32.totalorder %s16, 0
    %p173 = por %p171, %p172
    %p174 = scmp.ne.s32.totalorder %s160, %s161
    %p175 = scmp.eq.s32.totalorder %s17, 1
    %p176 = por %p174, %p175
    %p178 = scmp.ne.s32.totalorder %s161, %s177
    %p179 = scmp.eq.s32.totalorder %s17, 0
    %p180 = por %p178, %p179
    %p181 = scmp.le.s32.totalorder 1, %s11
    %p182 = scmp.lt.s32.totalorder %s11, 3
    %p183 = pnand %p181, %p182
    %p184 = pneg %p183
    // Predicated region
    $region9: #{resnet_generator_forward.36} parent=5 // pred_check
      _
    $region10: #{resnet_generator_forward.36} parent=5 // pred_check_branch
      %186 = sbr.rel (%p183) target = $region12
    $region11: #{resnet_generator_forward.36} parent=5 // pred_region
      %s187 = ssub.s32 %s11, 1
      // Predicated region
      $region13: #{resnet_generator_forward.36} parent=11 // pred_check
        %p188 = pneg %p124
      $region14: #{resnet_generator_forward.36} parent=11 // pred_check_branch
        %190 = sbr.rel (%p188) target = $region16
      $region15: #{resnet_generator_forward.36} parent=11 // pred_region
        _
      $region16: #{resnet_generator_forward.36} parent=11 // pred_fallthru
        _
      // Predicated region
      $region17: #{resnet_generator_forward.36} parent=11 // pred_check
        %p191 = pneg %p145
      $region18: #{resnet_generator_forward.36} parent=11 // pred_check_branch
        %193 = sbr.rel (%p191) target = $region20
      $region19: #{resnet_generator_forward.36} parent=11 // pred_region
        _
      $region20: #{resnet_generator_forward.36} parent=11 // pred_fallthru
        _
    $region12: #{resnet_generator_forward.36} parent=5 // pred_fallthru
      _
    %p194 = scmp.lt.s32.totalorder %s11, 2
    // Predicated region
    $region21: #{resnet_generator_forward.36} parent=5 // pred_check
      %p195 = pneg %p194
    $region22: #{resnet_generator_forward.36} parent=5 // pred_check_branch
      %197 = sbr.rel (%p195) target = $region24
    $region23: #{resnet_generator_forward.36} parent=5 // pred_region
      // Predicated region
      $region25: #{resnet_generator_forward.36} parent=23 // pred_check
        %p198 = pneg %p45
      $region26: #{resnet_generator_forward.36} parent=23 // pred_check_branch
        %200 = sbr.rel (%p198) target = $region28
      $region27: #{resnet_generator_forward.36} parent=23 // pred_region
        %s201 = smul.u32 32, %s19
        %p202 = scmp.lt.s32.totalorder %s18, 1
        %s203 = scalar_select %p202, %s18, 1
        %p204 = scmp.lt.s32.totalorder %s201, 31
        %s205 = scalar_select %p204, %s201, 31
        %s206 = smul.addr %s203, 32
        %s207 = sadd.s32 %s205, %s206
        %s208 = smul.addr %s207, 4
        %s209 = scalar_lea.vmem %s0, %s208
        %s210 = smul.u32 32, %s19
      $region28: #{resnet_generator_forward.36} parent=23 // pred_fallthru
        _
      // Predicated region
      $region29: #{resnet_generator_forward.36} parent=23 // pred_check
        %p211 = pneg %p71
      $region30: #{resnet_generator_forward.36} parent=23 // pred_check_branch
        %213 = sbr.rel (%p211) target = $region32
      $region31: #{resnet_generator_forward.36} parent=23 // pred_region
        %p214 = scmp.lt.s32.totalorder %s18, 1
        %s215 = scalar_select %p214, %s18, 1
        %s216 = scalar_lea.vmem %s1, %s215
      $region32: #{resnet_generator_forward.36} parent=23 // pred_fallthru
        _
      // Predicated region
      $region33: #{resnet_generator_forward.36} parent=23 // pred_check
        %p217 = pneg %p97
      $region34: #{resnet_generator_forward.36} parent=23 // pred_check_branch
        %219 = sbr.rel (%p217) target = $region36
      $region35: #{resnet_generator_forward.36} parent=23 // pred_region
        %p220 = scmp.lt.s32.totalorder %s18, 1
        %s221 = scalar_select %p220, %s18, 1
        %s222 = scalar_lea.vmem %s2, %s221
      $region36: #{resnet_generator_forward.36} parent=23 // pred_fallthru
        _
    $region24: #{resnet_generator_forward.36} parent=5 // pred_fallthru
      _
    %p223 = scmp.le.s32.totalorder 1, %s11
    %p224 = scmp.lt.s32.totalorder %s11, 3
    %p225 = pnand %p223, %p224
    %p226 = pneg %p225
    // Predicated region
    $region37: #{resnet_generator_forward.36} parent=5 // pred_check
      _
    $region38: #{resnet_generator_forward.36} parent=5 // pred_check_branch
      %228 = sbr.rel (%p225) target = $region40
    $region39: #{resnet_generator_forward.36} parent=5 // pred_region
      %s229 = ssub.s32 %s11, 1
      %s230 = smul.u32 32, %s21
      %p231 = scmp.lt.s32.totalorder %s20, 1
      %s232 = scalar_select %p231, %s20, 1
      %p233 = scmp.lt.s32.totalorder %s230, 31
      %s234 = scalar_select %p233, %s230, 31
      %s235 = smul.addr %s232, 32
      %s236 = sadd.s32 %s234, %s235
      %s237 = smul.addr %s236, 4
      %s238 = scalar_lea.vmem %s0, %s237
      %p239 = pneg %p51
      %p240 = pneg %p48
      %p241 = scmp.lt.s32.totalorder %s20, 1
      %s242 = scalar_select %p241, %s20, 1
      %s243 = scalar_lea.vmem %s1, %s242
      %p244 = pneg %p77
      %p245 = pneg %p74
      %p246 = scmp.lt.s32.totalorder %s20, 1
      %s247 = scalar_select %p246, %s20, 1
      %s248 = scalar_lea.vmem %s2, %s247
      %p249 = pneg %p103
      %p250 = pneg %p100
      %p251 = pneg %p124
      %p252 = pneg %p121
      %p253 = pneg %p145
      %p254 = pneg %p142
      %p255 = pneg %p173
      %p256 = pneg %p170
      %s257 = smul.u32 32, %s21
      %p258 = scmp.lt.s32.totalorder %s20, 1
      %s259 = scalar_select %p258, %s20, 1
      %p260 = scmp.lt.s32.totalorder %s257, 31
      %s261 = scalar_select %p260, %s257, 31
      %s262 = smul.addr %s259, 32
      %s263 = sadd.s32 %s261, %s262
      %s264 = smul.addr %s263, 4
      %s265 = scalar_lea.vmem %s5, %s264
      %s266 = smul.u32 32, %s21
      %p267 = scmp.lt.s32.totalorder %s20, 1
      %s268 = scalar_select %p267, %s20, 1
      %p269 = scmp.lt.s32.totalorder %s266, 31
      %s270 = scalar_select %p269, %s266, 31
      %s271 = smul.addr %s268, 32
      %s272 = sadd.s32 %s270, %s271
      %s273 = smul.addr %s272, 4
      %s274 = scalar_lea.vmem %s0, %s273
      %s275 = smul.u32 32, %s21
      %p276 = scmp.lt.s32.totalorder %s20, 1
      %s277 = scalar_select %p276, %s20, 1
      %s278 = scalar_lea.vmem %s1, %s277
      %p279 = scmp.lt.s32.totalorder %s20, 1
      %s280 = scalar_select %p279, %s20, 1
      %s281 = scalar_lea.vmem %s2, %s280
      %s282 = smul.u32 32, %s21
      %p283 = scmp.lt.s32.totalorder %s20, 1
      %s284 = scalar_select %p283, %s20, 1
      %p285 = scmp.lt.s32.totalorder %s282, 31
      %s286 = scalar_select %p285, %s282, 31
      %s287 = smul.addr %s284, 32
      %s288 = sadd.s32 %s286, %s287
      %s289 = smul.addr %s288, 4
      %s290 = scalar_lea.vmem %s5, %s289
      %s291 = smul.u32 32, %s21
      %v292 = vld [vmem:[%s274] sm:$0xf]
      %v293 = vld [vmem:[%s274 + $0x4] sm:$0xf]
      %v294 = vld [vmem:[%s274 + $0x8] sm:$0xf]
      %v295 = vld [vmem:[%s274 + $0xc] sm:$0xf]
      %v296 = vld [vmem:[%s274 + $0x10] sm:$0xf]
      %v297 = vld [vmem:[%s274 + $0x14] sm:$0xf]
      %v298 = vld [vmem:[%s274 + $0x18] sm:$0xf]
      %v299 = vld [vmem:[%s274 + $0x1c] sm:$0xf]
      %v300 = vld [vmem:[%s274 + $0x20] sm:$0xf]
      %v301 = vld [vmem:[%s274 + $0x24] sm:$0xf]
      %v302 = vld [vmem:[%s274 + $0x28] sm:$0xf]
      %v303 = vld [vmem:[%s274 + $0x2c] sm:$0xf]
      %v304 = vld [vmem:[%s274 + $0x30] sm:$0xf]
      %v305 = vld [vmem:[%s274 + $0x34] sm:$0xf]
      %v306 = vld [vmem:[%s274 + $0x38] sm:$0xf]
      %v307 = vld [vmem:[%s274 + $0x3c] sm:$0xf]
      %v308 = vld [vmem:[%s274 + $0x40] sm:$0xf]
      %v309 = vld [vmem:[%s274 + $0x44] sm:$0xf]
      %v310 = vld [vmem:[%s274 + $0x48] sm:$0xf]
      %v311 = vld [vmem:[%s274 + $0x4c] sm:$0xf]
      %v312 = vld [vmem:[%s274 + $0x50] sm:$0xf]
      %v313 = vld [vmem:[%s274 + $0x54] sm:$0xf]
      %v314 = vld [vmem:[%s274 + $0x58] sm:$0xf]
      %v315 = vld [vmem:[%s274 + $0x5c] sm:$0xf]
      %v316 = vld [vmem:[%s274 + $0x60] sm:$0xf]
      %v317 = vld [vmem:[%s274 + $0x64] sm:$0xf]
      %v318 = vld [vmem:[%s274 + $0x68] sm:$0xf]
      %v319 = vld [vmem:[%s274 + $0x6c] sm:$0xf]
      %v320 = vld [vmem:[%s274 + $0x70] sm:$0xf]
      %v321 = vld [vmem:[%s274 + $0x74] sm:$0xf]
      %v322 = vld [vmem:[%s274 + $0x78] sm:$0xf]
      %v323 = vld [vmem:[%s274 + $0x7c] sm:$0xf]
      %v324 = vunpack.c.l.bf16 %v292
      %v325 = vunpack.c.l.bf16 %v293
      %v326 = vunpack.c.l.bf16 %v294
      %v327 = vunpack.c.l.bf16 %v295
      %v328 = vunpack.c.l.bf16 %v296
      %v329 = vunpack.c.l.bf16 %v297
      %v330 = vunpack.c.l.bf16 %v298
      %v331 = vunpack.c.l.bf16 %v299
      %v332 = vunpack.c.l.bf16 %v300
      %v333 = vunpack.c.l.bf16 %v301
      %v334 = vunpack.c.l.bf16 %v302
      %v335 = vunpack.c.l.bf16 %v303
      %v336 = vunpack.c.l.bf16 %v304
      %v337 = vunpack.c.l.bf16 %v305
      %v338 = vunpack.c.l.bf16 %v306
      %v339 = vunpack.c.l.bf16 %v307
      %v340 = vunpack.c.l.bf16 %v308
      %v341 = vunpack.c.l.bf16 %v309
      %v342 = vunpack.c.l.bf16 %v310
      %v343 = vunpack.c.l.bf16 %v311
      %v344 = vunpack.c.l.bf16 %v312
      %v345 = vunpack.c.l.bf16 %v313
      %v346 = vunpack.c.l.bf16 %v314
      %v347 = vunpack.c.l.bf16 %v315
      %v348 = vunpack.c.l.bf16 %v316
      %v349 = vunpack.c.l.bf16 %v317
      %v350 = vunpack.c.l.bf16 %v318
      %v351 = vunpack.c.l.bf16 %v319
      %v352 = vunpack.c.l.bf16 %v320
      %v353 = vunpack.c.l.bf16 %v321
      %v354 = vunpack.c.l.bf16 %v322
      %v355 = vunpack.c.l.bf16 %v323
      %v356 = vld [vmem:[%s278] sm:$0x1]
      %v358 = vperm.slane %v356, 0
      %v360 = vsub.f32 %v324, %v358
      %v361 = vsub.f32 %v325, %v358
      %v362 = vsub.f32 %v326, %v358
      %v363 = vsub.f32 %v327, %v358
      %v364 = vsub.f32 %v328, %v358
      %v365 = vsub.f32 %v329, %v358
      %v366 = vsub.f32 %v330, %v358
      %v367 = vsub.f32 %v331, %v358
      %v368 = vsub.f32 %v332, %v358
      %v369 = vsub.f32 %v333, %v358
      %v370 = vsub.f32 %v334, %v358
      %v371 = vsub.f32 %v335, %v358
      %v372 = vsub.f32 %v336, %v358
      %v373 = vsub.f32 %v337, %v358
      %v374 = vsub.f32 %v338, %v358
      %v375 = vsub.f32 %v339, %v358
      %v376 = vsub.f32 %v340, %v358
      %v377 = vsub.f32 %v341, %v358
      %v378 = vsub.f32 %v342, %v358
      %v379 = vsub.f32 %v343, %v358
      %v380 = vsub.f32 %v344, %v358
      %v381 = vsub.f32 %v345, %v358
      %v382 = vsub.f32 %v346, %v358
      %v383 = vsub.f32 %v347, %v358
      %v384 = vsub.f32 %v348, %v358
      %v385 = vsub.f32 %v349, %v358
      %v386 = vsub.f32 %v350, %v358
      %v387 = vsub.f32 %v351, %v358
      %v388 = vsub.f32 %v352, %v358
      %v389 = vsub.f32 %v353, %v358
      %v390 = vsub.f32 %v354, %v358
      %v391 = vsub.f32 %v355, %v358
      %v392 = vld [vmem:[%s281] sm:$0x1]
      %v394 = vperm.slane %v392, 0
      %v396 = vmul.f32 %v360, %v394
      %v397 = vmul.f32 %v361, %v394
      %v398 = vmul.f32 %v362, %v394
      %v399 = vmul.f32 %v363, %v394
      %v400 = vmul.f32 %v364, %v394
      %v401 = vmul.f32 %v365, %v394
      %v402 = vmul.f32 %v366, %v394
      %v403 = vmul.f32 %v367, %v394
      %v404 = vmul.f32 %v368, %v394
      %v405 = vmul.f32 %v369, %v394
      %v406 = vmul.f32 %v370, %v394
      %v407 = vmul.f32 %v371, %v394
      %v408 = vmul.f32 %v372, %v394
      %v409 = vmul.f32 %v373, %v394
      %v410 = vmul.f32 %v374, %v394
      %v411 = vmul.f32 %v375, %v394
      %v412 = vmul.f32 %v376, %v394
      %v413 = vmul.f32 %v377, %v394
      %v414 = vmul.f32 %v378, %v394
      %v415 = vmul.f32 %v379, %v394
      %v416 = vmul.f32 %v380, %v394
      %v417 = vmul.f32 %v381, %v394
      %v418 = vmul.f32 %v382, %v394
      %v419 = vmul.f32 %v383, %v394
      %v420 = vmul.f32 %v384, %v394
      %v421 = vmul.f32 %v385, %v394
      %v422 = vmul.f32 %v386, %v394
      %v423 = vmul.f32 %v387, %v394
      %v424 = vmul.f32 %v388, %v394
      %v425 = vmul.f32 %v389, %v394
      %v426 = vmul.f32 %v390, %v394
      %v427 = vmul.f32 %v391, %v394
      %v428 = vld [vmem:[%s3] sm:$0x1]
      %v430 = vperm.slane %v428, 0
      %v432 = vmul.f32 %v396, %v430
      %v433 = vmul.f32 %v397, %v430
      %v434 = vmul.f32 %v398, %v430
      %v435 = vmul.f32 %v399, %v430
      %v436 = vmul.f32 %v400, %v430
      %v437 = vmul.f32 %v401, %v430
      %v438 = vmul.f32 %v402, %v430
      %v439 = vmul.f32 %v403, %v430
      %v440 = vmul.f32 %v404, %v430
      %v441 = vmul.f32 %v405, %v430
      %v442 = vmul.f32 %v406, %v430
      %v443 = vmul.f32 %v407, %v430
      %v444 = vmul.f32 %v408, %v430
      %v445 = vmul.f32 %v409, %v430
      %v446 = vmul.f32 %v410, %v430
      %v447 = vmul.f32 %v411, %v430
      %v448 = vmul.f32 %v412, %v430
      %v449 = vmul.f32 %v413, %v430
      %v450 = vmul.f32 %v414, %v430
      %v451 = vmul.f32 %v415, %v430
      %v452 = vmul.f32 %v416, %v430
      %v453 = vmul.f32 %v417, %v430
      %v454 = vmul.f32 %v418, %v430
      %v455 = vmul.f32 %v419, %v430
      %v456 = vmul.f32 %v420, %v430
      %v457 = vmul.f32 %v421, %v430
      %v458 = vmul.f32 %v422, %v430
      %v459 = vmul.f32 %v423, %v430
      %v460 = vmul.f32 %v424, %v430
      %v461 = vmul.f32 %v425, %v430
      %v462 = vmul.f32 %v426, %v430
      %v463 = vmul.f32 %v427, %v430
      %v464 = vld [vmem:[%s4] sm:$0x1]
      %v466 = vperm.slane %v464, 0
      %v468 = vadd.f32 %v432, %v466
      %v469 = vadd.f32 %v433, %v466
      %v470 = vadd.f32 %v434, %v466
      %v471 = vadd.f32 %v435, %v466
      %v472 = vadd.f32 %v436, %v466
      %v473 = vadd.f32 %v437, %v466
      %v474 = vadd.f32 %v438, %v466
      %v475 = vadd.f32 %v439, %v466
      %v476 = vadd.f32 %v440, %v466
      %v477 = vadd.f32 %v441, %v466
      %v478 = vadd.f32 %v442, %v466
      %v479 = vadd.f32 %v443, %v466
      %v480 = vadd.f32 %v444, %v466
      %v481 = vadd.f32 %v445, %v466
      %v482 = vadd.f32 %v446, %v466
      %v483 = vadd.f32 %v447, %v466
      %v484 = vadd.f32 %v448, %v466
      %v485 = vadd.f32 %v449, %v466
      %v486 = vadd.f32 %v450, %v466
      %v487 = vadd.f32 %v451, %v466
      %v488 = vadd.f32 %v452, %v466
      %v489 = vadd.f32 %v453, %v466
      %v490 = vadd.f32 %v454, %v466
      %v491 = vadd.f32 %v455, %v466
      %v492 = vadd.f32 %v456, %v466
      %v493 = vadd.f32 %v457, %v466
      %v494 = vadd.f32 %v458, %v466
      %v495 = vadd.f32 %v459, %v466
      %v496 = vadd.f32 %v460, %v466
      %v497 = vadd.f32 %v461, %v466
      %v498 = vadd.f32 %v462, %v466
      %v499 = vadd.f32 %v463, %v466
      %v500 = vmax.f32 %v468, 0.0
      %v501 = vmax.f32 %v469, 0.0
      %v502 = vmax.f32 %v470, 0.0
      %v503 = vmax.f32 %v471, 0.0
      %v504 = vmax.f32 %v472, 0.0
      %v505 = vmax.f32 %v473, 0.0
      %v506 = vmax.f32 %v474, 0.0
      %v507 = vmax.f32 %v475, 0.0
      %v508 = vmax.f32 %v476, 0.0
      %v509 = vmax.f32 %v477, 0.0
      %v510 = vmax.f32 %v478, 0.0
      %v511 = vmax.f32 %v479, 0.0
      %v512 = vmax.f32 %v480, 0.0
      %v513 = vmax.f32 %v481, 0.0
      %v514 = vmax.f32 %v482, 0.0
      %v515 = vmax.f32 %v483, 0.0
      %v516 = vmax.f32 %v484, 0.0
      %v517 = vmax.f32 %v485, 0.0
      %v518 = vmax.f32 %v486, 0.0
      %v519 = vmax.f32 %v487, 0.0
      %v520 = vmax.f32 %v488, 0.0
      %v521 = vmax.f32 %v489, 0.0
      %v522 = vmax.f32 %v490, 0.0
      %v523 = vmax.f32 %v491, 0.0
      %v524 = vmax.f32 %v492, 0.0
      %v525 = vmax.f32 %v493, 0.0
      %v526 = vmax.f32 %v494, 0.0
      %v527 = vmax.f32 %v495, 0.0
      %v528 = vmax.f32 %v496, 0.0
      %v529 = vmax.f32 %v497, 0.0
      %v530 = vmax.f32 %v498, 0.0
      %v531 = vmax.f32 %v499, 0.0
      %v532 = vpack.c.bf16 %v500, %v500
      %v533 = vpack.c.bf16 %v501, %v501
      %v534 = vpack.c.bf16 %v502, %v502
      %v535 = vpack.c.bf16 %v503, %v503
      %v536 = vpack.c.bf16 %v504, %v504
      %v537 = vpack.c.bf16 %v505, %v505
      %v538 = vpack.c.bf16 %v506, %v506
      %v539 = vpack.c.bf16 %v507, %v507
      %v540 = vpack.c.bf16 %v508, %v508
      %v541 = vpack.c.bf16 %v509, %v509
      %v542 = vpack.c.bf16 %v510, %v510
      %v543 = vpack.c.bf16 %v511, %v511
      %v544 = vpack.c.bf16 %v512, %v512
      %v545 = vpack.c.bf16 %v513, %v513
      %v546 = vpack.c.bf16 %v514, %v514
      %v547 = vpack.c.bf16 %v515, %v515
      %v548 = vpack.c.bf16 %v516, %v516
      %v549 = vpack.c.bf16 %v517, %v517
      %v550 = vpack.c.bf16 %v518, %v518
      %v551 = vpack.c.bf16 %v519, %v519
      %v552 = vpack.c.bf16 %v520, %v520
      %v553 = vpack.c.bf16 %v521, %v521
      %v554 = vpack.c.bf16 %v522, %v522
      %v555 = vpack.c.bf16 %v523, %v523
      %v556 = vpack.c.bf16 %v524, %v524
      %v557 = vpack.c.bf16 %v525, %v525
      %v558 = vpack.c.bf16 %v526, %v526
      %v559 = vpack.c.bf16 %v527, %v527
      %v560 = vpack.c.bf16 %v528, %v528
      %v561 = vpack.c.bf16 %v529, %v529
      %v562 = vpack.c.bf16 %v530, %v530
      %v563 = vpack.c.bf16 %v531, %v531
      %vm564 = vcmask 60416
      %565 = vst.msk [vmem:[%s290] sm:$0xf] %vm564, %v532
      %566 = vst.msk [vmem:[%s290 + $0x4] sm:$0xf] %vm564, %v533
      %567 = vst.msk [vmem:[%s290 + $0x8] sm:$0xf] %vm564, %v534
      %568 = vst.msk [vmem:[%s290 + $0xc] sm:$0xf] %vm564, %v535
      %569 = vst.msk [vmem:[%s290 + $0x10] sm:$0xf] %vm564, %v536
      %570 = vst.msk [vmem:[%s290 + $0x14] sm:$0xf] %vm564, %v537
      %571 = vst.msk [vmem:[%s290 + $0x18] sm:$0xf] %vm564, %v538
      %572 = vst.msk [vmem:[%s290 + $0x1c] sm:$0xf] %vm564, %v539
      %573 = vst.msk [vmem:[%s290 + $0x20] sm:$0xf] %vm564, %v540
      %574 = vst.msk [vmem:[%s290 + $0x24] sm:$0xf] %vm564, %v541
      %575 = vst.msk [vmem:[%s290 + $0x28] sm:$0xf] %vm564, %v542
      %576 = vst.msk [vmem:[%s290 + $0x2c] sm:$0xf] %vm564, %v543
      %577 = vst.msk [vmem:[%s290 + $0x30] sm:$0xf] %vm564, %v544
      %578 = vst.msk [vmem:[%s290 + $0x34] sm:$0xf] %vm564, %v545
      %579 = vst.msk [vmem:[%s290 + $0x38] sm:$0xf] %vm564, %v546
      %580 = vst.msk [vmem:[%s290 + $0x3c] sm:$0xf] %vm564, %v547
      %581 = vst.msk [vmem:[%s290 + $0x40] sm:$0xf] %vm564, %v548
      %582 = vst.msk [vmem:[%s290 + $0x44] sm:$0xf] %vm564, %v549
      %583 = vst.msk [vmem:[%s290 + $0x48] sm:$0xf] %vm564, %v550
      %584 = vst.msk [vmem:[%s290 + $0x4c] sm:$0xf] %vm564, %v551
      %585 = vst.msk [vmem:[%s290 + $0x50] sm:$0xf] %vm564, %v552
      %586 = vst.msk [vmem:[%s290 + $0x54] sm:$0xf] %vm564, %v553
      %587 = vst.msk [vmem:[%s290 + $0x58] sm:$0xf] %vm564, %v554
      %588 = vst.msk [vmem:[%s290 + $0x5c] sm:$0xf] %vm564, %v555
      %589 = vst.msk [vmem:[%s290 + $0x60] sm:$0xf] %vm564, %v556
      %590 = vst.msk [vmem:[%s290 + $0x64] sm:$0xf] %vm564, %v557
      %591 = vst.msk [vmem:[%s290 + $0x68] sm:$0xf] %vm564, %v558
      %592 = vst.msk [vmem:[%s290 + $0x6c] sm:$0xf] %vm564, %v559
      %593 = vst.msk [vmem:[%s290 + $0x70] sm:$0xf] %vm564, %v560
      %594 = vst.msk [vmem:[%s290 + $0x74] sm:$0xf] %vm564, %v561
      %595 = vst.msk [vmem:[%s290 + $0x78] sm:$0xf] %vm564, %v562
      %596 = vst.msk [vmem:[%s290 + $0x7c] sm:$0xf] %vm564, %v563
      %s597 = smul.u32 32, %s21
      %p598 = scmp.lt.s32.totalorder %s20, 1
      %s599 = scalar_select %p598, %s20, 1
      %p600 = scmp.lt.s32.totalorder %s597, 31
      %s601 = scalar_select %p600, %s597, 31
      %s602 = smul.addr %s599, 32
      %s603 = sadd.s32 %s601, %s602
      %s604 = smul.addr %s603, 4
      %s605 = scalar_lea.vmem %s5, %s604
      // Predicated region
      $region41: #{resnet_generator_forward.36} parent=39 // pred_check
        %p606 = pneg %p170
      $region42: #{resnet_generator_forward.36} parent=39 // pred_check_branch
        %608 = sbr.rel (%p606) target = $region44
      $region43: #{resnet_generator_forward.36} parent=39 // pred_region
        %s609 = smul.u32 32, %s21
      $region44: #{resnet_generator_forward.36} parent=39 // pred_fallthru
        _
    $region40: #{resnet_generator_forward.36} parent=5 // pred_fallthru
      _
    %p610 = scmp.le.s32.totalorder 2, %s11
    // Predicated region
    $region45: #{resnet_generator_forward.36} parent=5 // pred_check
      %p611 = pneg %p610
    $region46: #{resnet_generator_forward.36} parent=5 // pred_check_branch
      %613 = sbr.rel (%p611) target = $region48
    $region47: #{resnet_generator_forward.36} parent=5 // pred_region
      %s614 = ssub.s32 %s11, 2
      // Predicated region
      $region49: #{resnet_generator_forward.36} parent=47 // pred_check
        %p615 = pneg %p176
      $region50: #{resnet_generator_forward.36} parent=47 // pred_check_branch
        %617 = sbr.rel (%p615) target = $region52
      $region51: #{resnet_generator_forward.36} parent=47 // pred_region
        %s618 = smul.u32 32, %s23
        %p619 = scmp.lt.s32.totalorder %s22, 1
        %s620 = scalar_select %p619, %s22, 1
        %p621 = scmp.lt.s32.totalorder %s618, 31
        %s622 = scalar_select %p621, %s618, 31
        %s623 = smul.addr %s620, 32
        %s624 = sadd.s32 %s622, %s623
        %s625 = smul.addr %s624, 4
        %s626 = scalar_lea.vmem %s5, %s625
      $region52: #{resnet_generator_forward.36} parent=47 // pred_fallthru
        _
    $region48: #{resnet_generator_forward.36} parent=5 // pred_fallthru
      _
  $region6: #{resnet_generator_forward.36} parent=0 // loop_footer
    %s15 = sadd.s32 1, %s11
  $region7: #{resnet_generator_forward.36} parent=0 // loop_footer_branch
    %10 = sbr.rel target = $region3
  $region8: #{resnet_generator_forward.36} parent=0 // loop_exit
    _

// kernel: resnet_generator_forward.35
$region0: #{resnet_generator_forward.35}
  #allocation0 [shape = 'u32[]', space=smem, size = 0x4, offset = 0x4, fixed_abs, tag = 'smem constant byte address 0x4 - core index']
  #allocation1 [shape = 'u32[72,128]{1,0:T(1,128)}', space=vmem, size = 0x9000, scoped, tag = 'internal scratch']
  %s0 = inlined_call_operand.vmem [shape: bf16[2,256,8], index: 0, kind: input, shape index: {}]
  %s1 = inlined_call_operand.vmem [shape: f32[2,1,8], index: 1, kind: output, shape index: {0}]
  %s2 = inlined_call_operand.vmem [shape: f32[2,1,8], index: 2, kind: output, shape index: {1}]
  %3 = xla_tuple %s1, %s2
  %s4 = sld [smem:[#allocation0]]
  $region53: #{resnet_generator_forward.35} parent=0
    _
  %s6 = ssub.s32 1, %s4
  %s7 = scalar_select 0, %s6, %s4
  loop: start=0, step=1, limit=4
  $region2: #{resnet_generator_forward.35} parent=0 // loop_pre_header
    _
  $region3: #{resnet_generator_forward.35} parent=0 // loop_header
    %s9 = sphi 0, %s13
    %p10 = scmp.ge.s32.totalorder %s9, 4
    %s16 = sphi 0, %s28
    %s17 = sphi 0, %s24
    %s18 = sphi 0, %s16
    %s19 = sphi 0, %s17
    %s20 = sphi 0, %s18
    %s21 = sphi 0, %s19
    %s33 = sphi 0, %s35
    %s36 = sphi 0, %s33
    %s37 = sphi 0, %s36
    %s53 = sphi 0, %s37
    %s59 = sphi 0, %s61
    %s62 = sphi 0, %s59
    %s63 = sphi 0, %s62
    %s79 = sphi 0, %s63
    %s85 = sphi 0, %s87
    %s88 = sphi 0, %s85
    %s89 = sphi 0, %s88
    %s105 = sphi 0, %s89
  $region4: #{resnet_generator_forward.35} parent=0 // loop_header_branch
    %12 = sbr.rel (%p10) target = $region8
  $region5: #{resnet_generator_forward.35} parent=0 // loop_body
    %s14 = ssub.s32 %s9, 1
    %s15 = ssub.s32 %s9, 2
    %s22 = sadd.s32 1, %s17
    %p23 = scmp.ge.s32.totalorder %s22, 1
    %s24 = scalar_select %p23, 0, %s22
    %s25 = sadd.s32 1, %s16
    %s26 = scalar_select %p23, %s25, %s16
    %p27 = scmp.ge.s32.totalorder %s26, 2
    %s28 = scalar_select %p27, 0, %s26
    %s29 = ssub.s32 %s16, %s28
    %s30 = ssub.s32 %s17, %s24
    %s31 = sor.u32 %s29, %s30
    %p32 = scmp.eq.s32.totalorder %s31, 0
    %s34 = sadd.s32 %s33, 1
    %s35 = scalar_select %p32, %s33, %s34
    %p38 = pneg %p32
    %p39 = scmp.eq.s32.totalorder %s9, 1
    %p40 = por %p38, %p39
    %p41 = scmp.ne.s32.totalorder %s33, %s36
    %p42 = scmp.eq.s32.totalorder %s9, 0
    %p43 = por %p41, %p42
    %p44 = scmp.ne.s32.totalorder %s33, %s36
    %p45 = scmp.eq.s32.totalorder %s14, 1
    %p46 = por %p44, %p45
    %p47 = scmp.ne.s32.totalorder %s36, %s37
    %p48 = scmp.eq.s32.totalorder %s14, 0
    %p49 = por %p47, %p48
    %p50 = scmp.ne.s32.totalorder %s36, %s37
    %p51 = scmp.eq.s32.totalorder %s15, 1
    %p52 = por %p50, %p51
    %p54 = scmp.ne.s32.totalorder %s37, %s53
    %p55 = scmp.eq.s32.totalorder %s15, 0
    %p56 = por %p54, %p55
    %s57 = ssub.s32 %s16, %s28
    %p58 = scmp.eq.s32.totalorder %s57, 0
    %s60 = sadd.s32 %s59, 1
    %s61 = scalar_select %p58, %s59, %s60
    %p64 = pneg %p58
    %p65 = scmp.eq.s32.totalorder %s9, 1
    %p66 = por %p64, %p65
    %p67 = scmp.ne.s32.totalorder %s59, %s62
    %p68 = scmp.eq.s32.totalorder %s9, 0
    %p69 = por %p67, %p68
    %p70 = scmp.ne.s32.totalorder %s59, %s62
    %p71 = scmp.eq.s32.totalorder %s14, 1
    %p72 = por %p70, %p71
    %p73 = scmp.ne.s32.totalorder %s62, %s63
    %p74 = scmp.eq.s32.totalorder %s14, 0
    %p75 = por %p73, %p74
    %p76 = scmp.ne.s32.totalorder %s62, %s63
    %p77 = scmp.eq.s32.totalorder %s15, 1
    %p78 = por %p76, %p77
    %p80 = scmp.ne.s32.totalorder %s63, %s79
    %p81 = scmp.eq.s32.totalorder %s15, 0
    %p82 = por %p80, %p81
    %s83 = ssub.s32 %s16, %s28
    %p84 = scmp.eq.s32.totalorder %s83, 0
    %s86 = sadd.s32 %s85, 1
    %s87 = scalar_select %p84, %s85, %s86
    %p90 = pneg %p84
    %p91 = scmp.eq.s32.totalorder %s9, 1
    %p92 = por %p90, %p91
    %p93 = scmp.ne.s32.totalorder %s85, %s88
    %p94 = scmp.eq.s32.totalorder %s9, 0
    %p95 = por %p93, %p94
    %p96 = scmp.ne.s32.totalorder %s85, %s88
    %p97 = scmp.eq.s32.totalorder %s14, 1
    %p98 = por %p96, %p97
    %p99 = scmp.ne.s32.totalorder %s88, %s89
    %p100 = scmp.eq.s32.totalorder %s14, 0
    %p101 = por %p99, %p100
    %p102 = scmp.ne.s32.totalorder %s88, %s89
    %p103 = scmp.eq.s32.totalorder %s15, 1
    %p104 = por %p102, %p103
    %p106 = scmp.ne.s32.totalorder %s89, %s105
    %p107 = scmp.eq.s32.totalorder %s15, 0
    %p108 = por %p106, %p107
    %p109 = scmp.le.s32.totalorder 1, %s9
    %p110 = scmp.lt.s32.totalorder %s9, 3
    %p111 = pnand %p109, %p110
    %p112 = pneg %p111
    // Predicated region
    $region9: #{resnet_generator_forward.35} parent=5 // pred_check
      _
    $region10: #{resnet_generator_forward.35} parent=5 // pred_check_branch
      %114 = sbr.rel (%p111) target = $region12
    $region11: #{resnet_generator_forward.35} parent=5 // pred_region
      %s115 = ssub.s32 %s9, 1
    $region12: #{resnet_generator_forward.35} parent=5 // pred_fallthru
      _
    %p116 = scmp.lt.s32.totalorder %s9, 2
    // Predicated region
    $region13: #{resnet_generator_forward.35} parent=5 // pred_check
      %p117 = pneg %p116
    $region14: #{resnet_generator_forward.35} parent=5 // pred_check_branch
      %119 = sbr.rel (%p117) target = $region16
    $region15: #{resnet_generator_forward.35} parent=5 // pred_region
      // Predicated region
      $region17: #{resnet_generator_forward.35} parent=15 // pred_check
        %p120 = pneg %p43
      $region18: #{resnet_generator_forward.35} parent=15 // pred_check_branch
        %122 = sbr.rel (%p120) target = $region20
      $region19: #{resnet_generator_forward.35} parent=15 // pred_region
        %s123 = smul.u32 32, %s17
        %p124 = scmp.lt.s32.totalorder %s16, 1
        %s125 = scalar_select %p124, %s16, 1
        %p126 = scmp.lt.s32.totalorder %s123, 31
        %s127 = scalar_select %p126, %s123, 31
        %s128 = smul.addr %s125, 32
        %s129 = sadd.s32 %s127, %s128
        %s130 = smul.addr %s129, 4
        %s131 = scalar_lea.vmem %s0, %s130
        %s132 = smul.u32 32, %s17
      $region20: #{resnet_generator_forward.35} parent=15 // pred_fallthru
        _
    $region16: #{resnet_generator_forward.35} parent=5 // pred_fallthru
      _
    %p133 = scmp.le.s32.totalorder 1, %s9
    %p134 = scmp.lt.s32.totalorder %s9, 3
    %p135 = pnand %p133, %p134
    %p136 = pneg %p135
    // Predicated region
    $region21: #{resnet_generator_forward.35} parent=5 // pred_check
      _
    $region22: #{resnet_generator_forward.35} parent=5 // pred_check_branch
      %138 = sbr.rel (%p135) target = $region24
    $region23: #{resnet_generator_forward.35} parent=5 // pred_region
      %s139 = ssub.s32 %s9, 1
      %s140 = smul.u32 32, %s19
      %p141 = scmp.lt.s32.totalorder %s18, 1
      %s142 = scalar_select %p141, %s18, 1
      %p143 = scmp.lt.s32.totalorder %s140, 31
      %s144 = scalar_select %p143, %s140, 31
      %s145 = smul.addr %s142, 32
      %s146 = sadd.s32 %s144, %s145
      %s147 = smul.addr %s146, 4
      %s148 = scalar_lea.vmem %s0, %s147
      %p149 = pneg %p49
      %p150 = pneg %p46
      %p151 = pneg %p75
      %p152 = pneg %p72
      %p153 = scmp.lt.s32.totalorder %s18, 1
      %s154 = scalar_select %p153, %s18, 1
      %s155 = scalar_lea.vmem %s1, %s154
      %p156 = pneg %p101
      %p157 = pneg %p98
      %p158 = scmp.lt.s32.totalorder %s18, 1
      %s159 = scalar_select %p158, %s18, 1
      %s160 = scalar_lea.vmem %s2, %s159
      %s161 = smul.u32 32, %s19
      %p162 = scmp.lt.s32.totalorder %s18, 1
      %s163 = scalar_select %p162, %s18, 1
      %p164 = scmp.lt.s32.totalorder %s161, 31
      %s165 = scalar_select %p164, %s161, 31
      %s166 = smul.addr %s163, 32
      %s167 = sadd.s32 %s165, %s166
      %s168 = smul.addr %s167, 4
      %s169 = scalar_lea.vmem %s0, %s168
      %s170 = smul.u32 32, %s19
      %p171 = scmp.lt.s32.totalorder %s18, 1
      %s172 = scalar_select %p171, %s18, 1
      %s173 = scalar_lea.vmem %s1, %s172
      %p174 = scmp.lt.s32.totalorder %s18, 1
      %s175 = scalar_select %p174, %s18, 1
      %s176 = scalar_lea.vmem %s2, %s175
      %p177 = scmp.eq.s32.totalorder %s19, 0
      // Predicated region
      $region25: #{resnet_generator_forward.35} parent=23 // pred_check
        %p178 = pneg %p177
      $region26: #{resnet_generator_forward.35} parent=23 // pred_check_branch
        %180 = sbr.rel (%p178) target = $region28
      $region27: #{resnet_generator_forward.35} parent=23 // pred_region
        %vm181 = vcmask 57344
        %182 = vst.msk [vmem:[%s173] sm:$0x1] %vm181, 0.0
        %183 = vst.msk [vmem:[%s176] sm:$0x1] %vm181, 0.0
      $region28: #{resnet_generator_forward.35} parent=23 // pred_fallthru
        _
      %v184 = vld [vmem:[%s169] sm:$0xf]
      %v185 = vld [vmem:[%s169 + $0x4] sm:$0xf]
      %v186 = vld [vmem:[%s169 + $0x8] sm:$0xf]
      %v187 = vld [vmem:[%s169 + $0xc] sm:$0xf]
      %v188 = vld [vmem:[%s169 + $0x10] sm:$0xf]
      %v189 = vld [vmem:[%s169 + $0x14] sm:$0xf]
      %v190 = vld [vmem:[%s169 + $0x18] sm:$0xf]
      %v191 = vld [vmem:[%s169 + $0x1c] sm:$0xf]
      %v192 = vld [vmem:[%s169 + $0x20] sm:$0xf]
      %v193 = vld [vmem:[%s169 + $0x24] sm:$0xf]
      %v194 = vld [vmem:[%s169 + $0x28] sm:$0xf]
      %v195 = vld [vmem:[%s169 + $0x2c] sm:$0xf]
      %v196 = vld [vmem:[%s169 + $0x30] sm:$0xf]
      %v197 = vld [vmem:[%s169 + $0x34] sm:$0xf]
      %v198 = vld [vmem:[%s169 + $0x38] sm:$0xf]
      %v199 = vld [vmem:[%s169 + $0x3c] sm:$0xf]
      %v200 = vld [vmem:[%s169 + $0x40] sm:$0xf]
      %v201 = vld [vmem:[%s169 + $0x44] sm:$0xf]
      %v202 = vld [vmem:[%s169 + $0x48] sm:$0xf]
      %v203 = vld [vmem:[%s169 + $0x4c] sm:$0xf]
      %v204 = vld [vmem:[%s169 + $0x50] sm:$0xf]
      %v205 = vld [vmem:[%s169 + $0x54] sm:$0xf]
      %v206 = vld [vmem:[%s169 + $0x58] sm:$0xf]
      %v207 = vld [vmem:[%s169 + $0x5c] sm:$0xf]
      %v208 = vld [vmem:[%s169 + $0x60] sm:$0xf]
      %v209 = vld [vmem:[%s169 + $0x64] sm:$0xf]
      %v210 = vld [vmem:[%s169 + $0x68] sm:$0xf]
      %v211 = vld [vmem:[%s169 + $0x6c] sm:$0xf]
      %v212 = vld [vmem:[%s169 + $0x70] sm:$0xf]
      %v213 = vld [vmem:[%s169 + $0x74] sm:$0xf]
      %v214 = vld [vmem:[%s169 + $0x78] sm:$0xf]
      %v215 = vld [vmem:[%s169 + $0x7c] sm:$0xf]
      %v216 = vunpack.c.l.bf16 %v184
      %v217 = vunpack.c.l.bf16 %v185
      %v218 = vunpack.c.l.bf16 %v186
      %v219 = vunpack.c.l.bf16 %v187
      %v220 = vunpack.c.l.bf16 %v188
      %v221 = vunpack.c.l.bf16 %v189
      %v222 = vunpack.c.l.bf16 %v190
      %v223 = vunpack.c.l.bf16 %v191
      %v224 = vunpack.c.l.bf16 %v192
      %v225 = vunpack.c.l.bf16 %v193
      %v226 = vunpack.c.l.bf16 %v194
      %v227 = vunpack.c.l.bf16 %v195
      %v228 = vunpack.c.l.bf16 %v196
      %v229 = vunpack.c.l.bf16 %v197
      %v230 = vunpack.c.l.bf16 %v198
      %v231 = vunpack.c.l.bf16 %v199
      %v232 = vunpack.c.l.bf16 %v200
      %v233 = vunpack.c.l.bf16 %v201
      %v234 = vunpack.c.l.bf16 %v202
      %v235 = vunpack.c.l.bf16 %v203
      %v236 = vunpack.c.l.bf16 %v204
      %v237 = vunpack.c.l.bf16 %v205
      %v238 = vunpack.c.l.bf16 %v206
      %v239 = vunpack.c.l.bf16 %v207
      %v240 = vunpack.c.l.bf16 %v208
      %v241 = vunpack.c.l.bf16 %v209
      %v242 = vunpack.c.l.bf16 %v210
      %v243 = vunpack.c.l.bf16 %v211
      %v244 = vunpack.c.l.bf16 %v212
      %v245 = vunpack.c.l.bf16 %v213
      %v246 = vunpack.c.l.bf16 %v214
      %v247 = vunpack.c.l.bf16 %v215
      %v248 = vld [vmem:[%s173] sm:$0x1]
      %vm249 = vcmask 64512
      %v250 = vsel %vm249, %v216, 0.0
      %v251 = vsel %vm249, %v217, 0.0
      %v252 = vadd.f32 %v250, %v251
      %v253 = vsel %vm249, %v218, 0.0
      %v254 = vadd.f32 %v252, %v253
      %v255 = vsel %vm249, %v219, 0.0
      %v256 = vadd.f32 %v254, %v255
      %v257 = vsel %vm249, %v220, 0.0
      %v258 = vadd.f32 %v256, %v257
      %v259 = vsel %vm249, %v221, 0.0
      %v260 = vadd.f32 %v258, %v259
      %v261 = vsel %vm249, %v222, 0.0
      %v262 = vadd.f32 %v260, %v261
      %v263 = vsel %vm249, %v223, 0.0
      %v264 = vadd.f32 %v262, %v263
      %v265 = vsel %vm249, %v224, 0.0
      %v266 = vadd.f32 %v264, %v265
      %v267 = vsel %vm249, %v225, 0.0
      %v268 = vadd.f32 %v266, %v267
      %v269 = vsel %vm249, %v226, 0.0
      %v270 = vadd.f32 %v268, %v269
      %v271 = vsel %vm249, %v227, 0.0
      %v272 = vadd.f32 %v270, %v271
      %v273 = vsel %vm249, %v228, 0.0
      %v274 = vadd.f32 %v272, %v273
      %v275 = vsel %vm249, %v229, 0.0
      %v276 = vadd.f32 %v274, %v275
      %v277 = vsel %vm249, %v230, 0.0
      %v278 = vadd.f32 %v276, %v277
      %v279 = vsel %vm249, %v231, 0.0
      %v280 = vadd.f32 %v278, %v279
      %v281 = vsel %vm249, %v232, 0.0
      %v282 = vadd.f32 %v280, %v281
      %v283 = vsel %vm249, %v233, 0.0
      %v284 = vadd.f32 %v282, %v283
      %v285 = vsel %vm249, %v234, 0.0
      %v286 = vadd.f32 %v284, %v285
      %v287 = vsel %vm249, %v235, 0.0
      %v288 = vadd.f32 %v286, %v287
      %v289 = vsel %vm249, %v236, 0.0
      %v290 = vadd.f32 %v288, %v289
      %v291 = vsel %vm249, %v237, 0.0
      %v292 = vadd.f32 %v290, %v291
      %v293 = vsel %vm249, %v238, 0.0
      %v294 = vadd.f32 %v292, %v293
      %v295 = vsel %vm249, %v239, 0.0
      %v296 = vadd.f32 %v294, %v295
      %v297 = vsel %vm249, %v240, 0.0
      %v298 = vadd.f32 %v296, %v297
      %v299 = vsel %vm249, %v241, 0.0
      %v300 = vadd.f32 %v298, %v299
      %v301 = vsel %vm249, %v242, 0.0
      %v302 = vadd.f32 %v300, %v301
      %v303 = vsel %vm249, %v243, 0.0
      %v304 = vadd.f32 %v302, %v303
      %v305 = vsel %vm249, %v244, 0.0
      %v306 = vadd.f32 %v304, %v305
      %v307 = vsel %vm249, %v245, 0.0
      %v308 = vadd.f32 %v306, %v307
      %v309 = vsel %vm249, %v246, 0.0
      %v310 = vadd.f32 %v308, %v309
      %v311 = vsel %vm249, %v247, 0.0
      %v312 = vadd.f32 %v310, %v311
      %v313 = vrot.slane %v312, 4
      %v314 = vadd.f32 %v312, %v313
      %v315 = vrot.slane %v314, 2
      %v316 = vadd.f32 %v314, %v315
      %v317 = vrot.slane %v316, 1
      %v318 = vadd.f32 %v316, %v317
      %v319 = vadd.f32 %v248, %v318
      %vm320 = vcmask 57344
      %321 = vst.msk [vmem:[%s173] sm:$0x1] %vm320, %v319
      %v322 = vld [vmem:[%s176] sm:$0x1]
      %v323 = vmul.f32 %v216, %v216
      %v324 = vmul.f32 %v217, %v217
      %v325 = vmul.f32 %v218, %v218
      %v326 = vmul.f32 %v219, %v219
      %v327 = vmul.f32 %v220, %v220
      %v328 = vmul.f32 %v221, %v221
      %v329 = vmul.f32 %v222, %v222
      %v330 = vmul.f32 %v223, %v223
      %v331 = vmul.f32 %v224, %v224
      %v332 = vmul.f32 %v225, %v225
      %v333 = vmul.f32 %v226, %v226
      %v334 = vmul.f32 %v227, %v227
      %v335 = vmul.f32 %v228, %v228
      %v336 = vmul.f32 %v229, %v229
      %v337 = vmul.f32 %v230, %v230
      %v338 = vmul.f32 %v231, %v231
      %v339 = vmul.f32 %v232, %v232
      %v340 = vmul.f32 %v233, %v233
      %v341 = vmul.f32 %v234, %v234
      %v342 = vmul.f32 %v235, %v235
      %v343 = vmul.f32 %v236, %v236
      %v344 = vmul.f32 %v237, %v237
      %v345 = vmul.f32 %v238, %v238
      %v346 = vmul.f32 %v239, %v239
      %v347 = vmul.f32 %v240, %v240
      %v348 = vmul.f32 %v241, %v241
      %v349 = vmul.f32 %v242, %v242
      %v350 = vmul.f32 %v243, %v243
      %v351 = vmul.f32 %v244, %v244
      %v352 = vmul.f32 %v245, %v245
      %v353 = vmul.f32 %v246, %v246
      %v354 = vmul.f32 %v247, %v247
      %v355 = vsel %vm249, %v323, 0.0
      %v356 = vsel %vm249, %v324, 0.0
      %v357 = vadd.f32 %v355, %v356
      %v358 = vsel %vm249, %v325, 0.0
      %v359 = vadd.f32 %v357, %v358
      %v360 = vsel %vm249, %v326, 0.0
      %v361 = vadd.f32 %v359, %v360
      %v362 = vsel %vm249, %v327, 0.0
      %v363 = vadd.f32 %v361, %v362
      %v364 = vsel %vm249, %v328, 0.0
      %v365 = vadd.f32 %v363, %v364
      %v366 = vsel %vm249, %v329, 0.0
      %v367 = vadd.f32 %v365, %v366
      %v368 = vsel %vm249, %v330, 0.0
      %v369 = vadd.f32 %v367, %v368
      %v370 = vsel %vm249, %v331, 0.0
      %v371 = vadd.f32 %v369, %v370
      %v372 = vsel %vm249, %v332, 0.0
      %v373 = vadd.f32 %v371, %v372
      %v374 = vsel %vm249, %v333, 0.0
      %v375 = vadd.f32 %v373, %v374
      %v376 = vsel %vm249, %v334, 0.0
      %v377 = vadd.f32 %v375, %v376
      %v378 = vsel %vm249, %v335, 0.0
      %v379 = vadd.f32 %v377, %v378
      %v380 = vsel %vm249, %v336, 0.0
      %v381 = vadd.f32 %v379, %v380
      %v382 = vsel %vm249, %v337, 0.0
      %v383 = vadd.f32 %v381, %v382
      %v384 = vsel %vm249, %v338, 0.0
      %v385 = vadd.f32 %v383, %v384
      %v386 = vsel %vm249, %v339, 0.0
      %v387 = vadd.f32 %v385, %v386
      %v388 = vsel %vm249, %v340, 0.0
      %v389 = vadd.f32 %v387, %v388
      %v390 = vsel %vm249, %v341, 0.0
      %v391 = vadd.f32 %v389, %v390
      %v392 = vsel %vm249, %v342, 0.0
      %v393 = vadd.f32 %v391, %v392
      %v394 = vsel %vm249, %v343, 0.0
      %v395 = vadd.f32 %v393, %v394
      %v396 = vsel %vm249, %v344, 0.0
      %v397 = vadd.f32 %v395, %v396
      %v398 = vsel %vm249, %v345, 0.0
      %v399 = vadd.f32 %v397, %v398
      %v400 = vsel %vm249, %v346, 0.0
      %v401 = vadd.f32 %v399, %v400
      %v402 = vsel %vm249, %v347, 0.0
      %v403 = vadd.f32 %v401, %v402
      %v404 = vsel %vm249, %v348, 0.0
      %v405 = vadd.f32 %v403, %v404
      %v406 = vsel %vm249, %v349, 0.0
      %v407 = vadd.f32 %v405, %v406
      %v408 = vsel %vm249, %v350, 0.0
      %v409 = vadd.f32 %v407, %v408
      %v410 = vsel %vm249, %v351, 0.0
      %v411 = vadd.f32 %v409, %v410
      %v412 = vsel %vm249, %v352, 0.0
      %v413 = vadd.f32 %v411, %v412
      %v414 = vsel %vm249, %v353, 0.0
      %v415 = vadd.f32 %v413, %v414
      %v416 = vsel %vm249, %v354, 0.0
      %v417 = vadd.f32 %v415, %v416
      %v418 = vrot.slane %v417, 4
      %v419 = vadd.f32 %v417, %v418
      %v420 = vrot.slane %v419, 2
      %v421 = vadd.f32 %v419, %v420
      %v422 = vrot.slane %v421, 1
      %v423 = vadd.f32 %v421, %v422
      %v424 = vadd.f32 %v322, %v423
      %425 = vst.msk [vmem:[%s176] sm:$0x1] %vm320, %v424
      // Predicated region
      $region29: #{resnet_generator_forward.35} parent=23 // pred_check
        %p426 = pneg %p177
      $region30: #{resnet_generator_forward.35} parent=23 // pred_check_branch
        %428 = sbr.rel (%p426) target = $region32
      $region31: #{resnet_generator_forward.35} parent=23 // pred_region
        %v429 = vld [vmem:[%s173] sm:$0x1]
        %v430 = vmul.f32 %v429, 0.00390625
        %v431 = vld [vmem:[%s176] sm:$0x1]
        %v432 = vmul.f32 %v431, 0.00390625
        %v433 = vmul.f32 %v430, %v430
        %v434 = vsub.f32 %v432, %v433
        %435 = vst.msk [vmem:[%s173] sm:$0x1] %vm320, %v430
        %v436 = vmax.f32 %v434, 0.0
        %v437 = vadd.f32 %v436, 1e-05
        %v438 = vrsqrt.pop %v437
        %v439 = vmul.f32 %v438, %v437
        %v440 = vmul.f32 %v439, %v438
        %v441 = vmul.f32 0.5, %v440
        %v442 = vsub.f32 1.5, %v441
        %v443 = vmul.f32 %v438, %v442
        %vm444 = vweird.f32 %v437
        %vm445 = vweird.f32 %v438
        %vm446 = vmor %vm444, %vm445
        %v447 = vsel %vm446, %v438, %v443
        %448 = vst.msk [vmem:[%s176] sm:$0x1] %vm320, %v447
      $region32: #{resnet_generator_forward.35} parent=23 // pred_fallthru
        _
      %p449 = scmp.lt.s32.totalorder %s18, 1
      %s450 = scalar_select %p449, %s18, 1
      %s451 = scalar_lea.vmem %s1, %s450
      %p452 = scmp.lt.s32.totalorder %s18, 1
      %s453 = scalar_select %p452, %s18, 1
      %s454 = scalar_lea.vmem %s2, %s453
      // Predicated region
      $region33: #{resnet_generator_forward.35} parent=23 // pred_check
        %p455 = pneg %p72
      $region34: #{resnet_generator_forward.35} parent=23 // pred_check_branch
        %457 = sbr.rel (%p455) target = $region36
      $region35: #{resnet_generator_forward.35} parent=23 // pred_region
        _
      $region36: #{resnet_generator_forward.35} parent=23 // pred_fallthru
        _
      // Predicated region
      $region37: #{resnet_generator_forward.35} parent=23 // pred_check
        %p458 = pneg %p98
      $region38: #{resnet_generator_forward.35} parent=23 // pred_check_branch
        %460 = sbr.rel (%p458) target = $region40
      $region39: #{resnet_generator_forward.35} parent=23 // pred_region
        _
      $region40: #{resnet_generator_forward.35} parent=23 // pred_fallthru
        _
    $region24: #{resnet_generator_forward.35} parent=5 // pred_fallthru
      _
    %p461 = scmp.le.s32.totalorder 2, %s9
    // Predicated region
    $region41: #{resnet_generator_forward.35} parent=5 // pred_check
      %p462 = pneg %p461
    $region42: #{resnet_generator_forward.35} parent=5 // pred_check_branch
      %464 = sbr.rel (%p462) target = $region44
    $region43: #{resnet_generator_forward.35} parent=5 // pred_region
      %s465 = ssub.s32 %s9, 2
      // Predicated region
      $region45: #{resnet_generator_forward.35} parent=43 // pred_check
        %p466 = pneg %p78
      $region46: #{resnet_generator_forward.35} parent=43 // pred_check_branch
        %468 = sbr.rel (%p466) target = $region48
      $region47: #{resnet_generator_forward.35} parent=43 // pred_region
        %p469 = scmp.lt.s32.totalorder %s20, 1
        %s470 = scalar_select %p469, %s20, 1
        %s471 = scalar_lea.vmem %s1, %s470
      $region48: #{resnet_generator_forward.35} parent=43 // pred_fallthru
        _
      // Predicated region
      $region49: #{resnet_generator_forward.35} parent=43 // pred_check
        %p472 = pneg %p104
      $region50: #{resnet_generator_forward.35} parent=43 // pred_check_branch
        %474 = sbr.rel (%p472) target = $region52
      $region51: #{resnet_generator_forward.35} parent=43 // pred_region
        %p475 = scmp.lt.s32.totalorder %s20, 1
        %s476 = scalar_select %p475, %s20, 1
        %s477 = scalar_lea.vmem %s2, %s476
      $region52: #{resnet_generator_forward.35} parent=43 // pred_fallthru
        _
    $region44: #{resnet_generator_forward.35} parent=5 // pred_fallthru
      _
  $region6: #{resnet_generator_forward.35} parent=0 // loop_footer
    %s13 = sadd.s32 1, %s9
  $region7: #{resnet_generator_forward.35} parent=0 // loop_footer_branch
    %8 = sbr.rel target = $region3
  $region8: #{resnet_generator_forward.35} parent=0 // loop_exit
    _

// kernel: resnet_generator_forward.34
$region0: #{resnet_generator_forward.34}
  #allocation0 [shape = 'u32[]', space=smem, size = 0x4, offset = 0x4, fixed_abs, tag = 'smem constant byte address 0x4 - core index']
  #allocation1 [shape = 'u32[72,128]{1,0:T(1,128)}', space=vmem, size = 0x9000, scoped, tag = 'internal scratch']
  #allocation2 [shape = 'f32[256,128]{1,0:T(8,128)}', space=vmem, size = 0x20000, scoped, tag = 'scratch operand']
  %s0 = inlined_call_operand.vmem [shape: bf16[512,256], index: 0, kind: input, shape index: {}]
  %s1 = inlined_call_operand.vmem [shape: bf16[256,128], index: 1, kind: input, shape index: {}]
  %s2 = inlined_call_operand.vmem [shape: bf16[512,128], index: 2, kind: output, shape index: {}]
  %s3 = sld [smem:[#allocation0]]
  $region49: #{resnet_generator_forward.34} parent=0
    _
  %s5 = ssub.s32 1, %s3
  %s6 = scalar_select 0, %s5, %s3
  loop: start=0, step=1, limit=4
  $region2: #{resnet_generator_forward.34} parent=0 // loop_pre_header
    _
  $region3: #{resnet_generator_forward.34} parent=0 // loop_header
    %s8 = sphi 0, %s12
    %p9 = scmp.ge.s32.totalorder %s8, 4
    %s15 = sphi 0, %s34
    %s16 = sphi 0, %s30
    %s17 = sphi 0, %s26
    %s18 = sphi 0, %s15
    %s19 = sphi 0, %s16
    %s20 = sphi 0, %s17
    %s21 = sphi 0, %s18
    %s22 = sphi 0, %s19
    %s23 = sphi 0, %s20
    %s39 = sphi 0, %s41
    %s42 = sphi 0, %s39
    %s43 = sphi 0, %s42
    %s59 = sphi 0, %s43
    %s67 = sphi 0, %s69
    %s70 = sphi 0, %s67
    %s71 = sphi 0, %s70
    %s87 = sphi 0, %s71
    %s95 = sphi 0, %s97
    %s98 = sphi 0, %s95
    %s99 = sphi 0, %s98
    %s115 = sphi 0, %s99
  $region4: #{resnet_generator_forward.34} parent=0 // loop_header_branch
    %11 = sbr.rel (%p9) target = $region8
  $region5: #{resnet_generator_forward.34} parent=0 // loop_body
    %s13 = ssub.s32 %s8, 1
    %s14 = ssub.s32 %s8, 2
    %s24 = sadd.s32 1, %s17
    %p25 = scmp.ge.s32.totalorder %s24, 1
    %s26 = scalar_select %p25, 0, %s24
    %s27 = sadd.s32 1, %s16
    %s28 = scalar_select %p25, %s27, %s16
    %p29 = scmp.ge.s32.totalorder %s28, 1
    %s30 = scalar_select %p29, 0, %s28
    %s31 = sadd.s32 1, %s15
    %s32 = scalar_select %p29, %s31, %s15
    %p33 = scmp.ge.s32.totalorder %s32, 2
    %s34 = scalar_select %p33, 0, %s32
    %s35 = ssub.s32 %s15, %s34
    %s36 = ssub.s32 %s17, %s26
    %s37 = sor.u32 %s35, %s36
    %p38 = scmp.eq.s32.totalorder %s37, 0
    %s40 = sadd.s32 %s39, 1
    %s41 = scalar_select %p38, %s39, %s40
    %p44 = pneg %p38
    %p45 = scmp.eq.s32.totalorder %s8, 1
    %p46 = por %p44, %p45
    %p47 = scmp.ne.s32.totalorder %s39, %s42
    %p48 = scmp.eq.s32.totalorder %s8, 0
    %p49 = por %p47, %p48
    %p50 = scmp.ne.s32.totalorder %s39, %s42
    %p51 = scmp.eq.s32.totalorder %s13, 1
    %p52 = por %p50, %p51
    %p53 = scmp.ne.s32.totalorder %s42, %s43
    %p54 = scmp.eq.s32.totalorder %s13, 0
    %p55 = por %p53, %p54
    %p56 = scmp.ne.s32.totalorder %s42, %s43
    %p57 = scmp.eq.s32.totalorder %s14, 1
    %p58 = por %p56, %p57
    %p60 = scmp.ne.s32.totalorder %s43, %s59
    %p61 = scmp.eq.s32.totalorder %s14, 0
    %p62 = por %p60, %p61
    %s63 = ssub.s32 %s17, %s26
    %s64 = ssub.s32 %s16, %s30
    %s65 = sor.u32 %s63, %s64
    %p66 = scmp.eq.s32.totalorder %s65, 0
    %s68 = sadd.s32 %s67, 1
    %s69 = scalar_select %p66, %s67, %s68
    %p72 = pneg %p66
    %p73 = scmp.eq.s32.totalorder %s8, 1
    %p74 = por %p72, %p73
    %p75 = scmp.ne.s32.totalorder %s67, %s70
    %p76 = scmp.eq.s32.totalorder %s8, 0
    %p77 = por %p75, %p76
    %p78 = scmp.ne.s32.totalorder %s67, %s70
    %p79 = scmp.eq.s32.totalorder %s13, 1
    %p80 = por %p78, %p79
    %p81 = scmp.ne.s32.totalorder %s70, %s71
    %p82 = scmp.eq.s32.totalorder %s13, 0
    %p83 = por %p81, %p82
    %p84 = scmp.ne.s32.totalorder %s70, %s71
    %p85 = scmp.eq.s32.totalorder %s14, 1
    %p86 = por %p84, %p85
    %p88 = scmp.ne.s32.totalorder %s71, %s87
    %p89 = scmp.eq.s32.totalorder %s14, 0
    %p90 = por %p88, %p89
    %s91 = ssub.s32 %s15, %s34
    %s92 = ssub.s32 %s16, %s30
    %s93 = sor.u32 %s91, %s92
    %p94 = scmp.eq.s32.totalorder %s93, 0
    %s96 = sadd.s32 %s95, 1
    %s97 = scalar_select %p94, %s95, %s96
    %p100 = pneg %p94
    %p101 = scmp.eq.s32.totalorder %s8, 1
    %p102 = por %p100, %p101
    %p103 = scmp.ne.s32.totalorder %s95, %s98
    %p104 = scmp.eq.s32.totalorder %s8, 0
    %p105 = por %p103, %p104
    %p106 = scmp.ne.s32.totalorder %s95, %s98
    %p107 = scmp.eq.s32.totalorder %s13, 1
    %p108 = por %p106, %p107
    %p109 = scmp.ne.s32.totalorder %s98, %s99
    %p110 = scmp.eq.s32.totalorder %s13, 0
    %p111 = por %p109, %p110
    %p112 = scmp.ne.s32.totalorder %s98, %s99
    %p113 = scmp.eq.s32.totalorder %s14, 1
    %p114 = por %p112, %p113
    %p116 = scmp.ne.s32.totalorder %s99, %s115
    %p117 = scmp.eq.s32.totalorder %s14, 0
    %p118 = por %p116, %p117
    %p119 = scmp.le.s32.totalorder 1, %s8
    %p120 = scmp.lt.s32.totalorder %s8, 3
    %p121 = pnand %p119, %p120
    %p122 = pneg %p121
    // Predicated region
    $region9: #{resnet_generator_forward.34} parent=5 // pred_check
      _
    $region10: #{resnet_generator_forward.34} parent=5 // pred_check_branch
      %124 = sbr.rel (%p121) target = $region12
    $region11: #{resnet_generator_forward.34} parent=5 // pred_region
      %s125 = ssub.s32 %s8, 1
      // Predicated region
      $region13: #{resnet_generator_forward.34} parent=11 // pred_check
        %p126 = pneg %p83
      $region14: #{resnet_generator_forward.34} parent=11 // pred_check_branch
        %128 = sbr.rel (%p126) target = $region16
      $region15: #{resnet_generator_forward.34} parent=11 // pred_region
        %s129 = smul.u32 32, %s20
        %p130 = scmp.lt.s32.totalorder %s129, 31
        %s131 = scalar_select %p130, %s129, 31
        %p132 = scmp.lt.s32.totalorder %s19, 0
        %s133 = scalar_select %p132, %s19, 0
        %s134 = sadd.s32 %s133, %s131
        %s135 = smul.addr %s134, 4
        %s136 = scalar_lea.vmem %s1, %s135
        %s137 = smul.u32 32, %s20
      $region16: #{resnet_generator_forward.34} parent=11 // pred_fallthru
        _
    $region12: #{resnet_generator_forward.34} parent=5 // pred_fallthru
      _
    %p138 = scmp.lt.s32.totalorder %s8, 2
    // Predicated region
    $region17: #{resnet_generator_forward.34} parent=5 // pred_check
      %p139 = pneg %p138
    $region18: #{resnet_generator_forward.34} parent=5 // pred_check_branch
      %141 = sbr.rel (%p139) target = $region20
    $region19: #{resnet_generator_forward.34} parent=5 // pred_region
      // Predicated region
      $region21: #{resnet_generator_forward.34} parent=19 // pred_check
        %p142 = pneg %p49
      $region22: #{resnet_generator_forward.34} parent=19 // pred_check_branch
        %144 = sbr.rel (%p142) target = $region24
      $region23: #{resnet_generator_forward.34} parent=19 // pred_region
        %s145 = smul.u32 32, %s15
        %s146 = smul.u32 2, %s17
        %p147 = scmp.lt.s32.totalorder %s145, 63
        %s148 = scalar_select %p147, %s145, 63
        %p149 = scmp.lt.s32.totalorder %s146, 1
        %s150 = scalar_select %p149, %s146, 1
        %s151 = smul.addr %s148, 2
        %s152 = sadd.s32 %s150, %s151
        %s153 = smul.addr %s152, 4
        %s154 = scalar_lea.vmem %s0, %s153
        %s155 = smul.u32 32, %s15
        %s156 = smul.u32 2, %s17
      $region24: #{resnet_generator_forward.34} parent=19 // pred_fallthru
        _
    $region20: #{resnet_generator_forward.34} parent=5 // pred_fallthru
      _
    %p157 = scmp.le.s32.totalorder 1, %s8
    %p158 = scmp.lt.s32.totalorder %s8, 3
    %p159 = pnand %p157, %p158
    %p160 = pneg %p159
    // Predicated region
    $region25: #{resnet_generator_forward.34} parent=5 // pred_check
      _
    $region26: #{resnet_generator_forward.34} parent=5 // pred_check_branch
      %162 = sbr.rel (%p159) target = $region28
    $region27: #{resnet_generator_forward.34} parent=5 // pred_region
      %s163 = ssub.s32 %s8, 1
      %s164 = smul.u32 32, %s18
      %s165 = smul.u32 2, %s20
      %p166 = scmp.lt.s32.totalorder %s164, 63
      %s167 = scalar_select %p166, %s164, 63
      %p168 = scmp.lt.s32.totalorder %s165, 1
      %s169 = scalar_select %p168, %s165, 1
      %s170 = smul.addr %s167, 2
      %s171 = sadd.s32 %s169, %s170
      %s172 = smul.addr %s171, 4
      %s173 = scalar_lea.vmem %s0, %s172
      %p174 = pneg %p55
      %p175 = pneg %p52
      %s176 = smul.u32 32, %s20
      %p177 = scmp.lt.s32.totalorder %s176, 31
      %s178 = scalar_select %p177, %s176, 31
      %p179 = scmp.lt.s32.totalorder %s19, 0
      %s180 = scalar_select %p179, %s19, 0
      %s181 = sadd.s32 %s180, %s178
      %s182 = smul.addr %s181, 4
      %s183 = scalar_lea.vmem %s1, %s182
      %p184 = pneg %p83
      %p185 = pneg %p80
      %p186 = pneg %p111
      %p187 = pneg %p108
      %s188 = smul.u32 32, %s18
      %p189 = scmp.lt.s32.totalorder %s188, 63
      %s190 = scalar_select %p189, %s188, 63
      %p191 = scmp.lt.s32.totalorder %s19, 0
      %s192 = scalar_select %p191, %s19, 0
      %s193 = sadd.s32 %s192, %s190
      %s194 = smul.addr %s193, 4
      %s195 = scalar_lea.vmem %s2, %s194
      %s196 = smul.u32 32, %s18
      %s197 = smul.u32 2, %s20
      %p198 = scmp.lt.s32.totalorder %s196, 63
      %s199 = scalar_select %p198, %s196, 63
      %p200 = scmp.lt.s32.totalorder %s197, 1
      %s201 = scalar_select %p200, %s197, 1
      %s202 = smul.addr %s199, 2
      %s203 = sadd.s32 %s201, %s202
      %s204 = smul.addr %s203, 4
      %s205 = scalar_lea.vmem %s0, %s204
      %s206 = smul.u32 32, %s18
      %s207 = smul.u32 2, %s20
      %s208 = smul.u32 32, %s20
      %p209 = scmp.lt.s32.totalorder %s208, 31
      %s210 = scalar_select %p209, %s208, 31
      %p211 = scmp.lt.s32.totalorder %s19, 0
      %s212 = scalar_select %p211, %s19, 0
      %s213 = sadd.s32 %s212, %s210
      %s214 = smul.addr %s213, 4
      %s215 = scalar_lea.vmem %s1, %s214
      %s216 = smul.u32 32, %s20
      %s217 = smul.u32 32, %s18
      %p218 = scmp.lt.s32.totalorder %s217, 63
      %s219 = scalar_select %p218, %s217, 63
      %p220 = scmp.lt.s32.totalorder %s19, 0
      %s221 = scalar_select %p220, %s19, 0
      %s222 = sadd.s32 %s221, %s219
      %s223 = smul.addr %s222, 4
      %s224 = scalar_lea.vmem %s2, %s223
      %s225 = smul.u32 32, %s18
      %p226 = scmp.eq.s32.totalorder %s20, 0
      // Predicated region
      $region29: #{resnet_generator_forward.34} parent=27 // pred_check
        %p227 = pneg %p226
      $region30: #{resnet_generator_forward.34} parent=27 // pred_check_branch
        %229 = sbr.rel (%p227) target = $region32
      $region31: #{resnet_generator_forward.34} parent=27 // pred_region
        %230 = vst [vmem:[#allocation2] sm:$0xff] 0.0
        %231 = vst [vmem:[#allocation2 + $0x8] sm:$0xff] 0.0
        %232 = vst [vmem:[#allocation2 + $0x10] sm:$0xff] 0.0
        %233 = vst [vmem:[#allocation2 + $0x18] sm:$0xff] 0.0
        %234 = vst [vmem:[#allocation2 + $0x20] sm:$0xff] 0.0
        %235 = vst [vmem:[#allocation2 + $0x28] sm:$0xff] 0.0
        %236 = vst [vmem:[#allocation2 + $0x30] sm:$0xff] 0.0
        %237 = vst [vmem:[#allocation2 + $0x38] sm:$0xff] 0.0
        %238 = vst [vmem:[#allocation2 + $0x40] sm:$0xff] 0.0
        %239 = vst [vmem:[#allocation2 + $0x48] sm:$0xff] 0.0
        %240 = vst [vmem:[#allocation2 + $0x50] sm:$0xff] 0.0
        %241 = vst [vmem:[#allocation2 + $0x58] sm:$0xff] 0.0
        %242 = vst [vmem:[#allocation2 + $0x60] sm:$0xff] 0.0
        %243 = vst [vmem:[#allocation2 + $0x68] sm:$0xff] 0.0
        %244 = vst [vmem:[#allocation2 + $0x70] sm:$0xff] 0.0
        %245 = vst [vmem:[#allocation2 + $0x78] sm:$0xff] 0.0
        %246 = vst [vmem:[#allocation2 + $0x80] sm:$0xff] 0.0
        %247 = vst [vmem:[#allocation2 + $0x88] sm:$0xff] 0.0
        %248 = vst [vmem:[#allocation2 + $0x90] sm:$0xff] 0.0
        %249 = vst [vmem:[#allocation2 + $0x98] sm:$0xff] 0.0
        %250 = vst [vmem:[#allocation2 + $0xa0] sm:$0xff] 0.0
        %251 = vst [vmem:[#allocation2 + $0xa8] sm:$0xff] 0.0
        %252 = vst [vmem:[#allocation2 + $0xb0] sm:$0xff] 0.0
        %253 = vst [vmem:[#allocation2 + $0xb8] sm:$0xff] 0.0
        %254 = vst [vmem:[#allocation2 + $0xc0] sm:$0xff] 0.0
        %255 = vst [vmem:[#allocation2 + $0xc8] sm:$0xff] 0.0
        %256 = vst [vmem:[#allocation2 + $0xd0] sm:$0xff] 0.0
        %257 = vst [vmem:[#allocation2 + $0xd8] sm:$0xff] 0.0
        %258 = vst [vmem:[#allocation2 + $0xe0] sm:$0xff] 0.0
        %259 = vst [vmem:[#allocation2 + $0xe8] sm:$0xff] 0.0
        %260 = vst [vmem:[#allocation2 + $0xf0] sm:$0xff] 0.0
        %261 = vst [vmem:[#allocation2 + $0xf8] sm:$0xff] 0.0
      $region32: #{resnet_generator_forward.34} parent=27 // pred_fallthru
        _
      %v262 = vld [vmem:[#allocation2] sm:$0xff]
      %v263 = vld [vmem:[#allocation2 + $0x8] sm:$0xff]
      %v264 = vld [vmem:[#allocation2 + $0x10] sm:$0xff]
      %v265 = vld [vmem:[#allocation2 + $0x18] sm:$0xff]
      %v266 = vld [vmem:[#allocation2 + $0x20] sm:$0xff]
      %v267 = vld [vmem:[#allocation2 + $0x28] sm:$0xff]
      %v268 = vld [vmem:[#allocation2 + $0x30] sm:$0xff]
      %v269 = vld [vmem:[#allocation2 + $0x38] sm:$0xff]
      %v270 = vld [vmem:[#allocation2 + $0x40] sm:$0xff]
      %v271 = vld [vmem:[#allocation2 + $0x48] sm:$0xff]
      %v272 = vld [vmem:[#allocation2 + $0x50] sm:$0xff]
      %v273 = vld [vmem:[#allocation2 + $0x58] sm:$0xff]
      %v274 = vld [vmem:[#allocation2 + $0x60] sm:$0xff]
      %v275 = vld [vmem:[#allocation2 + $0x68] sm:$0xff]
      %v276 = vld [vmem:[#allocation2 + $0x70] sm:$0xff]
      %v277 = vld [vmem:[#allocation2 + $0x78] sm:$0xff]
      %v278 = vld [vmem:[#allocation2 + $0x80] sm:$0xff]
      %v279 = vld [vmem:[#allocation2 + $0x88] sm:$0xff]
      %v280 = vld [vmem:[#allocation2 + $0x90] sm:$0xff]
      %v281 = vld [vmem:[#allocation2 + $0x98] sm:$0xff]
      %v282 = vld [vmem:[#allocation2 + $0xa0] sm:$0xff]
      %v283 = vld [vmem:[#allocation2 + $0xa8] sm:$0xff]
      %v284 = vld [vmem:[#allocation2 + $0xb0] sm:$0xff]
      %v285 = vld [vmem:[#allocation2 + $0xb8] sm:$0xff]
      %v286 = vld [vmem:[#allocation2 + $0xc0] sm:$0xff]
      %v287 = vld [vmem:[#allocation2 + $0xc8] sm:$0xff]
      %v288 = vld [vmem:[#allocation2 + $0xd0] sm:$0xff]
      %v289 = vld [vmem:[#allocation2 + $0xd8] sm:$0xff]
      %v290 = vld [vmem:[#allocation2 + $0xe0] sm:$0xff]
      %v291 = vld [vmem:[#allocation2 + $0xe8] sm:$0xff]
      %v292 = vld [vmem:[#allocation2 + $0xf0] sm:$0xff]
      %v293 = vld [vmem:[#allocation2 + $0xf8] sm:$0xff]
      %v294 = vld [vmem:[%s205] sm:$0xff]
      %v295 = vld [vmem:[%s205 + $0x8] sm:$0xff]
      %v296 = vld [vmem:[%s205 + $0x10] sm:$0xff]
      %v297 = vld [vmem:[%s205 + $0x18] sm:$0xff]
      %v298 = vld [vmem:[%s205 + $0x20] sm:$0xff]
      %v299 = vld [vmem:[%s205 + $0x28] sm:$0xff]
      %v300 = vld [vmem:[%s205 + $0x30] sm:$0xff]
      %v301 = vld [vmem:[%s205 + $0x38] sm:$0xff]
      %v302 = vld [vmem:[%s205 + $0x40] sm:$0xff]
      %v303 = vld [vmem:[%s205 + $0x48] sm:$0xff]
      %v304 = vld [vmem:[%s205 + $0x50] sm:$0xff]
      %v305 = vld [vmem:[%s205 + $0x58] sm:$0xff]
      %v306 = vld [vmem:[%s205 + $0x60] sm:$0xff]
      %v307 = vld [vmem:[%s205 + $0x68] sm:$0xff]
      %v308 = vld [vmem:[%s205 + $0x70] sm:$0xff]
      %v309 = vld [vmem:[%s205 + $0x78] sm:$0xff]
      %v310 = vld [vmem:[%s205 + $0x80] sm:$0xff]
      %v311 = vld [vmem:[%s205 + $0x88] sm:$0xff]
      %v312 = vld [vmem:[%s205 + $0x90] sm:$0xff]
      %v313 = vld [vmem:[%s205 + $0x98] sm:$0xff]
      %v314 = vld [vmem:[%s205 + $0xa0] sm:$0xff]
      %v315 = vld [vmem:[%s205 + $0xa8] sm:$0xff]
      %v316 = vld [vmem:[%s205 + $0xb0] sm:$0xff]
      %v317 = vld [vmem:[%s205 + $0xb8] sm:$0xff]
      %v318 = vld [vmem:[%s205 + $0xc0] sm:$0xff]
      %v319 = vld [vmem:[%s205 + $0xc8] sm:$0xff]
      %v320 = vld [vmem:[%s205 + $0xd0] sm:$0xff]
      %v321 = vld [vmem:[%s205 + $0xd8] sm:$0xff]
      %v322 = vld [vmem:[%s205 + $0xe0] sm:$0xff]
      %v323 = vld [vmem:[%s205 + $0xe8] sm:$0xff]
      %v324 = vld [vmem:[%s205 + $0xf0] sm:$0xff]
      %v325 = vld [vmem:[%s205 + $0xf8] sm:$0xff]
      %v326 = vld [vmem:[%s215] sm:$0xf]
      %v327 = vld [vmem:[%s215 + $0x4] sm:$0xf]
      %v328 = vld [vmem:[%s215 + $0x8] sm:$0xf]
      %v329 = vld [vmem:[%s215 + $0xc] sm:$0xf]
      %v330 = vld [vmem:[%s215 + $0x10] sm:$0xf]
      %v331 = vld [vmem:[%s215 + $0x14] sm:$0xf]
      %v332 = vld [vmem:[%s215 + $0x18] sm:$0xf]
      %v333 = vld [vmem:[%s215 + $0x1c] sm:$0xf]
      %v334 = vld [vmem:[%s215 + $0x20] sm:$0xf]
      %v335 = vld [vmem:[%s215 + $0x24] sm:$0xf]
      %v336 = vld [vmem:[%s215 + $0x28] sm:$0xf]
      %v337 = vld [vmem:[%s215 + $0x2c] sm:$0xf]
      %v338 = vld [vmem:[%s215 + $0x30] sm:$0xf]
      %v339 = vld [vmem:[%s215 + $0x34] sm:$0xf]
      %v340 = vld [vmem:[%s215 + $0x38] sm:$0xf]
      %v341 = vld [vmem:[%s215 + $0x3c] sm:$0xf]
      %v342 = vld [vmem:[%s215 + $0x40] sm:$0xf]
      %v343 = vld [vmem:[%s215 + $0x44] sm:$0xf]
      %v344 = vld [vmem:[%s215 + $0x48] sm:$0xf]
      %v345 = vld [vmem:[%s215 + $0x4c] sm:$0xf]
      %v346 = vld [vmem:[%s215 + $0x50] sm:$0xf]
      %v347 = vld [vmem:[%s215 + $0x54] sm:$0xf]
      %v348 = vld [vmem:[%s215 + $0x58] sm:$0xf]
      %v349 = vld [vmem:[%s215 + $0x5c] sm:$0xf]
      %v350 = vld [vmem:[%s215 + $0x60] sm:$0xf]
      %v351 = vld [vmem:[%s215 + $0x64] sm:$0xf]
      %v352 = vld [vmem:[%s215 + $0x68] sm:$0xf]
      %v353 = vld [vmem:[%s215 + $0x6c] sm:$0xf]
      %v354 = vld [vmem:[%s215 + $0x70] sm:$0xf]
      %v355 = vld [vmem:[%s215 + $0x74] sm:$0xf]
      %v356 = vld [vmem:[%s215 + $0x78] sm:$0xf]
      %v357 = vld [vmem:[%s215 + $0x7c] sm:$0xf]
      %v390 = vunpack.c.l.b16 %v294
      %v391 = vunpack.c.h.b16 %v294
      %v392 = vunpack.c.l.b16 %v295
      %v393 = vunpack.c.h.b16 %v295
      %v394 = vunpack.c.l.b16 %v296
      %v395 = vunpack.c.h.b16 %v296
      %v396 = vunpack.c.l.b16 %v297
      %v397 = vunpack.c.h.b16 %v297
      %v398 = vunpack.c.l.b16 %v298
      %v399 = vunpack.c.h.b16 %v298
      %v400 = vunpack.c.l.b16 %v299
      %v401 = vunpack.c.h.b16 %v299
      %v402 = vunpack.c.l.b16 %v300
      %v403 = vunpack.c.h.b16 %v300
      %v404 = vunpack.c.l.b16 %v301
      %v405 = vunpack.c.h.b16 %v301
      %v406 = vunpack.c.l.b16 %v302
      %v407 = vunpack.c.h.b16 %v302
      %v408 = vunpack.c.l.b16 %v303
      %v409 = vunpack.c.h.b16 %v303
      %v410 = vunpack.c.l.b16 %v304
      %v411 = vunpack.c.h.b16 %v304
      %v412 = vunpack.c.l.b16 %v305
      %v413 = vunpack.c.h.b16 %v305
      %v414 = vunpack.c.l.b16 %v306
      %v415 = vunpack.c.h.b16 %v306
      %v416 = vunpack.c.l.b16 %v307
      %v417 = vunpack.c.h.b16 %v307
      %v418 = vunpack.c.l.b16 %v308
      %v419 = vunpack.c.h.b16 %v308
      %v420 = vunpack.c.l.b16 %v309
      %v421 = vunpack.c.h.b16 %v309
      %v422 = vunpack.c.l.b16 %v310
      %v423 = vunpack.c.h.b16 %v310
      %v424 = vunpack.c.l.b16 %v311
      %v425 = vunpack.c.h.b16 %v311
      %v426 = vunpack.c.l.b16 %v312
      %v427 = vunpack.c.h.b16 %v312
      %v428 = vunpack.c.l.b16 %v313
      %v429 = vunpack.c.h.b16 %v313
      %v430 = vunpack.c.l.b16 %v314
      %v431 = vunpack.c.h.b16 %v314
      %v432 = vunpack.c.l.b16 %v315
      %v433 = vunpack.c.h.b16 %v315
      %v434 = vunpack.c.l.b16 %v316
      %v435 = vunpack.c.h.b16 %v316
      %v436 = vunpack.c.l.b16 %v317
      %v437 = vunpack.c.h.b16 %v317
      %v438 = vunpack.c.l.b16 %v318
      %v439 = vunpack.c.h.b16 %v318
      %v440 = vunpack.c.l.b16 %v319
      %v441 = vunpack.c.h.b16 %v319
      %v442 = vunpack.c.l.b16 %v320
      %v443 = vunpack.c.h.b16 %v320
      %v444 = vunpack.c.l.b16 %v321
      %v445 = vunpack.c.h.b16 %v321
      %v446 = vunpack.c.l.b16 %v322
      %v447 = vunpack.c.h.b16 %v322
      %v448 = vunpack.c.l.b16 %v323
      %v449 = vunpack.c.h.b16 %v323
      %v450 = vunpack.c.l.b16 %v324
      %v451 = vunpack.c.h.b16 %v324
      %v452 = vunpack.c.l.b16 %v325
      %v453 = vunpack.c.h.b16 %v325
      %v454 = vpack.c.b16 %v392, %v390
      %v455 = vpack.c.b16 %v393, %v391
      %v456 = vpack.c.b16 %v396, %v394
      %v457 = vpack.c.b16 %v397, %v395
      %v458 = vpack.c.b16 %v400, %v398
      %v459 = vpack.c.b16 %v401, %v399
      %v460 = vpack.c.b16 %v404, %v402
      %v461 = vpack.c.b16 %v405, %v403
      %v462 = vpack.c.b16 %v408, %v406
      %v463 = vpack.c.b16 %v409, %v407
      %v464 = vpack.c.b16 %v412, %v410
      %v465 = vpack.c.b16 %v413, %v411
      %v466 = vpack.c.b16 %v416, %v414
      %v467 = vpack.c.b16 %v417, %v415
      %v468 = vpack.c.b16 %v420, %v418
      %v469 = vpack.c.b16 %v421, %v419
      %v470 = vpack.c.b16 %v424, %v422
      %v471 = vpack.c.b16 %v425, %v423
      %v472 = vpack.c.b16 %v428, %v426
      %v473 = vpack.c.b16 %v429, %v427
      %v474 = vpack.c.b16 %v432, %v430
      %v475 = vpack.c.b16 %v433, %v431
      %v476 = vpack.c.b16 %v436, %v434
      %v477 = vpack.c.b16 %v437, %v435
      %v478 = vpack.c.b16 %v440, %v438
      %v479 = vpack.c.b16 %v441, %v439
      %v480 = vpack.c.b16 %v444, %v442
      %v481 = vpack.c.b16 %v445, %v443
      %v482 = vpack.c.b16 %v448, %v446
      %v483 = vpack.c.b16 %v449, %v447
      %v484 = vpack.c.b16 %v452, %v450
      %v485 = vpack.c.b16 %v453, %v451
      %v550 = vunpack.c.l.b16 %v326
      %v551 = vunpack.c.l.b16 %v327
      %v552 = vunpack.c.l.b16 %v328
      %v553 = vunpack.c.l.b16 %v329
      %v554 = vunpack.c.l.b16 %v330
      %v555 = vunpack.c.l.b16 %v331
      %v556 = vunpack.c.l.b16 %v332
      %v557 = vunpack.c.l.b16 %v333
      %v558 = vunpack.c.l.b16 %v334
      %v559 = vunpack.c.l.b16 %v335
      %v560 = vunpack.c.l.b16 %v336
      %v561 = vunpack.c.l.b16 %v337
      %v562 = vunpack.c.l.b16 %v338
      %v563 = vunpack.c.l.b16 %v339
      %v564 = vunpack.c.l.b16 %v340
      %v565 = vunpack.c.l.b16 %v341
      %v566 = vunpack.c.l.b16 %v342
      %v567 = vunpack.c.l.b16 %v343
      %v568 = vunpack.c.l.b16 %v344
      %v569 = vunpack.c.l.b16 %v345
      %v570 = vunpack.c.l.b16 %v346
      %v571 = vunpack.c.l.b16 %v347
      %v572 = vunpack.c.l.b16 %v348
      %v573 = vunpack.c.l.b16 %v349
      %v574 = vunpack.c.l.b16 %v350
      %v575 = vunpack.c.l.b16 %v351
      %v576 = vunpack.c.l.b16 %v352
      %v577 = vunpack.c.l.b16 %v353
      %v578 = vunpack.c.l.b16 %v354
      %v579 = vunpack.c.l.b16 %v355
      %v580 = vunpack.c.l.b16 %v356
      %v581 = vunpack.c.l.b16 %v357
      %v582 = vpack.c.b16 %v551, %v550
      %v583 = vpack.c.b16 %v553, %v552
      %v584 = vpack.c.b16 %v555, %v554
      %v585 = vpack.c.b16 %v557, %v556
      %v586 = vpack.c.b16 %v559, %v558
      %v587 = vpack.c.b16 %v561, %v560
      %v588 = vpack.c.b16 %v563, %v562
      %v589 = vpack.c.b16 %v565, %v564
      %v590 = vpack.c.b16 %v567, %v566
      %v591 = vpack.c.b16 %v569, %v568
      %v592 = vpack.c.b16 %v571, %v570
      %v593 = vpack.c.b16 %v573, %v572
      %v594 = vpack.c.b16 %v575, %v574
      %v595 = vpack.c.b16 %v577, %v576
      %v596 = vpack.c.b16 %v579, %v578
      %v597 = vpack.c.b16 %v581, %v580
      %614 = vmatpush.bf16.msra.mxu0 %v589
      %615 = vmatpush.bf16.msra.mxu0 %v588
      %616 = vmatpush.bf16.msra.mxu0 %v587
      %617 = vmatpush.bf16.msra.mxu0 %v586
      %618 = vmatpush.bf16.msra.mxu0 %v585
      %619 = vmatpush.bf16.msra.mxu0 %v584
      %620 = vmatpush.bf16.msra.mxu0 %v583
      %621 = vmatpush.bf16.msra.mxu0 %v582
      %622 = vmatmul.bf16.gmra.mxu0 %v454
      %v623 = vpop.f32.mrf.mxu0
      %v624 = vadd.f32 0.0, %v623
      %v625 = vpop.f32.mrf.mxu0
      %v626 = vadd.f32 0.0, %v625
      %627 = vmatmul.bf16.gmra.mxu0 %v456
      %v628 = vpop.f32.mrf.mxu0
      %v629 = vadd.f32 0.0, %v628
      %v630 = vpop.f32.mrf.mxu0
      %v631 = vadd.f32 0.0, %v630
      %632 = vmatmul.bf16.gmra.mxu0 %v458
      %v633 = vpop.f32.mrf.mxu0
      %v634 = vadd.f32 0.0, %v633
      %v635 = vpop.f32.mrf.mxu0
      %v636 = vadd.f32 0.0, %v635
      %637 = vmatmul.bf16.gmra.mxu0 %v460
      %v638 = vpop.f32.mrf.mxu0
      %v639 = vadd.f32 0.0, %v638
      %v640 = vpop.f32.mrf.mxu0
      %v641 = vadd.f32 0.0, %v640
      %642 = vmatmul.bf16.gmra.mxu0 %v462
      %v643 = vpop.f32.mrf.mxu0
      %v644 = vadd.f32 0.0, %v643
      %v645 = vpop.f32.mrf.mxu0
      %v646 = vadd.f32 0.0, %v645
      %647 = vmatmul.bf16.gmra.mxu0 %v464
      %v648 = vpop.f32.mrf.mxu0
      %v649 = vadd.f32 0.0, %v648
      %v650 = vpop.f32.mrf.mxu0
      %v651 = vadd.f32 0.0, %v650
      %652 = vmatmul.bf16.gmra.mxu0 %v466
      %v653 = vpop.f32.mrf.mxu0
      %v654 = vadd.f32 0.0, %v653
      %v655 = vpop.f32.mrf.mxu0
      %v656 = vadd.f32 0.0, %v655
      %657 = vmatmul.bf16.gmra.mxu0 %v468
      %v658 = vpop.f32.mrf.mxu0
      %v659 = vadd.f32 0.0, %v658
      %v660 = vpop.f32.mrf.mxu0
      %v661 = vadd.f32 0.0, %v660
      %662 = vmatmul.bf16.gmra.mxu0 %v470
      %v663 = vpop.f32.mrf.mxu0
      %v664 = vadd.f32 0.0, %v663
      %v665 = vpop.f32.mrf.mxu0
      %v666 = vadd.f32 0.0, %v665
      %667 = vmatmul.bf16.gmra.mxu0 %v472
      %v668 = vpop.f32.mrf.mxu0
      %v669 = vadd.f32 0.0, %v668
      %v670 = vpop.f32.mrf.mxu0
      %v671 = vadd.f32 0.0, %v670
      %672 = vmatmul.bf16.gmra.mxu0 %v474
      %v673 = vpop.f32.mrf.mxu0
      %v674 = vadd.f32 0.0, %v673
      %v675 = vpop.f32.mrf.mxu0
      %v676 = vadd.f32 0.0, %v675
      %677 = vmatmul.bf16.gmra.mxu0 %v476
      %v678 = vpop.f32.mrf.mxu0
      %v679 = vadd.f32 0.0, %v678
      %v680 = vpop.f32.mrf.mxu0
      %v681 = vadd.f32 0.0, %v680
      %682 = vmatmul.bf16.gmra.mxu0 %v478
      %v683 = vpop.f32.mrf.mxu0
      %v684 = vadd.f32 0.0, %v683
      %v685 = vpop.f32.mrf.mxu0
      %v686 = vadd.f32 0.0, %v685
      %687 = vmatmul.bf16.gmra.mxu0 %v480
      %v688 = vpop.f32.mrf.mxu0
      %v689 = vadd.f32 0.0, %v688
      %v690 = vpop.f32.mrf.mxu0
      %v691 = vadd.f32 0.0, %v690
      %692 = vmatmul.bf16.gmra.mxu0 %v482
      %v693 = vpop.f32.mrf.mxu0
      %v694 = vadd.f32 0.0, %v693
      %v695 = vpop.f32.mrf.mxu0
      %v696 = vadd.f32 0.0, %v695
      %697 = vmatmul.bf16.gmra.mxu0 %v484
      %v698 = vpop.f32.mrf.mxu0
      %v699 = vadd.f32 0.0, %v698
      %v700 = vpop.f32.mrf.mxu0
      %v701 = vadd.f32 0.0, %v700
      %702 = vdwg.mxu0
      %703 = vmatpush.bf16.msra.mxu0 %v597
      %704 = vmatpush.bf16.msra.mxu0 %v596
      %705 = vmatpush.bf16.msra.mxu0 %v595
      %706 = vmatpush.bf16.msra.mxu0 %v594
      %707 = vmatpush.bf16.msra.mxu0 %v593
      %708 = vmatpush.bf16.msra.mxu0 %v592
      %709 = vmatpush.bf16.msra.mxu0 %v591
      %710 = vmatpush.bf16.msra.mxu0 %v590
      %711 = vmatmul.bf16.gmra.mxu0 %v455
      %v712 = vpop.f32.mrf.mxu0
      %v713 = vadd.f32 %v624, %v712
      %v714 = vpop.f32.mrf.mxu0
      %v715 = vadd.f32 %v626, %v714
      %716 = vmatmul.bf16.gmra.mxu0 %v457
      %v717 = vpop.f32.mrf.mxu0
      %v718 = vadd.f32 %v629, %v717
      %v719 = vpop.f32.mrf.mxu0
      %v720 = vadd.f32 %v631, %v719
      %721 = vmatmul.bf16.gmra.mxu0 %v459
      %v722 = vpop.f32.mrf.mxu0
      %v723 = vadd.f32 %v634, %v722
      %v724 = vpop.f32.mrf.mxu0
      %v725 = vadd.f32 %v636, %v724
      %726 = vmatmul.bf16.gmra.mxu0 %v461
      %v727 = vpop.f32.mrf.mxu0
      %v728 = vadd.f32 %v639, %v727
      %v729 = vpop.f32.mrf.mxu0
      %v730 = vadd.f32 %v641, %v729
      %731 = vmatmul.bf16.gmra.mxu0 %v463
      %v732 = vpop.f32.mrf.mxu0
      %v733 = vadd.f32 %v644, %v732
      %v734 = vpop.f32.mrf.mxu0
      %v735 = vadd.f32 %v646, %v734
      %736 = vmatmul.bf16.gmra.mxu0 %v465
      %v737 = vpop.f32.mrf.mxu0
      %v738 = vadd.f32 %v649, %v737
      %v739 = vpop.f32.mrf.mxu0
      %v740 = vadd.f32 %v651, %v739
      %741 = vmatmul.bf16.gmra.mxu0 %v467
      %v742 = vpop.f32.mrf.mxu0
      %v743 = vadd.f32 %v654, %v742
      %v744 = vpop.f32.mrf.mxu0
      %v745 = vadd.f32 %v656, %v744
      %746 = vmatmul.bf16.gmra.mxu0 %v469
      %v747 = vpop.f32.mrf.mxu0
      %v748 = vadd.f32 %v659, %v747
      %v749 = vpop.f32.mrf.mxu0
      %v750 = vadd.f32 %v661, %v749
      %751 = vmatmul.bf16.gmra.mxu0 %v471
      %v752 = vpop.f32.mrf.mxu0
      %v753 = vadd.f32 %v664, %v752
      %v754 = vpop.f32.mrf.mxu0
      %v755 = vadd.f32 %v666, %v754
      %756 = vmatmul.bf16.gmra.mxu0 %v473
      %v757 = vpop.f32.mrf.mxu0
      %v758 = vadd.f32 %v669, %v757
      %v759 = vpop.f32.mrf.mxu0
      %v760 = vadd.f32 %v671, %v759
      %761 = vmatmul.bf16.gmra.mxu0 %v475
      %v762 = vpop.f32.mrf.mxu0
      %v763 = vadd.f32 %v674, %v762
      %v764 = vpop.f32.mrf.mxu0
      %v765 = vadd.f32 %v676, %v764
      %766 = vmatmul.bf16.gmra.mxu0 %v477
      %v767 = vpop.f32.mrf.mxu0
      %v768 = vadd.f32 %v679, %v767
      %v769 = vpop.f32.mrf.mxu0
      %v770 = vadd.f32 %v681, %v769
      %771 = vmatmul.bf16.gmra.mxu0 %v479
      %v772 = vpop.f32.mrf.mxu0
      %v773 = vadd.f32 %v684, %v772
      %v774 = vpop.f32.mrf.mxu0
      %v775 = vadd.f32 %v686, %v774
      %776 = vmatmul.bf16.gmra.mxu0 %v481
      %v777 = vpop.f32.mrf.mxu0
      %v778 = vadd.f32 %v689, %v777
      %v779 = vpop.f32.mrf.mxu0
      %v780 = vadd.f32 %v691, %v779
      %781 = vmatmul.bf16.gmra.mxu0 %v483
      %v782 = vpop.f32.mrf.mxu0
      %v783 = vadd.f32 %v694, %v782
      %v784 = vpop.f32.mrf.mxu0
      %v785 = vadd.f32 %v696, %v784
      %786 = vmatmul.bf16.gmra.mxu0 %v485
      %v787 = vpop.f32.mrf.mxu0
      %v788 = vadd.f32 %v699, %v787
      %v789 = vpop.f32.mrf.mxu0
      %v790 = vadd.f32 %v701, %v789
      %791 = vdwg.mxu0
      %v792 = vadd.f32 %v262, %v713
      %v793 = vadd.f32 %v263, %v715
      %v794 = vadd.f32 %v264, %v718
      %v795 = vadd.f32 %v265, %v720
      %v796 = vadd.f32 %v266, %v723
      %v797 = vadd.f32 %v267, %v725
      %v798 = vadd.f32 %v268, %v728
      %v799 = vadd.f32 %v269, %v730
      %v800 = vadd.f32 %v270, %v733
      %v801 = vadd.f32 %v271, %v735
      %v802 = vadd.f32 %v272, %v738
      %v803 = vadd.f32 %v273, %v740
      %v804 = vadd.f32 %v274, %v743
      %v805 = vadd.f32 %v275, %v745
      %v806 = vadd.f32 %v276, %v748
      %v807 = vadd.f32 %v277, %v750
      %v808 = vadd.f32 %v278, %v753
      %v809 = vadd.f32 %v279, %v755
      %v810 = vadd.f32 %v280, %v758
      %v811 = vadd.f32 %v281, %v760
      %v812 = vadd.f32 %v282, %v763
      %v813 = vadd.f32 %v283, %v765
      %v814 = vadd.f32 %v284, %v768
      %v815 = vadd.f32 %v285, %v770
      %v816 = vadd.f32 %v286, %v773
      %v817 = vadd.f32 %v287, %v775
      %v818 = vadd.f32 %v288, %v778
      %v819 = vadd.f32 %v289, %v780
      %v820 = vadd.f32 %v290, %v783
      %v821 = vadd.f32 %v291, %v785
      %v822 = vadd.f32 %v292, %v788
      %v823 = vadd.f32 %v293, %v790
      %824 = vst [vmem:[#allocation2] sm:$0xff] %v792
      %825 = vst [vmem:[#allocation2 + $0x8] sm:$0xff] %v793
      %826 = vst [vmem:[#allocation2 + $0x10] sm:$0xff] %v794
      %827 = vst [vmem:[#allocation2 + $0x18] sm:$0xff] %v795
      %828 = vst [vmem:[#allocation2 + $0x20] sm:$0xff] %v796
      %829 = vst [vmem:[#allocation2 + $0x28] sm:$0xff] %v797
      %830 = vst [vmem:[#allocation2 + $0x30] sm:$0xff] %v798
      %831 = vst [vmem:[#allocation2 + $0x38] sm:$0xff] %v799
      %832 = vst [vmem:[#allocation2 + $0x40] sm:$0xff] %v800
      %833 = vst [vmem:[#allocation2 + $0x48] sm:$0xff] %v801
      %834 = vst [vmem:[#allocation2 + $0x50] sm:$0xff] %v802
      %835 = vst [vmem:[#allocation2 + $0x58] sm:$0xff] %v803
      %836 = vst [vmem:[#allocation2 + $0x60] sm:$0xff] %v804
      %837 = vst [vmem:[#allocation2 + $0x68] sm:$0xff] %v805
      %838 = vst [vmem:[#allocation2 + $0x70] sm:$0xff] %v806
      %839 = vst [vmem:[#allocation2 + $0x78] sm:$0xff] %v807
      %840 = vst [vmem:[#allocation2 + $0x80] sm:$0xff] %v808
      %841 = vst [vmem:[#allocation2 + $0x88] sm:$0xff] %v809
      %842 = vst [vmem:[#allocation2 + $0x90] sm:$0xff] %v810
      %843 = vst [vmem:[#allocation2 + $0x98] sm:$0xff] %v811
      %844 = vst [vmem:[#allocation2 + $0xa0] sm:$0xff] %v812
      %845 = vst [vmem:[#allocation2 + $0xa8] sm:$0xff] %v813
      %846 = vst [vmem:[#allocation2 + $0xb0] sm:$0xff] %v814
      %847 = vst [vmem:[#allocation2 + $0xb8] sm:$0xff] %v815
      %848 = vst [vmem:[#allocation2 + $0xc0] sm:$0xff] %v816
      %849 = vst [vmem:[#allocation2 + $0xc8] sm:$0xff] %v817
      %850 = vst [vmem:[#allocation2 + $0xd0] sm:$0xff] %v818
      %851 = vst [vmem:[#allocation2 + $0xd8] sm:$0xff] %v819
      %852 = vst [vmem:[#allocation2 + $0xe0] sm:$0xff] %v820
      %853 = vst [vmem:[#allocation2 + $0xe8] sm:$0xff] %v821
      %854 = vst [vmem:[#allocation2 + $0xf0] sm:$0xff] %v822
      %855 = vst [vmem:[#allocation2 + $0xf8] sm:$0xff] %v823
      // Predicated region
      $region33: #{resnet_generator_forward.34} parent=27 // pred_check
        %p856 = pneg %p226
      $region34: #{resnet_generator_forward.34} parent=27 // pred_check_branch
        %858 = sbr.rel (%p856) target = $region36
      $region35: #{resnet_generator_forward.34} parent=27 // pred_region
        %v859 = vld [vmem:[#allocation2] sm:$0xff]
        %v860 = vld [vmem:[#allocation2 + $0x8] sm:$0xff]
        %v861 = vld [vmem:[#allocation2 + $0x10] sm:$0xff]
        %v862 = vld [vmem:[#allocation2 + $0x18] sm:$0xff]
        %v863 = vld [vmem:[#allocation2 + $0x20] sm:$0xff]
        %v864 = vld [vmem:[#allocation2 + $0x28] sm:$0xff]
        %v865 = vld [vmem:[#allocation2 + $0x30] sm:$0xff]
        %v866 = vld [vmem:[#allocation2 + $0x38] sm:$0xff]
        %v867 = vld [vmem:[#allocation2 + $0x40] sm:$0xff]
        %v868 = vld [vmem:[#allocation2 + $0x48] sm:$0xff]
        %v869 = vld [vmem:[#allocation2 + $0x50] sm:$0xff]
        %v870 = vld [vmem:[#allocation2 + $0x58] sm:$0xff]
        %v871 = vld [vmem:[#allocation2 + $0x60] sm:$0xff]
        %v872 = vld [vmem:[#allocation2 + $0x68] sm:$0xff]
        %v873 = vld [vmem:[#allocation2 + $0x70] sm:$0xff]
        %v874 = vld [vmem:[#allocation2 + $0x78] sm:$0xff]
        %v875 = vld [vmem:[#allocation2 + $0x80] sm:$0xff]
        %v876 = vld [vmem:[#allocation2 + $0x88] sm:$0xff]
        %v877 = vld [vmem:[#allocation2 + $0x90] sm:$0xff]
        %v878 = vld [vmem:[#allocation2 + $0x98] sm:$0xff]
        %v879 = vld [vmem:[#allocation2 + $0xa0] sm:$0xff]
        %v880 = vld [vmem:[#allocation2 + $0xa8] sm:$0xff]
        %v881 = vld [vmem:[#allocation2 + $0xb0] sm:$0xff]
        %v882 = vld [vmem:[#allocation2 + $0xb8] sm:$0xff]
        %v883 = vld [vmem:[#allocation2 + $0xc0] sm:$0xff]
        %v884 = vld [vmem:[#allocation2 + $0xc8] sm:$0xff]
        %v885 = vld [vmem:[#allocation2 + $0xd0] sm:$0xff]
        %v886 = vld [vmem:[#allocation2 + $0xd8] sm:$0xff]
        %v887 = vld [vmem:[#allocation2 + $0xe0] sm:$0xff]
        %v888 = vld [vmem:[#allocation2 + $0xe8] sm:$0xff]
        %v889 = vld [vmem:[#allocation2 + $0xf0] sm:$0xff]
        %v890 = vld [vmem:[#allocation2 + $0xf8] sm:$0xff]
        %v891 = vpack.c.bf16 %v859, %v859
        %v892 = vpack.c.bf16 %v860, %v860
        %v893 = vpack.c.bf16 %v861, %v861
        %v894 = vpack.c.bf16 %v862, %v862
        %v895 = vpack.c.bf16 %v863, %v863
        %v896 = vpack.c.bf16 %v864, %v864
        %v897 = vpack.c.bf16 %v865, %v865
        %v898 = vpack.c.bf16 %v866, %v866
        %v899 = vpack.c.bf16 %v867, %v867
        %v900 = vpack.c.bf16 %v868, %v868
        %v901 = vpack.c.bf16 %v869, %v869
        %v902 = vpack.c.bf16 %v870, %v870
        %v903 = vpack.c.bf16 %v871, %v871
        %v904 = vpack.c.bf16 %v872, %v872
        %v905 = vpack.c.bf16 %v873, %v873
        %v906 = vpack.c.bf16 %v874, %v874
        %v907 = vpack.c.bf16 %v875, %v875
        %v908 = vpack.c.bf16 %v876, %v876
        %v909 = vpack.c.bf16 %v877, %v877
        %v910 = vpack.c.bf16 %v878, %v878
        %v911 = vpack.c.bf16 %v879, %v879
        %v912 = vpack.c.bf16 %v880, %v880
        %v913 = vpack.c.bf16 %v881, %v881
        %v914 = vpack.c.bf16 %v882, %v882
        %v915 = vpack.c.bf16 %v883, %v883
        %v916 = vpack.c.bf16 %v884, %v884
        %v917 = vpack.c.bf16 %v885, %v885
        %v918 = vpack.c.bf16 %v886, %v886
        %v919 = vpack.c.bf16 %v887, %v887
        %v920 = vpack.c.bf16 %v888, %v888
        %v921 = vpack.c.bf16 %v889, %v889
        %v922 = vpack.c.bf16 %v890, %v890
        %923 = vst [vmem:[%s224] sm:$0xf] %v891
        %924 = vst [vmem:[%s224 + $0x4] sm:$0xf] %v892
        %925 = vst [vmem:[%s224 + $0x8] sm:$0xf] %v893
        %926 = vst [vmem:[%s224 + $0xc] sm:$0xf] %v894
        %927 = vst [vmem:[%s224 + $0x10] sm:$0xf] %v895
        %928 = vst [vmem:[%s224 + $0x14] sm:$0xf] %v896
        %929 = vst [vmem:[%s224 + $0x18] sm:$0xf] %v897
        %930 = vst [vmem:[%s224 + $0x1c] sm:$0xf] %v898
        %931 = vst [vmem:[%s224 + $0x20] sm:$0xf] %v899
        %932 = vst [vmem:[%s224 + $0x24] sm:$0xf] %v900
        %933 = vst [vmem:[%s224 + $0x28] sm:$0xf] %v901
        %934 = vst [vmem:[%s224 + $0x2c] sm:$0xf] %v902
        %935 = vst [vmem:[%s224 + $0x30] sm:$0xf] %v903
        %936 = vst [vmem:[%s224 + $0x34] sm:$0xf] %v904
        %937 = vst [vmem:[%s224 + $0x38] sm:$0xf] %v905
        %938 = vst [vmem:[%s224 + $0x3c] sm:$0xf] %v906
        %939 = vst [vmem:[%s224 + $0x40] sm:$0xf] %v907
        %940 = vst [vmem:[%s224 + $0x44] sm:$0xf] %v908
        %941 = vst [vmem:[%s224 + $0x48] sm:$0xf] %v909
        %942 = vst [vmem:[%s224 + $0x4c] sm:$0xf] %v910
        %943 = vst [vmem:[%s224 + $0x50] sm:$0xf] %v911
        %944 = vst [vmem:[%s224 + $0x54] sm:$0xf] %v912
        %945 = vst [vmem:[%s224 + $0x58] sm:$0xf] %v913
        %946 = vst [vmem:[%s224 + $0x5c] sm:$0xf] %v914
        %947 = vst [vmem:[%s224 + $0x60] sm:$0xf] %v915
        %948 = vst [vmem:[%s224 + $0x64] sm:$0xf] %v916
        %949 = vst [vmem:[%s224 + $0x68] sm:$0xf] %v917
        %950 = vst [vmem:[%s224 + $0x6c] sm:$0xf] %v918
        %951 = vst [vmem:[%s224 + $0x70] sm:$0xf] %v919
        %952 = vst [vmem:[%s224 + $0x74] sm:$0xf] %v920
        %953 = vst [vmem:[%s224 + $0x78] sm:$0xf] %v921
        %954 = vst [vmem:[%s224 + $0x7c] sm:$0xf] %v922
      $region36: #{resnet_generator_forward.34} parent=27 // pred_fallthru
        _
      %s955 = smul.u32 32, %s18
      %p956 = scmp.lt.s32.totalorder %s955, 63
      %s957 = scalar_select %p956, %s955, 63
      %p958 = scmp.lt.s32.totalorder %s19, 0
      %s959 = scalar_select %p958, %s19, 0
      %s960 = sadd.s32 %s959, %s957
      %s961 = smul.addr %s960, 4
      %s962 = scalar_lea.vmem %s2, %s961
      // Predicated region
      $region37: #{resnet_generator_forward.34} parent=27 // pred_check
        %p963 = pneg %p108
      $region38: #{resnet_generator_forward.34} parent=27 // pred_check_branch
        %965 = sbr.rel (%p963) target = $region40
      $region39: #{resnet_generator_forward.34} parent=27 // pred_region
        %s966 = smul.u32 32, %s18
      $region40: #{resnet_generator_forward.34} parent=27 // pred_fallthru
        _
    $region28: #{resnet_generator_forward.34} parent=5 // pred_fallthru
      _
    %p967 = scmp.le.s32.totalorder 2, %s8
    // Predicated region
    $region41: #{resnet_generator_forward.34} parent=5 // pred_check
      %p968 = pneg %p967
    $region42: #{resnet_generator_forward.34} parent=5 // pred_check_branch
      %970 = sbr.rel (%p968) target = $region44
    $region43: #{resnet_generator_forward.34} parent=5 // pred_region
      %s971 = ssub.s32 %s8, 2
      // Predicated region
      $region45: #{resnet_generator_forward.34} parent=43 // pred_check
        %p972 = pneg %p114
      $region46: #{resnet_generator_forward.34} parent=43 // pred_check_branch
        %974 = sbr.rel (%p972) target = $region48
      $region47: #{resnet_generator_forward.34} parent=43 // pred_region
        %s975 = smul.u32 32, %s21
        %p976 = scmp.lt.s32.totalorder %s975, 63
        %s977 = scalar_select %p976, %s975, 63
        %p978 = scmp.lt.s32.totalorder %s22, 0
        %s979 = scalar_select %p978, %s22, 0
        %s980 = sadd.s32 %s979, %s977
        %s981 = smul.addr %s980, 4
        %s982 = scalar_lea.vmem %s2, %s981
      $region48: #{resnet_generator_forward.34} parent=43 // pred_fallthru
        _
    $region44: #{resnet_generator_forward.34} parent=5 // pred_fallthru
      _
  $region6: #{resnet_generator_forward.34} parent=0 // loop_footer
    %s12 = sadd.s32 1, %s8
  $region7: #{resnet_generator_forward.34} parent=0 // loop_footer_branch
    %7 = sbr.rel target = $region3
  $region8: #{resnet_generator_forward.34} parent=0 // loop_exit
    _

// kernel: resnet_generator_forward.38
$region0: #{resnet_generator_forward.38}
  #allocation0 [shape = 'u32[]', space=smem, size = 0x4, offset = 0x4, fixed_abs, tag = 'smem constant byte address 0x4 - core index']
  #allocation1 [shape = 'u32[72,128]{1,0:T(1,128)}', space=vmem, size = 0x9000, scoped, tag = 'internal scratch']
  %s0 = inlined_call_operand.vmem [shape: bf16[2,64,16], index: 0, kind: input, shape index: {}]
  %s1 = inlined_call_operand.vmem [shape: f32[2,1,16], index: 1, kind: output, shape index: {0}]
  %s2 = inlined_call_operand.vmem [shape: f32[2,1,16], index: 2, kind: output, shape index: {1}]
  %3 = xla_tuple %s1, %s2
  %s4 = sld [smem:[#allocation0]]
  $region53: #{resnet_generator_forward.38} parent=0
    _
  %s6 = ssub.s32 1, %s4
  %s7 = scalar_select 0, %s6, %s4
  loop: start=0, step=1, limit=4
  $region2: #{resnet_generator_forward.38} parent=0 // loop_pre_header
    _
  $region3: #{resnet_generator_forward.38} parent=0 // loop_header
    %s9 = sphi 0, %s13
    %p10 = scmp.ge.s32.totalorder %s9, 4
    %s16 = sphi 0, %s28
    %s17 = sphi 0, %s24
    %s18 = sphi 0, %s16
    %s19 = sphi 0, %s17
    %s20 = sphi 0, %s18
    %s21 = sphi 0, %s19
    %s33 = sphi 0, %s35
    %s36 = sphi 0, %s33
    %s37 = sphi 0, %s36
    %s53 = sphi 0, %s37
    %s59 = sphi 0, %s61
    %s62 = sphi 0, %s59
    %s63 = sphi 0, %s62
    %s79 = sphi 0, %s63
    %s85 = sphi 0, %s87
    %s88 = sphi 0, %s85
    %s89 = sphi 0, %s88
    %s105 = sphi 0, %s89
  $region4: #{resnet_generator_forward.38} parent=0 // loop_header_branch
    %12 = sbr.rel (%p10) target = $region8
  $region5: #{resnet_generator_forward.38} parent=0 // loop_body
    %s14 = ssub.s32 %s9, 1
    %s15 = ssub.s32 %s9, 2
    %s22 = sadd.s32 1, %s17
    %p23 = scmp.ge.s32.totalorder %s22, 1
    %s24 = scalar_select %p23, 0, %s22
    %s25 = sadd.s32 1, %s16
    %s26 = scalar_select %p23, %s25, %s16
    %p27 = scmp.ge.s32.totalorder %s26, 2
    %s28 = scalar_select %p27, 0, %s26
    %s29 = ssub.s32 %s16, %s28
    %s30 = ssub.s32 %s17, %s24
    %s31 = sor.u32 %s29, %s30
    %p32 = scmp.eq.s32.totalorder %s31, 0
    %s34 = sadd.s32 %s33, 1
    %s35 = scalar_select %p32, %s33, %s34
    %p38 = pneg %p32
    %p39 = scmp.eq.s32.totalorder %s9, 1
    %p40 = por %p38, %p39
    %p41 = scmp.ne.s32.totalorder %s33, %s36
    %p42 = scmp.eq.s32.totalorder %s9, 0
    %p43 = por %p41, %p42
    %p44 = scmp.ne.s32.totalorder %s33, %s36
    %p45 = scmp.eq.s32.totalorder %s14, 1
    %p46 = por %p44, %p45
    %p47 = scmp.ne.s32.totalorder %s36, %s37
    %p48 = scmp.eq.s32.totalorder %s14, 0
    %p49 = por %p47, %p48
    %p50 = scmp.ne.s32.totalorder %s36, %s37
    %p51 = scmp.eq.s32.totalorder %s15, 1
    %p52 = por %p50, %p51
    %p54 = scmp.ne.s32.totalorder %s37, %s53
    %p55 = scmp.eq.s32.totalorder %s15, 0
    %p56 = por %p54, %p55
    %s57 = ssub.s32 %s16, %s28
    %p58 = scmp.eq.s32.totalorder %s57, 0
    %s60 = sadd.s32 %s59, 1
    %s61 = scalar_select %p58, %s59, %s60
    %p64 = pneg %p58
    %p65 = scmp.eq.s32.totalorder %s9, 1
    %p66 = por %p64, %p65
    %p67 = scmp.ne.s32.totalorder %s59, %s62
    %p68 = scmp.eq.s32.totalorder %s9, 0
    %p69 = por %p67, %p68
    %p70 = scmp.ne.s32.totalorder %s59, %s62
    %p71 = scmp.eq.s32.totalorder %s14, 1
    %p72 = por %p70, %p71
    %p73 = scmp.ne.s32.totalorder %s62, %s63
    %p74 = scmp.eq.s32.totalorder %s14, 0
    %p75 = por %p73, %p74
    %p76 = scmp.ne.s32.totalorder %s62, %s63
    %p77 = scmp.eq.s32.totalorder %s15, 1
    %p78 = por %p76, %p77
    %p80 = scmp.ne.s32.totalorder %s63, %s79
    %p81 = scmp.eq.s32.totalorder %s15, 0
    %p82 = por %p80, %p81
    %s83 = ssub.s32 %s16, %s28
    %p84 = scmp.eq.s32.totalorder %s83, 0
    %s86 = sadd.s32 %s85, 1
    %s87 = scalar_select %p84, %s85, %s86
    %p90 = pneg %p84
    %p91 = scmp.eq.s32.totalorder %s9, 1
    %p92 = por %p90, %p91
    %p93 = scmp.ne.s32.totalorder %s85, %s88
    %p94 = scmp.eq.s32.totalorder %s9, 0
    %p95 = por %p93, %p94
    %p96 = scmp.ne.s32.totalorder %s85, %s88
    %p97 = scmp.eq.s32.totalorder %s14, 1
    %p98 = por %p96, %p97
    %p99 = scmp.ne.s32.totalorder %s88, %s89
    %p100 = scmp.eq.s32.totalorder %s14, 0
    %p101 = por %p99, %p100
    %p102 = scmp.ne.s32.totalorder %s88, %s89
    %p103 = scmp.eq.s32.totalorder %s15, 1
    %p104 = por %p102, %p103
    %p106 = scmp.ne.s32.totalorder %s89, %s105
    %p107 = scmp.eq.s32.totalorder %s15, 0
    %p108 = por %p106, %p107
    %p109 = scmp.le.s32.totalorder 1, %s9
    %p110 = scmp.lt.s32.totalorder %s9, 3
    %p111 = pnand %p109, %p110
    %p112 = pneg %p111
    // Predicated region
    $region9: #{resnet_generator_forward.38} parent=5 // pred_check
      _
    $region10: #{resnet_generator_forward.38} parent=5 // pred_check_branch
      %114 = sbr.rel (%p111) target = $region12
    $region11: #{resnet_generator_forward.38} parent=5 // pred_region
      %s115 = ssub.s32 %s9, 1
    $region12: #{resnet_generator_forward.38} parent=5 // pred_fallthru
      _
    %p116 = scmp.lt.s32.totalorder %s9, 2
    // Predicated region
    $region13: #{resnet_generator_forward.38} parent=5 // pred_check
      %p117 = pneg %p116
    $region14: #{resnet_generator_forward.38} parent=5 // pred_check_branch
      %119 = sbr.rel (%p117) target = $region16
    $region15: #{resnet_generator_forward.38} parent=5 // pred_region
      // Predicated region
      $region17: #{resnet_generator_forward.38} parent=15 // pred_check
        %p120 = pneg %p43
      $region18: #{resnet_generator_forward.38} parent=15 // pred_check_branch
        %122 = sbr.rel (%p120) target = $region20
      $region19: #{resnet_generator_forward.38} parent=15 // pred_region
        %s123 = smul.u32 8, %s17
        %p124 = scmp.lt.s32.totalorder %s16, 1
        %s125 = scalar_select %p124, %s16, 1
        %p126 = scmp.lt.s32.totalorder %s123, 7
        %s127 = scalar_select %p126, %s123, 7
        %s128 = smul.addr %s125, 8
        %s129 = sadd.s32 %s127, %s128
        %s130 = smul.addr %s129, 4
        %s131 = scalar_lea.vmem %s0, %s130
        %s132 = smul.u32 8, %s17
      $region20: #{resnet_generator_forward.38} parent=15 // pred_fallthru
        _
    $region16: #{resnet_generator_forward.38} parent=5 // pred_fallthru
      _
    %p133 = scmp.le.s32.totalorder 1, %s9
    %p134 = scmp.lt.s32.totalorder %s9, 3
    %p135 = pnand %p133, %p134
    %p136 = pneg %p135
    // Predicated region
    $region21: #{resnet_generator_forward.38} parent=5 // pred_check
      _
    $region22: #{resnet_generator_forward.38} parent=5 // pred_check_branch
      %138 = sbr.rel (%p135) target = $region24
    $region23: #{resnet_generator_forward.38} parent=5 // pred_region
      %s139 = ssub.s32 %s9, 1
      %s140 = smul.u32 8, %s19
      %p141 = scmp.lt.s32.totalorder %s18, 1
      %s142 = scalar_select %p141, %s18, 1
      %p143 = scmp.lt.s32.totalorder %s140, 7
      %s144 = scalar_select %p143, %s140, 7
      %s145 = smul.addr %s142, 8
      %s146 = sadd.s32 %s144, %s145
      %s147 = smul.addr %s146, 4
      %s148 = scalar_lea.vmem %s0, %s147
      %p149 = pneg %p49
      %p150 = pneg %p46
      %p151 = pneg %p75
      %p152 = pneg %p72
      %p153 = scmp.lt.s32.totalorder %s18, 1
      %s154 = scalar_select %p153, %s18, 1
      %s155 = scalar_lea.vmem %s1, %s154
      %p156 = pneg %p101
      %p157 = pneg %p98
      %p158 = scmp.lt.s32.totalorder %s18, 1
      %s159 = scalar_select %p158, %s18, 1
      %s160 = scalar_lea.vmem %s2, %s159
      %s161 = smul.u32 8, %s19
      %p162 = scmp.lt.s32.totalorder %s18, 1
      %s163 = scalar_select %p162, %s18, 1
      %p164 = scmp.lt.s32.totalorder %s161, 7
      %s165 = scalar_select %p164, %s161, 7
      %s166 = smul.addr %s163, 8
      %s167 = sadd.s32 %s165, %s166
      %s168 = smul.addr %s167, 4
      %s169 = scalar_lea.vmem %s0, %s168
      %s170 = smul.u32 8, %s19
      %p171 = scmp.lt.s32.totalorder %s18, 1
      %s172 = scalar_select %p171, %s18, 1
      %s173 = scalar_lea.vmem %s1, %s172
      %p174 = scmp.lt.s32.totalorder %s18, 1
      %s175 = scalar_select %p174, %s18, 1
      %s176 = scalar_lea.vmem %s2, %s175
      %p177 = scmp.eq.s32.totalorder %s19, 0
      // Predicated region
      $region25: #{resnet_generator_forward.38} parent=23 // pred_check
        %p178 = pneg %p177
      $region26: #{resnet_generator_forward.38} parent=23 // pred_check_branch
        %180 = sbr.rel (%p178) target = $region28
      $region27: #{resnet_generator_forward.38} parent=23 // pred_region
        %vm181 = vcmask 122880
        %182 = vst.msk [vmem:[%s173] sm:$0x1] %vm181, 0.0
        %183 = vst.msk [vmem:[%s176] sm:$0x1] %vm181, 0.0
      $region28: #{resnet_generator_forward.38} parent=23 // pred_fallthru
        _
      %v184 = vld [vmem:[%s169] sm:$0xf]
      %v185 = vld [vmem:[%s169 + $0x4] sm:$0xf]
      %v186 = vld [vmem:[%s169 + $0x8] sm:$0xf]
      %v187 = vld [vmem:[%s169 + $0xc] sm:$0xf]
      %v188 = vld [vmem:[%s169 + $0x10] sm:$0xf]
      %v189 = vld [vmem:[%s169 + $0x14] sm:$0xf]
      %v190 = vld [vmem:[%s169 + $0x18] sm:$0xf]
      %v191 = vld [vmem:[%s169 + $0x1c] sm:$0xf]
      %v192 = vunpack.c.l.bf16 %v184
      %v193 = vunpack.c.l.bf16 %v185
      %v194 = vunpack.c.l.bf16 %v186
      %v195 = vunpack.c.l.bf16 %v187
      %v196 = vunpack.c.l.bf16 %v188
      %v197 = vunpack.c.l.bf16 %v189
      %v198 = vunpack.c.l.bf16 %v190
      %v199 = vunpack.c.l.bf16 %v191
      %v200 = vld [vmem:[%s173] sm:$0x1]
      %vm201 = vcmask 130048
      %v202 = vsel %vm201, %v192, 0.0
      %v203 = vsel %vm201, %v193, 0.0
      %v204 = vadd.f32 %v202, %v203
      %v205 = vsel %vm201, %v194, 0.0
      %v206 = vadd.f32 %v204, %v205
      %v207 = vsel %vm201, %v195, 0.0
      %v208 = vadd.f32 %v206, %v207
      %v209 = vsel %vm201, %v196, 0.0
      %v210 = vadd.f32 %v208, %v209
      %v211 = vsel %vm201, %v197, 0.0
      %v212 = vadd.f32 %v210, %v211
      %v213 = vsel %vm201, %v198, 0.0
      %v214 = vadd.f32 %v212, %v213
      %v215 = vsel %vm201, %v199, 0.0
      %v216 = vadd.f32 %v214, %v215
      %v217 = vrot.slane %v216, 4
      %v218 = vadd.f32 %v216, %v217
      %v219 = vrot.slane %v218, 2
      %v220 = vadd.f32 %v218, %v219
      %v221 = vrot.slane %v220, 1
      %v222 = vadd.f32 %v220, %v221
      %v223 = vadd.f32 %v200, %v222
      %vm224 = vcmask 122880
      %225 = vst.msk [vmem:[%s173] sm:$0x1] %vm224, %v223
      %v226 = vld [vmem:[%s176] sm:$0x1]
      %v227 = vmul.f32 %v192, %v192
      %v228 = vmul.f32 %v193, %v193
      %v229 = vmul.f32 %v194, %v194
      %v230 = vmul.f32 %v195, %v195
      %v231 = vmul.f32 %v196, %v196
      %v232 = vmul.f32 %v197, %v197
      %v233 = vmul.f32 %v198, %v198
      %v234 = vmul.f32 %v199, %v199
      %v235 = vsel %vm201, %v227, 0.0
      %v236 = vsel %vm201, %v228, 0.0
      %v237 = vadd.f32 %v235, %v236
      %v238 = vsel %vm201, %v229, 0.0
      %v239 = vadd.f32 %v237, %v238
      %v240 = vsel %vm201, %v230, 0.0
      %v241 = vadd.f32 %v239, %v240
      %v242 = vsel %vm201, %v231, 0.0
      %v243 = vadd.f32 %v241, %v242
      %v244 = vsel %vm201, %v232, 0.0
      %v245 = vadd.f32 %v243, %v244
      %v246 = vsel %vm201, %v233, 0.0
      %v247 = vadd.f32 %v245, %v246
      %v248 = vsel %vm201, %v234, 0.0
      %v249 = vadd.f32 %v247, %v248
      %v250 = vrot.slane %v249, 4
      %v251 = vadd.f32 %v249, %v250
      %v252 = vrot.slane %v251, 2
      %v253 = vadd.f32 %v251, %v252
      %v254 = vrot.slane %v253, 1
      %v255 = vadd.f32 %v253, %v254
      %v256 = vadd.f32 %v226, %v255
      %257 = vst.msk [vmem:[%s176] sm:$0x1] %vm224, %v256
      // Predicated region
      $region29: #{resnet_generator_forward.38} parent=23 // pred_check
        %p258 = pneg %p177
      $region30: #{resnet_generator_forward.38} parent=23 // pred_check_branch
        %260 = sbr.rel (%p258) target = $region32
      $region31: #{resnet_generator_forward.38} parent=23 // pred_region
        %v261 = vld [vmem:[%s173] sm:$0x1]
        %v262 = vmul.f32 %v261, 0.015625
        %v263 = vld [vmem:[%s176] sm:$0x1]
        %v264 = vmul.f32 %v263, 0.015625
        %v265 = vmul.f32 %v262, %v262
        %v266 = vsub.f32 %v264, %v265
        %267 = vst.msk [vmem:[%s173] sm:$0x1] %vm224, %v262
        %v268 = vmax.f32 %v266, 0.0
        %v269 = vadd.f32 %v268, 1e-05
        %v270 = vrsqrt.pop %v269
        %v271 = vmul.f32 %v270, %v269
        %v272 = vmul.f32 %v271, %v270
        %v273 = vmul.f32 0.5, %v272
        %v274 = vsub.f32 1.5, %v273
        %v275 = vmul.f32 %v270, %v274
        %vm276 = vweird.f32 %v269
        %vm277 = vweird.f32 %v270
        %vm278 = vmor %vm276, %vm277
        %v279 = vsel %vm278, %v270, %v275
        %280 = vst.msk [vmem:[%s176] sm:$0x1] %vm224, %v279
      $region32: #{resnet_generator_forward.38} parent=23 // pred_fallthru
        _
      %p281 = scmp.lt.s32.totalorder %s18, 1
      %s282 = scalar_select %p281, %s18, 1
      %s283 = scalar_lea.vmem %s1, %s282
      %p284 = scmp.lt.s32.totalorder %s18, 1
      %s285 = scalar_select %p284, %s18, 1
      %s286 = scalar_lea.vmem %s2, %s285
      // Predicated region
      $region33: #{resnet_generator_forward.38} parent=23 // pred_check
        %p287 = pneg %p72
      $region34: #{resnet_generator_forward.38} parent=23 // pred_check_branch
        %289 = sbr.rel (%p287) target = $region36
      $region35: #{resnet_generator_forward.38} parent=23 // pred_region
        _
      $region36: #{resnet_generator_forward.38} parent=23 // pred_fallthru
        _
      // Predicated region
      $region37: #{resnet_generator_forward.38} parent=23 // pred_check
        %p290 = pneg %p98
      $region38: #{resnet_generator_forward.38} parent=23 // pred_check_branch
        %292 = sbr.rel (%p290) target = $region40
      $region39: #{resnet_generator_forward.38} parent=23 // pred_region
        _
      $region40: #{resnet_generator_forward.38} parent=23 // pred_fallthru
        _
    $region24: #{resnet_generator_forward.38} parent=5 // pred_fallthru
      _
    %p293 = scmp.le.s32.totalorder 2, %s9
    // Predicated region
    $region41: #{resnet_generator_forward.38} parent=5 // pred_check
      %p294 = pneg %p293
    $region42: #{resnet_generator_forward.38} parent=5 // pred_check_branch
      %296 = sbr.rel (%p294) target = $region44
    $region43: #{resnet_generator_forward.38} parent=5 // pred_region
      %s297 = ssub.s32 %s9, 2
      // Predicated region
      $region45: #{resnet_generator_forward.38} parent=43 // pred_check
        %p298 = pneg %p78
      $region46: #{resnet_generator_forward.38} parent=43 // pred_check_branch
        %300 = sbr.rel (%p298) target = $region48
      $region47: #{resnet_generator_forward.38} parent=43 // pred_region
        %p301 = scmp.lt.s32.totalorder %s20, 1
        %s302 = scalar_select %p301, %s20, 1
        %s303 = scalar_lea.vmem %s1, %s302
      $region48: #{resnet_generator_forward.38} parent=43 // pred_fallthru
        _
      // Predicated region
      $region49: #{resnet_generator_forward.38} parent=43 // pred_check
        %p304 = pneg %p104
      $region50: #{resnet_generator_forward.38} parent=43 // pred_check_branch
        %306 = sbr.rel (%p304) target = $region52
      $region51: #{resnet_generator_forward.38} parent=43 // pred_region
        %p307 = scmp.lt.s32.totalorder %s20, 1
        %s308 = scalar_select %p307, %s20, 1
        %s309 = scalar_lea.vmem %s2, %s308
      $region52: #{resnet_generator_forward.38} parent=43 // pred_fallthru
        _
    $region44: #{resnet_generator_forward.38} parent=5 // pred_fallthru
      _
  $region6: #{resnet_generator_forward.38} parent=0 // loop_footer
    %s13 = sadd.s32 1, %s9
  $region7: #{resnet_generator_forward.38} parent=0 // loop_footer_branch
    %8 = sbr.rel target = $region3
  $region8: #{resnet_generator_forward.38} parent=0 // loop_exit
    _

// kernel: resnet_generator_forward.37
$region0: #{resnet_generator_forward.37}
  #allocation0 [shape = 'u32[]', space=smem, size = 0x4, offset = 0x4, fixed_abs, tag = 'smem constant byte address 0x4 - core index']
  #allocation1 [shape = 'u32[72,128]{1,0:T(1,128)}', space=vmem, size = 0x9000, scoped, tag = 'internal scratch']
  #allocation2 [shape = 'f32[128,128]{1,0:T(8,128)}', space=vmem, size = 0x10000, scoped, tag = 'scratch operand']
  %s0 = inlined_call_operand.vmem [shape: bf16[128,128], index: 0, kind: input, shape index: {}]
  %s1 = inlined_call_operand.vmem [shape: bf16[128,128], index: 1, kind: input, shape index: {}]
  %s2 = inlined_call_operand.vmem [shape: bf16[128,128], index: 2, kind: output, shape index: {}]
  %s3 = sld [smem:[#allocation0]]
  $region26: #{resnet_generator_forward.37} parent=0
    _
  %s5 = ssub.s32 1, %s3
  %s6 = scalar_select 0, %s5, %s3
  // Predicated region
  $region2: #{resnet_generator_forward.37} parent=0 // pred_check
    _
  $region3: #{resnet_generator_forward.37} parent=0 // pred_check_branch
    %8 = sbr.rel (0) target = $region5
  $region4: #{resnet_generator_forward.37} parent=0 // pred_region
    _
  $region5: #{resnet_generator_forward.37} parent=0 // pred_fallthru
    _
  // Predicated region
  $region6: #{resnet_generator_forward.37} parent=0 // pred_check
    _
  $region7: #{resnet_generator_forward.37} parent=0 // pred_check_branch
    %10 = sbr.rel (0) target = $region9
  $region8: #{resnet_generator_forward.37} parent=0 // pred_region
    _
  $region9: #{resnet_generator_forward.37} parent=0 // pred_fallthru
    _
  %p11 = scmp.eq.s32.totalorder 0, 0
  // Predicated region
  $region10: #{resnet_generator_forward.37} parent=0 // pred_check
    %p12 = pneg %p11
  $region11: #{resnet_generator_forward.37} parent=0 // pred_check_branch
    %14 = sbr.rel (%p12) target = $region13
  $region12: #{resnet_generator_forward.37} parent=0 // pred_region
    %15 = vst [vmem:[#allocation2] sm:$0xff] 0.0
    %16 = vst [vmem:[#allocation2 + $0x8] sm:$0xff] 0.0
    %17 = vst [vmem:[#allocation2 + $0x10] sm:$0xff] 0.0
    %18 = vst [vmem:[#allocation2 + $0x18] sm:$0xff] 0.0
    %19 = vst [vmem:[#allocation2 + $0x20] sm:$0xff] 0.0
    %20 = vst [vmem:[#allocation2 + $0x28] sm:$0xff] 0.0
    %21 = vst [vmem:[#allocation2 + $0x30] sm:$0xff] 0.0
    %22 = vst [vmem:[#allocation2 + $0x38] sm:$0xff] 0.0
    %23 = vst [vmem:[#allocation2 + $0x40] sm:$0xff] 0.0
    %24 = vst [vmem:[#allocation2 + $0x48] sm:$0xff] 0.0
    %25 = vst [vmem:[#allocation2 + $0x50] sm:$0xff] 0.0
    %26 = vst [vmem:[#allocation2 + $0x58] sm:$0xff] 0.0
    %27 = vst [vmem:[#allocation2 + $0x60] sm:$0xff] 0.0
    %28 = vst [vmem:[#allocation2 + $0x68] sm:$0xff] 0.0
    %29 = vst [vmem:[#allocation2 + $0x70] sm:$0xff] 0.0
    %30 = vst [vmem:[#allocation2 + $0x78] sm:$0xff] 0.0
  $region13: #{resnet_generator_forward.37} parent=0 // pred_fallthru
    _
  %v31 = vld [vmem:[#allocation2] sm:$0xff]
  %v32 = vld [vmem:[#allocation2 + $0x8] sm:$0xff]
  %v33 = vld [vmem:[#allocation2 + $0x10] sm:$0xff]
  %v34 = vld [vmem:[#allocation2 + $0x18] sm:$0xff]
  %v35 = vld [vmem:[#allocation2 + $0x20] sm:$0xff]
  %v36 = vld [vmem:[#allocation2 + $0x28] sm:$0xff]
  %v37 = vld [vmem:[#allocation2 + $0x30] sm:$0xff]
  %v38 = vld [vmem:[#allocation2 + $0x38] sm:$0xff]
  %v39 = vld [vmem:[#allocation2 + $0x40] sm:$0xff]
  %v40 = vld [vmem:[#allocation2 + $0x48] sm:$0xff]
  %v41 = vld [vmem:[#allocation2 + $0x50] sm:$0xff]
  %v42 = vld [vmem:[#allocation2 + $0x58] sm:$0xff]
  %v43 = vld [vmem:[#allocation2 + $0x60] sm:$0xff]
  %v44 = vld [vmem:[#allocation2 + $0x68] sm:$0xff]
  %v45 = vld [vmem:[#allocation2 + $0x70] sm:$0xff]
  %v46 = vld [vmem:[#allocation2 + $0x78] sm:$0xff]
  %v47 = vld [vmem:[%s0] sm:$0xf]
  %v48 = vld [vmem:[%s0 + $0x4] sm:$0xf]
  %v49 = vld [vmem:[%s0 + $0x8] sm:$0xf]
  %v50 = vld [vmem:[%s0 + $0xc] sm:$0xf]
  %v51 = vld [vmem:[%s0 + $0x10] sm:$0xf]
  %v52 = vld [vmem:[%s0 + $0x14] sm:$0xf]
  %v53 = vld [vmem:[%s0 + $0x18] sm:$0xf]
  %v54 = vld [vmem:[%s0 + $0x1c] sm:$0xf]
  %v55 = vld [vmem:[%s0 + $0x20] sm:$0xf]
  %v56 = vld [vmem:[%s0 + $0x24] sm:$0xf]
  %v57 = vld [vmem:[%s0 + $0x28] sm:$0xf]
  %v58 = vld [vmem:[%s0 + $0x2c] sm:$0xf]
  %v59 = vld [vmem:[%s0 + $0x30] sm:$0xf]
  %v60 = vld [vmem:[%s0 + $0x34] sm:$0xf]
  %v61 = vld [vmem:[%s0 + $0x38] sm:$0xf]
  %v62 = vld [vmem:[%s0 + $0x3c] sm:$0xf]
  %v63 = vld [vmem:[%s1] sm:$0xf]
  %v64 = vld [vmem:[%s1 + $0x4] sm:$0xf]
  %v65 = vld [vmem:[%s1 + $0x8] sm:$0xf]
  %v66 = vld [vmem:[%s1 + $0xc] sm:$0xf]
  %v67 = vld [vmem:[%s1 + $0x10] sm:$0xf]
  %v68 = vld [vmem:[%s1 + $0x14] sm:$0xf]
  %v69 = vld [vmem:[%s1 + $0x18] sm:$0xf]
  %v70 = vld [vmem:[%s1 + $0x1c] sm:$0xf]
  %v71 = vld [vmem:[%s1 + $0x20] sm:$0xf]
  %v72 = vld [vmem:[%s1 + $0x24] sm:$0xf]
  %v73 = vld [vmem:[%s1 + $0x28] sm:$0xf]
  %v74 = vld [vmem:[%s1 + $0x2c] sm:$0xf]
  %v75 = vld [vmem:[%s1 + $0x30] sm:$0xf]
  %v76 = vld [vmem:[%s1 + $0x34] sm:$0xf]
  %v77 = vld [vmem:[%s1 + $0x38] sm:$0xf]
  %v78 = vld [vmem:[%s1 + $0x3c] sm:$0xf]
  %v95 = vunpack.c.l.b16 %v47
  %v96 = vunpack.c.l.b16 %v48
  %v97 = vunpack.c.l.b16 %v49
  %v98 = vunpack.c.l.b16 %v50
  %v99 = vunpack.c.l.b16 %v51
  %v100 = vunpack.c.l.b16 %v52
  %v101 = vunpack.c.l.b16 %v53
  %v102 = vunpack.c.l.b16 %v54
  %v103 = vunpack.c.l.b16 %v55
  %v104 = vunpack.c.l.b16 %v56
  %v105 = vunpack.c.l.b16 %v57
  %v106 = vunpack.c.l.b16 %v58
  %v107 = vunpack.c.l.b16 %v59
  %v108 = vunpack.c.l.b16 %v60
  %v109 = vunpack.c.l.b16 %v61
  %v110 = vunpack.c.l.b16 %v62
  %v111 = vpack.c.b16 %v96, %v95
  %v112 = vpack.c.b16 %v98, %v97
  %v113 = vpack.c.b16 %v100, %v99
  %v114 = vpack.c.b16 %v102, %v101
  %v115 = vpack.c.b16 %v104, %v103
  %v116 = vpack.c.b16 %v106, %v105
  %v117 = vpack.c.b16 %v108, %v107
  %v118 = vpack.c.b16 %v110, %v109
  %v143 = vunpack.c.l.b16 %v63
  %v144 = vunpack.c.l.b16 %v64
  %v145 = vunpack.c.l.b16 %v65
  %v146 = vunpack.c.l.b16 %v66
  %v147 = vunpack.c.l.b16 %v67
  %v148 = vunpack.c.l.b16 %v68
  %v149 = vunpack.c.l.b16 %v69
  %v150 = vunpack.c.l.b16 %v70
  %v151 = vunpack.c.l.b16 %v71
  %v152 = vunpack.c.l.b16 %v72
  %v153 = vunpack.c.l.b16 %v73
  %v154 = vunpack.c.l.b16 %v74
  %v155 = vunpack.c.l.b16 %v75
  %v156 = vunpack.c.l.b16 %v76
  %v157 = vunpack.c.l.b16 %v77
  %v158 = vunpack.c.l.b16 %v78
  %v159 = vpack.c.b16 %v144, %v143
  %v160 = vpack.c.b16 %v146, %v145
  %v161 = vpack.c.b16 %v148, %v147
  %v162 = vpack.c.b16 %v150, %v149
  %v163 = vpack.c.b16 %v152, %v151
  %v164 = vpack.c.b16 %v154, %v153
  %v165 = vpack.c.b16 %v156, %v155
  %v166 = vpack.c.b16 %v158, %v157
  %175 = vmatpush.bf16.msra.mxu0 %v166
  %176 = vmatpush.bf16.msra.mxu0 %v165
  %177 = vmatpush.bf16.msra.mxu0 %v164
  %178 = vmatpush.bf16.msra.mxu0 %v163
  %179 = vmatpush.bf16.msra.mxu0 %v162
  %180 = vmatpush.bf16.msra.mxu0 %v161
  %181 = vmatpush.bf16.msra.mxu0 %v160
  %182 = vmatpush.bf16.msra.mxu0 %v159
  %183 = vmatmul.bf16.gmra.mxu0 %v111
  %v184 = vpop.f32.mrf.mxu0
  %v185 = vadd.f32 0.0, %v184
  %v186 = vpop.f32.mrf.mxu0
  %v187 = vadd.f32 0.0, %v186
  %188 = vmatmul.bf16.gmra.mxu0 %v112
  %v189 = vpop.f32.mrf.mxu0
  %v190 = vadd.f32 0.0, %v189
  %v191 = vpop.f32.mrf.mxu0
  %v192 = vadd.f32 0.0, %v191
  %193 = vmatmul.bf16.gmra.mxu0 %v113
  %v194 = vpop.f32.mrf.mxu0
  %v195 = vadd.f32 0.0, %v194
  %v196 = vpop.f32.mrf.mxu0
  %v197 = vadd.f32 0.0, %v196
  %198 = vmatmul.bf16.gmra.mxu0 %v114
  %v199 = vpop.f32.mrf.mxu0
  %v200 = vadd.f32 0.0, %v199
  %v201 = vpop.f32.mrf.mxu0
  %v202 = vadd.f32 0.0, %v201
  %203 = vmatmul.bf16.gmra.mxu0 %v115
  %v204 = vpop.f32.mrf.mxu0
  %v205 = vadd.f32 0.0, %v204
  %v206 = vpop.f32.mrf.mxu0
  %v207 = vadd.f32 0.0, %v206
  %208 = vmatmul.bf16.gmra.mxu0 %v116
  %v209 = vpop.f32.mrf.mxu0
  %v210 = vadd.f32 0.0, %v209
  %v211 = vpop.f32.mrf.mxu0
  %v212 = vadd.f32 0.0, %v211
  %213 = vmatmul.bf16.gmra.mxu0 %v117
  %v214 = vpop.f32.mrf.mxu0
  %v215 = vadd.f32 0.0, %v214
  %v216 = vpop.f32.mrf.mxu0
  %v217 = vadd.f32 0.0, %v216
  %218 = vmatmul.bf16.gmra.mxu0 %v118
  %v219 = vpop.f32.mrf.mxu0
  %v220 = vadd.f32 0.0, %v219
  %v221 = vpop.f32.mrf.mxu0
  %v222 = vadd.f32 0.0, %v221
  %223 = vdwg.mxu0
  %v224 = vadd.f32 %v31, %v185
  %v225 = vadd.f32 %v32, %v187
  %v226 = vadd.f32 %v33, %v190
  %v227 = vadd.f32 %v34, %v192
  %v228 = vadd.f32 %v35, %v195
  %v229 = vadd.f32 %v36, %v197
  %v230 = vadd.f32 %v37, %v200
  %v231 = vadd.f32 %v38, %v202
  %v232 = vadd.f32 %v39, %v205
  %v233 = vadd.f32 %v40, %v207
  %v234 = vadd.f32 %v41, %v210
  %v235 = vadd.f32 %v42, %v212
  %v236 = vadd.f32 %v43, %v215
  %v237 = vadd.f32 %v44, %v217
  %v238 = vadd.f32 %v45, %v220
  %v239 = vadd.f32 %v46, %v222
  %240 = vst [vmem:[#allocation2] sm:$0xff] %v224
  %241 = vst [vmem:[#allocation2 + $0x8] sm:$0xff] %v225
  %242 = vst [vmem:[#allocation2 + $0x10] sm:$0xff] %v226
  %243 = vst [vmem:[#allocation2 + $0x18] sm:$0xff] %v227
  %244 = vst [vmem:[#allocation2 + $0x20] sm:$0xff] %v228
  %245 = vst [vmem:[#allocation2 + $0x28] sm:$0xff] %v229
  %246 = vst [vmem:[#allocation2 + $0x30] sm:$0xff] %v230
  %247 = vst [vmem:[#allocation2 + $0x38] sm:$0xff] %v231
  %248 = vst [vmem:[#allocation2 + $0x40] sm:$0xff] %v232
  %249 = vst [vmem:[#allocation2 + $0x48] sm:$0xff] %v233
  %250 = vst [vmem:[#allocation2 + $0x50] sm:$0xff] %v234
  %251 = vst [vmem:[#allocation2 + $0x58] sm:$0xff] %v235
  %252 = vst [vmem:[#allocation2 + $0x60] sm:$0xff] %v236
  %253 = vst [vmem:[#allocation2 + $0x68] sm:$0xff] %v237
  %254 = vst [vmem:[#allocation2 + $0x70] sm:$0xff] %v238
  %255 = vst [vmem:[#allocation2 + $0x78] sm:$0xff] %v239
  // Predicated region
  $region14: #{resnet_generator_forward.37} parent=0 // pred_check
    %p256 = pneg %p11
  $region15: #{resnet_generator_forward.37} parent=0 // pred_check_branch
    %258 = sbr.rel (%p256) target = $region17
  $region16: #{resnet_generator_forward.37} parent=0 // pred_region
    %v259 = vld [vmem:[#allocation2] sm:$0xff]
    %v260 = vld [vmem:[#allocation2 + $0x8] sm:$0xff]
    %v261 = vld [vmem:[#allocation2 + $0x10] sm:$0xff]
    %v262 = vld [vmem:[#allocation2 + $0x18] sm:$0xff]
    %v263 = vld [vmem:[#allocation2 + $0x20] sm:$0xff]
    %v264 = vld [vmem:[#allocation2 + $0x28] sm:$0xff]
    %v265 = vld [vmem:[#allocation2 + $0x30] sm:$0xff]
    %v266 = vld [vmem:[#allocation2 + $0x38] sm:$0xff]
    %v267 = vld [vmem:[#allocation2 + $0x40] sm:$0xff]
    %v268 = vld [vmem:[#allocation2 + $0x48] sm:$0xff]
    %v269 = vld [vmem:[#allocation2 + $0x50] sm:$0xff]
    %v270 = vld [vmem:[#allocation2 + $0x58] sm:$0xff]
    %v271 = vld [vmem:[#allocation2 + $0x60] sm:$0xff]
    %v272 = vld [vmem:[#allocation2 + $0x68] sm:$0xff]
    %v273 = vld [vmem:[#allocation2 + $0x70] sm:$0xff]
    %v274 = vld [vmem:[#allocation2 + $0x78] sm:$0xff]
    %v275 = vpack.c.bf16 %v259, %v259
    %v276 = vpack.c.bf16 %v260, %v260
    %v277 = vpack.c.bf16 %v261, %v261
    %v278 = vpack.c.bf16 %v262, %v262
    %v279 = vpack.c.bf16 %v263, %v263
    %v280 = vpack.c.bf16 %v264, %v264
    %v281 = vpack.c.bf16 %v265, %v265
    %v282 = vpack.c.bf16 %v266, %v266
    %v283 = vpack.c.bf16 %v267, %v267
    %v284 = vpack.c.bf16 %v268, %v268
    %v285 = vpack.c.bf16 %v269, %v269
    %v286 = vpack.c.bf16 %v270, %v270
    %v287 = vpack.c.bf16 %v271, %v271
    %v288 = vpack.c.bf16 %v272, %v272
    %v289 = vpack.c.bf16 %v273, %v273
    %v290 = vpack.c.bf16 %v274, %v274
    %291 = vst [vmem:[%s2] sm:$0xf] %v275
    %292 = vst [vmem:[%s2 + $0x4] sm:$0xf] %v276
    %293 = vst [vmem:[%s2 + $0x8] sm:$0xf] %v277
    %294 = vst [vmem:[%s2 + $0xc] sm:$0xf] %v278
    %295 = vst [vmem:[%s2 + $0x10] sm:$0xf] %v279
    %296 = vst [vmem:[%s2 + $0x14] sm:$0xf] %v280
    %297 = vst [vmem:[%s2 + $0x18] sm:$0xf] %v281
    %298 = vst [vmem:[%s2 + $0x1c] sm:$0xf] %v282
    %299 = vst [vmem:[%s2 + $0x20] sm:$0xf] %v283
    %300 = vst [vmem:[%s2 + $0x24] sm:$0xf] %v284
    %301 = vst [vmem:[%s2 + $0x28] sm:$0xf] %v285
    %302 = vst [vmem:[%s2 + $0x2c] sm:$0xf] %v286
    %303 = vst [vmem:[%s2 + $0x30] sm:$0xf] %v287
    %304 = vst [vmem:[%s2 + $0x34] sm:$0xf] %v288
    %305 = vst [vmem:[%s2 + $0x38] sm:$0xf] %v289
    %306 = vst [vmem:[%s2 + $0x3c] sm:$0xf] %v290
  $region17: #{resnet_generator_forward.37} parent=0 // pred_fallthru
    _
  // Predicated region
  $region18: #{resnet_generator_forward.37} parent=0 // pred_check
    _
  $region19: #{resnet_generator_forward.37} parent=0 // pred_check_branch
    %308 = sbr.rel (0) target = $region21
  $region20: #{resnet_generator_forward.37} parent=0 // pred_region
    _
  $region21: #{resnet_generator_forward.37} parent=0 // pred_fallthru
    _
  // Predicated region
  $region22: #{resnet_generator_forward.37} parent=0 // pred_check
    _
  $region23: #{resnet_generator_forward.37} parent=0 // pred_check_branch
    %310 = sbr.rel (0) target = $region25
  $region24: #{resnet_generator_forward.37} parent=0 // pred_region
    _
  $region25: #{resnet_generator_forward.37} parent=0 // pred_fallthru
    _

// kernel: resnet_generator_forward.39
$region0: #{resnet_generator_forward.39}
  #allocation0 [shape = 'u32[]', space=smem, size = 0x4, offset = 0x4, fixed_abs, tag = 'smem constant byte address 0x4 - core index']
  #allocation1 [shape = 'u32[72,128]{1,0:T(1,128)}', space=vmem, size = 0x9000, scoped, tag = 'internal scratch']
  %s0 = inlined_call_operand.vmem [shape: bf16[2,64,16], index: 0, kind: input, shape index: {}]
  %s1 = inlined_call_operand.vmem [shape: f32[2,1,16], index: 1, kind: input, shape index: {}]
  %s2 = inlined_call_operand.vmem [shape: f32[2,1,16], index: 2, kind: input, shape index: {}]
  %s3 = inlined_call_operand.vmem [shape: f32[1,1,16], index: 3, kind: input, shape index: {}]
  %s4 = inlined_call_operand.vmem [shape: f32[1,1,16], index: 4, kind: input, shape index: {}]
  %s5 = inlined_call_operand.vmem [shape: bf16[2,64,16], index: 5, kind: output, shape index: {}]
  %s6 = sld [smem:[#allocation0]]
  $region53: #{resnet_generator_forward.39} parent=0
    _
  %s8 = ssub.s32 1, %s6
  %s9 = scalar_select 0, %s8, %s6
  loop: start=0, step=1, limit=4
  $region2: #{resnet_generator_forward.39} parent=0 // loop_pre_header
    _
  $region3: #{resnet_generator_forward.39} parent=0 // loop_header
    %s11 = sphi 0, %s15
    %p12 = scmp.ge.s32.totalorder %s11, 4
    %s18 = sphi 0, %s30
    %s19 = sphi 0, %s26
    %s20 = sphi 0, %s18
    %s21 = sphi 0, %s19
    %s22 = sphi 0, %s20
    %s23 = sphi 0, %s21
    %s35 = sphi 0, %s37
    %s38 = sphi 0, %s35
    %s39 = sphi 0, %s38
    %s55 = sphi 0, %s39
    %s61 = sphi 0, %s63
    %s64 = sphi 0, %s61
    %s65 = sphi 0, %s64
    %s81 = sphi 0, %s65
    %s87 = sphi 0, %s89
    %s90 = sphi 0, %s87
    %s91 = sphi 0, %s90
    %s107 = sphi 0, %s91
    %s111 = sphi 0, %s111
    %s113 = sphi 0, %s111
    %s114 = sphi 0, %s113
    %s128 = sphi 0, %s114
    %s132 = sphi 0, %s132
    %s134 = sphi 0, %s132
    %s135 = sphi 0, %s134
    %s149 = sphi 0, %s135
    %s157 = sphi 0, %s159
    %s160 = sphi 0, %s157
    %s161 = sphi 0, %s160
    %s177 = sphi 0, %s161
  $region4: #{resnet_generator_forward.39} parent=0 // loop_header_branch
    %14 = sbr.rel (%p12) target = $region8
  $region5: #{resnet_generator_forward.39} parent=0 // loop_body
    %s16 = ssub.s32 %s11, 1
    %s17 = ssub.s32 %s11, 2
    %s24 = sadd.s32 1, %s19
    %p25 = scmp.ge.s32.totalorder %s24, 1
    %s26 = scalar_select %p25, 0, %s24
    %s27 = sadd.s32 1, %s18
    %s28 = scalar_select %p25, %s27, %s18
    %p29 = scmp.ge.s32.totalorder %s28, 2
    %s30 = scalar_select %p29, 0, %s28
    %s31 = ssub.s32 %s18, %s30
    %s32 = ssub.s32 %s19, %s26
    %s33 = sor.u32 %s31, %s32
    %p34 = scmp.eq.s32.totalorder %s33, 0
    %s36 = sadd.s32 %s35, 1
    %s37 = scalar_select %p34, %s35, %s36
    %p40 = pneg %p34
    %p41 = scmp.eq.s32.totalorder %s11, 1
    %p42 = por %p40, %p41
    %p43 = scmp.ne.s32.totalorder %s35, %s38
    %p44 = scmp.eq.s32.totalorder %s11, 0
    %p45 = por %p43, %p44
    %p46 = scmp.ne.s32.totalorder %s35, %s38
    %p47 = scmp.eq.s32.totalorder %s16, 1
    %p48 = por %p46, %p47
    %p49 = scmp.ne.s32.totalorder %s38, %s39
    %p50 = scmp.eq.s32.totalorder %s16, 0
    %p51 = por %p49, %p50
    %p52 = scmp.ne.s32.totalorder %s38, %s39
    %p53 = scmp.eq.s32.totalorder %s17, 1
    %p54 = por %p52, %p53
    %p56 = scmp.ne.s32.totalorder %s39, %s55
    %p57 = scmp.eq.s32.totalorder %s17, 0
    %p58 = por %p56, %p57
    %s59 = ssub.s32 %s18, %s30
    %p60 = scmp.eq.s32.totalorder %s59, 0
    %s62 = sadd.s32 %s61, 1
    %s63 = scalar_select %p60, %s61, %s62
    %p66 = pneg %p60
    %p67 = scmp.eq.s32.totalorder %s11, 1
    %p68 = por %p66, %p67
    %p69 = scmp.ne.s32.totalorder %s61, %s64
    %p70 = scmp.eq.s32.totalorder %s11, 0
    %p71 = por %p69, %p70
    %p72 = scmp.ne.s32.totalorder %s61, %s64
    %p73 = scmp.eq.s32.totalorder %s16, 1
    %p74 = por %p72, %p73
    %p75 = scmp.ne.s32.totalorder %s64, %s65
    %p76 = scmp.eq.s32.totalorder %s16, 0
    %p77 = por %p75, %p76
    %p78 = scmp.ne.s32.totalorder %s64, %s65
    %p79 = scmp.eq.s32.totalorder %s17, 1
    %p80 = por %p78, %p79
    %p82 = scmp.ne.s32.totalorder %s65, %s81
    %p83 = scmp.eq.s32.totalorder %s17, 0
    %p84 = por %p82, %p83
    %s85 = ssub.s32 %s18, %s30
    %p86 = scmp.eq.s32.totalorder %s85, 0
    %s88 = sadd.s32 %s87, 1
    %s89 = scalar_select %p86, %s87, %s88
    %p92 = pneg %p86
    %p93 = scmp.eq.s32.totalorder %s11, 1
    %p94 = por %p92, %p93
    %p95 = scmp.ne.s32.totalorder %s87, %s90
    %p96 = scmp.eq.s32.totalorder %s11, 0
    %p97 = por %p95, %p96
    %p98 = scmp.ne.s32.totalorder %s87, %s90
    %p99 = scmp.eq.s32.totalorder %s16, 1
    %p100 = por %p98, %p99
    %p101 = scmp.ne.s32.totalorder %s90, %s91
    %p102 = scmp.eq.s32.totalorder %s16, 0
    %p103 = por %p101, %p102
    %p104 = scmp.ne.s32.totalorder %s90, %s91
    %p105 = scmp.eq.s32.totalorder %s17, 1
    %p106 = por %p104, %p105
    %p108 = scmp.ne.s32.totalorder %s91, %s107
    %p109 = scmp.eq.s32.totalorder %s17, 0
    %p110 = por %p108, %p109
    %s112 = sadd.s32 %s111, 1
    %p115 = scmp.eq.s32.totalorder %s11, 1
    %p116 = scmp.ne.s32.totalorder %s111, %s113
    %p117 = scmp.eq.s32.totalorder %s11, 0
    %p118 = por %p116, %p117
    %p119 = scmp.ne.s32.totalorder %s111, %s113
    %p120 = scmp.eq.s32.totalorder %s16, 1
    %p121 = por %p119, %p120
    %p122 = scmp.ne.s32.totalorder %s113, %s114
    %p123 = scmp.eq.s32.totalorder %s16, 0
    %p124 = por %p122, %p123
    %p125 = scmp.ne.s32.totalorder %s113, %s114
    %p126 = scmp.eq.s32.totalorder %s17, 1
    %p127 = por %p125, %p126
    %p129 = scmp.ne.s32.totalorder %s114, %s128
    %p130 = scmp.eq.s32.totalorder %s17, 0
    %p131 = por %p129, %p130
    %s133 = sadd.s32 %s132, 1
    %p136 = scmp.eq.s32.totalorder %s11, 1
    %p137 = scmp.ne.s32.totalorder %s132, %s134
    %p138 = scmp.eq.s32.totalorder %s11, 0
    %p139 = por %p137, %p138
    %p140 = scmp.ne.s32.totalorder %s132, %s134
    %p141 = scmp.eq.s32.totalorder %s16, 1
    %p142 = por %p140, %p141
    %p143 = scmp.ne.s32.totalorder %s134, %s135
    %p144 = scmp.eq.s32.totalorder %s16, 0
    %p145 = por %p143, %p144
    %p146 = scmp.ne.s32.totalorder %s134, %s135
    %p147 = scmp.eq.s32.totalorder %s17, 1
    %p148 = por %p146, %p147
    %p150 = scmp.ne.s32.totalorder %s135, %s149
    %p151 = scmp.eq.s32.totalorder %s17, 0
    %p152 = por %p150, %p151
    %s153 = ssub.s32 %s18, %s30
    %s154 = ssub.s32 %s19, %s26
    %s155 = sor.u32 %s153, %s154
    %p156 = scmp.eq.s32.totalorder %s155, 0
    %s158 = sadd.s32 %s157, 1
    %s159 = scalar_select %p156, %s157, %s158
    %p162 = pneg %p156
    %p163 = scmp.eq.s32.totalorder %s11, 1
    %p164 = por %p162, %p163
    %p165 = scmp.ne.s32.totalorder %s157, %s160
    %p166 = scmp.eq.s32.totalorder %s11, 0
    %p167 = por %p165, %p166
    %p168 = scmp.ne.s32.totalorder %s157, %s160
    %p169 = scmp.eq.s32.totalorder %s16, 1
    %p170 = por %p168, %p169
    %p171 = scmp.ne.s32.totalorder %s160, %s161
    %p172 = scmp.eq.s32.totalorder %s16, 0
    %p173 = por %p171, %p172
    %p174 = scmp.ne.s32.totalorder %s160, %s161
    %p175 = scmp.eq.s32.totalorder %s17, 1
    %p176 = por %p174, %p175
    %p178 = scmp.ne.s32.totalorder %s161, %s177
    %p179 = scmp.eq.s32.totalorder %s17, 0
    %p180 = por %p178, %p179
    %p181 = scmp.le.s32.totalorder 1, %s11
    %p182 = scmp.lt.s32.totalorder %s11, 3
    %p183 = pnand %p181, %p182
    %p184 = pneg %p183
    // Predicated region
    $region9: #{resnet_generator_forward.39} parent=5 // pred_check
      _
    $region10: #{resnet_generator_forward.39} parent=5 // pred_check_branch
      %186 = sbr.rel (%p183) target = $region12
    $region11: #{resnet_generator_forward.39} parent=5 // pred_region
      %s187 = ssub.s32 %s11, 1
      // Predicated region
      $region13: #{resnet_generator_forward.39} parent=11 // pred_check
        %p188 = pneg %p124
      $region14: #{resnet_generator_forward.39} parent=11 // pred_check_branch
        %190 = sbr.rel (%p188) target = $region16
      $region15: #{resnet_generator_forward.39} parent=11 // pred_region
        _
      $region16: #{resnet_generator_forward.39} parent=11 // pred_fallthru
        _
      // Predicated region
      $region17: #{resnet_generator_forward.39} parent=11 // pred_check
        %p191 = pneg %p145
      $region18: #{resnet_generator_forward.39} parent=11 // pred_check_branch
        %193 = sbr.rel (%p191) target = $region20
      $region19: #{resnet_generator_forward.39} parent=11 // pred_region
        _
      $region20: #{resnet_generator_forward.39} parent=11 // pred_fallthru
        _
    $region12: #{resnet_generator_forward.39} parent=5 // pred_fallthru
      _
    %p194 = scmp.lt.s32.totalorder %s11, 2
    // Predicated region
    $region21: #{resnet_generator_forward.39} parent=5 // pred_check
      %p195 = pneg %p194
    $region22: #{resnet_generator_forward.39} parent=5 // pred_check_branch
      %197 = sbr.rel (%p195) target = $region24
    $region23: #{resnet_generator_forward.39} parent=5 // pred_region
      // Predicated region
      $region25: #{resnet_generator_forward.39} parent=23 // pred_check
        %p198 = pneg %p45
      $region26: #{resnet_generator_forward.39} parent=23 // pred_check_branch
        %200 = sbr.rel (%p198) target = $region28
      $region27: #{resnet_generator_forward.39} parent=23 // pred_region
        %s201 = smul.u32 8, %s19
        %p202 = scmp.lt.s32.totalorder %s18, 1
        %s203 = scalar_select %p202, %s18, 1
        %p204 = scmp.lt.s32.totalorder %s201, 7
        %s205 = scalar_select %p204, %s201, 7
        %s206 = smul.addr %s203, 8
        %s207 = sadd.s32 %s205, %s206
        %s208 = smul.addr %s207, 4
        %s209 = scalar_lea.vmem %s0, %s208
        %s210 = smul.u32 8, %s19
      $region28: #{resnet_generator_forward.39} parent=23 // pred_fallthru
        _
      // Predicated region
      $region29: #{resnet_generator_forward.39} parent=23 // pred_check
        %p211 = pneg %p71
      $region30: #{resnet_generator_forward.39} parent=23 // pred_check_branch
        %213 = sbr.rel (%p211) target = $region32
      $region31: #{resnet_generator_forward.39} parent=23 // pred_region
        %p214 = scmp.lt.s32.totalorder %s18, 1
        %s215 = scalar_select %p214, %s18, 1
        %s216 = scalar_lea.vmem %s1, %s215
      $region32: #{resnet_generator_forward.39} parent=23 // pred_fallthru
        _
      // Predicated region
      $region33: #{resnet_generator_forward.39} parent=23 // pred_check
        %p217 = pneg %p97
      $region34: #{resnet_generator_forward.39} parent=23 // pred_check_branch
        %219 = sbr.rel (%p217) target = $region36
      $region35: #{resnet_generator_forward.39} parent=23 // pred_region
        %p220 = scmp.lt.s32.totalorder %s18, 1
        %s221 = scalar_select %p220, %s18, 1
        %s222 = scalar_lea.vmem %s2, %s221
      $region36: #{resnet_generator_forward.39} parent=23 // pred_fallthru
        _
    $region24: #{resnet_generator_forward.39} parent=5 // pred_fallthru
      _
    %p223 = scmp.le.s32.totalorder 1, %s11
    %p224 = scmp.lt.s32.totalorder %s11, 3
    %p225 = pnand %p223, %p224
    %p226 = pneg %p225
    // Predicated region
    $region37: #{resnet_generator_forward.39} parent=5 // pred_check
      _
    $region38: #{resnet_generator_forward.39} parent=5 // pred_check_branch
      %228 = sbr.rel (%p225) target = $region40
    $region39: #{resnet_generator_forward.39} parent=5 // pred_region
      %s229 = ssub.s32 %s11, 1
      %s230 = smul.u32 8, %s21
      %p231 = scmp.lt.s32.totalorder %s20, 1
      %s232 = scalar_select %p231, %s20, 1
      %p233 = scmp.lt.s32.totalorder %s230, 7
      %s234 = scalar_select %p233, %s230, 7
      %s235 = smul.addr %s232, 8
      %s236 = sadd.s32 %s234, %s235
      %s237 = smul.addr %s236, 4
      %s238 = scalar_lea.vmem %s0, %s237
      %p239 = pneg %p51
      %p240 = pneg %p48
      %p241 = scmp.lt.s32.totalorder %s20, 1
      %s242 = scalar_select %p241, %s20, 1
      %s243 = scalar_lea.vmem %s1, %s242
      %p244 = pneg %p77
      %p245 = pneg %p74
      %p246 = scmp.lt.s32.totalorder %s20, 1
      %s247 = scalar_select %p246, %s20, 1
      %s248 = scalar_lea.vmem %s2, %s247
      %p249 = pneg %p103
      %p250 = pneg %p100
      %p251 = pneg %p124
      %p252 = pneg %p121
      %p253 = pneg %p145
      %p254 = pneg %p142
      %p255 = pneg %p173
      %p256 = pneg %p170
      %s257 = smul.u32 8, %s21
      %p258 = scmp.lt.s32.totalorder %s20, 1
      %s259 = scalar_select %p258, %s20, 1
      %p260 = scmp.lt.s32.totalorder %s257, 7
      %s261 = scalar_select %p260, %s257, 7
      %s262 = smul.addr %s259, 8
      %s263 = sadd.s32 %s261, %s262
      %s264 = smul.addr %s263, 4
      %s265 = scalar_lea.vmem %s5, %s264
      %s266 = smul.u32 8, %s21
      %p267 = scmp.lt.s32.totalorder %s20, 1
      %s268 = scalar_select %p267, %s20, 1
      %p269 = scmp.lt.s32.totalorder %s266, 7
      %s270 = scalar_select %p269, %s266, 7
      %s271 = smul.addr %s268, 8
      %s272 = sadd.s32 %s270, %s271
      %s273 = smul.addr %s272, 4
      %s274 = scalar_lea.vmem %s0, %s273
      %s275 = smul.u32 8, %s21
      %p276 = scmp.lt.s32.totalorder %s20, 1
      %s277 = scalar_select %p276, %s20, 1
      %s278 = scalar_lea.vmem %s1, %s277
      %p279 = scmp.lt.s32.totalorder %s20, 1
      %s280 = scalar_select %p279, %s20, 1
      %s281 = scalar_lea.vmem %s2, %s280
      %s282 = smul.u32 8, %s21
      %p283 = scmp.lt.s32.totalorder %s20, 1
      %s284 = scalar_select %p283, %s20, 1
      %p285 = scmp.lt.s32.totalorder %s282, 7
      %s286 = scalar_select %p285, %s282, 7
      %s287 = smul.addr %s284, 8
      %s288 = sadd.s32 %s286, %s287
      %s289 = smul.addr %s288, 4
      %s290 = scalar_lea.vmem %s5, %s289
      %s291 = smul.u32 8, %s21
      %v292 = vld [vmem:[%s274] sm:$0xf]
      %v293 = vld [vmem:[%s274 + $0x4] sm:$0xf]
      %v294 = vld [vmem:[%s274 + $0x8] sm:$0xf]
      %v295 = vld [vmem:[%s274 + $0xc] sm:$0xf]
      %v296 = vld [vmem:[%s274 + $0x10] sm:$0xf]
      %v297 = vld [vmem:[%s274 + $0x14] sm:$0xf]
      %v298 = vld [vmem:[%s274 + $0x18] sm:$0xf]
      %v299 = vld [vmem:[%s274 + $0x1c] sm:$0xf]
      %v300 = vunpack.c.l.bf16 %v292
      %v301 = vunpack.c.l.bf16 %v293
      %v302 = vunpack.c.l.bf16 %v294
      %v303 = vunpack.c.l.bf16 %v295
      %v304 = vunpack.c.l.bf16 %v296
      %v305 = vunpack.c.l.bf16 %v297
      %v306 = vunpack.c.l.bf16 %v298
      %v307 = vunpack.c.l.bf16 %v299
      %v308 = vld [vmem:[%s278] sm:$0x1]
      %v310 = vperm.slane %v308, 0
      %v312 = vsub.f32 %v300, %v310
      %v313 = vsub.f32 %v301, %v310
      %v314 = vsub.f32 %v302, %v310
      %v315 = vsub.f32 %v303, %v310
      %v316 = vsub.f32 %v304, %v310
      %v317 = vsub.f32 %v305, %v310
      %v318 = vsub.f32 %v306, %v310
      %v319 = vsub.f32 %v307, %v310
      %v320 = vld [vmem:[%s281] sm:$0x1]
      %v322 = vperm.slane %v320, 0
      %v324 = vmul.f32 %v312, %v322
      %v325 = vmul.f32 %v313, %v322
      %v326 = vmul.f32 %v314, %v322
      %v327 = vmul.f32 %v315, %v322
      %v328 = vmul.f32 %v316, %v322
      %v329 = vmul.f32 %v317, %v322
      %v330 = vmul.f32 %v318, %v322
      %v331 = vmul.f32 %v319, %v322
      %v332 = vld [vmem:[%s3] sm:$0x1]
      %v334 = vperm.slane %v332, 0
      %v336 = vmul.f32 %v324, %v334
      %v337 = vmul.f32 %v325, %v334
      %v338 = vmul.f32 %v326, %v334
      %v339 = vmul.f32 %v327, %v334
      %v340 = vmul.f32 %v328, %v334
      %v341 = vmul.f32 %v329, %v334
      %v342 = vmul.f32 %v330, %v334
      %v343 = vmul.f32 %v331, %v334
      %v344 = vld [vmem:[%s4] sm:$0x1]
      %v346 = vperm.slane %v344, 0
      %v348 = vadd.f32 %v336, %v346
      %v349 = vadd.f32 %v337, %v346
      %v350 = vadd.f32 %v338, %v346
      %v351 = vadd.f32 %v339, %v346
      %v352 = vadd.f32 %v340, %v346
      %v353 = vadd.f32 %v341, %v346
      %v354 = vadd.f32 %v342, %v346
      %v355 = vadd.f32 %v343, %v346
      %v356 = vmax.f32 %v348, 0.0
      %v357 = vmax.f32 %v349, 0.0
      %v358 = vmax.f32 %v350, 0.0
      %v359 = vmax.f32 %v351, 0.0
      %v360 = vmax.f32 %v352, 0.0
      %v361 = vmax.f32 %v353, 0.0
      %v362 = vmax.f32 %v354, 0.0
      %v363 = vmax.f32 %v355, 0.0
      %v364 = vpack.c.bf16 %v356, %v356
      %v365 = vpack.c.bf16 %v357, %v357
      %v366 = vpack.c.bf16 %v358, %v358
      %v367 = vpack.c.bf16 %v359, %v359
      %v368 = vpack.c.bf16 %v360, %v360
      %v369 = vpack.c.bf16 %v361, %v361
      %v370 = vpack.c.bf16 %v362, %v362
      %v371 = vpack.c.bf16 %v363, %v363
      %vm372 = vcmask 125952
      %373 = vst.msk [vmem:[%s290] sm:$0xf] %vm372, %v364
      %374 = vst.msk [vmem:[%s290 + $0x4] sm:$0xf] %vm372, %v365
      %375 = vst.msk [vmem:[%s290 + $0x8] sm:$0xf] %vm372, %v366
      %376 = vst.msk [vmem:[%s290 + $0xc] sm:$0xf] %vm372, %v367
      %377 = vst.msk [vmem:[%s290 + $0x10] sm:$0xf] %vm372, %v368
      %378 = vst.msk [vmem:[%s290 + $0x14] sm:$0xf] %vm372, %v369
      %379 = vst.msk [vmem:[%s290 + $0x18] sm:$0xf] %vm372, %v370
      %380 = vst.msk [vmem:[%s290 + $0x1c] sm:$0xf] %vm372, %v371
      %s381 = smul.u32 8, %s21
      %p382 = scmp.lt.s32.totalorder %s20, 1
      %s383 = scalar_select %p382, %s20, 1
      %p384 = scmp.lt.s32.totalorder %s381, 7
      %s385 = scalar_select %p384, %s381, 7
      %s386 = smul.addr %s383, 8
      %s387 = sadd.s32 %s385, %s386
      %s388 = smul.addr %s387, 4
      %s389 = scalar_lea.vmem %s5, %s388
      // Predicated region
      $region41: #{resnet_generator_forward.39} parent=39 // pred_check
        %p390 = pneg %p170
      $region42: #{resnet_generator_forward.39} parent=39 // pred_check_branch
        %392 = sbr.rel (%p390) target = $region44
      $region43: #{resnet_generator_forward.39} parent=39 // pred_region
        %s393 = smul.u32 8, %s21
      $region44: #{resnet_generator_forward.39} parent=39 // pred_fallthru
        _
    $region40: #{resnet_generator_forward.39} parent=5 // pred_fallthru
      _
    %p394 = scmp.le.s32.totalorder 2, %s11
    // Predicated region
    $region45: #{resnet_generator_forward.39} parent=5 // pred_check
      %p395 = pneg %p394
    $region46: #{resnet_generator_forward.39} parent=5 // pred_check_branch
      %397 = sbr.rel (%p395) target = $region48
    $region47: #{resnet_generator_forward.39} parent=5 // pred_region
      %s398 = ssub.s32 %s11, 2
      // Predicated region
      $region49: #{resnet_generator_forward.39} parent=47 // pred_check
        %p399 = pneg %p176
      $region50: #{resnet_generator_forward.39} parent=47 // pred_check_branch
        %401 = sbr.rel (%p399) target = $region52
      $region51: #{resnet_generator_forward.39} parent=47 // pred_region
        %s402 = smul.u32 8, %s23
        %p403 = scmp.lt.s32.totalorder %s22, 1
        %s404 = scalar_select %p403, %s22, 1
        %p405 = scmp.lt.s32.totalorder %s402, 7
        %s406 = scalar_select %p405, %s402, 7
        %s407 = smul.addr %s404, 8
        %s408 = sadd.s32 %s406, %s407
        %s409 = smul.addr %s408, 4
        %s410 = scalar_lea.vmem %s5, %s409
      $region52: #{resnet_generator_forward.39} parent=47 // pred_fallthru
        _
    $region48: #{resnet_generator_forward.39} parent=5 // pred_fallthru
      _
  $region6: #{resnet_generator_forward.39} parent=0 // loop_footer
    %s15 = sadd.s32 1, %s11
  $region7: #{resnet_generator_forward.39} parent=0 // loop_footer_branch
    %10 = sbr.rel target = $region3
  $region8: #{resnet_generator_forward.39} parent=0 // loop_exit
    _

// kernel: resnet_generator_forward.42
$region0: #{resnet_generator_forward.42}
  #allocation0 [shape = 'u32[]', space=smem, size = 0x4, offset = 0x4, fixed_abs, tag = 'smem constant byte address 0x4 - core index']
  #allocation1 [shape = 'u32[72,128]{1,0:T(1,128)}', space=vmem, size = 0x9000, scoped, tag = 'internal scratch']
  %s0 = inlined_call_operand.vmem [shape: bf16[2,16,32], index: 0, kind: input, shape index: {}]
  %s1 = inlined_call_operand.vmem [shape: f32[2,1,32], index: 1, kind: input, shape index: {}]
  %s2 = inlined_call_operand.vmem [shape: f32[2,1,32], index: 2, kind: input, shape index: {}]
  %s3 = inlined_call_operand.vmem [shape: f32[1,1,32], index: 3, kind: input, shape index: {}]
  %s4 = inlined_call_operand.vmem [shape: f32[1,1,32], index: 4, kind: input, shape index: {}]
  %s5 = inlined_call_operand.vmem [shape: bf16[2,16,32], index: 5, kind: output, shape index: {}]
  %s6 = sld [smem:[#allocation0]]
  $region53: #{resnet_generator_forward.42} parent=0
    _
  %s8 = ssub.s32 1, %s6
  %s9 = scalar_select 0, %s8, %s6
  loop: start=0, step=1, limit=4
  $region2: #{resnet_generator_forward.42} parent=0 // loop_pre_header
    _
  $region3: #{resnet_generator_forward.42} parent=0 // loop_header
    %s11 = sphi 0, %s15
    %p12 = scmp.ge.s32.totalorder %s11, 4
    %s18 = sphi 0, %s30
    %s19 = sphi 0, %s26
    %s20 = sphi 0, %s18
    %s21 = sphi 0, %s19
    %s22 = sphi 0, %s20
    %s23 = sphi 0, %s21
    %s35 = sphi 0, %s37
    %s38 = sphi 0, %s35
    %s39 = sphi 0, %s38
    %s55 = sphi 0, %s39
    %s61 = sphi 0, %s63
    %s64 = sphi 0, %s61
    %s65 = sphi 0, %s64
    %s81 = sphi 0, %s65
    %s87 = sphi 0, %s89
    %s90 = sphi 0, %s87
    %s91 = sphi 0, %s90
    %s107 = sphi 0, %s91
    %s111 = sphi 0, %s111
    %s113 = sphi 0, %s111
    %s114 = sphi 0, %s113
    %s128 = sphi 0, %s114
    %s132 = sphi 0, %s132
    %s134 = sphi 0, %s132
    %s135 = sphi 0, %s134
    %s149 = sphi 0, %s135
    %s157 = sphi 0, %s159
    %s160 = sphi 0, %s157
    %s161 = sphi 0, %s160
    %s177 = sphi 0, %s161
  $region4: #{resnet_generator_forward.42} parent=0 // loop_header_branch
    %14 = sbr.rel (%p12) target = $region8
  $region5: #{resnet_generator_forward.42} parent=0 // loop_body
    %s16 = ssub.s32 %s11, 1
    %s17 = ssub.s32 %s11, 2
    %s24 = sadd.s32 1, %s19
    %p25 = scmp.ge.s32.totalorder %s24, 1
    %s26 = scalar_select %p25, 0, %s24
    %s27 = sadd.s32 1, %s18
    %s28 = scalar_select %p25, %s27, %s18
    %p29 = scmp.ge.s32.totalorder %s28, 2
    %s30 = scalar_select %p29, 0, %s28
    %s31 = ssub.s32 %s18, %s30
    %s32 = ssub.s32 %s19, %s26
    %s33 = sor.u32 %s31, %s32
    %p34 = scmp.eq.s32.totalorder %s33, 0
    %s36 = sadd.s32 %s35, 1
    %s37 = scalar_select %p34, %s35, %s36
    %p40 = pneg %p34
    %p41 = scmp.eq.s32.totalorder %s11, 1
    %p42 = por %p40, %p41
    %p43 = scmp.ne.s32.totalorder %s35, %s38
    %p44 = scmp.eq.s32.totalorder %s11, 0
    %p45 = por %p43, %p44
    %p46 = scmp.ne.s32.totalorder %s35, %s38
    %p47 = scmp.eq.s32.totalorder %s16, 1
    %p48 = por %p46, %p47
    %p49 = scmp.ne.s32.totalorder %s38, %s39
    %p50 = scmp.eq.s32.totalorder %s16, 0
    %p51 = por %p49, %p50
    %p52 = scmp.ne.s32.totalorder %s38, %s39
    %p53 = scmp.eq.s32.totalorder %s17, 1
    %p54 = por %p52, %p53
    %p56 = scmp.ne.s32.totalorder %s39, %s55
    %p57 = scmp.eq.s32.totalorder %s17, 0
    %p58 = por %p56, %p57
    %s59 = ssub.s32 %s18, %s30
    %p60 = scmp.eq.s32.totalorder %s59, 0
    %s62 = sadd.s32 %s61, 1
    %s63 = scalar_select %p60, %s61, %s62
    %p66 = pneg %p60
    %p67 = scmp.eq.s32.totalorder %s11, 1
    %p68 = por %p66, %p67
    %p69 = scmp.ne.s32.totalorder %s61, %s64
    %p70 = scmp.eq.s32.totalorder %s11, 0
    %p71 = por %p69, %p70
    %p72 = scmp.ne.s32.totalorder %s61, %s64
    %p73 = scmp.eq.s32.totalorder %s16, 1
    %p74 = por %p72, %p73
    %p75 = scmp.ne.s32.totalorder %s64, %s65
    %p76 = scmp.eq.s32.totalorder %s16, 0
    %p77 = por %p75, %p76
    %p78 = scmp.ne.s32.totalorder %s64, %s65
    %p79 = scmp.eq.s32.totalorder %s17, 1
    %p80 = por %p78, %p79
    %p82 = scmp.ne.s32.totalorder %s65, %s81
    %p83 = scmp.eq.s32.totalorder %s17, 0
    %p84 = por %p82, %p83
    %s85 = ssub.s32 %s18, %s30
    %p86 = scmp.eq.s32.totalorder %s85, 0
    %s88 = sadd.s32 %s87, 1
    %s89 = scalar_select %p86, %s87, %s88
    %p92 = pneg %p86
    %p93 = scmp.eq.s32.totalorder %s11, 1
    %p94 = por %p92, %p93
    %p95 = scmp.ne.s32.totalorder %s87, %s90
    %p96 = scmp.eq.s32.totalorder %s11, 0
    %p97 = por %p95, %p96
    %p98 = scmp.ne.s32.totalorder %s87, %s90
    %p99 = scmp.eq.s32.totalorder %s16, 1
    %p100 = por %p98, %p99
    %p101 = scmp.ne.s32.totalorder %s90, %s91
    %p102 = scmp.eq.s32.totalorder %s16, 0
    %p103 = por %p101, %p102
    %p104 = scmp.ne.s32.totalorder %s90, %s91
    %p105 = scmp.eq.s32.totalorder %s17, 1
    %p106 = por %p104, %p105
    %p108 = scmp.ne.s32.totalorder %s91, %s107
    %p109 = scmp.eq.s32.totalorder %s17, 0
    %p110 = por %p108, %p109
    %s112 = sadd.s32 %s111, 1
    %p115 = scmp.eq.s32.totalorder %s11, 1
    %p116 = scmp.ne.s32.totalorder %s111, %s113
    %p117 = scmp.eq.s32.totalorder %s11, 0
    %p118 = por %p116, %p117
    %p119 = scmp.ne.s32.totalorder %s111, %s113
    %p120 = scmp.eq.s32.totalorder %s16, 1
    %p121 = por %p119, %p120
    %p122 = scmp.ne.s32.totalorder %s113, %s114
    %p123 = scmp.eq.s32.totalorder %s16, 0
    %p124 = por %p122, %p123
    %p125 = scmp.ne.s32.totalorder %s113, %s114
    %p126 = scmp.eq.s32.totalorder %s17, 1
    %p127 = por %p125, %p126
    %p129 = scmp.ne.s32.totalorder %s114, %s128
    %p130 = scmp.eq.s32.totalorder %s17, 0
    %p131 = por %p129, %p130
    %s133 = sadd.s32 %s132, 1
    %p136 = scmp.eq.s32.totalorder %s11, 1
    %p137 = scmp.ne.s32.totalorder %s132, %s134
    %p138 = scmp.eq.s32.totalorder %s11, 0
    %p139 = por %p137, %p138
    %p140 = scmp.ne.s32.totalorder %s132, %s134
    %p141 = scmp.eq.s32.totalorder %s16, 1
    %p142 = por %p140, %p141
    %p143 = scmp.ne.s32.totalorder %s134, %s135
    %p144 = scmp.eq.s32.totalorder %s16, 0
    %p145 = por %p143, %p144
    %p146 = scmp.ne.s32.totalorder %s134, %s135
    %p147 = scmp.eq.s32.totalorder %s17, 1
    %p148 = por %p146, %p147
    %p150 = scmp.ne.s32.totalorder %s135, %s149
    %p151 = scmp.eq.s32.totalorder %s17, 0
    %p152 = por %p150, %p151
    %s153 = ssub.s32 %s18, %s30
    %s154 = ssub.s32 %s19, %s26
    %s155 = sor.u32 %s153, %s154
    %p156 = scmp.eq.s32.totalorder %s155, 0
    %s158 = sadd.s32 %s157, 1
    %s159 = scalar_select %p156, %s157, %s158
    %p162 = pneg %p156
    %p163 = scmp.eq.s32.totalorder %s11, 1
    %p164 = por %p162, %p163
    %p165 = scmp.ne.s32.totalorder %s157, %s160
    %p166 = scmp.eq.s32.totalorder %s11, 0
    %p167 = por %p165, %p166
    %p168 = scmp.ne.s32.totalorder %s157, %s160
    %p169 = scmp.eq.s32.totalorder %s16, 1
    %p170 = por %p168, %p169
    %p171 = scmp.ne.s32.totalorder %s160, %s161
    %p172 = scmp.eq.s32.totalorder %s16, 0
    %p173 = por %p171, %p172
    %p174 = scmp.ne.s32.totalorder %s160, %s161
    %p175 = scmp.eq.s32.totalorder %s17, 1
    %p176 = por %p174, %p175
    %p178 = scmp.ne.s32.totalorder %s161, %s177
    %p179 = scmp.eq.s32.totalorder %s17, 0
    %p180 = por %p178, %p179
    %p181 = scmp.le.s32.totalorder 1, %s11
    %p182 = scmp.lt.s32.totalorder %s11, 3
    %p183 = pnand %p181, %p182
    %p184 = pneg %p183
    // Predicated region
    $region9: #{resnet_generator_forward.42} parent=5 // pred_check
      _
    $region10: #{resnet_generator_forward.42} parent=5 // pred_check_branch
      %186 = sbr.rel (%p183) target = $region12
    $region11: #{resnet_generator_forward.42} parent=5 // pred_region
      %s187 = ssub.s32 %s11, 1
      // Predicated region
      $region13: #{resnet_generator_forward.42} parent=11 // pred_check
        %p188 = pneg %p124
      $region14: #{resnet_generator_forward.42} parent=11 // pred_check_branch
        %190 = sbr.rel (%p188) target = $region16
      $region15: #{resnet_generator_forward.42} parent=11 // pred_region
        _
      $region16: #{resnet_generator_forward.42} parent=11 // pred_fallthru
        _
      // Predicated region
      $region17: #{resnet_generator_forward.42} parent=11 // pred_check
        %p191 = pneg %p145
      $region18: #{resnet_generator_forward.42} parent=11 // pred_check_branch
        %193 = sbr.rel (%p191) target = $region20
      $region19: #{resnet_generator_forward.42} parent=11 // pred_region
        _
      $region20: #{resnet_generator_forward.42} parent=11 // pred_fallthru
        _
    $region12: #{resnet_generator_forward.42} parent=5 // pred_fallthru
      _
    %p194 = scmp.lt.s32.totalorder %s11, 2
    // Predicated region
    $region21: #{resnet_generator_forward.42} parent=5 // pred_check
      %p195 = pneg %p194
    $region22: #{resnet_generator_forward.42} parent=5 // pred_check_branch
      %197 = sbr.rel (%p195) target = $region24
    $region23: #{resnet_generator_forward.42} parent=5 // pred_region
      // Predicated region
      $region25: #{resnet_generator_forward.42} parent=23 // pred_check
        %p198 = pneg %p45
      $region26: #{resnet_generator_forward.42} parent=23 // pred_check_branch
        %200 = sbr.rel (%p198) target = $region28
      $region27: #{resnet_generator_forward.42} parent=23 // pred_region
        %s201 = smul.u32 2, %s19
        %p202 = scmp.lt.s32.totalorder %s18, 1
        %s203 = scalar_select %p202, %s18, 1
        %p204 = scmp.lt.s32.totalorder %s201, 1
        %s205 = scalar_select %p204, %s201, 1
        %s206 = smul.addr %s203, 2
        %s207 = sadd.s32 %s205, %s206
        %s208 = smul.addr %s207, 4
        %s209 = scalar_lea.vmem %s0, %s208
        %s210 = smul.u32 2, %s19
      $region28: #{resnet_generator_forward.42} parent=23 // pred_fallthru
        _
      // Predicated region
      $region29: #{resnet_generator_forward.42} parent=23 // pred_check
        %p211 = pneg %p71
      $region30: #{resnet_generator_forward.42} parent=23 // pred_check_branch
        %213 = sbr.rel (%p211) target = $region32
      $region31: #{resnet_generator_forward.42} parent=23 // pred_region
        %p214 = scmp.lt.s32.totalorder %s18, 1
        %s215 = scalar_select %p214, %s18, 1
        %s216 = scalar_lea.vmem %s1, %s215
      $region32: #{resnet_generator_forward.42} parent=23 // pred_fallthru
        _
      // Predicated region
      $region33: #{resnet_generator_forward.42} parent=23 // pred_check
        %p217 = pneg %p97
      $region34: #{resnet_generator_forward.42} parent=23 // pred_check_branch
        %219 = sbr.rel (%p217) target = $region36
      $region35: #{resnet_generator_forward.42} parent=23 // pred_region
        %p220 = scmp.lt.s32.totalorder %s18, 1
        %s221 = scalar_select %p220, %s18, 1
        %s222 = scalar_lea.vmem %s2, %s221
      $region36: #{resnet_generator_forward.42} parent=23 // pred_fallthru
        _
    $region24: #{resnet_generator_forward.42} parent=5 // pred_fallthru
      _
    %p223 = scmp.le.s32.totalorder 1, %s11
    %p224 = scmp.lt.s32.totalorder %s11, 3
    %p225 = pnand %p223, %p224
    %p226 = pneg %p225
    // Predicated region
    $region37: #{resnet_generator_forward.42} parent=5 // pred_check
      _
    $region38: #{resnet_generator_forward.42} parent=5 // pred_check_branch
      %228 = sbr.rel (%p225) target = $region40
    $region39: #{resnet_generator_forward.42} parent=5 // pred_region
      %s229 = ssub.s32 %s11, 1
      %s230 = smul.u32 2, %s21
      %p231 = scmp.lt.s32.totalorder %s20, 1
      %s232 = scalar_select %p231, %s20, 1
      %p233 = scmp.lt.s32.totalorder %s230, 1
      %s234 = scalar_select %p233, %s230, 1
      %s235 = smul.addr %s232, 2
      %s236 = sadd.s32 %s234, %s235
      %s237 = smul.addr %s236, 4
      %s238 = scalar_lea.vmem %s0, %s237
      %p239 = pneg %p51
      %p240 = pneg %p48
      %p241 = scmp.lt.s32.totalorder %s20, 1
      %s242 = scalar_select %p241, %s20, 1
      %s243 = scalar_lea.vmem %s1, %s242
      %p244 = pneg %p77
      %p245 = pneg %p74
      %p246 = scmp.lt.s32.totalorder %s20, 1
      %s247 = scalar_select %p246, %s20, 1
      %s248 = scalar_lea.vmem %s2, %s247
      %p249 = pneg %p103
      %p250 = pneg %p100
      %p251 = pneg %p124
      %p252 = pneg %p121
      %p253 = pneg %p145
      %p254 = pneg %p142
      %p255 = pneg %p173
      %p256 = pneg %p170
      %s257 = smul.u32 2, %s21
      %p258 = scmp.lt.s32.totalorder %s20, 1
      %s259 = scalar_select %p258, %s20, 1
      %p260 = scmp.lt.s32.totalorder %s257, 1
      %s261 = scalar_select %p260, %s257, 1
      %s262 = smul.addr %s259, 2
      %s263 = sadd.s32 %s261, %s262
      %s264 = smul.addr %s263, 4
      %s265 = scalar_lea.vmem %s5, %s264
      %s266 = smul.u32 2, %s21
      %p267 = scmp.lt.s32.totalorder %s20, 1
      %s268 = scalar_select %p267, %s20, 1
      %p269 = scmp.lt.s32.totalorder %s266, 1
      %s270 = scalar_select %p269, %s266, 1
      %s271 = smul.addr %s268, 2
      %s272 = sadd.s32 %s270, %s271
      %s273 = smul.addr %s272, 4
      %s274 = scalar_lea.vmem %s0, %s273
      %s275 = smul.u32 2, %s21
      %p276 = scmp.lt.s32.totalorder %s20, 1
      %s277 = scalar_select %p276, %s20, 1
      %s278 = scalar_lea.vmem %s1, %s277
      %p279 = scmp.lt.s32.totalorder %s20, 1
      %s280 = scalar_select %p279, %s20, 1
      %s281 = scalar_lea.vmem %s2, %s280
      %s282 = smul.u32 2, %s21
      %p283 = scmp.lt.s32.totalorder %s20, 1
      %s284 = scalar_select %p283, %s20, 1
      %p285 = scmp.lt.s32.totalorder %s282, 1
      %s286 = scalar_select %p285, %s282, 1
      %s287 = smul.addr %s284, 2
      %s288 = sadd.s32 %s286, %s287
      %s289 = smul.addr %s288, 4
      %s290 = scalar_lea.vmem %s5, %s289
      %s291 = smul.u32 2, %s21
      %v292 = vld [vmem:[%s274] sm:$0xf]
      %v293 = vld [vmem:[%s274 + $0x4] sm:$0xf]
      %v294 = vunpack.c.l.bf16 %v292
      %v295 = vunpack.c.l.bf16 %v293
      %v296 = vld [vmem:[%s278] sm:$0x1]
      %v298 = vperm.slane %v296, 0
      %v300 = vsub.f32 %v294, %v298
      %v301 = vsub.f32 %v295, %v298
      %v302 = vld [vmem:[%s281] sm:$0x1]
      %v304 = vperm.slane %v302, 0
      %v306 = vmul.f32 %v300, %v304
      %v307 = vmul.f32 %v301, %v304
      %v308 = vld [vmem:[%s3] sm:$0x1]
      %v310 = vperm.slane %v308, 0
      %v312 = vmul.f32 %v306, %v310
      %v313 = vmul.f32 %v307, %v310
      %v314 = vld [vmem:[%s4] sm:$0x1]
      %v316 = vperm.slane %v314, 0
      %v318 = vadd.f32 %v312, %v316
      %v319 = vadd.f32 %v313, %v316
      %v320 = vmax.f32 %v318, 0.0
      %v321 = vmax.f32 %v319, 0.0
      %v322 = vpack.c.bf16 %v320, %v320
      %v323 = vpack.c.bf16 %v321, %v321
      %vm324 = vcmask 257024
      %325 = vst.msk [vmem:[%s290] sm:$0xf] %vm324, %v322
      %326 = vst.msk [vmem:[%s290 + $0x4] sm:$0xf] %vm324, %v323
      %s327 = smul.u32 2, %s21
      %p328 = scmp.lt.s32.totalorder %s20, 1
      %s329 = scalar_select %p328, %s20, 1
      %p330 = scmp.lt.s32.totalorder %s327, 1
      %s331 = scalar_select %p330, %s327, 1
      %s332 = smul.addr %s329, 2
      %s333 = sadd.s32 %s331, %s332
      %s334 = smul.addr %s333, 4
      %s335 = scalar_lea.vmem %s5, %s334
      // Predicated region
      $region41: #{resnet_generator_forward.42} parent=39 // pred_check
        %p336 = pneg %p170
      $region42: #{resnet_generator_forward.42} parent=39 // pred_check_branch
        %338 = sbr.rel (%p336) target = $region44
      $region43: #{resnet_generator_forward.42} parent=39 // pred_region
        %s339 = smul.u32 2, %s21
      $region44: #{resnet_generator_forward.42} parent=39 // pred_fallthru
        _
    $region40: #{resnet_generator_forward.42} parent=5 // pred_fallthru
      _
    %p340 = scmp.le.s32.totalorder 2, %s11
    // Predicated region
    $region45: #{resnet_generator_forward.42} parent=5 // pred_check
      %p341 = pneg %p340
    $region46: #{resnet_generator_forward.42} parent=5 // pred_check_branch
      %343 = sbr.rel (%p341) target = $region48
    $region47: #{resnet_generator_forward.42} parent=5 // pred_region
      %s344 = ssub.s32 %s11, 2
      // Predicated region
      $region49: #{resnet_generator_forward.42} parent=47 // pred_check
        %p345 = pneg %p176
      $region50: #{resnet_generator_forward.42} parent=47 // pred_check_branch
        %347 = sbr.rel (%p345) target = $region52
      $region51: #{resnet_generator_forward.42} parent=47 // pred_region
        %s348 = smul.u32 2, %s23
        %p349 = scmp.lt.s32.totalorder %s22, 1
        %s350 = scalar_select %p349, %s22, 1
        %p351 = scmp.lt.s32.totalorder %s348, 1
        %s352 = scalar_select %p351, %s348, 1
        %s353 = smul.addr %s350, 2
        %s354 = sadd.s32 %s352, %s353
        %s355 = smul.addr %s354, 4
        %s356 = scalar_lea.vmem %s5, %s355
      $region52: #{resnet_generator_forward.42} parent=47 // pred_fallthru
        _
    $region48: #{resnet_generator_forward.42} parent=5 // pred_fallthru
      _
  $region6: #{resnet_generator_forward.42} parent=0 // loop_footer
    %s15 = sadd.s32 1, %s11
  $region7: #{resnet_generator_forward.42} parent=0 // loop_footer_branch
    %10 = sbr.rel target = $region3
  $region8: #{resnet_generator_forward.42} parent=0 // loop_exit
    _

// kernel: resnet_generator_forward.40
$region0: #{resnet_generator_forward.40}
  #allocation0 [shape = 'u32[]', space=smem, size = 0x4, offset = 0x4, fixed_abs, tag = 'smem constant byte address 0x4 - core index']
  #allocation1 [shape = 'u32[72,128]{1,0:T(1,128)}', space=vmem, size = 0x9000, scoped, tag = 'internal scratch']
  #allocation2 [shape = 'f32[128,128]{1,0:T(8,128)}', space=vmem, size = 0x10000, scoped, tag = 'scratch operand']
  %s0 = inlined_call_operand.vmem [shape: bf16[128,256], index: 0, kind: input, shape index: {}]
  %s1 = inlined_call_operand.vmem [shape: bf16[256,128], index: 1, kind: input, shape index: {}]
  %s2 = inlined_call_operand.vmem [shape: bf16[128,128], index: 2, kind: output, shape index: {}]
  %s3 = sld [smem:[#allocation0]]
  $region26: #{resnet_generator_forward.40} parent=0
    _
  %s5 = ssub.s32 1, %s3
  %s6 = scalar_select 0, %s5, %s3
  // Predicated region
  $region2: #{resnet_generator_forward.40} parent=0 // pred_check
    _
  $region3: #{resnet_generator_forward.40} parent=0 // pred_check_branch
    %8 = sbr.rel (0) target = $region5
  $region4: #{resnet_generator_forward.40} parent=0 // pred_region
    _
  $region5: #{resnet_generator_forward.40} parent=0 // pred_fallthru
    _
  // Predicated region
  $region6: #{resnet_generator_forward.40} parent=0 // pred_check
    _
  $region7: #{resnet_generator_forward.40} parent=0 // pred_check_branch
    %10 = sbr.rel (0) target = $region9
  $region8: #{resnet_generator_forward.40} parent=0 // pred_region
    _
  $region9: #{resnet_generator_forward.40} parent=0 // pred_fallthru
    _
  %p11 = scmp.eq.s32.totalorder 0, 0
  // Predicated region
  $region10: #{resnet_generator_forward.40} parent=0 // pred_check
    %p12 = pneg %p11
  $region11: #{resnet_generator_forward.40} parent=0 // pred_check_branch
    %14 = sbr.rel (%p12) target = $region13
  $region12: #{resnet_generator_forward.40} parent=0 // pred_region
    %15 = vst [vmem:[#allocation2] sm:$0xff] 0.0
    %16 = vst [vmem:[#allocation2 + $0x8] sm:$0xff] 0.0
    %17 = vst [vmem:[#allocation2 + $0x10] sm:$0xff] 0.0
    %18 = vst [vmem:[#allocation2 + $0x18] sm:$0xff] 0.0
    %19 = vst [vmem:[#allocation2 + $0x20] sm:$0xff] 0.0
    %20 = vst [vmem:[#allocation2 + $0x28] sm:$0xff] 0.0
    %21 = vst [vmem:[#allocation2 + $0x30] sm:$0xff] 0.0
    %22 = vst [vmem:[#allocation2 + $0x38] sm:$0xff] 0.0
    %23 = vst [vmem:[#allocation2 + $0x40] sm:$0xff] 0.0
    %24 = vst [vmem:[#allocation2 + $0x48] sm:$0xff] 0.0
    %25 = vst [vmem:[#allocation2 + $0x50] sm:$0xff] 0.0
    %26 = vst [vmem:[#allocation2 + $0x58] sm:$0xff] 0.0
    %27 = vst [vmem:[#allocation2 + $0x60] sm:$0xff] 0.0
    %28 = vst [vmem:[#allocation2 + $0x68] sm:$0xff] 0.0
    %29 = vst [vmem:[#allocation2 + $0x70] sm:$0xff] 0.0
    %30 = vst [vmem:[#allocation2 + $0x78] sm:$0xff] 0.0
  $region13: #{resnet_generator_forward.40} parent=0 // pred_fallthru
    _
  %v31 = vld [vmem:[#allocation2] sm:$0xff]
  %v32 = vld [vmem:[#allocation2 + $0x8] sm:$0xff]
  %v33 = vld [vmem:[#allocation2 + $0x10] sm:$0xff]
  %v34 = vld [vmem:[#allocation2 + $0x18] sm:$0xff]
  %v35 = vld [vmem:[#allocation2 + $0x20] sm:$0xff]
  %v36 = vld [vmem:[#allocation2 + $0x28] sm:$0xff]
  %v37 = vld [vmem:[#allocation2 + $0x30] sm:$0xff]
  %v38 = vld [vmem:[#allocation2 + $0x38] sm:$0xff]
  %v39 = vld [vmem:[#allocation2 + $0x40] sm:$0xff]
  %v40 = vld [vmem:[#allocation2 + $0x48] sm:$0xff]
  %v41 = vld [vmem:[#allocation2 + $0x50] sm:$0xff]
  %v42 = vld [vmem:[#allocation2 + $0x58] sm:$0xff]
  %v43 = vld [vmem:[#allocation2 + $0x60] sm:$0xff]
  %v44 = vld [vmem:[#allocation2 + $0x68] sm:$0xff]
  %v45 = vld [vmem:[#allocation2 + $0x70] sm:$0xff]
  %v46 = vld [vmem:[#allocation2 + $0x78] sm:$0xff]
  %v47 = vld [vmem:[%s0] sm:$0xff]
  %v48 = vld [vmem:[%s0 + $0x8] sm:$0xff]
  %v49 = vld [vmem:[%s0 + $0x10] sm:$0xff]
  %v50 = vld [vmem:[%s0 + $0x18] sm:$0xff]
  %v51 = vld [vmem:[%s0 + $0x20] sm:$0xff]
  %v52 = vld [vmem:[%s0 + $0x28] sm:$0xff]
  %v53 = vld [vmem:[%s0 + $0x30] sm:$0xff]
  %v54 = vld [vmem:[%s0 + $0x38] sm:$0xff]
  %v55 = vld [vmem:[%s0 + $0x40] sm:$0xff]
  %v56 = vld [vmem:[%s0 + $0x48] sm:$0xff]
  %v57 = vld [vmem:[%s0 + $0x50] sm:$0xff]
  %v58 = vld [vmem:[%s0 + $0x58] sm:$0xff]
  %v59 = vld [vmem:[%s0 + $0x60] sm:$0xff]
  %v60 = vld [vmem:[%s0 + $0x68] sm:$0xff]
  %v61 = vld [vmem:[%s0 + $0x70] sm:$0xff]
  %v62 = vld [vmem:[%s0 + $0x78] sm:$0xff]
  %v63 = vld [vmem:[%s1] sm:$0xf]
  %v64 = vld [vmem:[%s1 + $0x4] sm:$0xf]
  %v65 = vld [vmem:[%s1 + $0x8] sm:$0xf]
  %v66 = vld [vmem:[%s1 + $0xc] sm:$0xf]
  %v67 = vld [vmem:[%s1 + $0x10] sm:$0xf]
  %v68 = vld [vmem:[%s1 + $0x14] sm:$0xf]
  %v69 = vld [vmem:[%s1 + $0x18] sm:$0xf]
  %v70 = vld [vmem:[%s1 + $0x1c] sm:$0xf]
  %v71 = vld [vmem:[%s1 + $0x20] sm:$0xf]
  %v72 = vld [vmem:[%s1 + $0x24] sm:$0xf]
  %v73 = vld [vmem:[%s1 + $0x28] sm:$0xf]
  %v74 = vld [vmem:[%s1 + $0x2c] sm:$0xf]
  %v75 = vld [vmem:[%s1 + $0x30] sm:$0xf]
  %v76 = vld [vmem:[%s1 + $0x34] sm:$0xf]
  %v77 = vld [vmem:[%s1 + $0x38] sm:$0xf]
  %v78 = vld [vmem:[%s1 + $0x3c] sm:$0xf]
  %v79 = vld [vmem:[%s1 + $0x40] sm:$0xf]
  %v80 = vld [vmem:[%s1 + $0x44] sm:$0xf]
  %v81 = vld [vmem:[%s1 + $0x48] sm:$0xf]
  %v82 = vld [vmem:[%s1 + $0x4c] sm:$0xf]
  %v83 = vld [vmem:[%s1 + $0x50] sm:$0xf]
  %v84 = vld [vmem:[%s1 + $0x54] sm:$0xf]
  %v85 = vld [vmem:[%s1 + $0x58] sm:$0xf]
  %v86 = vld [vmem:[%s1 + $0x5c] sm:$0xf]
  %v87 = vld [vmem:[%s1 + $0x60] sm:$0xf]
  %v88 = vld [vmem:[%s1 + $0x64] sm:$0xf]
  %v89 = vld [vmem:[%s1 + $0x68] sm:$0xf]
  %v90 = vld [vmem:[%s1 + $0x6c] sm:$0xf]
  %v91 = vld [vmem:[%s1 + $0x70] sm:$0xf]
  %v92 = vld [vmem:[%s1 + $0x74] sm:$0xf]
  %v93 = vld [vmem:[%s1 + $0x78] sm:$0xf]
  %v94 = vld [vmem:[%s1 + $0x7c] sm:$0xf]
  %v111 = vunpack.c.l.b16 %v47
  %v112 = vunpack.c.h.b16 %v47
  %v113 = vunpack.c.l.b16 %v48
  %v114 = vunpack.c.h.b16 %v48
  %v115 = vunpack.c.l.b16 %v49
  %v116 = vunpack.c.h.b16 %v49
  %v117 = vunpack.c.l.b16 %v50
  %v118 = vunpack.c.h.b16 %v50
  %v119 = vunpack.c.l.b16 %v51
  %v120 = vunpack.c.h.b16 %v51
  %v121 = vunpack.c.l.b16 %v52
  %v122 = vunpack.c.h.b16 %v52
  %v123 = vunpack.c.l.b16 %v53
  %v124 = vunpack.c.h.b16 %v53
  %v125 = vunpack.c.l.b16 %v54
  %v126 = vunpack.c.h.b16 %v54
  %v127 = vunpack.c.l.b16 %v55
  %v128 = vunpack.c.h.b16 %v55
  %v129 = vunpack.c.l.b16 %v56
  %v130 = vunpack.c.h.b16 %v56
  %v131 = vunpack.c.l.b16 %v57
  %v132 = vunpack.c.h.b16 %v57
  %v133 = vunpack.c.l.b16 %v58
  %v134 = vunpack.c.h.b16 %v58
  %v135 = vunpack.c.l.b16 %v59
  %v136 = vunpack.c.h.b16 %v59
  %v137 = vunpack.c.l.b16 %v60
  %v138 = vunpack.c.h.b16 %v60
  %v139 = vunpack.c.l.b16 %v61
  %v140 = vunpack.c.h.b16 %v61
  %v141 = vunpack.c.l.b16 %v62
  %v142 = vunpack.c.h.b16 %v62
  %v143 = vpack.c.b16 %v113, %v111
  %v144 = vpack.c.b16 %v114, %v112
  %v145 = vpack.c.b16 %v117, %v115
  %v146 = vpack.c.b16 %v118, %v116
  %v147 = vpack.c.b16 %v121, %v119
  %v148 = vpack.c.b16 %v122, %v120
  %v149 = vpack.c.b16 %v125, %v123
  %v150 = vpack.c.b16 %v126, %v124
  %v151 = vpack.c.b16 %v129, %v127
  %v152 = vpack.c.b16 %v130, %v128
  %v153 = vpack.c.b16 %v133, %v131
  %v154 = vpack.c.b16 %v134, %v132
  %v155 = vpack.c.b16 %v137, %v135
  %v156 = vpack.c.b16 %v138, %v136
  %v157 = vpack.c.b16 %v141, %v139
  %v158 = vpack.c.b16 %v142, %v140
  %v207 = vunpack.c.l.b16 %v63
  %v208 = vunpack.c.l.b16 %v64
  %v209 = vunpack.c.l.b16 %v65
  %v210 = vunpack.c.l.b16 %v66
  %v211 = vunpack.c.l.b16 %v67
  %v212 = vunpack.c.l.b16 %v68
  %v213 = vunpack.c.l.b16 %v69
  %v214 = vunpack.c.l.b16 %v70
  %v215 = vunpack.c.l.b16 %v71
  %v216 = vunpack.c.l.b16 %v72
  %v217 = vunpack.c.l.b16 %v73
  %v218 = vunpack.c.l.b16 %v74
  %v219 = vunpack.c.l.b16 %v75
  %v220 = vunpack.c.l.b16 %v76
  %v221 = vunpack.c.l.b16 %v77
  %v222 = vunpack.c.l.b16 %v78
  %v223 = vunpack.c.l.b16 %v79
  %v224 = vunpack.c.l.b16 %v80
  %v225 = vunpack.c.l.b16 %v81
  %v226 = vunpack.c.l.b16 %v82
  %v227 = vunpack.c.l.b16 %v83
  %v228 = vunpack.c.l.b16 %v84
  %v229 = vunpack.c.l.b16 %v85
  %v230 = vunpack.c.l.b16 %v86
  %v231 = vunpack.c.l.b16 %v87
  %v232 = vunpack.c.l.b16 %v88
  %v233 = vunpack.c.l.b16 %v89
  %v234 = vunpack.c.l.b16 %v90
  %v235 = vunpack.c.l.b16 %v91
  %v236 = vunpack.c.l.b16 %v92
  %v237 = vunpack.c.l.b16 %v93
  %v238 = vunpack.c.l.b16 %v94
  %v239 = vpack.c.b16 %v208, %v207
  %v240 = vpack.c.b16 %v210, %v209
  %v241 = vpack.c.b16 %v212, %v211
  %v242 = vpack.c.b16 %v214, %v213
  %v243 = vpack.c.b16 %v216, %v215
  %v244 = vpack.c.b16 %v218, %v217
  %v245 = vpack.c.b16 %v220, %v219
  %v246 = vpack.c.b16 %v222, %v221
  %v247 = vpack.c.b16 %v224, %v223
  %v248 = vpack.c.b16 %v226, %v225
  %v249 = vpack.c.b16 %v228, %v227
  %v250 = vpack.c.b16 %v230, %v229
  %v251 = vpack.c.b16 %v232, %v231
  %v252 = vpack.c.b16 %v234, %v233
  %v253 = vpack.c.b16 %v236, %v235
  %v254 = vpack.c.b16 %v238, %v237
  %271 = vmatpush.bf16.msra.mxu0 %v246
  %272 = vmatpush.bf16.msra.mxu0 %v245
  %273 = vmatpush.bf16.msra.mxu0 %v244
  %274 = vmatpush.bf16.msra.mxu0 %v243
  %275 = vmatpush.bf16.msra.mxu0 %v242
  %276 = vmatpush.bf16.msra.mxu0 %v241
  %277 = vmatpush.bf16.msra.mxu0 %v240
  %278 = vmatpush.bf16.msra.mxu0 %v239
  %279 = vmatmul.bf16.gmra.mxu0 %v143
  %v280 = vpop.f32.mrf.mxu0
  %v281 = vadd.f32 0.0, %v280
  %v282 = vpop.f32.mrf.mxu0
  %v283 = vadd.f32 0.0, %v282
  %284 = vmatmul.bf16.gmra.mxu0 %v145
  %v285 = vpop.f32.mrf.mxu0
  %v286 = vadd.f32 0.0, %v285
  %v287 = vpop.f32.mrf.mxu0
  %v288 = vadd.f32 0.0, %v287
  %289 = vmatmul.bf16.gmra.mxu0 %v147
  %v290 = vpop.f32.mrf.mxu0
  %v291 = vadd.f32 0.0, %v290
  %v292 = vpop.f32.mrf.mxu0
  %v293 = vadd.f32 0.0, %v292
  %294 = vmatmul.bf16.gmra.mxu0 %v149
  %v295 = vpop.f32.mrf.mxu0
  %v296 = vadd.f32 0.0, %v295
  %v297 = vpop.f32.mrf.mxu0
  %v298 = vadd.f32 0.0, %v297
  %299 = vmatmul.bf16.gmra.mxu0 %v151
  %v300 = vpop.f32.mrf.mxu0
  %v301 = vadd.f32 0.0, %v300
  %v302 = vpop.f32.mrf.mxu0
  %v303 = vadd.f32 0.0, %v302
  %304 = vmatmul.bf16.gmra.mxu0 %v153
  %v305 = vpop.f32.mrf.mxu0
  %v306 = vadd.f32 0.0, %v305
  %v307 = vpop.f32.mrf.mxu0
  %v308 = vadd.f32 0.0, %v307
  %309 = vmatmul.bf16.gmra.mxu0 %v155
  %v310 = vpop.f32.mrf.mxu0
  %v311 = vadd.f32 0.0, %v310
  %v312 = vpop.f32.mrf.mxu0
  %v313 = vadd.f32 0.0, %v312
  %314 = vmatmul.bf16.gmra.mxu0 %v157
  %v315 = vpop.f32.mrf.mxu0
  %v316 = vadd.f32 0.0, %v315
  %v317 = vpop.f32.mrf.mxu0
  %v318 = vadd.f32 0.0, %v317
  %319 = vdwg.mxu0
  %320 = vmatpush.bf16.msra.mxu0 %v254
  %321 = vmatpush.bf16.msra.mxu0 %v253
  %322 = vmatpush.bf16.msra.mxu0 %v252
  %323 = vmatpush.bf16.msra.mxu0 %v251
  %324 = vmatpush.bf16.msra.mxu0 %v250
  %325 = vmatpush.bf16.msra.mxu0 %v249
  %326 = vmatpush.bf16.msra.mxu0 %v248
  %327 = vmatpush.bf16.msra.mxu0 %v247
  %328 = vmatmul.bf16.gmra.mxu0 %v144
  %v329 = vpop.f32.mrf.mxu0
  %v330 = vadd.f32 %v281, %v329
  %v331 = vpop.f32.mrf.mxu0
  %v332 = vadd.f32 %v283, %v331
  %333 = vmatmul.bf16.gmra.mxu0 %v146
  %v334 = vpop.f32.mrf.mxu0
  %v335 = vadd.f32 %v286, %v334
  %v336 = vpop.f32.mrf.mxu0
  %v337 = vadd.f32 %v288, %v336
  %338 = vmatmul.bf16.gmra.mxu0 %v148
  %v339 = vpop.f32.mrf.mxu0
  %v340 = vadd.f32 %v291, %v339
  %v341 = vpop.f32.mrf.mxu0
  %v342 = vadd.f32 %v293, %v341
  %343 = vmatmul.bf16.gmra.mxu0 %v150
  %v344 = vpop.f32.mrf.mxu0
  %v345 = vadd.f32 %v296, %v344
  %v346 = vpop.f32.mrf.mxu0
  %v347 = vadd.f32 %v298, %v346
  %348 = vmatmul.bf16.gmra.mxu0 %v152
  %v349 = vpop.f32.mrf.mxu0
  %v350 = vadd.f32 %v301, %v349
  %v351 = vpop.f32.mrf.mxu0
  %v352 = vadd.f32 %v303, %v351
  %353 = vmatmul.bf16.gmra.mxu0 %v154
  %v354 = vpop.f32.mrf.mxu0
  %v355 = vadd.f32 %v306, %v354
  %v356 = vpop.f32.mrf.mxu0
  %v357 = vadd.f32 %v308, %v356
  %358 = vmatmul.bf16.gmra.mxu0 %v156
  %v359 = vpop.f32.mrf.mxu0
  %v360 = vadd.f32 %v311, %v359
  %v361 = vpop.f32.mrf.mxu0
  %v362 = vadd.f32 %v313, %v361
  %363 = vmatmul.bf16.gmra.mxu0 %v158
  %v364 = vpop.f32.mrf.mxu0
  %v365 = vadd.f32 %v316, %v364
  %v366 = vpop.f32.mrf.mxu0
  %v367 = vadd.f32 %v318, %v366
  %368 = vdwg.mxu0
  %v369 = vadd.f32 %v31, %v330
  %v370 = vadd.f32 %v32, %v332
  %v371 = vadd.f32 %v33, %v335
  %v372 = vadd.f32 %v34, %v337
  %v373 = vadd.f32 %v35, %v340
  %v374 = vadd.f32 %v36, %v342
  %v375 = vadd.f32 %v37, %v345
  %v376 = vadd.f32 %v38, %v347
  %v377 = vadd.f32 %v39, %v350
  %v378 = vadd.f32 %v40, %v352
  %v379 = vadd.f32 %v41, %v355
  %v380 = vadd.f32 %v42, %v357
  %v381 = vadd.f32 %v43, %v360
  %v382 = vadd.f32 %v44, %v362
  %v383 = vadd.f32 %v45, %v365
  %v384 = vadd.f32 %v46, %v367
  %385 = vst [vmem:[#allocation2] sm:$0xff] %v369
  %386 = vst [vmem:[#allocation2 + $0x8] sm:$0xff] %v370
  %387 = vst [vmem:[#allocation2 + $0x10] sm:$0xff] %v371
  %388 = vst [vmem:[#allocation2 + $0x18] sm:$0xff] %v372
  %389 = vst [vmem:[#allocation2 + $0x20] sm:$0xff] %v373
  %390 = vst [vmem:[#allocation2 + $0x28] sm:$0xff] %v374
  %391 = vst [vmem:[#allocation2 + $0x30] sm:$0xff] %v375
  %392 = vst [vmem:[#allocation2 + $0x38] sm:$0xff] %v376
  %393 = vst [vmem:[#allocation2 + $0x40] sm:$0xff] %v377
  %394 = vst [vmem:[#allocation2 + $0x48] sm:$0xff] %v378
  %395 = vst [vmem:[#allocation2 + $0x50] sm:$0xff] %v379
  %396 = vst [vmem:[#allocation2 + $0x58] sm:$0xff] %v380
  %397 = vst [vmem:[#allocation2 + $0x60] sm:$0xff] %v381
  %398 = vst [vmem:[#allocation2 + $0x68] sm:$0xff] %v382
  %399 = vst [vmem:[#allocation2 + $0x70] sm:$0xff] %v383
  %400 = vst [vmem:[#allocation2 + $0x78] sm:$0xff] %v384
  // Predicated region
  $region14: #{resnet_generator_forward.40} parent=0 // pred_check
    %p401 = pneg %p11
  $region15: #{resnet_generator_forward.40} parent=0 // pred_check_branch
    %403 = sbr.rel (%p401) target = $region17
  $region16: #{resnet_generator_forward.40} parent=0 // pred_region
    %v404 = vld [vmem:[#allocation2] sm:$0xff]
    %v405 = vld [vmem:[#allocation2 + $0x8] sm:$0xff]
    %v406 = vld [vmem:[#allocation2 + $0x10] sm:$0xff]
    %v407 = vld [vmem:[#allocation2 + $0x18] sm:$0xff]
    %v408 = vld [vmem:[#allocation2 + $0x20] sm:$0xff]
    %v409 = vld [vmem:[#allocation2 + $0x28] sm:$0xff]
    %v410 = vld [vmem:[#allocation2 + $0x30] sm:$0xff]
    %v411 = vld [vmem:[#allocation2 + $0x38] sm:$0xff]
    %v412 = vld [vmem:[#allocation2 + $0x40] sm:$0xff]
    %v413 = vld [vmem:[#allocation2 + $0x48] sm:$0xff]
    %v414 = vld [vmem:[#allocation2 + $0x50] sm:$0xff]
    %v415 = vld [vmem:[#allocation2 + $0x58] sm:$0xff]
    %v416 = vld [vmem:[#allocation2 + $0x60] sm:$0xff]
    %v417 = vld [vmem:[#allocation2 + $0x68] sm:$0xff]
    %v418 = vld [vmem:[#allocation2 + $0x70] sm:$0xff]
    %v419 = vld [vmem:[#allocation2 + $0x78] sm:$0xff]
    %v420 = vpack.c.bf16 %v404, %v404
    %v421 = vpack.c.bf16 %v405, %v405
    %v422 = vpack.c.bf16 %v406, %v406
    %v423 = vpack.c.bf16 %v407, %v407
    %v424 = vpack.c.bf16 %v408, %v408
    %v425 = vpack.c.bf16 %v409, %v409
    %v426 = vpack.c.bf16 %v410, %v410
    %v427 = vpack.c.bf16 %v411, %v411
    %v428 = vpack.c.bf16 %v412, %v412
    %v429 = vpack.c.bf16 %v413, %v413
    %v430 = vpack.c.bf16 %v414, %v414
    %v431 = vpack.c.bf16 %v415, %v415
    %v432 = vpack.c.bf16 %v416, %v416
    %v433 = vpack.c.bf16 %v417, %v417
    %v434 = vpack.c.bf16 %v418, %v418
    %v435 = vpack.c.bf16 %v419, %v419
    %436 = vst [vmem:[%s2] sm:$0xf] %v420
    %437 = vst [vmem:[%s2 + $0x4] sm:$0xf] %v421
    %438 = vst [vmem:[%s2 + $0x8] sm:$0xf] %v422
    %439 = vst [vmem:[%s2 + $0xc] sm:$0xf] %v423
    %440 = vst [vmem:[%s2 + $0x10] sm:$0xf] %v424
    %441 = vst [vmem:[%s2 + $0x14] sm:$0xf] %v425
    %442 = vst [vmem:[%s2 + $0x18] sm:$0xf] %v426
    %443 = vst [vmem:[%s2 + $0x1c] sm:$0xf] %v427
    %444 = vst [vmem:[%s2 + $0x20] sm:$0xf] %v428
    %445 = vst [vmem:[%s2 + $0x24] sm:$0xf] %v429
    %446 = vst [vmem:[%s2 + $0x28] sm:$0xf] %v430
    %447 = vst [vmem:[%s2 + $0x2c] sm:$0xf] %v431
    %448 = vst [vmem:[%s2 + $0x30] sm:$0xf] %v432
    %449 = vst [vmem:[%s2 + $0x34] sm:$0xf] %v433
    %450 = vst [vmem:[%s2 + $0x38] sm:$0xf] %v434
    %451 = vst [vmem:[%s2 + $0x3c] sm:$0xf] %v435
  $region17: #{resnet_generator_forward.40} parent=0 // pred_fallthru
    _
  // Predicated region
  $region18: #{resnet_generator_forward.40} parent=0 // pred_check
    _
  $region19: #{resnet_generator_forward.40} parent=0 // pred_check_branch
    %453 = sbr.rel (0) target = $region21
  $region20: #{resnet_generator_forward.40} parent=0 // pred_region
    _
  $region21: #{resnet_generator_forward.40} parent=0 // pred_fallthru
    _
  // Predicated region
  $region22: #{resnet_generator_forward.40} parent=0 // pred_check
    _
  $region23: #{resnet_generator_forward.40} parent=0 // pred_check_branch
    %455 = sbr.rel (0) target = $region25
  $region24: #{resnet_generator_forward.40} parent=0 // pred_region
    _
  $region25: #{resnet_generator_forward.40} parent=0 // pred_fallthru
    _

// kernel: resnet_generator_forward.41
$region0: #{resnet_generator_forward.41}
  #allocation0 [shape = 'u32[]', space=smem, size = 0x4, offset = 0x4, fixed_abs, tag = 'smem constant byte address 0x4 - core index']
  #allocation1 [shape = 'u32[72,128]{1,0:T(1,128)}', space=vmem, size = 0x9000, scoped, tag = 'internal scratch']
  %s0 = inlined_call_operand.vmem [shape: bf16[2,16,32], index: 0, kind: input, shape index: {}]
  %s1 = inlined_call_operand.vmem [shape: f32[2,1,32], index: 1, kind: output, shape index: {0}]
  %s2 = inlined_call_operand.vmem [shape: f32[2,1,32], index: 2, kind: output, shape index: {1}]
  %3 = xla_tuple %s1, %s2
  %s4 = sld [smem:[#allocation0]]
  $region53: #{resnet_generator_forward.41} parent=0
    _
  %s6 = ssub.s32 1, %s4
  %s7 = scalar_select 0, %s6, %s4
  loop: start=0, step=1, limit=4
  $region2: #{resnet_generator_forward.41} parent=0 // loop_pre_header
    _
  $region3: #{resnet_generator_forward.41} parent=0 // loop_header
    %s9 = sphi 0, %s13
    %p10 = scmp.ge.s32.totalorder %s9, 4
    %s16 = sphi 0, %s28
    %s17 = sphi 0, %s24
    %s18 = sphi 0, %s16
    %s19 = sphi 0, %s17
    %s20 = sphi 0, %s18
    %s21 = sphi 0, %s19
    %s33 = sphi 0, %s35
    %s36 = sphi 0, %s33
    %s37 = sphi 0, %s36
    %s53 = sphi 0, %s37
    %s59 = sphi 0, %s61
    %s62 = sphi 0, %s59
    %s63 = sphi 0, %s62
    %s79 = sphi 0, %s63
    %s85 = sphi 0, %s87
    %s88 = sphi 0, %s85
    %s89 = sphi 0, %s88
    %s105 = sphi 0, %s89
  $region4: #{resnet_generator_forward.41} parent=0 // loop_header_branch
    %12 = sbr.rel (%p10) target = $region8
  $region5: #{resnet_generator_forward.41} parent=0 // loop_body
    %s14 = ssub.s32 %s9, 1
    %s15 = ssub.s32 %s9, 2
    %s22 = sadd.s32 1, %s17
    %p23 = scmp.ge.s32.totalorder %s22, 1
    %s24 = scalar_select %p23, 0, %s22
    %s25 = sadd.s32 1, %s16
    %s26 = scalar_select %p23, %s25, %s16
    %p27 = scmp.ge.s32.totalorder %s26, 2
    %s28 = scalar_select %p27, 0, %s26
    %s29 = ssub.s32 %s16, %s28
    %s30 = ssub.s32 %s17, %s24
    %s31 = sor.u32 %s29, %s30
    %p32 = scmp.eq.s32.totalorder %s31, 0
    %s34 = sadd.s32 %s33, 1
    %s35 = scalar_select %p32, %s33, %s34
    %p38 = pneg %p32
    %p39 = scmp.eq.s32.totalorder %s9, 1
    %p40 = por %p38, %p39
    %p41 = scmp.ne.s32.totalorder %s33, %s36
    %p42 = scmp.eq.s32.totalorder %s9, 0
    %p43 = por %p41, %p42
    %p44 = scmp.ne.s32.totalorder %s33, %s36
    %p45 = scmp.eq.s32.totalorder %s14, 1
    %p46 = por %p44, %p45
    %p47 = scmp.ne.s32.totalorder %s36, %s37
    %p48 = scmp.eq.s32.totalorder %s14, 0
    %p49 = por %p47, %p48
    %p50 = scmp.ne.s32.totalorder %s36, %s37
    %p51 = scmp.eq.s32.totalorder %s15, 1
    %p52 = por %p50, %p51
    %p54 = scmp.ne.s32.totalorder %s37, %s53
    %p55 = scmp.eq.s32.totalorder %s15, 0
    %p56 = por %p54, %p55
    %s57 = ssub.s32 %s16, %s28
    %p58 = scmp.eq.s32.totalorder %s57, 0
    %s60 = sadd.s32 %s59, 1
    %s61 = scalar_select %p58, %s59, %s60
    %p64 = pneg %p58
    %p65 = scmp.eq.s32.totalorder %s9, 1
    %p66 = por %p64, %p65
    %p67 = scmp.ne.s32.totalorder %s59, %s62
    %p68 = scmp.eq.s32.totalorder %s9, 0
    %p69 = por %p67, %p68
    %p70 = scmp.ne.s32.totalorder %s59, %s62
    %p71 = scmp.eq.s32.totalorder %s14, 1
    %p72 = por %p70, %p71
    %p73 = scmp.ne.s32.totalorder %s62, %s63
    %p74 = scmp.eq.s32.totalorder %s14, 0
    %p75 = por %p73, %p74
    %p76 = scmp.ne.s32.totalorder %s62, %s63
    %p77 = scmp.eq.s32.totalorder %s15, 1
    %p78 = por %p76, %p77
    %p80 = scmp.ne.s32.totalorder %s63, %s79
    %p81 = scmp.eq.s32.totalorder %s15, 0
    %p82 = por %p80, %p81
    %s83 = ssub.s32 %s16, %s28
    %p84 = scmp.eq.s32.totalorder %s83, 0
    %s86 = sadd.s32 %s85, 1
    %s87 = scalar_select %p84, %s85, %s86
    %p90 = pneg %p84
    %p91 = scmp.eq.s32.totalorder %s9, 1
    %p92 = por %p90, %p91
    %p93 = scmp.ne.s32.totalorder %s85, %s88
    %p94 = scmp.eq.s32.totalorder %s9, 0
    %p95 = por %p93, %p94
    %p96 = scmp.ne.s32.totalorder %s85, %s88
    %p97 = scmp.eq.s32.totalorder %s14, 1
    %p98 = por %p96, %p97
    %p99 = scmp.ne.s32.totalorder %s88, %s89
    %p100 = scmp.eq.s32.totalorder %s14, 0
    %p101 = por %p99, %p100
    %p102 = scmp.ne.s32.totalorder %s88, %s89
    %p103 = scmp.eq.s32.totalorder %s15, 1
    %p104 = por %p102, %p103
    %p106 = scmp.ne.s32.totalorder %s89, %s105
    %p107 = scmp.eq.s32.totalorder %s15, 0
    %p108 = por %p106, %p107
    %p109 = scmp.le.s32.totalorder 1, %s9
    %p110 = scmp.lt.s32.totalorder %s9, 3
    %p111 = pnand %p109, %p110
    %p112 = pneg %p111
    // Predicated region
    $region9: #{resnet_generator_forward.41} parent=5 // pred_check
      _
    $region10: #{resnet_generator_forward.41} parent=5 // pred_check_branch
      %114 = sbr.rel (%p111) target = $region12
    $region11: #{resnet_generator_forward.41} parent=5 // pred_region
      %s115 = ssub.s32 %s9, 1
    $region12: #{resnet_generator_forward.41} parent=5 // pred_fallthru
      _
    %p116 = scmp.lt.s32.totalorder %s9, 2
    // Predicated region
    $region13: #{resnet_generator_forward.41} parent=5 // pred_check
      %p117 = pneg %p116
    $region14: #{resnet_generator_forward.41} parent=5 // pred_check_branch
      %119 = sbr.rel (%p117) target = $region16
    $region15: #{resnet_generator_forward.41} parent=5 // pred_region
      // Predicated region
      $region17: #{resnet_generator_forward.41} parent=15 // pred_check
        %p120 = pneg %p43
      $region18: #{resnet_generator_forward.41} parent=15 // pred_check_branch
        %122 = sbr.rel (%p120) target = $region20
      $region19: #{resnet_generator_forward.41} parent=15 // pred_region
        %s123 = smul.u32 2, %s17
        %p124 = scmp.lt.s32.totalorder %s16, 1
        %s125 = scalar_select %p124, %s16, 1
        %p126 = scmp.lt.s32.totalorder %s123, 1
        %s127 = scalar_select %p126, %s123, 1
        %s128 = smul.addr %s125, 2
        %s129 = sadd.s32 %s127, %s128
        %s130 = smul.addr %s129, 4
        %s131 = scalar_lea.vmem %s0, %s130
        %s132 = smul.u32 2, %s17
      $region20: #{resnet_generator_forward.41} parent=15 // pred_fallthru
        _
    $region16: #{resnet_generator_forward.41} parent=5 // pred_fallthru
      _
    %p133 = scmp.le.s32.totalorder 1, %s9
    %p134 = scmp.lt.s32.totalorder %s9, 3
    %p135 = pnand %p133, %p134
    %p136 = pneg %p135
    // Predicated region
    $region21: #{resnet_generator_forward.41} parent=5 // pred_check
      _
    $region22: #{resnet_generator_forward.41} parent=5 // pred_check_branch
      %138 = sbr.rel (%p135) target = $region24
    $region23: #{resnet_generator_forward.41} parent=5 // pred_region
      %s139 = ssub.s32 %s9, 1
      %s140 = smul.u32 2, %s19
      %p141 = scmp.lt.s32.totalorder %s18, 1
      %s142 = scalar_select %p141, %s18, 1
      %p143 = scmp.lt.s32.totalorder %s140, 1
      %s144 = scalar_select %p143, %s140, 1
      %s145 = smul.addr %s142, 2
      %s146 = sadd.s32 %s144, %s145
      %s147 = smul.addr %s146, 4
      %s148 = scalar_lea.vmem %s0, %s147
      %p149 = pneg %p49
      %p150 = pneg %p46
      %p151 = pneg %p75
      %p152 = pneg %p72
      %p153 = scmp.lt.s32.totalorder %s18, 1
      %s154 = scalar_select %p153, %s18, 1
      %s155 = scalar_lea.vmem %s1, %s154
      %p156 = pneg %p101
      %p157 = pneg %p98
      %p158 = scmp.lt.s32.totalorder %s18, 1
      %s159 = scalar_select %p158, %s18, 1
      %s160 = scalar_lea.vmem %s2, %s159
      %s161 = smul.u32 2, %s19
      %p162 = scmp.lt.s32.totalorder %s18, 1
      %s163 = scalar_select %p162, %s18, 1
      %p164 = scmp.lt.s32.totalorder %s161, 1
      %s165 = scalar_select %p164, %s161, 1
      %s166 = smul.addr %s163, 2
      %s167 = sadd.s32 %s165, %s166
      %s168 = smul.addr %s167, 4
      %s169 = scalar_lea.vmem %s0, %s168
      %s170 = smul.u32 2, %s19
      %p171 = scmp.lt.s32.totalorder %s18, 1
      %s172 = scalar_select %p171, %s18, 1
      %s173 = scalar_lea.vmem %s1, %s172
      %p174 = scmp.lt.s32.totalorder %s18, 1
      %s175 = scalar_select %p174, %s18, 1
      %s176 = scalar_lea.vmem %s2, %s175
      %p177 = scmp.eq.s32.totalorder %s19, 0
      // Predicated region
      $region25: #{resnet_generator_forward.41} parent=23 // pred_check
        %p178 = pneg %p177
      $region26: #{resnet_generator_forward.41} parent=23 // pred_check_branch
        %180 = sbr.rel (%p178) target = $region28
      $region27: #{resnet_generator_forward.41} parent=23 // pred_region
        %vm181 = vcmask 253952
        %182 = vst.msk [vmem:[%s173] sm:$0x1] %vm181, 0.0
        %183 = vst.msk [vmem:[%s176] sm:$0x1] %vm181, 0.0
      $region28: #{resnet_generator_forward.41} parent=23 // pred_fallthru
        _
      %v184 = vld [vmem:[%s169] sm:$0xf]
      %v185 = vld [vmem:[%s169 + $0x4] sm:$0xf]
      %v186 = vunpack.c.l.bf16 %v184
      %v187 = vunpack.c.l.bf16 %v185
      %v188 = vld [vmem:[%s173] sm:$0x1]
      %vm189 = vcmask 261120
      %v190 = vsel %vm189, %v186, 0.0
      %v191 = vsel %vm189, %v187, 0.0
      %v192 = vadd.f32 %v190, %v191
      %v193 = vrot.slane %v192, 4
      %v194 = vadd.f32 %v192, %v193
      %v195 = vrot.slane %v194, 2
      %v196 = vadd.f32 %v194, %v195
      %v197 = vrot.slane %v196, 1
      %v198 = vadd.f32 %v196, %v197
      %v199 = vadd.f32 %v188, %v198
      %vm200 = vcmask 253952
      %201 = vst.msk [vmem:[%s173] sm:$0x1] %vm200, %v199
      %v202 = vld [vmem:[%s176] sm:$0x1]
      %v203 = vmul.f32 %v186, %v186
      %v204 = vmul.f32 %v187, %v187
      %v205 = vsel %vm189, %v203, 0.0
      %v206 = vsel %vm189, %v204, 0.0
      %v207 = vadd.f32 %v205, %v206
      %v208 = vrot.slane %v207, 4
      %v209 = vadd.f32 %v207, %v208
      %v210 = vrot.slane %v209, 2
      %v211 = vadd.f32 %v209, %v210
      %v212 = vrot.slane %v211, 1
      %v213 = vadd.f32 %v211, %v212
      %v214 = vadd.f32 %v202, %v213
      %215 = vst.msk [vmem:[%s176] sm:$0x1] %vm200, %v214
      // Predicated region
      $region29: #{resnet_generator_forward.41} parent=23 // pred_check
        %p216 = pneg %p177
      $region30: #{resnet_generator_forward.41} parent=23 // pred_check_branch
        %218 = sbr.rel (%p216) target = $region32
      $region31: #{resnet_generator_forward.41} parent=23 // pred_region
        %v219 = vld [vmem:[%s173] sm:$0x1]
        %v220 = vmul.f32 %v219, 0.0625
        %v221 = vld [vmem:[%s176] sm:$0x1]
        %v222 = vmul.f32 %v221, 0.0625
        %v223 = vmul.f32 %v220, %v220
        %v224 = vsub.f32 %v222, %v223
        %225 = vst.msk [vmem:[%s173] sm:$0x1] %vm200, %v220
        %v226 = vmax.f32 %v224, 0.0
        %v227 = vadd.f32 %v226, 1e-05
        %v228 = vrsqrt.pop %v227
        %v229 = vmul.f32 %v228, %v227
        %v230 = vmul.f32 %v229, %v228
        %v231 = vmul.f32 0.5, %v230
        %v232 = vsub.f32 1.5, %v231
        %v233 = vmul.f32 %v228, %v232
        %vm234 = vweird.f32 %v227
        %vm235 = vweird.f32 %v228
        %vm236 = vmor %vm234, %vm235
        %v237 = vsel %vm236, %v228, %v233
        %238 = vst.msk [vmem:[%s176] sm:$0x1] %vm200, %v237
      $region32: #{resnet_generator_forward.41} parent=23 // pred_fallthru
        _
      %p239 = scmp.lt.s32.totalorder %s18, 1
      %s240 = scalar_select %p239, %s18, 1
      %s241 = scalar_lea.vmem %s1, %s240
      %p242 = scmp.lt.s32.totalorder %s18, 1
      %s243 = scalar_select %p242, %s18, 1
      %s244 = scalar_lea.vmem %s2, %s243
      // Predicated region
      $region33: #{resnet_generator_forward.41} parent=23 // pred_check
        %p245 = pneg %p72
      $region34: #{resnet_generator_forward.41} parent=23 // pred_check_branch
        %247 = sbr.rel (%p245) target = $region36
      $region35: #{resnet_generator_forward.41} parent=23 // pred_region
        _
      $region36: #{resnet_generator_forward.41} parent=23 // pred_fallthru
        _
      // Predicated region
      $region37: #{resnet_generator_forward.41} parent=23 // pred_check
        %p248 = pneg %p98
      $region38: #{resnet_generator_forward.41} parent=23 // pred_check_branch
        %250 = sbr.rel (%p248) target = $region40
      $region39: #{resnet_generator_forward.41} parent=23 // pred_region
        _
      $region40: #{resnet_generator_forward.41} parent=23 // pred_fallthru
        _
    $region24: #{resnet_generator_forward.41} parent=5 // pred_fallthru
      _
    %p251 = scmp.le.s32.totalorder 2, %s9
    // Predicated region
    $region41: #{resnet_generator_forward.41} parent=5 // pred_check
      %p252 = pneg %p251
    $region42: #{resnet_generator_forward.41} parent=5 // pred_check_branch
      %254 = sbr.rel (%p252) target = $region44
    $region43: #{resnet_generator_forward.41} parent=5 // pred_region
      %s255 = ssub.s32 %s9, 2
      // Predicated region
      $region45: #{resnet_generator_forward.41} parent=43 // pred_check
        %p256 = pneg %p78
      $region46: #{resnet_generator_forward.41} parent=43 // pred_check_branch
        %258 = sbr.rel (%p256) target = $region48
      $region47: #{resnet_generator_forward.41} parent=43 // pred_region
        %p259 = scmp.lt.s32.totalorder %s20, 1
        %s260 = scalar_select %p259, %s20, 1
        %s261 = scalar_lea.vmem %s1, %s260
      $region48: #{resnet_generator_forward.41} parent=43 // pred_fallthru
        _
      // Predicated region
      $region49: #{resnet_generator_forward.41} parent=43 // pred_check
        %p262 = pneg %p104
      $region50: #{resnet_generator_forward.41} parent=43 // pred_check_branch
        %264 = sbr.rel (%p262) target = $region52
      $region51: #{resnet_generator_forward.41} parent=43 // pred_region
        %p265 = scmp.lt.s32.totalorder %s20, 1
        %s266 = scalar_select %p265, %s20, 1
        %s267 = scalar_lea.vmem %s2, %s266
      $region52: #{resnet_generator_forward.41} parent=43 // pred_fallthru
        _
    $region44: #{resnet_generator_forward.41} parent=5 // pred_fallthru
      _
  $region6: #{resnet_generator_forward.41} parent=0 // loop_footer
    %s13 = sadd.s32 1, %s9
  $region7: #{resnet_generator_forward.41} parent=0 // loop_footer_branch
    %8 = sbr.rel target = $region3
  $region8: #{resnet_generator_forward.41} parent=0 // loop_exit
    _

// kernel: resnet_generator_forward.48
$region0: #{resnet_generator_forward.48}
  #allocation0 [shape = 'u32[]', space=smem, size = 0x4, offset = 0x4, fixed_abs, tag = 'smem constant byte address 0x4 - core index']
  #allocation1 [shape = 'u32[72,128]{1,0:T(1,128)}', space=vmem, size = 0x9000, scoped, tag = 'internal scratch']
  %s0 = inlined_call_operand.vmem [shape: bf16[2,16,32], index: 0, kind: input, shape index: {}]
  %s1 = inlined_call_operand.vmem [shape: f32[2,1,32], index: 1, kind: input, shape index: {}]
  %s2 = inlined_call_operand.vmem [shape: f32[2,1,32], index: 2, kind: input, shape index: {}]
  %s3 = inlined_call_operand.vmem [shape: f32[1,1,32], index: 3, kind: input, shape index: {}]
  %s4 = inlined_call_operand.vmem [shape: f32[1,1,32], index: 4, kind: input, shape index: {}]
  %s5 = inlined_call_operand.vmem [shape: bf16[2,16,32], index: 5, kind: input, shape index: {}]
  %s6 = inlined_call_operand.vmem [shape: bf16[2,16,32], index: 6, kind: output, shape index: {}]
  %s7 = sld [smem:[#allocation0]]
  $region57: #{resnet_generator_forward.48} parent=0
    _
  %s9 = ssub.s32 1, %s7
  %s10 = scalar_select 0, %s9, %s7
  loop: start=0, step=1, limit=4
  $region2: #{resnet_generator_forward.48} parent=0 // loop_pre_header
    _
  $region3: #{resnet_generator_forward.48} parent=0 // loop_header
    %s12 = sphi 0, %s16
    %p13 = scmp.ge.s32.totalorder %s12, 4
    %s19 = sphi 0, %s31
    %s20 = sphi 0, %s27
    %s21 = sphi 0, %s19
    %s22 = sphi 0, %s20
    %s23 = sphi 0, %s21
    %s24 = sphi 0, %s22
    %s36 = sphi 0, %s38
    %s39 = sphi 0, %s36
    %s40 = sphi 0, %s39
    %s56 = sphi 0, %s40
    %s62 = sphi 0, %s64
    %s65 = sphi 0, %s62
    %s66 = sphi 0, %s65
    %s82 = sphi 0, %s66
    %s88 = sphi 0, %s90
    %s91 = sphi 0, %s88
    %s92 = sphi 0, %s91
    %s108 = sphi 0, %s92
    %s112 = sphi 0, %s112
    %s114 = sphi 0, %s112
    %s115 = sphi 0, %s114
    %s129 = sphi 0, %s115
    %s133 = sphi 0, %s133
    %s135 = sphi 0, %s133
    %s136 = sphi 0, %s135
    %s150 = sphi 0, %s136
    %s158 = sphi 0, %s160
    %s161 = sphi 0, %s158
    %s162 = sphi 0, %s161
    %s178 = sphi 0, %s162
    %s186 = sphi 0, %s188
    %s189 = sphi 0, %s186
    %s190 = sphi 0, %s189
    %s206 = sphi 0, %s190
  $region4: #{resnet_generator_forward.48} parent=0 // loop_header_branch
    %15 = sbr.rel (%p13) target = $region8
  $region5: #{resnet_generator_forward.48} parent=0 // loop_body
    %s17 = ssub.s32 %s12, 1
    %s18 = ssub.s32 %s12, 2
    %s25 = sadd.s32 1, %s20
    %p26 = scmp.ge.s32.totalorder %s25, 1
    %s27 = scalar_select %p26, 0, %s25
    %s28 = sadd.s32 1, %s19
    %s29 = scalar_select %p26, %s28, %s19
    %p30 = scmp.ge.s32.totalorder %s29, 2
    %s31 = scalar_select %p30, 0, %s29
    %s32 = ssub.s32 %s19, %s31
    %s33 = ssub.s32 %s20, %s27
    %s34 = sor.u32 %s32, %s33
    %p35 = scmp.eq.s32.totalorder %s34, 0
    %s37 = sadd.s32 %s36, 1
    %s38 = scalar_select %p35, %s36, %s37
    %p41 = pneg %p35
    %p42 = scmp.eq.s32.totalorder %s12, 1
    %p43 = por %p41, %p42
    %p44 = scmp.ne.s32.totalorder %s36, %s39
    %p45 = scmp.eq.s32.totalorder %s12, 0
    %p46 = por %p44, %p45
    %p47 = scmp.ne.s32.totalorder %s36, %s39
    %p48 = scmp.eq.s32.totalorder %s17, 1
    %p49 = por %p47, %p48
    %p50 = scmp.ne.s32.totalorder %s39, %s40
    %p51 = scmp.eq.s32.totalorder %s17, 0
    %p52 = por %p50, %p51
    %p53 = scmp.ne.s32.totalorder %s39, %s40
    %p54 = scmp.eq.s32.totalorder %s18, 1
    %p55 = por %p53, %p54
    %p57 = scmp.ne.s32.totalorder %s40, %s56
    %p58 = scmp.eq.s32.totalorder %s18, 0
    %p59 = por %p57, %p58
    %s60 = ssub.s32 %s19, %s31
    %p61 = scmp.eq.s32.totalorder %s60, 0
    %s63 = sadd.s32 %s62, 1
    %s64 = scalar_select %p61, %s62, %s63
    %p67 = pneg %p61
    %p68 = scmp.eq.s32.totalorder %s12, 1
    %p69 = por %p67, %p68
    %p70 = scmp.ne.s32.totalorder %s62, %s65
    %p71 = scmp.eq.s32.totalorder %s12, 0
    %p72 = por %p70, %p71
    %p73 = scmp.ne.s32.totalorder %s62, %s65
    %p74 = scmp.eq.s32.totalorder %s17, 1
    %p75 = por %p73, %p74
    %p76 = scmp.ne.s32.totalorder %s65, %s66
    %p77 = scmp.eq.s32.totalorder %s17, 0
    %p78 = por %p76, %p77
    %p79 = scmp.ne.s32.totalorder %s65, %s66
    %p80 = scmp.eq.s32.totalorder %s18, 1
    %p81 = por %p79, %p80
    %p83 = scmp.ne.s32.totalorder %s66, %s82
    %p84 = scmp.eq.s32.totalorder %s18, 0
    %p85 = por %p83, %p84
    %s86 = ssub.s32 %s19, %s31
    %p87 = scmp.eq.s32.totalorder %s86, 0
    %s89 = sadd.s32 %s88, 1
    %s90 = scalar_select %p87, %s88, %s89
    %p93 = pneg %p87
    %p94 = scmp.eq.s32.totalorder %s12, 1
    %p95 = por %p93, %p94
    %p96 = scmp.ne.s32.totalorder %s88, %s91
    %p97 = scmp.eq.s32.totalorder %s12, 0
    %p98 = por %p96, %p97
    %p99 = scmp.ne.s32.totalorder %s88, %s91
    %p100 = scmp.eq.s32.totalorder %s17, 1
    %p101 = por %p99, %p100
    %p102 = scmp.ne.s32.totalorder %s91, %s92
    %p103 = scmp.eq.s32.totalorder %s17, 0
    %p104 = por %p102, %p103
    %p105 = scmp.ne.s32.totalorder %s91, %s92
    %p106 = scmp.eq.s32.totalorder %s18, 1
    %p107 = por %p105, %p106
    %p109 = scmp.ne.s32.totalorder %s92, %s108
    %p110 = scmp.eq.s32.totalorder %s18, 0
    %p111 = por %p109, %p110
    %s113 = sadd.s32 %s112, 1
    %p116 = scmp.eq.s32.totalorder %s12, 1
    %p117 = scmp.ne.s32.totalorder %s112, %s114
    %p118 = scmp.eq.s32.totalorder %s12, 0
    %p119 = por %p117, %p118
    %p120 = scmp.ne.s32.totalorder %s112, %s114
    %p121 = scmp.eq.s32.totalorder %s17, 1
    %p122 = por %p120, %p121
    %p123 = scmp.ne.s32.totalorder %s114, %s115
    %p124 = scmp.eq.s32.totalorder %s17, 0
    %p125 = por %p123, %p124
    %p126 = scmp.ne.s32.totalorder %s114, %s115
    %p127 = scmp.eq.s32.totalorder %s18, 1
    %p128 = por %p126, %p127
    %p130 = scmp.ne.s32.totalorder %s115, %s129
    %p131 = scmp.eq.s32.totalorder %s18, 0
    %p132 = por %p130, %p131
    %s134 = sadd.s32 %s133, 1
    %p137 = scmp.eq.s32.totalorder %s12, 1
    %p138 = scmp.ne.s32.totalorder %s133, %s135
    %p139 = scmp.eq.s32.totalorder %s12, 0
    %p140 = por %p138, %p139
    %p141 = scmp.ne.s32.totalorder %s133, %s135
    %p142 = scmp.eq.s32.totalorder %s17, 1
    %p143 = por %p141, %p142
    %p144 = scmp.ne.s32.totalorder %s135, %s136
    %p145 = scmp.eq.s32.totalorder %s17, 0
    %p146 = por %p144, %p145
    %p147 = scmp.ne.s32.totalorder %s135, %s136
    %p148 = scmp.eq.s32.totalorder %s18, 1
    %p149 = por %p147, %p148
    %p151 = scmp.ne.s32.totalorder %s136, %s150
    %p152 = scmp.eq.s32.totalorder %s18, 0
    %p153 = por %p151, %p152
    %s154 = ssub.s32 %s19, %s31
    %s155 = ssub.s32 %s20, %s27
    %s156 = sor.u32 %s154, %s155
    %p157 = scmp.eq.s32.totalorder %s156, 0
    %s159 = sadd.s32 %s158, 1
    %s160 = scalar_select %p157, %s158, %s159
    %p163 = pneg %p157
    %p164 = scmp.eq.s32.totalorder %s12, 1
    %p165 = por %p163, %p164
    %p166 = scmp.ne.s32.totalorder %s158, %s161
    %p167 = scmp.eq.s32.totalorder %s12, 0
    %p168 = por %p166, %p167
    %p169 = scmp.ne.s32.totalorder %s158, %s161
    %p170 = scmp.eq.s32.totalorder %s17, 1
    %p171 = por %p169, %p170
    %p172 = scmp.ne.s32.totalorder %s161, %s162
    %p173 = scmp.eq.s32.totalorder %s17, 0
    %p174 = por %p172, %p173
    %p175 = scmp.ne.s32.totalorder %s161, %s162
    %p176 = scmp.eq.s32.totalorder %s18, 1
    %p177 = por %p175, %p176
    %p179 = scmp.ne.s32.totalorder %s162, %s178
    %p180 = scmp.eq.s32.totalorder %s18, 0
    %p181 = por %p179, %p180
    %s182 = ssub.s32 %s19, %s31
    %s183 = ssub.s32 %s20, %s27
    %s184 = sor.u32 %s182, %s183
    %p185 = scmp.eq.s32.totalorder %s184, 0
    %s187 = sadd.s32 %s186, 1
    %s188 = scalar_select %p185, %s186, %s187
    %p191 = pneg %p185
    %p192 = scmp.eq.s32.totalorder %s12, 1
    %p193 = por %p191, %p192
    %p194 = scmp.ne.s32.totalorder %s186, %s189
    %p195 = scmp.eq.s32.totalorder %s12, 0
    %p196 = por %p194, %p195
    %p197 = scmp.ne.s32.totalorder %s186, %s189
    %p198 = scmp.eq.s32.totalorder %s17, 1
    %p199 = por %p197, %p198
    %p200 = scmp.ne.s32.totalorder %s189, %s190
    %p201 = scmp.eq.s32.totalorder %s17, 0
    %p202 = por %p200, %p201
    %p203 = scmp.ne.s32.totalorder %s189, %s190
    %p204 = scmp.eq.s32.totalorder %s18, 1
    %p205 = por %p203, %p204
    %p207 = scmp.ne.s32.totalorder %s190, %s206
    %p208 = scmp.eq.s32.totalorder %s18, 0
    %p209 = por %p207, %p208
    %p210 = scmp.le.s32.totalorder 1, %s12
    %p211 = scmp.lt.s32.totalorder %s12, 3
    %p212 = pnand %p210, %p211
    %p213 = pneg %p212
    // Predicated region
    $region9: #{resnet_generator_forward.48} parent=5 // pred_check
      _
    $region10: #{resnet_generator_forward.48} parent=5 // pred_check_branch
      %215 = sbr.rel (%p212) target = $region12
    $region11: #{resnet_generator_forward.48} parent=5 // pred_region
      %s216 = ssub.s32 %s12, 1
      // Predicated region
      $region13: #{resnet_generator_forward.48} parent=11 // pred_check
        %p217 = pneg %p125
      $region14: #{resnet_generator_forward.48} parent=11 // pred_check_branch
        %219 = sbr.rel (%p217) target = $region16
      $region15: #{resnet_generator_forward.48} parent=11 // pred_region
        _
      $region16: #{resnet_generator_forward.48} parent=11 // pred_fallthru
        _
      // Predicated region
      $region17: #{resnet_generator_forward.48} parent=11 // pred_check
        %p220 = pneg %p146
      $region18: #{resnet_generator_forward.48} parent=11 // pred_check_branch
        %222 = sbr.rel (%p220) target = $region20
      $region19: #{resnet_generator_forward.48} parent=11 // pred_region
        _
      $region20: #{resnet_generator_forward.48} parent=11 // pred_fallthru
        _
    $region12: #{resnet_generator_forward.48} parent=5 // pred_fallthru
      _
    %p223 = scmp.lt.s32.totalorder %s12, 2
    // Predicated region
    $region21: #{resnet_generator_forward.48} parent=5 // pred_check
      %p224 = pneg %p223
    $region22: #{resnet_generator_forward.48} parent=5 // pred_check_branch
      %226 = sbr.rel (%p224) target = $region24
    $region23: #{resnet_generator_forward.48} parent=5 // pred_region
      // Predicated region
      $region25: #{resnet_generator_forward.48} parent=23 // pred_check
        %p227 = pneg %p46
      $region26: #{resnet_generator_forward.48} parent=23 // pred_check_branch
        %229 = sbr.rel (%p227) target = $region28
      $region27: #{resnet_generator_forward.48} parent=23 // pred_region
        %s230 = smul.u32 2, %s20
        %p231 = scmp.lt.s32.totalorder %s19, 1
        %s232 = scalar_select %p231, %s19, 1
        %p233 = scmp.lt.s32.totalorder %s230, 1
        %s234 = scalar_select %p233, %s230, 1
        %s235 = smul.addr %s232, 2
        %s236 = sadd.s32 %s234, %s235
        %s237 = smul.addr %s236, 4
        %s238 = scalar_lea.vmem %s0, %s237
        %s239 = smul.u32 2, %s20
      $region28: #{resnet_generator_forward.48} parent=23 // pred_fallthru
        _
      // Predicated region
      $region29: #{resnet_generator_forward.48} parent=23 // pred_check
        %p240 = pneg %p72
      $region30: #{resnet_generator_forward.48} parent=23 // pred_check_branch
        %242 = sbr.rel (%p240) target = $region32
      $region31: #{resnet_generator_forward.48} parent=23 // pred_region
        %p243 = scmp.lt.s32.totalorder %s19, 1
        %s244 = scalar_select %p243, %s19, 1
        %s245 = scalar_lea.vmem %s1, %s244
      $region32: #{resnet_generator_forward.48} parent=23 // pred_fallthru
        _
      // Predicated region
      $region33: #{resnet_generator_forward.48} parent=23 // pred_check
        %p246 = pneg %p98
      $region34: #{resnet_generator_forward.48} parent=23 // pred_check_branch
        %248 = sbr.rel (%p246) target = $region36
      $region35: #{resnet_generator_forward.48} parent=23 // pred_region
        %p249 = scmp.lt.s32.totalorder %s19, 1
        %s250 = scalar_select %p249, %s19, 1
        %s251 = scalar_lea.vmem %s2, %s250
      $region36: #{resnet_generator_forward.48} parent=23 // pred_fallthru
        _
      // Predicated region
      $region37: #{resnet_generator_forward.48} parent=23 // pred_check
        %p252 = pneg %p168
      $region38: #{resnet_generator_forward.48} parent=23 // pred_check_branch
        %254 = sbr.rel (%p252) target = $region40
      $region39: #{resnet_generator_forward.48} parent=23 // pred_region
        %s255 = smul.u32 2, %s20
        %p256 = scmp.lt.s32.totalorder %s19, 1
        %s257 = scalar_select %p256, %s19, 1
        %p258 = scmp.lt.s32.totalorder %s255, 1
        %s259 = scalar_select %p258, %s255, 1
        %s260 = smul.addr %s257, 2
        %s261 = sadd.s32 %s259, %s260
        %s262 = smul.addr %s261, 4
        %s263 = scalar_lea.vmem %s5, %s262
        %s264 = smul.u32 2, %s20
      $region40: #{resnet_generator_forward.48} parent=23 // pred_fallthru
        _
    $region24: #{resnet_generator_forward.48} parent=5 // pred_fallthru
      _
    %p265 = scmp.le.s32.totalorder 1, %s12
    %p266 = scmp.lt.s32.totalorder %s12, 3
    %p267 = pnand %p265, %p266
    %p268 = pneg %p267
    // Predicated region
    $region41: #{resnet_generator_forward.48} parent=5 // pred_check
      _
    $region42: #{resnet_generator_forward.48} parent=5 // pred_check_branch
      %270 = sbr.rel (%p267) target = $region44
    $region43: #{resnet_generator_forward.48} parent=5 // pred_region
      %s271 = ssub.s32 %s12, 1
      %s272 = smul.u32 2, %s22
      %p273 = scmp.lt.s32.totalorder %s21, 1
      %s274 = scalar_select %p273, %s21, 1
      %p275 = scmp.lt.s32.totalorder %s272, 1
      %s276 = scalar_select %p275, %s272, 1
      %s277 = smul.addr %s274, 2
      %s278 = sadd.s32 %s276, %s277
      %s279 = smul.addr %s278, 4
      %s280 = scalar_lea.vmem %s0, %s279
      %p281 = pneg %p52
      %p282 = pneg %p49
      %p283 = scmp.lt.s32.totalorder %s21, 1
      %s284 = scalar_select %p283, %s21, 1
      %s285 = scalar_lea.vmem %s1, %s284
      %p286 = pneg %p78
      %p287 = pneg %p75
      %p288 = scmp.lt.s32.totalorder %s21, 1
      %s289 = scalar_select %p288, %s21, 1
      %s290 = scalar_lea.vmem %s2, %s289
      %p291 = pneg %p104
      %p292 = pneg %p101
      %p293 = pneg %p125
      %p294 = pneg %p122
      %p295 = pneg %p146
      %p296 = pneg %p143
      %s297 = smul.u32 2, %s22
      %p298 = scmp.lt.s32.totalorder %s21, 1
      %s299 = scalar_select %p298, %s21, 1
      %p300 = scmp.lt.s32.totalorder %s297, 1
      %s301 = scalar_select %p300, %s297, 1
      %s302 = smul.addr %s299, 2
      %s303 = sadd.s32 %s301, %s302
      %s304 = smul.addr %s303, 4
      %s305 = scalar_lea.vmem %s5, %s304
      %p306 = pneg %p174
      %p307 = pneg %p171
      %p308 = pneg %p202
      %p309 = pneg %p199
      %s310 = smul.u32 2, %s22
      %p311 = scmp.lt.s32.totalorder %s21, 1
      %s312 = scalar_select %p311, %s21, 1
      %p313 = scmp.lt.s32.totalorder %s310, 1
      %s314 = scalar_select %p313, %s310, 1
      %s315 = smul.addr %s312, 2
      %s316 = sadd.s32 %s314, %s315
      %s317 = smul.addr %s316, 4
      %s318 = scalar_lea.vmem %s6, %s317
      %s319 = smul.u32 2, %s22
      %p320 = scmp.lt.s32.totalorder %s21, 1
      %s321 = scalar_select %p320, %s21, 1
      %p322 = scmp.lt.s32.totalorder %s319, 1
      %s323 = scalar_select %p322, %s319, 1
      %s324 = smul.addr %s321, 2
      %s325 = sadd.s32 %s323, %s324
      %s326 = smul.addr %s325, 4
      %s327 = scalar_lea.vmem %s0, %s326
      %s328 = smul.u32 2, %s22
      %p329 = scmp.lt.s32.totalorder %s21, 1
      %s330 = scalar_select %p329, %s21, 1
      %s331 = scalar_lea.vmem %s1, %s330
      %p332 = scmp.lt.s32.totalorder %s21, 1
      %s333 = scalar_select %p332, %s21, 1
      %s334 = scalar_lea.vmem %s2, %s333
      %s335 = smul.u32 2, %s22
      %p336 = scmp.lt.s32.totalorder %s21, 1
      %s337 = scalar_select %p336, %s21, 1
      %p338 = scmp.lt.s32.totalorder %s335, 1
      %s339 = scalar_select %p338, %s335, 1
      %s340 = smul.addr %s337, 2
      %s341 = sadd.s32 %s339, %s340
      %s342 = smul.addr %s341, 4
      %s343 = scalar_lea.vmem %s5, %s342
      %s344 = smul.u32 2, %s22
      %s345 = smul.u32 2, %s22
      %p346 = scmp.lt.s32.totalorder %s21, 1
      %s347 = scalar_select %p346, %s21, 1
      %p348 = scmp.lt.s32.totalorder %s345, 1
      %s349 = scalar_select %p348, %s345, 1
      %s350 = smul.addr %s347, 2
      %s351 = sadd.s32 %s349, %s350
      %s352 = smul.addr %s351, 4
      %s353 = scalar_lea.vmem %s6, %s352
      %s354 = smul.u32 2, %s22
      %v355 = vld [vmem:[%s327] sm:$0xf]
      %v356 = vld [vmem:[%s327 + $0x4] sm:$0xf]
      %v357 = vunpack.c.l.bf16 %v355
      %v358 = vunpack.c.l.bf16 %v356
      %v359 = vld [vmem:[%s331] sm:$0x1]
      %v361 = vperm.slane %v359, 0
      %v363 = vsub.f32 %v357, %v361
      %v364 = vsub.f32 %v358, %v361
      %v365 = vld [vmem:[%s334] sm:$0x1]
      %v367 = vperm.slane %v365, 0
      %v369 = vmul.f32 %v363, %v367
      %v370 = vmul.f32 %v364, %v367
      %v371 = vld [vmem:[%s3] sm:$0x1]
      %v373 = vperm.slane %v371, 0
      %v375 = vmul.f32 %v369, %v373
      %v376 = vmul.f32 %v370, %v373
      %v377 = vld [vmem:[%s4] sm:$0x1]
      %v379 = vperm.slane %v377, 0
      %v381 = vadd.f32 %v375, %v379
      %v382 = vadd.f32 %v376, %v379
      %v383 = vld [vmem:[%s343] sm:$0xf]
      %v384 = vld [vmem:[%s343 + $0x4] sm:$0xf]
      %v385 = vunpack.c.l.bf16 %v383
      %v386 = vunpack.c.l.bf16 %v384
      %v387 = vadd.f32 %v381, %v385
      %v388 = vadd.f32 %v382, %v386
      %v389 = vpack.c.bf16 %v387, %v387
      %v390 = vpack.c.bf16 %v388, %v388
      %vm391 = vcmask 257024
      %392 = vst.msk [vmem:[%s353] sm:$0xf] %vm391, %v389
      %393 = vst.msk [vmem:[%s353 + $0x4] sm:$0xf] %vm391, %v390
      %s394 = smul.u32 2, %s22
      %p395 = scmp.lt.s32.totalorder %s21, 1
      %s396 = scalar_select %p395, %s21, 1
      %p397 = scmp.lt.s32.totalorder %s394, 1
      %s398 = scalar_select %p397, %s394, 1
      %s399 = smul.addr %s396, 2
      %s400 = sadd.s32 %s398, %s399
      %s401 = smul.addr %s400, 4
      %s402 = scalar_lea.vmem %s6, %s401
      // Predicated region
      $region45: #{resnet_generator_forward.48} parent=43 // pred_check
        %p403 = pneg %p199
      $region46: #{resnet_generator_forward.48} parent=43 // pred_check_branch
        %405 = sbr.rel (%p403) target = $region48
      $region47: #{resnet_generator_forward.48} parent=43 // pred_region
        %s406 = smul.u32 2, %s22
      $region48: #{resnet_generator_forward.48} parent=43 // pred_fallthru
        _
    $region44: #{resnet_generator_forward.48} parent=5 // pred_fallthru
      _
    %p407 = scmp.le.s32.totalorder 2, %s12
    // Predicated region
    $region49: #{resnet_generator_forward.48} parent=5 // pred_check
      %p408 = pneg %p407
    $region50: #{resnet_generator_forward.48} parent=5 // pred_check_branch
      %410 = sbr.rel (%p408) target = $region52
    $region51: #{resnet_generator_forward.48} parent=5 // pred_region
      %s411 = ssub.s32 %s12, 2
      // Predicated region
      $region53: #{resnet_generator_forward.48} parent=51 // pred_check
        %p412 = pneg %p205
      $region54: #{resnet_generator_forward.48} parent=51 // pred_check_branch
        %414 = sbr.rel (%p412) target = $region56
      $region55: #{resnet_generator_forward.48} parent=51 // pred_region
        %s415 = smul.u32 2, %s24
        %p416 = scmp.lt.s32.totalorder %s23, 1
        %s417 = scalar_select %p416, %s23, 1
        %p418 = scmp.lt.s32.totalorder %s415, 1
        %s419 = scalar_select %p418, %s415, 1
        %s420 = smul.addr %s417, 2
        %s421 = sadd.s32 %s419, %s420
        %s422 = smul.addr %s421, 4
        %s423 = scalar_lea.vmem %s6, %s422
      $region56: #{resnet_generator_forward.48} parent=51 // pred_fallthru
        _
    $region52: #{resnet_generator_forward.48} parent=5 // pred_fallthru
      _
  $region6: #{resnet_generator_forward.48} parent=0 // loop_footer
    %s16 = sadd.s32 1, %s12
  $region7: #{resnet_generator_forward.48} parent=0 // loop_footer_branch
    %11 = sbr.rel target = $region3
  $region8: #{resnet_generator_forward.48} parent=0 // loop_exit
    _

// kernel: resnet_generator_forward.43
$region0: #{resnet_generator_forward.43}
  #allocation0 [shape = 'u32[]', space=smem, size = 0x4, offset = 0x4, fixed_abs, tag = 'smem constant byte address 0x4 - core index']
  #allocation1 [shape = 'u32[72,128]{1,0:T(1,128)}', space=vmem, size = 0x9000, scoped, tag = 'internal scratch']
  #allocation2 [shape = 'f32[128,128]{1,0:T(8,128)}', space=vmem, size = 0x10000, scoped, tag = 'scratch operand']
  %s0 = inlined_call_operand.vmem [shape: bf16[128,512], index: 0, kind: input, shape index: {}]
  %s1 = inlined_call_operand.vmem [shape: bf16[512,128], index: 1, kind: input, shape index: {}]
  %s2 = inlined_call_operand.vmem [shape: bf16[128,128], index: 2, kind: output, shape index: {}]
  %s3 = sld [smem:[#allocation0]]
  $region87: #{resnet_generator_forward.43} parent=0
    _
  %s5 = ssub.s32 1, %s3
  %s6 = scalar_select 0, %s5, %s3
  $region1: #{resnet_generator_forward.43} parent=0
    #allocation3 [shape = 'u8[131072]{0}', space=vmem, size = 0x20000, scoped, tag = 'input window, operand 0']
    loop: start=0, step=1, limit=4
    $region2: #{resnet_generator_forward.43} parent=1 // loop_pre_header
      _
    $region3: #{resnet_generator_forward.43} parent=1 // loop_header
      %s8 = sphi 0, %s12
      %p9 = scmp.ge.s32.totalorder %s8, 4
      %s15 = sphi 0, %s34
      %s16 = sphi 0, %s30
      %s17 = sphi 0, %s26
      %s18 = sphi 0, %s15
      %s19 = sphi 0, %s16
      %s20 = sphi 0, %s17
      %s21 = sphi 0, %s18
      %s22 = sphi 0, %s19
      %s23 = sphi 0, %s20
      %s39 = sphi 0, %s41
      %s42 = sphi 0, %s39
      %s43 = sphi 0, %s42
      %s59 = sphi 0, %s43
      %s67 = sphi 0, %s69
      %s70 = sphi 0, %s67
      %s71 = sphi 0, %s70
      %s87 = sphi 0, %s71
      %s95 = sphi 0, %s97
      %s98 = sphi 0, %s95
      %s99 = sphi 0, %s98
      %s115 = sphi 0, %s99
    $region4: #{resnet_generator_forward.43} parent=1 // loop_header_branch
      %11 = sbr.rel (%p9) target = $region8
    $region5: #{resnet_generator_forward.43} parent=1 // loop_body
      %s13 = ssub.s32 %s8, 1
      %s14 = ssub.s32 %s8, 2
      %s24 = sadd.s32 1, %s17
      %p25 = scmp.ge.s32.totalorder %s24, 2
      %s26 = scalar_select %p25, 0, %s24
      %s27 = sadd.s32 1, %s16
      %s28 = scalar_select %p25, %s27, %s16
      %p29 = scmp.ge.s32.totalorder %s28, 1
      %s30 = scalar_select %p29, 0, %s28
      %s31 = sadd.s32 1, %s15
      %s32 = scalar_select %p29, %s31, %s15
      %p33 = scmp.ge.s32.totalorder %s32, 1
      %s34 = scalar_select %p33, 0, %s32
      %s35 = ssub.s32 %s15, %s34
      %s36 = ssub.s32 %s17, %s26
      %s37 = sor.u32 %s35, %s36
      %p38 = scmp.eq.s32.totalorder %s37, 0
      %s40 = sadd.s32 %s39, 1
      %s41 = scalar_select %p38, %s39, %s40
      %p44 = pneg %p38
      %p45 = scmp.eq.s32.totalorder %s8, 1
      %p46 = por %p44, %p45
      %p47 = scmp.ne.s32.totalorder %s39, %s42
      %p48 = scmp.eq.s32.totalorder %s8, 0
      %p49 = por %p47, %p48
      %p50 = scmp.ne.s32.totalorder %s39, %s42
      %p51 = scmp.eq.s32.totalorder %s13, 1
      %p52 = por %p50, %p51
      %p53 = scmp.ne.s32.totalorder %s42, %s43
      %p54 = scmp.eq.s32.totalorder %s13, 0
      %p55 = por %p53, %p54
      %p56 = scmp.ne.s32.totalorder %s42, %s43
      %p57 = scmp.eq.s32.totalorder %s14, 1
      %p58 = por %p56, %p57
      %p60 = scmp.ne.s32.totalorder %s43, %s59
      %p61 = scmp.eq.s32.totalorder %s14, 0
      %p62 = por %p60, %p61
      %s63 = ssub.s32 %s17, %s26
      %s64 = ssub.s32 %s16, %s30
      %s65 = sor.u32 %s63, %s64
      %p66 = scmp.eq.s32.totalorder %s65, 0
      %s68 = sadd.s32 %s67, 1
      %s69 = scalar_select %p66, %s67, %s68
      %p72 = pneg %p66
      %p73 = scmp.eq.s32.totalorder %s8, 1
      %p74 = por %p72, %p73
      %p75 = scmp.ne.s32.totalorder %s67, %s70
      %p76 = scmp.eq.s32.totalorder %s8, 0
      %p77 = por %p75, %p76
      %p78 = scmp.ne.s32.totalorder %s67, %s70
      %p79 = scmp.eq.s32.totalorder %s13, 1
      %p80 = por %p78, %p79
      %p81 = scmp.ne.s32.totalorder %s70, %s71
      %p82 = scmp.eq.s32.totalorder %s13, 0
      %p83 = por %p81, %p82
      %p84 = scmp.ne.s32.totalorder %s70, %s71
      %p85 = scmp.eq.s32.totalorder %s14, 1
      %p86 = por %p84, %p85
      %p88 = scmp.ne.s32.totalorder %s71, %s87
      %p89 = scmp.eq.s32.totalorder %s14, 0
      %p90 = por %p88, %p89
      %s91 = ssub.s32 %s15, %s34
      %s92 = ssub.s32 %s16, %s30
      %s93 = sor.u32 %s91, %s92
      %p94 = scmp.eq.s32.totalorder %s93, 0
      %s96 = sadd.s32 %s95, 1
      %s97 = scalar_select %p94, %s95, %s96
      %p100 = pneg %p94
      %p101 = scmp.eq.s32.totalorder %s8, 1
      %p102 = por %p100, %p101
      %p103 = scmp.ne.s32.totalorder %s95, %s98
      %p104 = scmp.eq.s32.totalorder %s8, 0
      %p105 = por %p103, %p104
      %p106 = scmp.ne.s32.totalorder %s95, %s98
      %p107 = scmp.eq.s32.totalorder %s13, 1
      %p108 = por %p106, %p107
      %p109 = scmp.ne.s32.totalorder %s98, %s99
      %p110 = scmp.eq.s32.totalorder %s13, 0
      %p111 = por %p109, %p110
      %p112 = scmp.ne.s32.totalorder %s98, %s99
      %p113 = scmp.eq.s32.totalorder %s14, 1
      %p114 = por %p112, %p113
      %p116 = scmp.ne.s32.totalorder %s99, %s115
      %p117 = scmp.eq.s32.totalorder %s14, 0
      %p118 = por %p116, %p117
      %p119 = scmp.le.s32.totalorder 1, %s8
      %p120 = scmp.lt.s32.totalorder %s8, 3
      %p121 = pnand %p119, %p120
      %p122 = pneg %p121
      // Predicated region
      $region9: #{resnet_generator_forward.43} parent=5 // pred_check
        _
      $region10: #{resnet_generator_forward.43} parent=5 // pred_check_branch
        %124 = sbr.rel (%p121) target = $region12
      $region11: #{resnet_generator_forward.43} parent=5 // pred_region
        %s125 = ssub.s32 %s8, 1
      $region12: #{resnet_generator_forward.43} parent=5 // pred_fallthru
        _
      %p126 = scmp.lt.s32.totalorder %s8, 2
      // Predicated region
      $region13: #{resnet_generator_forward.43} parent=5 // pred_check
        %p127 = pneg %p126
      $region14: #{resnet_generator_forward.43} parent=5 // pred_check_branch
        %129 = sbr.rel (%p127) target = $region16
      $region15: #{resnet_generator_forward.43} parent=5 // pred_region
        // Predicated region
        $region17: #{resnet_generator_forward.43} parent=15 // pred_check
          %p130 = pneg %p49
        $region18: #{resnet_generator_forward.43} parent=15 // pred_check_branch
          %132 = sbr.rel (%p130) target = $region20
        $region19: #{resnet_generator_forward.43} parent=15 // pred_region
          %s133 = sand.u32 %s39, 1
          %s134 = sand.u32 %s39, 1
          %s135 = smul.addr %s134, 128
          %s136 = scalar_lea.vmem [#allocation3], %s135
          %s137 = smul.u32 16, %s15
          %s138 = smul.u32 2, %s17
          %s139 = smul.addr %s137, 4
          %s140 = sadd.s32 %s138, %s139
          %s141 = smul.addr %s140, 4
          %s142 = scalar_lea.vmem %s0, %s141
          // Predicated region
          $region21: #{resnet_generator_forward.43} parent=19 // pred_check
            _
          $region22: #{resnet_generator_forward.43} parent=19 // pred_check_branch
            %144 = sbr.rel (0) target = $region24
          $region23: #{resnet_generator_forward.43} parent=19 // pred_region
            // Predicated region
            $region25: #{resnet_generator_forward.43} parent=23 // pred_check
              _
            $region26: #{resnet_generator_forward.43} parent=23 // pred_check_branch
              %146 = sbr.rel (0) target = $region28
            $region27: #{resnet_generator_forward.43} parent=23 // pred_region
              // Predicated region
              $region40: #{resnet_generator_forward.43} parent=27 // pred_check
                _
              $region41: #{resnet_generator_forward.43} parent=27 // pred_check_branch
                %192 = sbr.rel (0) target = $region43
              $region42: #{resnet_generator_forward.43} parent=27 // pred_region
                loop: start=0, step=1, limit=1
                $region44: #{resnet_generator_forward.43} parent=42 // loop_pre_header
                  _
                $region45: #{resnet_generator_forward.43} parent=42 // loop_header
                  %s194 = sphi 0, %s198
                  %p195 = scmp.ge.s32.totalorder %s194, 1
                  %s199 = sphi %s142, %s142
                  %s200 = sphi %s136, %s136
                $region46: #{resnet_generator_forward.43} parent=42 // loop_header_branch
                  %197 = sbr.rel (%p195) target = $region50
                $region47: #{resnet_generator_forward.43} parent=42 // loop_body
                  %v201 = vld [vmem:[%s199] sm:$0xff]
                  %202 = vst [vmem:[%s200] sm:$0xff] %v201
                  %v203 = vld [vmem:[%s199 + $0x10] sm:$0xff]
                  %204 = vst [vmem:[%s200 + $0x8] sm:$0xff] %v203
                  %v205 = vld [vmem:[%s199 + $0x20] sm:$0xff]
                  %206 = vst [vmem:[%s200 + $0x10] sm:$0xff] %v205
                  %v207 = vld [vmem:[%s199 + $0x30] sm:$0xff]
                  %208 = vst [vmem:[%s200 + $0x18] sm:$0xff] %v207
                  %v209 = vld [vmem:[%s199 + $0x40] sm:$0xff]
                  %210 = vst [vmem:[%s200 + $0x20] sm:$0xff] %v209
                  %v211 = vld [vmem:[%s199 + $0x50] sm:$0xff]
                  %212 = vst [vmem:[%s200 + $0x28] sm:$0xff] %v211
                  %v213 = vld [vmem:[%s199 + $0x60] sm:$0xff]
                  %214 = vst [vmem:[%s200 + $0x30] sm:$0xff] %v213
                  %v215 = vld [vmem:[%s199 + $0x70] sm:$0xff]
                  %216 = vst [vmem:[%s200 + $0x38] sm:$0xff] %v215
                  %v217 = vld [vmem:[%s199 + $0x80] sm:$0xff]
                  %218 = vst [vmem:[%s200 + $0x40] sm:$0xff] %v217
                  %v219 = vld [vmem:[%s199 + $0x90] sm:$0xff]
                  %220 = vst [vmem:[%s200 + $0x48] sm:$0xff] %v219
                  %v221 = vld [vmem:[%s199 + $0xa0] sm:$0xff]
                  %222 = vst [vmem:[%s200 + $0x50] sm:$0xff] %v221
                  %v223 = vld [vmem:[%s199 + $0xb0] sm:$0xff]
                  %224 = vst [vmem:[%s200 + $0x58] sm:$0xff] %v223
                  %v225 = vld [vmem:[%s199 + $0xc0] sm:$0xff]
                  %226 = vst [vmem:[%s200 + $0x60] sm:$0xff] %v225
                  %v227 = vld [vmem:[%s199 + $0xd0] sm:$0xff]
                  %228 = vst [vmem:[%s200 + $0x68] sm:$0xff] %v227
                  %v229 = vld [vmem:[%s199 + $0xe0] sm:$0xff]
                  %230 = vst [vmem:[%s200 + $0x70] sm:$0xff] %v229
                  %v231 = vld [vmem:[%s199 + $0xf0] sm:$0xff]
                  %232 = vst [vmem:[%s200 + $0x78] sm:$0xff] %v231
                $region48: #{resnet_generator_forward.43} parent=42 // loop_footer
                  %s198 = sadd.s32 1, %s194
                $region49: #{resnet_generator_forward.43} parent=42 // loop_footer_branch
                  %193 = sbr.rel target = $region45
                $region50: #{resnet_generator_forward.43} parent=42 // loop_exit
                  _
              $region43: #{resnet_generator_forward.43} parent=27 // pred_fallthru
                _
              // Predicated region
              $region51: #{resnet_generator_forward.43} parent=27 // pred_check
                _
              $region52: #{resnet_generator_forward.43} parent=27 // pred_check_branch
                %234 = sbr.rel target = $region54
              $region53: #{resnet_generator_forward.43} parent=27 // pred_region
                _
              $region54: #{resnet_generator_forward.43} parent=27 // pred_fallthru
                _
            $region28: #{resnet_generator_forward.43} parent=23 // pred_fallthru
              _
            // Predicated region
            $region29: #{resnet_generator_forward.43} parent=23 // pred_check
              _
            $region30: #{resnet_generator_forward.43} parent=23 // pred_check_branch
              %148 = sbr.rel target = $region32
            $region31: #{resnet_generator_forward.43} parent=23 // pred_region
              %s150 = ssub.s32 256, 1
              loop: start=0, step=1, limit=1
              $region33: #{resnet_generator_forward.43} parent=31 // loop_pre_header
                _
              $region34: #{resnet_generator_forward.43} parent=31 // loop_header
                %s152 = sphi 0, %s156
                %p153 = scmp.ge.s32.totalorder %s152, 1
                %s157 = sphi %s142, %s142
                %s158 = sphi %s136, %s136
              $region35: #{resnet_generator_forward.43} parent=31 // loop_header_branch
                %155 = sbr.rel (%p153) target = $region39
              $region36: #{resnet_generator_forward.43} parent=31 // loop_body
                %v159 = vld [vmem:[%s157] sm:%s150]
                %160 = vst [vmem:[%s158] sm:%s150] %v159
                %v161 = vld [vmem:[%s157 + $0x10] sm:%s150]
                %162 = vst [vmem:[%s158 + $0x8] sm:%s150] %v161
                %v163 = vld [vmem:[%s157 + $0x20] sm:%s150]
                %164 = vst [vmem:[%s158 + $0x10] sm:%s150] %v163
                %v165 = vld [vmem:[%s157 + $0x30] sm:%s150]
                %166 = vst [vmem:[%s158 + $0x18] sm:%s150] %v165
                %v167 = vld [vmem:[%s157 + $0x40] sm:%s150]
                %168 = vst [vmem:[%s158 + $0x20] sm:%s150] %v167
                %v169 = vld [vmem:[%s157 + $0x50] sm:%s150]
                %170 = vst [vmem:[%s158 + $0x28] sm:%s150] %v169
                %v171 = vld [vmem:[%s157 + $0x60] sm:%s150]
                %172 = vst [vmem:[%s158 + $0x30] sm:%s150] %v171
                %v173 = vld [vmem:[%s157 + $0x70] sm:%s150]
                %174 = vst [vmem:[%s158 + $0x38] sm:%s150] %v173
                %v175 = vld [vmem:[%s157 + $0x80] sm:%s150]
                %176 = vst [vmem:[%s158 + $0x40] sm:%s150] %v175
                %v177 = vld [vmem:[%s157 + $0x90] sm:%s150]
                %178 = vst [vmem:[%s158 + $0x48] sm:%s150] %v177
                %v179 = vld [vmem:[%s157 + $0xa0] sm:%s150]
                %180 = vst [vmem:[%s158 + $0x50] sm:%s150] %v179
                %v181 = vld [vmem:[%s157 + $0xb0] sm:%s150]
                %182 = vst [vmem:[%s158 + $0x58] sm:%s150] %v181
                %v183 = vld [vmem:[%s157 + $0xc0] sm:%s150]
                %184 = vst [vmem:[%s158 + $0x60] sm:%s150] %v183
                %v185 = vld [vmem:[%s157 + $0xd0] sm:%s150]
                %186 = vst [vmem:[%s158 + $0x68] sm:%s150] %v185
                %v187 = vld [vmem:[%s157 + $0xe0] sm:%s150]
                %188 = vst [vmem:[%s158 + $0x70] sm:%s150] %v187
                %v189 = vld [vmem:[%s157 + $0xf0] sm:%s150]
                %190 = vst [vmem:[%s158 + $0x78] sm:%s150] %v189
              $region37: #{resnet_generator_forward.43} parent=31 // loop_footer
                %s156 = sadd.s32 1, %s152
              $region38: #{resnet_generator_forward.43} parent=31 // loop_footer_branch
                %151 = sbr.rel target = $region34
              $region39: #{resnet_generator_forward.43} parent=31 // loop_exit
                _
            $region32: #{resnet_generator_forward.43} parent=23 // pred_fallthru
              _
          $region24: #{resnet_generator_forward.43} parent=19 // pred_fallthru
            _
          %235 = vnop
        $region20: #{resnet_generator_forward.43} parent=15 // pred_fallthru
          _
        // Predicated region
        $region55: #{resnet_generator_forward.43} parent=15 // pred_check
          %p236 = pneg %p77
        $region56: #{resnet_generator_forward.43} parent=15 // pred_check_branch
          %238 = sbr.rel (%p236) target = $region58
        $region57: #{resnet_generator_forward.43} parent=15 // pred_region
          %s239 = smul.u32 32, %s17
          %p240 = scmp.lt.s32.totalorder %s239, 63
          %s241 = scalar_select %p240, %s239, 63
          %p242 = scmp.lt.s32.totalorder %s16, 0
          %s243 = scalar_select %p242, %s16, 0
          %s244 = sadd.s32 %s243, %s241
          %s245 = smul.addr %s244, 4
          %s246 = scalar_lea.vmem %s1, %s245
          %s247 = smul.u32 32, %s17
        $region58: #{resnet_generator_forward.43} parent=15 // pred_fallthru
          _
      $region16: #{resnet_generator_forward.43} parent=5 // pred_fallthru
        _
      %p248 = scmp.le.s32.totalorder 1, %s8
      %p249 = scmp.lt.s32.totalorder %s8, 3
      %p250 = pnand %p248, %p249
      %p251 = pneg %p250
      // Predicated region
      $region59: #{resnet_generator_forward.43} parent=5 // pred_check
        _
      $region60: #{resnet_generator_forward.43} parent=5 // pred_check_branch
        %253 = sbr.rel (%p250) target = $region62
      $region61: #{resnet_generator_forward.43} parent=5 // pred_region
        %s254 = ssub.s32 %s8, 1
        %s255 = sand.u32 %s42, 1
        %s256 = sand.u32 %s42, 1
        %s257 = smul.addr %s256, 128
        %s258 = scalar_lea.vmem [#allocation3], %s257
        // Predicated region
        $region63: #{resnet_generator_forward.43} parent=61 // pred_check
          %p259 = pneg %p55
        $region64: #{resnet_generator_forward.43} parent=61 // pred_check_branch
          %261 = sbr.rel (%p259) target = $region66
        $region65: #{resnet_generator_forward.43} parent=61 // pred_region
          _
        $region66: #{resnet_generator_forward.43} parent=61 // pred_fallthru
          _
        %s262 = sand.u32 %s42, 1
        %s263 = sand.u32 %s42, 1
        %s264 = smul.addr %s263, 128
        %s265 = scalar_lea.vmem [#allocation3], %s264
        %p266 = pneg %p55
        %p267 = pneg %p52
        %s268 = smul.u32 32, %s20
        %p269 = scmp.lt.s32.totalorder %s268, 63
        %s270 = scalar_select %p269, %s268, 63
        %p271 = scmp.lt.s32.totalorder %s19, 0
        %s272 = scalar_select %p271, %s19, 0
        %s273 = sadd.s32 %s272, %s270
        %s274 = smul.addr %s273, 4
        %s275 = scalar_lea.vmem %s1, %s274
        %p276 = pneg %p83
        %p277 = pneg %p80
        %p278 = pneg %p111
        %p279 = pneg %p108
        %s280 = smul.u32 16, %s18
        %p281 = scmp.lt.s32.totalorder %s280, 15
        %s282 = scalar_select %p281, %s280, 15
        %p283 = scmp.lt.s32.totalorder %s19, 0
        %s284 = scalar_select %p283, %s19, 0
        %s285 = sadd.s32 %s284, %s282
        %s286 = smul.addr %s285, 4
        %s287 = scalar_lea.vmem %s2, %s286
        %s288 = smul.u32 16, %s18
        %s289 = smul.u32 2, %s20
        %s290 = smul.u32 32, %s20
        %p291 = scmp.lt.s32.totalorder %s290, 63
        %s292 = scalar_select %p291, %s290, 63
        %p293 = scmp.lt.s32.totalorder %s19, 0
        %s294 = scalar_select %p293, %s19, 0
        %s295 = sadd.s32 %s294, %s292
        %s296 = smul.addr %s295, 4
        %s297 = scalar_lea.vmem %s1, %s296
        %s298 = smul.u32 32, %s20
        %s299 = smul.u32 16, %s18
        %p300 = scmp.lt.s32.totalorder %s299, 15
        %s301 = scalar_select %p300, %s299, 15
        %p302 = scmp.lt.s32.totalorder %s19, 0
        %s303 = scalar_select %p302, %s19, 0
        %s304 = sadd.s32 %s303, %s301
        %s305 = smul.addr %s304, 4
        %s306 = scalar_lea.vmem %s2, %s305
        %s307 = smul.u32 16, %s18
        %p308 = scmp.eq.s32.totalorder %s20, 0
        // Predicated region
        $region67: #{resnet_generator_forward.43} parent=61 // pred_check
          %p309 = pneg %p308
        $region68: #{resnet_generator_forward.43} parent=61 // pred_check_branch
          %311 = sbr.rel (%p309) target = $region70
        $region69: #{resnet_generator_forward.43} parent=61 // pred_region
          %312 = vst [vmem:[#allocation2] sm:$0xff] 0.0
          %313 = vst [vmem:[#allocation2 + $0x8] sm:$0xff] 0.0
          %314 = vst [vmem:[#allocation2 + $0x10] sm:$0xff] 0.0
          %315 = vst [vmem:[#allocation2 + $0x18] sm:$0xff] 0.0
          %316 = vst [vmem:[#allocation2 + $0x20] sm:$0xff] 0.0
          %317 = vst [vmem:[#allocation2 + $0x28] sm:$0xff] 0.0
          %318 = vst [vmem:[#allocation2 + $0x30] sm:$0xff] 0.0
          %319 = vst [vmem:[#allocation2 + $0x38] sm:$0xff] 0.0
          %320 = vst [vmem:[#allocation2 + $0x40] sm:$0xff] 0.0
          %321 = vst [vmem:[#allocation2 + $0x48] sm:$0xff] 0.0
          %322 = vst [vmem:[#allocation2 + $0x50] sm:$0xff] 0.0
          %323 = vst [vmem:[#allocation2 + $0x58] sm:$0xff] 0.0
          %324 = vst [vmem:[#allocation2 + $0x60] sm:$0xff] 0.0
          %325 = vst [vmem:[#allocation2 + $0x68] sm:$0xff] 0.0
          %326 = vst [vmem:[#allocation2 + $0x70] sm:$0xff] 0.0
          %327 = vst [vmem:[#allocation2 + $0x78] sm:$0xff] 0.0
        $region70: #{resnet_generator_forward.43} parent=61 // pred_fallthru
          _
        %v328 = vld [vmem:[#allocation2] sm:$0xff]
        %v329 = vld [vmem:[#allocation2 + $0x8] sm:$0xff]
        %v330 = vld [vmem:[#allocation2 + $0x10] sm:$0xff]
        %v331 = vld [vmem:[#allocation2 + $0x18] sm:$0xff]
        %v332 = vld [vmem:[#allocation2 + $0x20] sm:$0xff]
        %v333 = vld [vmem:[#allocation2 + $0x28] sm:$0xff]
        %v334 = vld [vmem:[#allocation2 + $0x30] sm:$0xff]
        %v335 = vld [vmem:[#allocation2 + $0x38] sm:$0xff]
        %v336 = vld [vmem:[#allocation2 + $0x40] sm:$0xff]
        %v337 = vld [vmem:[#allocation2 + $0x48] sm:$0xff]
        %v338 = vld [vmem:[#allocation2 + $0x50] sm:$0xff]
        %v339 = vld [vmem:[#allocation2 + $0x58] sm:$0xff]
        %v340 = vld [vmem:[#allocation2 + $0x60] sm:$0xff]
        %v341 = vld [vmem:[#allocation2 + $0x68] sm:$0xff]
        %v342 = vld [vmem:[#allocation2 + $0x70] sm:$0xff]
        %v343 = vld [vmem:[#allocation2 + $0x78] sm:$0xff]
        %v344 = vld [vmem:[%s258] sm:$0xff]
        %v345 = vld [vmem:[%s258 + $0x8] sm:$0xff]
        %v346 = vld [vmem:[%s258 + $0x10] sm:$0xff]
        %v347 = vld [vmem:[%s258 + $0x18] sm:$0xff]
        %v348 = vld [vmem:[%s258 + $0x20] sm:$0xff]
        %v349 = vld [vmem:[%s258 + $0x28] sm:$0xff]
        %v350 = vld [vmem:[%s258 + $0x30] sm:$0xff]
        %v351 = vld [vmem:[%s258 + $0x38] sm:$0xff]
        %v352 = vld [vmem:[%s258 + $0x40] sm:$0xff]
        %v353 = vld [vmem:[%s258 + $0x48] sm:$0xff]
        %v354 = vld [vmem:[%s258 + $0x50] sm:$0xff]
        %v355 = vld [vmem:[%s258 + $0x58] sm:$0xff]
        %v356 = vld [vmem:[%s258 + $0x60] sm:$0xff]
        %v357 = vld [vmem:[%s258 + $0x68] sm:$0xff]
        %v358 = vld [vmem:[%s258 + $0x70] sm:$0xff]
        %v359 = vld [vmem:[%s258 + $0x78] sm:$0xff]
        %v360 = vld [vmem:[%s297] sm:$0xf]
        %v361 = vld [vmem:[%s297 + $0x4] sm:$0xf]
        %v362 = vld [vmem:[%s297 + $0x8] sm:$0xf]
        %v363 = vld [vmem:[%s297 + $0xc] sm:$0xf]
        %v364 = vld [vmem:[%s297 + $0x10] sm:$0xf]
        %v365 = vld [vmem:[%s297 + $0x14] sm:$0xf]
        %v366 = vld [vmem:[%s297 + $0x18] sm:$0xf]
        %v367 = vld [vmem:[%s297 + $0x1c] sm:$0xf]
        %v368 = vld [vmem:[%s297 + $0x20] sm:$0xf]
        %v369 = vld [vmem:[%s297 + $0x24] sm:$0xf]
        %v370 = vld [vmem:[%s297 + $0x28] sm:$0xf]
        %v371 = vld [vmem:[%s297 + $0x2c] sm:$0xf]
        %v372 = vld [vmem:[%s297 + $0x30] sm:$0xf]
        %v373 = vld [vmem:[%s297 + $0x34] sm:$0xf]
        %v374 = vld [vmem:[%s297 + $0x38] sm:$0xf]
        %v375 = vld [vmem:[%s297 + $0x3c] sm:$0xf]
        %v376 = vld [vmem:[%s297 + $0x40] sm:$0xf]
        %v377 = vld [vmem:[%s297 + $0x44] sm:$0xf]
        %v378 = vld [vmem:[%s297 + $0x48] sm:$0xf]
        %v379 = vld [vmem:[%s297 + $0x4c] sm:$0xf]
        %v380 = vld [vmem:[%s297 + $0x50] sm:$0xf]
        %v381 = vld [vmem:[%s297 + $0x54] sm:$0xf]
        %v382 = vld [vmem:[%s297 + $0x58] sm:$0xf]
        %v383 = vld [vmem:[%s297 + $0x5c] sm:$0xf]
        %v384 = vld [vmem:[%s297 + $0x60] sm:$0xf]
        %v385 = vld [vmem:[%s297 + $0x64] sm:$0xf]
        %v386 = vld [vmem:[%s297 + $0x68] sm:$0xf]
        %v387 = vld [vmem:[%s297 + $0x6c] sm:$0xf]
        %v388 = vld [vmem:[%s297 + $0x70] sm:$0xf]
        %v389 = vld [vmem:[%s297 + $0x74] sm:$0xf]
        %v390 = vld [vmem:[%s297 + $0x78] sm:$0xf]
        %v391 = vld [vmem:[%s297 + $0x7c] sm:$0xf]
        %v408 = vunpack.c.l.b16 %v344
        %v409 = vunpack.c.h.b16 %v344
        %v410 = vunpack.c.l.b16 %v345
        %v411 = vunpack.c.h.b16 %v345
        %v412 = vunpack.c.l.b16 %v346
        %v413 = vunpack.c.h.b16 %v346
        %v414 = vunpack.c.l.b16 %v347
        %v415 = vunpack.c.h.b16 %v347
        %v416 = vunpack.c.l.b16 %v348
        %v417 = vunpack.c.h.b16 %v348
        %v418 = vunpack.c.l.b16 %v349
        %v419 = vunpack.c.h.b16 %v349
        %v420 = vunpack.c.l.b16 %v350
        %v421 = vunpack.c.h.b16 %v350
        %v422 = vunpack.c.l.b16 %v351
        %v423 = vunpack.c.h.b16 %v351
        %v424 = vunpack.c.l.b16 %v352
        %v425 = vunpack.c.h.b16 %v352
        %v426 = vunpack.c.l.b16 %v353
        %v427 = vunpack.c.h.b16 %v353
        %v428 = vunpack.c.l.b16 %v354
        %v429 = vunpack.c.h.b16 %v354
        %v430 = vunpack.c.l.b16 %v355
        %v431 = vunpack.c.h.b16 %v355
        %v432 = vunpack.c.l.b16 %v356
        %v433 = vunpack.c.h.b16 %v356
        %v434 = vunpack.c.l.b16 %v357
        %v435 = vunpack.c.h.b16 %v357
        %v436 = vunpack.c.l.b16 %v358
        %v437 = vunpack.c.h.b16 %v358
        %v438 = vunpack.c.l.b16 %v359
        %v439 = vunpack.c.h.b16 %v359
        %v440 = vpack.c.b16 %v410, %v408
        %v441 = vpack.c.b16 %v411, %v409
        %v442 = vpack.c.b16 %v414, %v412
        %v443 = vpack.c.b16 %v415, %v413
        %v444 = vpack.c.b16 %v418, %v416
        %v445 = vpack.c.b16 %v419, %v417
        %v446 = vpack.c.b16 %v422, %v420
        %v447 = vpack.c.b16 %v423, %v421
        %v448 = vpack.c.b16 %v426, %v424
        %v449 = vpack.c.b16 %v427, %v425
        %v450 = vpack.c.b16 %v430, %v428
        %v451 = vpack.c.b16 %v431, %v429
        %v452 = vpack.c.b16 %v434, %v432
        %v453 = vpack.c.b16 %v435, %v433
        %v454 = vpack.c.b16 %v438, %v436
        %v455 = vpack.c.b16 %v439, %v437
        %v504 = vunpack.c.l.b16 %v360
        %v505 = vunpack.c.l.b16 %v361
        %v506 = vunpack.c.l.b16 %v362
        %v507 = vunpack.c.l.b16 %v363
        %v508 = vunpack.c.l.b16 %v364
        %v509 = vunpack.c.l.b16 %v365
        %v510 = vunpack.c.l.b16 %v366
        %v511 = vunpack.c.l.b16 %v367
        %v512 = vunpack.c.l.b16 %v368
        %v513 = vunpack.c.l.b16 %v369
        %v514 = vunpack.c.l.b16 %v370
        %v515 = vunpack.c.l.b16 %v371
        %v516 = vunpack.c.l.b16 %v372
        %v517 = vunpack.c.l.b16 %v373
        %v518 = vunpack.c.l.b16 %v374
        %v519 = vunpack.c.l.b16 %v375
        %v520 = vunpack.c.l.b16 %v376
        %v521 = vunpack.c.l.b16 %v377
        %v522 = vunpack.c.l.b16 %v378
        %v523 = vunpack.c.l.b16 %v379
        %v524 = vunpack.c.l.b16 %v380
        %v525 = vunpack.c.l.b16 %v381
        %v526 = vunpack.c.l.b16 %v382
        %v527 = vunpack.c.l.b16 %v383
        %v528 = vunpack.c.l.b16 %v384
        %v529 = vunpack.c.l.b16 %v385
        %v530 = vunpack.c.l.b16 %v386
        %v531 = vunpack.c.l.b16 %v387
        %v532 = vunpack.c.l.b16 %v388
        %v533 = vunpack.c.l.b16 %v389
        %v534 = vunpack.c.l.b16 %v390
        %v535 = vunpack.c.l.b16 %v391
        %v536 = vpack.c.b16 %v505, %v504
        %v537 = vpack.c.b16 %v507, %v506
        %v538 = vpack.c.b16 %v509, %v508
        %v539 = vpack.c.b16 %v511, %v510
        %v540 = vpack.c.b16 %v513, %v512
        %v541 = vpack.c.b16 %v515, %v514
        %v542 = vpack.c.b16 %v517, %v516
        %v543 = vpack.c.b16 %v519, %v518
        %v544 = vpack.c.b16 %v521, %v520
        %v545 = vpack.c.b16 %v523, %v522
        %v546 = vpack.c.b16 %v525, %v524
        %v547 = vpack.c.b16 %v527, %v526
        %v548 = vpack.c.b16 %v529, %v528
        %v549 = vpack.c.b16 %v531, %v530
        %v550 = vpack.c.b16 %v533, %v532
        %v551 = vpack.c.b16 %v535, %v534
        %568 = vmatpush.bf16.msra.mxu0 %v543
        %569 = vmatpush.bf16.msra.mxu0 %v542
        %570 = vmatpush.bf16.msra.mxu0 %v541
        %571 = vmatpush.bf16.msra.mxu0 %v540
        %572 = vmatpush.bf16.msra.mxu0 %v539
        %573 = vmatpush.bf16.msra.mxu0 %v538
        %574 = vmatpush.bf16.msra.mxu0 %v537
        %575 = vmatpush.bf16.msra.mxu0 %v536
        %576 = vmatmul.bf16.gmra.mxu0 %v440
        %v577 = vpop.f32.mrf.mxu0
        %v578 = vadd.f32 0.0, %v577
        %v579 = vpop.f32.mrf.mxu0
        %v580 = vadd.f32 0.0, %v579
        %581 = vmatmul.bf16.gmra.mxu0 %v442
        %v582 = vpop.f32.mrf.mxu0
        %v583 = vadd.f32 0.0, %v582
        %v584 = vpop.f32.mrf.mxu0
        %v585 = vadd.f32 0.0, %v584
        %586 = vmatmul.bf16.gmra.mxu0 %v444
        %v587 = vpop.f32.mrf.mxu0
        %v588 = vadd.f32 0.0, %v587
        %v589 = vpop.f32.mrf.mxu0
        %v590 = vadd.f32 0.0, %v589
        %591 = vmatmul.bf16.gmra.mxu0 %v446
        %v592 = vpop.f32.mrf.mxu0
        %v593 = vadd.f32 0.0, %v592
        %v594 = vpop.f32.mrf.mxu0
        %v595 = vadd.f32 0.0, %v594
        %596 = vmatmul.bf16.gmra.mxu0 %v448
        %v597 = vpop.f32.mrf.mxu0
        %v598 = vadd.f32 0.0, %v597
        %v599 = vpop.f32.mrf.mxu0
        %v600 = vadd.f32 0.0, %v599
        %601 = vmatmul.bf16.gmra.mxu0 %v450
        %v602 = vpop.f32.mrf.mxu0
        %v603 = vadd.f32 0.0, %v602
        %v604 = vpop.f32.mrf.mxu0
        %v605 = vadd.f32 0.0, %v604
        %606 = vmatmul.bf16.gmra.mxu0 %v452
        %v607 = vpop.f32.mrf.mxu0
        %v608 = vadd.f32 0.0, %v607
        %v609 = vpop.f32.mrf.mxu0
        %v610 = vadd.f32 0.0, %v609
        %611 = vmatmul.bf16.gmra.mxu0 %v454
        %v612 = vpop.f32.mrf.mxu0
        %v613 = vadd.f32 0.0, %v612
        %v614 = vpop.f32.mrf.mxu0
        %v615 = vadd.f32 0.0, %v614
        %616 = vdwg.mxu0
        %617 = vmatpush.bf16.msra.mxu0 %v551
        %618 = vmatpush.bf16.msra.mxu0 %v550
        %619 = vmatpush.bf16.msra.mxu0 %v549
        %620 = vmatpush.bf16.msra.mxu0 %v548
        %621 = vmatpush.bf16.msra.mxu0 %v547
        %622 = vmatpush.bf16.msra.mxu0 %v546
        %623 = vmatpush.bf16.msra.mxu0 %v545
        %624 = vmatpush.bf16.msra.mxu0 %v544
        %625 = vmatmul.bf16.gmra.mxu0 %v441
        %v626 = vpop.f32.mrf.mxu0
        %v627 = vadd.f32 %v578, %v626
        %v628 = vpop.f32.mrf.mxu0
        %v629 = vadd.f32 %v580, %v628
        %630 = vmatmul.bf16.gmra.mxu0 %v443
        %v631 = vpop.f32.mrf.mxu0
        %v632 = vadd.f32 %v583, %v631
        %v633 = vpop.f32.mrf.mxu0
        %v634 = vadd.f32 %v585, %v633
        %635 = vmatmul.bf16.gmra.mxu0 %v445
        %v636 = vpop.f32.mrf.mxu0
        %v637 = vadd.f32 %v588, %v636
        %v638 = vpop.f32.mrf.mxu0
        %v639 = vadd.f32 %v590, %v638
        %640 = vmatmul.bf16.gmra.mxu0 %v447
        %v641 = vpop.f32.mrf.mxu0
        %v642 = vadd.f32 %v593, %v641
        %v643 = vpop.f32.mrf.mxu0
        %v644 = vadd.f32 %v595, %v643
        %645 = vmatmul.bf16.gmra.mxu0 %v449
        %v646 = vpop.f32.mrf.mxu0
        %v647 = vadd.f32 %v598, %v646
        %v648 = vpop.f32.mrf.mxu0
        %v649 = vadd.f32 %v600, %v648
        %650 = vmatmul.bf16.gmra.mxu0 %v451
        %v651 = vpop.f32.mrf.mxu0
        %v652 = vadd.f32 %v603, %v651
        %v653 = vpop.f32.mrf.mxu0
        %v654 = vadd.f32 %v605, %v653
        %655 = vmatmul.bf16.gmra.mxu0 %v453
        %v656 = vpop.f32.mrf.mxu0
        %v657 = vadd.f32 %v608, %v656
        %v658 = vpop.f32.mrf.mxu0
        %v659 = vadd.f32 %v610, %v658
        %660 = vmatmul.bf16.gmra.mxu0 %v455
        %v661 = vpop.f32.mrf.mxu0
        %v662 = vadd.f32 %v613, %v661
        %v663 = vpop.f32.mrf.mxu0
        %v664 = vadd.f32 %v615, %v663
        %665 = vdwg.mxu0
        %v666 = vadd.f32 %v328, %v627
        %v667 = vadd.f32 %v329, %v629
        %v668 = vadd.f32 %v330, %v632
        %v669 = vadd.f32 %v331, %v634
        %v670 = vadd.f32 %v332, %v637
        %v671 = vadd.f32 %v333, %v639
        %v672 = vadd.f32 %v334, %v642
        %v673 = vadd.f32 %v335, %v644
        %v674 = vadd.f32 %v336, %v647
        %v675 = vadd.f32 %v337, %v649
        %v676 = vadd.f32 %v338, %v652
        %v677 = vadd.f32 %v339, %v654
        %v678 = vadd.f32 %v340, %v657
        %v679 = vadd.f32 %v341, %v659
        %v680 = vadd.f32 %v342, %v662
        %v681 = vadd.f32 %v343, %v664
        %682 = vst [vmem:[#allocation2] sm:$0xff] %v666
        %683 = vst [vmem:[#allocation2 + $0x8] sm:$0xff] %v667
        %684 = vst [vmem:[#allocation2 + $0x10] sm:$0xff] %v668
        %685 = vst [vmem:[#allocation2 + $0x18] sm:$0xff] %v669
        %686 = vst [vmem:[#allocation2 + $0x20] sm:$0xff] %v670
        %687 = vst [vmem:[#allocation2 + $0x28] sm:$0xff] %v671
        %688 = vst [vmem:[#allocation2 + $0x30] sm:$0xff] %v672
        %689 = vst [vmem:[#allocation2 + $0x38] sm:$0xff] %v673
        %690 = vst [vmem:[#allocation2 + $0x40] sm:$0xff] %v674
        %691 = vst [vmem:[#allocation2 + $0x48] sm:$0xff] %v675
        %692 = vst [vmem:[#allocation2 + $0x50] sm:$0xff] %v676
        %693 = vst [vmem:[#allocation2 + $0x58] sm:$0xff] %v677
        %694 = vst [vmem:[#allocation2 + $0x60] sm:$0xff] %v678
        %695 = vst [vmem:[#allocation2 + $0x68] sm:$0xff] %v679
        %696 = vst [vmem:[#allocation2 + $0x70] sm:$0xff] %v680
        %697 = vst [vmem:[#allocation2 + $0x78] sm:$0xff] %v681
        %p698 = scmp.eq.s32.totalorder %s20, 1
        // Predicated region
        $region71: #{resnet_generator_forward.43} parent=61 // pred_check
          %p699 = pneg %p698
        $region72: #{resnet_generator_forward.43} parent=61 // pred_check_branch
          %701 = sbr.rel (%p699) target = $region74
        $region73: #{resnet_generator_forward.43} parent=61 // pred_region
          %v702 = vld [vmem:[#allocation2] sm:$0xff]
          %v703 = vld [vmem:[#allocation2 + $0x8] sm:$0xff]
          %v704 = vld [vmem:[#allocation2 + $0x10] sm:$0xff]
          %v705 = vld [vmem:[#allocation2 + $0x18] sm:$0xff]
          %v706 = vld [vmem:[#allocation2 + $0x20] sm:$0xff]
          %v707 = vld [vmem:[#allocation2 + $0x28] sm:$0xff]
          %v708 = vld [vmem:[#allocation2 + $0x30] sm:$0xff]
          %v709 = vld [vmem:[#allocation2 + $0x38] sm:$0xff]
          %v710 = vld [vmem:[#allocation2 + $0x40] sm:$0xff]
          %v711 = vld [vmem:[#allocation2 + $0x48] sm:$0xff]
          %v712 = vld [vmem:[#allocation2 + $0x50] sm:$0xff]
          %v713 = vld [vmem:[#allocation2 + $0x58] sm:$0xff]
          %v714 = vld [vmem:[#allocation2 + $0x60] sm:$0xff]
          %v715 = vld [vmem:[#allocation2 + $0x68] sm:$0xff]
          %v716 = vld [vmem:[#allocation2 + $0x70] sm:$0xff]
          %v717 = vld [vmem:[#allocation2 + $0x78] sm:$0xff]
          %v718 = vpack.c.bf16 %v702, %v702
          %v719 = vpack.c.bf16 %v703, %v703
          %v720 = vpack.c.bf16 %v704, %v704
          %v721 = vpack.c.bf16 %v705, %v705
          %v722 = vpack.c.bf16 %v706, %v706
          %v723 = vpack.c.bf16 %v707, %v707
          %v724 = vpack.c.bf16 %v708, %v708
          %v725 = vpack.c.bf16 %v709, %v709
          %v726 = vpack.c.bf16 %v710, %v710
          %v727 = vpack.c.bf16 %v711, %v711
          %v728 = vpack.c.bf16 %v712, %v712
          %v729 = vpack.c.bf16 %v713, %v713
          %v730 = vpack.c.bf16 %v714, %v714
          %v731 = vpack.c.bf16 %v715, %v715
          %v732 = vpack.c.bf16 %v716, %v716
          %v733 = vpack.c.bf16 %v717, %v717
          %734 = vst [vmem:[%s306] sm:$0xf] %v718
          %735 = vst [vmem:[%s306 + $0x4] sm:$0xf] %v719
          %736 = vst [vmem:[%s306 + $0x8] sm:$0xf] %v720
          %737 = vst [vmem:[%s306 + $0xc] sm:$0xf] %v721
          %738 = vst [vmem:[%s306 + $0x10] sm:$0xf] %v722
          %739 = vst [vmem:[%s306 + $0x14] sm:$0xf] %v723
          %740 = vst [vmem:[%s306 + $0x18] sm:$0xf] %v724
          %741 = vst [vmem:[%s306 + $0x1c] sm:$0xf] %v725
          %742 = vst [vmem:[%s306 + $0x20] sm:$0xf] %v726
          %743 = vst [vmem:[%s306 + $0x24] sm:$0xf] %v727
          %744 = vst [vmem:[%s306 + $0x28] sm:$0xf] %v728
          %745 = vst [vmem:[%s306 + $0x2c] sm:$0xf] %v729
          %746 = vst [vmem:[%s306 + $0x30] sm:$0xf] %v730
          %747 = vst [vmem:[%s306 + $0x34] sm:$0xf] %v731
          %748 = vst [vmem:[%s306 + $0x38] sm:$0xf] %v732
          %749 = vst [vmem:[%s306 + $0x3c] sm:$0xf] %v733
        $region74: #{resnet_generator_forward.43} parent=61 // pred_fallthru
          _
        %s750 = smul.u32 16, %s18
        %p751 = scmp.lt.s32.totalorder %s750, 15
        %s752 = scalar_select %p751, %s750, 15
        %p753 = scmp.lt.s32.totalorder %s19, 0
        %s754 = scalar_select %p753, %s19, 0
        %s755 = sadd.s32 %s754, %s752
        %s756 = smul.addr %s755, 4
        %s757 = scalar_lea.vmem %s2, %s756
        // Predicated region
        $region75: #{resnet_generator_forward.43} parent=61 // pred_check
          %p758 = pneg %p108
        $region76: #{resnet_generator_forward.43} parent=61 // pred_check_branch
          %760 = sbr.rel (%p758) target = $region78
        $region77: #{resnet_generator_forward.43} parent=61 // pred_region
          %s761 = smul.u32 16, %s18
        $region78: #{resnet_generator_forward.43} parent=61 // pred_fallthru
          _
        // Predicated region
        $region79: #{resnet_generator_forward.43} parent=61 // pred_check
          %p762 = pneg %p108
        $region80: #{resnet_generator_forward.43} parent=61 // pred_check_branch
          %764 = sbr.rel (%p762) target = $region82
        $region81: #{resnet_generator_forward.43} parent=61 // pred_region
          %s765 = smul.u32 16, %s18
          %p766 = scmp.lt.s32.totalorder %s765, 15
          %s767 = scalar_select %p766, %s765, 15
          %p768 = scmp.lt.s32.totalorder %s19, 0
          %s769 = scalar_select %p768, %s19, 0
          %s770 = sadd.s32 %s769, %s767
          %s771 = smul.addr %s770, 4
          %s772 = scalar_lea.vmem %s2, %s771
        $region82: #{resnet_generator_forward.43} parent=61 // pred_fallthru
          _
      $region62: #{resnet_generator_forward.43} parent=5 // pred_fallthru
        _
      %p773 = scmp.le.s32.totalorder 2, %s8
      // Predicated region
      $region83: #{resnet_generator_forward.43} parent=5 // pred_check
        %p774 = pneg %p773
      $region84: #{resnet_generator_forward.43} parent=5 // pred_check_branch
        %776 = sbr.rel (%p774) target = $region86
      $region85: #{resnet_generator_forward.43} parent=5 // pred_region
        %s777 = ssub.s32 %s8, 2
      $region86: #{resnet_generator_forward.43} parent=5 // pred_fallthru
        _
    $region6: #{resnet_generator_forward.43} parent=1 // loop_footer
      %s12 = sadd.s32 1, %s8
    $region7: #{resnet_generator_forward.43} parent=1 // loop_footer_branch
      %7 = sbr.rel target = $region3
    $region8: #{resnet_generator_forward.43} parent=1 // loop_exit
      _

// kernel: resnet_generator_forward.67
$region0: #{resnet_generator_forward.67}
  #allocation0 [shape = 'u32[]', space=smem, size = 0x4, offset = 0x4, fixed_abs, tag = 'smem constant byte address 0x4 - core index']
  #allocation1 [shape = 'u32[72,128]{1,0:T(1,128)}', space=vmem, size = 0x9000, scoped, tag = 'internal scratch']
  #allocation2 [shape = 'f32[256,128]{1,0:T(8,128)}', space=vmem, size = 0x20000, scoped, tag = 'scratch operand']
  %s0 = inlined_call_operand.vmem [shape: bf16[512,512], index: 0, kind: input, shape index: {}]
  %s1 = inlined_call_operand.vmem [shape: bf16[512,128], index: 1, kind: input, shape index: {}]
  %s2 = inlined_call_operand.vmem [shape: f32[1,128], index: 2, kind: input, shape index: {}]
  %s3 = inlined_call_operand.vmem [shape: f32[512,128], index: 3, kind: output, shape index: {}]
  %s4 = sld [smem:[#allocation0]]
  $region91: #{resnet_generator_forward.67} parent=0
    _
  %s6 = ssub.s32 1, %s4
  %s7 = scalar_select 0, %s6, %s4
  $region1: #{resnet_generator_forward.67} parent=0
    #allocation3 [shape = 'u8[262144]{0}', space=vmem, size = 0x40000, scoped, tag = 'input window, operand 0']
    loop: start=0, step=1, limit=6
    $region2: #{resnet_generator_forward.67} parent=1 // loop_pre_header
      _
    $region3: #{resnet_generator_forward.67} parent=1 // loop_header
      %s9 = sphi 0, %s13
      %p10 = scmp.ge.s32.totalorder %s9, 6
      %s16 = sphi 0, %s35
      %s17 = sphi 0, %s31
      %s18 = sphi 0, %s27
      %s19 = sphi 0, %s16
      %s20 = sphi 0, %s17
      %s21 = sphi 0, %s18
      %s22 = sphi 0, %s19
      %s23 = sphi 0, %s20
      %s24 = sphi 0, %s21
      %s40 = sphi 0, %s42
      %s43 = sphi 0, %s40
      %s44 = sphi 0, %s43
      %s60 = sphi 0, %s44
      %s68 = sphi 0, %s70
      %s71 = sphi 0, %s68
      %s72 = sphi 0, %s71
      %s88 = sphi 0, %s72
      %s94 = sphi 0, %s96
      %s97 = sphi 0, %s94
      %s98 = sphi 0, %s97
      %s114 = sphi 0, %s98
      %s122 = sphi 0, %s124
      %s125 = sphi 0, %s122
      %s126 = sphi 0, %s125
      %s142 = sphi 0, %s126
    $region4: #{resnet_generator_forward.67} parent=1 // loop_header_branch
      %12 = sbr.rel (%p10) target = $region8
    $region5: #{resnet_generator_forward.67} parent=1 // loop_body
      %s14 = ssub.s32 %s9, 1
      %s15 = ssub.s32 %s9, 2
      %s25 = sadd.s32 1, %s18
      %p26 = scmp.ge.s32.totalorder %s25, 2
      %s27 = scalar_select %p26, 0, %s25
      %s28 = sadd.s32 1, %s17
      %s29 = scalar_select %p26, %s28, %s17
      %p30 = scmp.ge.s32.totalorder %s29, 1
      %s31 = scalar_select %p30, 0, %s29
      %s32 = sadd.s32 1, %s16
      %s33 = scalar_select %p30, %s32, %s16
      %p34 = scmp.ge.s32.totalorder %s33, 2
      %s35 = scalar_select %p34, 0, %s33
      %s36 = ssub.s32 %s16, %s35
      %s37 = ssub.s32 %s18, %s27
      %s38 = sor.u32 %s36, %s37
      %p39 = scmp.eq.s32.totalorder %s38, 0
      %s41 = sadd.s32 %s40, 1
      %s42 = scalar_select %p39, %s40, %s41
      %p45 = pneg %p39
      %p46 = scmp.eq.s32.totalorder %s9, 3
      %p47 = por %p45, %p46
      %p48 = scmp.ne.s32.totalorder %s40, %s43
      %p49 = scmp.eq.s32.totalorder %s9, 0
      %p50 = por %p48, %p49
      %p51 = scmp.ne.s32.totalorder %s40, %s43
      %p52 = scmp.eq.s32.totalorder %s14, 3
      %p53 = por %p51, %p52
      %p54 = scmp.ne.s32.totalorder %s43, %s44
      %p55 = scmp.eq.s32.totalorder %s14, 0
      %p56 = por %p54, %p55
      %p57 = scmp.ne.s32.totalorder %s43, %s44
      %p58 = scmp.eq.s32.totalorder %s15, 3
      %p59 = por %p57, %p58
      %p61 = scmp.ne.s32.totalorder %s44, %s60
      %p62 = scmp.eq.s32.totalorder %s15, 0
      %p63 = por %p61, %p62
      %s64 = ssub.s32 %s18, %s27
      %s65 = ssub.s32 %s17, %s31
      %s66 = sor.u32 %s64, %s65
      %p67 = scmp.eq.s32.totalorder %s66, 0
      %s69 = sadd.s32 %s68, 1
      %s70 = scalar_select %p67, %s68, %s69
      %p73 = pneg %p67
      %p74 = scmp.eq.s32.totalorder %s9, 3
      %p75 = por %p73, %p74
      %p76 = scmp.ne.s32.totalorder %s68, %s71
      %p77 = scmp.eq.s32.totalorder %s9, 0
      %p78 = por %p76, %p77
      %p79 = scmp.ne.s32.totalorder %s68, %s71
      %p80 = scmp.eq.s32.totalorder %s14, 3
      %p81 = por %p79, %p80
      %p82 = scmp.ne.s32.totalorder %s71, %s72
      %p83 = scmp.eq.s32.totalorder %s14, 0
      %p84 = por %p82, %p83
      %p85 = scmp.ne.s32.totalorder %s71, %s72
      %p86 = scmp.eq.s32.totalorder %s15, 3
      %p87 = por %p85, %p86
      %p89 = scmp.ne.s32.totalorder %s72, %s88
      %p90 = scmp.eq.s32.totalorder %s15, 0
      %p91 = por %p89, %p90
      %s92 = ssub.s32 %s17, %s31
      %p93 = scmp.eq.s32.totalorder %s92, 0
      %s95 = sadd.s32 %s94, 1
      %s96 = scalar_select %p93, %s94, %s95
      %p99 = pneg %p93
      %p100 = scmp.eq.s32.totalorder %s9, 3
      %p101 = por %p99, %p100
      %p102 = scmp.ne.s32.totalorder %s94, %s97
      %p103 = scmp.eq.s32.totalorder %s9, 0
      %p104 = por %p102, %p103
      %p105 = scmp.ne.s32.totalorder %s94, %s97
      %p106 = scmp.eq.s32.totalorder %s14, 3
      %p107 = por %p105, %p106
      %p108 = scmp.ne.s32.totalorder %s97, %s98
      %p109 = scmp.eq.s32.totalorder %s14, 0
      %p110 = por %p108, %p109
      %p111 = scmp.ne.s32.totalorder %s97, %s98
      %p112 = scmp.eq.s32.totalorder %s15, 3
      %p113 = por %p111, %p112
      %p115 = scmp.ne.s32.totalorder %s98, %s114
      %p116 = scmp.eq.s32.totalorder %s15, 0
      %p117 = por %p115, %p116
      %s118 = ssub.s32 %s16, %s35
      %s119 = ssub.s32 %s17, %s31
      %s120 = sor.u32 %s118, %s119
      %p121 = scmp.eq.s32.totalorder %s120, 0
      %s123 = sadd.s32 %s122, 1
      %s124 = scalar_select %p121, %s122, %s123
      %p127 = pneg %p121
      %p128 = scmp.eq.s32.totalorder %s9, 3
      %p129 = por %p127, %p128
      %p130 = scmp.ne.s32.totalorder %s122, %s125
      %p131 = scmp.eq.s32.totalorder %s9, 0
      %p132 = por %p130, %p131
      %p133 = scmp.ne.s32.totalorder %s122, %s125
      %p134 = scmp.eq.s32.totalorder %s14, 3
      %p135 = por %p133, %p134
      %p136 = scmp.ne.s32.totalorder %s125, %s126
      %p137 = scmp.eq.s32.totalorder %s14, 0
      %p138 = por %p136, %p137
      %p139 = scmp.ne.s32.totalorder %s125, %s126
      %p140 = scmp.eq.s32.totalorder %s15, 3
      %p141 = por %p139, %p140
      %p143 = scmp.ne.s32.totalorder %s126, %s142
      %p144 = scmp.eq.s32.totalorder %s15, 0
      %p145 = por %p143, %p144
      %p146 = scmp.le.s32.totalorder 1, %s9
      %p147 = scmp.lt.s32.totalorder %s9, 5
      %p148 = pnand %p146, %p147
      %p149 = pneg %p148
      // Predicated region
      $region9: #{resnet_generator_forward.67} parent=5 // pred_check
        _
      $region10: #{resnet_generator_forward.67} parent=5 // pred_check_branch
        %151 = sbr.rel (%p148) target = $region12
      $region11: #{resnet_generator_forward.67} parent=5 // pred_region
        %s152 = ssub.s32 %s9, 1
        // Predicated region
        $region13: #{resnet_generator_forward.67} parent=11 // pred_check
          %p153 = pneg %p110
        $region14: #{resnet_generator_forward.67} parent=11 // pred_check_branch
          %155 = sbr.rel (%p153) target = $region16
        $region15: #{resnet_generator_forward.67} parent=11 // pred_region
          %p156 = scmp.lt.s32.totalorder %s20, 0
          %s157 = scalar_select %p156, %s20, 0
          %s158 = scalar_lea.vmem %s2, %s157
        $region16: #{resnet_generator_forward.67} parent=11 // pred_fallthru
          _
      $region12: #{resnet_generator_forward.67} parent=5 // pred_fallthru
        _
      %p159 = scmp.lt.s32.totalorder %s9, 4
      // Predicated region
      $region17: #{resnet_generator_forward.67} parent=5 // pred_check
        %p160 = pneg %p159
      $region18: #{resnet_generator_forward.67} parent=5 // pred_check_branch
        %162 = sbr.rel (%p160) target = $region20
      $region19: #{resnet_generator_forward.67} parent=5 // pred_region
        // Predicated region
        $region21: #{resnet_generator_forward.67} parent=19 // pred_check
          %p163 = pneg %p50
        $region22: #{resnet_generator_forward.67} parent=19 // pred_check_branch
          %165 = sbr.rel (%p163) target = $region24
        $region23: #{resnet_generator_forward.67} parent=19 // pred_region
          %s166 = sand.u32 %s40, 1
          %s167 = sand.u32 %s40, 1
          %s168 = smul.addr %s167, 256
          %s169 = scalar_lea.vmem [#allocation3], %s168
          %s170 = smul.u32 32, %s16
          %s171 = smul.u32 2, %s18
          %s172 = smul.addr %s170, 4
          %s173 = sadd.s32 %s171, %s172
          %s174 = smul.addr %s173, 4
          %s175 = scalar_lea.vmem %s0, %s174
          // Predicated region
          $region25: #{resnet_generator_forward.67} parent=23 // pred_check
            _
          $region26: #{resnet_generator_forward.67} parent=23 // pred_check_branch
            %177 = sbr.rel (0) target = $region28
          $region27: #{resnet_generator_forward.67} parent=23 // pred_region
            // Predicated region
            $region29: #{resnet_generator_forward.67} parent=27 // pred_check
              _
            $region30: #{resnet_generator_forward.67} parent=27 // pred_check_branch
              %179 = sbr.rel (0) target = $region32
            $region31: #{resnet_generator_forward.67} parent=27 // pred_region
              // Predicated region
              $region44: #{resnet_generator_forward.67} parent=31 // pred_check
                _
              $region45: #{resnet_generator_forward.67} parent=31 // pred_check_branch
                %257 = sbr.rel (0) target = $region47
              $region46: #{resnet_generator_forward.67} parent=31 // pred_region
                loop: start=0, step=1, limit=1
                $region48: #{resnet_generator_forward.67} parent=46 // loop_pre_header
                  _
                $region49: #{resnet_generator_forward.67} parent=46 // loop_header
                  %s259 = sphi 0, %s263
                  %p260 = scmp.ge.s32.totalorder %s259, 1
                  %s264 = sphi %s175, %s175
                  %s265 = sphi %s169, %s169
                $region50: #{resnet_generator_forward.67} parent=46 // loop_header_branch
                  %262 = sbr.rel (%p260) target = $region54
                $region51: #{resnet_generator_forward.67} parent=46 // loop_body
                  %v266 = vld [vmem:[%s264] sm:$0xff]
                  %267 = vst [vmem:[%s265] sm:$0xff] %v266
                  %v268 = vld [vmem:[%s264 + $0x10] sm:$0xff]
                  %269 = vst [vmem:[%s265 + $0x8] sm:$0xff] %v268
                  %v270 = vld [vmem:[%s264 + $0x20] sm:$0xff]
                  %271 = vst [vmem:[%s265 + $0x10] sm:$0xff] %v270
                  %v272 = vld [vmem:[%s264 + $0x30] sm:$0xff]
                  %273 = vst [vmem:[%s265 + $0x18] sm:$0xff] %v272
                  %v274 = vld [vmem:[%s264 + $0x40] sm:$0xff]
                  %275 = vst [vmem:[%s265 + $0x20] sm:$0xff] %v274
                  %v276 = vld [vmem:[%s264 + $0x50] sm:$0xff]
                  %277 = vst [vmem:[%s265 + $0x28] sm:$0xff] %v276
                  %v278 = vld [vmem:[%s264 + $0x60] sm:$0xff]
                  %279 = vst [vmem:[%s265 + $0x30] sm:$0xff] %v278
                  %v280 = vld [vmem:[%s264 + $0x70] sm:$0xff]
                  %281 = vst [vmem:[%s265 + $0x38] sm:$0xff] %v280
                  %v282 = vld [vmem:[%s264 + $0x80] sm:$0xff]
                  %283 = vst [vmem:[%s265 + $0x40] sm:$0xff] %v282
                  %v284 = vld [vmem:[%s264 + $0x90] sm:$0xff]
                  %285 = vst [vmem:[%s265 + $0x48] sm:$0xff] %v284
                  %v286 = vld [vmem:[%s264 + $0xa0] sm:$0xff]
                  %287 = vst [vmem:[%s265 + $0x50] sm:$0xff] %v286
                  %v288 = vld [vmem:[%s264 + $0xb0] sm:$0xff]
                  %289 = vst [vmem:[%s265 + $0x58] sm:$0xff] %v288
                  %v290 = vld [vmem:[%s264 + $0xc0] sm:$0xff]
                  %291 = vst [vmem:[%s265 + $0x60] sm:$0xff] %v290
                  %v292 = vld [vmem:[%s264 + $0xd0] sm:$0xff]
                  %293 = vst [vmem:[%s265 + $0x68] sm:$0xff] %v292
                  %v294 = vld [vmem:[%s264 + $0xe0] sm:$0xff]
                  %295 = vst [vmem:[%s265 + $0x70] sm:$0xff] %v294
                  %v296 = vld [vmem:[%s264 + $0xf0] sm:$0xff]
                  %297 = vst [vmem:[%s265 + $0x78] sm:$0xff] %v296
                  %v298 = vld [vmem:[%s264 + $0x100] sm:$0xff]
                  %299 = vst [vmem:[%s265 + $0x80] sm:$0xff] %v298
                  %v300 = vld [vmem:[%s264 + $0x110] sm:$0xff]
                  %301 = vst [vmem:[%s265 + $0x88] sm:$0xff] %v300
                  %v302 = vld [vmem:[%s264 + $0x120] sm:$0xff]
                  %303 = vst [vmem:[%s265 + $0x90] sm:$0xff] %v302
                  %v304 = vld [vmem:[%s264 + $0x130] sm:$0xff]
                  %305 = vst [vmem:[%s265 + $0x98] sm:$0xff] %v304
                  %v306 = vld [vmem:[%s264 + $0x140] sm:$0xff]
                  %307 = vst [vmem:[%s265 + $0xa0] sm:$0xff] %v306
                  %v308 = vld [vmem:[%s264 + $0x150] sm:$0xff]
                  %309 = vst [vmem:[%s265 + $0xa8] sm:$0xff] %v308
                  %v310 = vld [vmem:[%s264 + $0x160] sm:$0xff]
                  %311 = vst [vmem:[%s265 + $0xb0] sm:$0xff] %v310
                  %v312 = vld [vmem:[%s264 + $0x170] sm:$0xff]
                  %313 = vst [vmem:[%s265 + $0xb8] sm:$0xff] %v312
                  %v314 = vld [vmem:[%s264 + $0x180] sm:$0xff]
                  %315 = vst [vmem:[%s265 + $0xc0] sm:$0xff] %v314
                  %v316 = vld [vmem:[%s264 + $0x190] sm:$0xff]
                  %317 = vst [vmem:[%s265 + $0xc8] sm:$0xff] %v316
                  %v318 = vld [vmem:[%s264 + $0x1a0] sm:$0xff]
                  %319 = vst [vmem:[%s265 + $0xd0] sm:$0xff] %v318
                  %v320 = vld [vmem:[%s264 + $0x1b0] sm:$0xff]
                  %321 = vst [vmem:[%s265 + $0xd8] sm:$0xff] %v320
                  %v322 = vld [vmem:[%s264 + $0x1c0] sm:$0xff]
                  %323 = vst [vmem:[%s265 + $0xe0] sm:$0xff] %v322
                  %v324 = vld [vmem:[%s264 + $0x1d0] sm:$0xff]
                  %325 = vst [vmem:[%s265 + $0xe8] sm:$0xff] %v324
                  %v326 = vld [vmem:[%s264 + $0x1e0] sm:$0xff]
                  %327 = vst [vmem:[%s265 + $0xf0] sm:$0xff] %v326
                  %v328 = vld [vmem:[%s264 + $0x1f0] sm:$0xff]
                  %329 = vst [vmem:[%s265 + $0xf8] sm:$0xff] %v328
                $region52: #{resnet_generator_forward.67} parent=46 // loop_footer
                  %s263 = sadd.s32 1, %s259
                $region53: #{resnet_generator_forward.67} parent=46 // loop_footer_branch
                  %258 = sbr.rel target = $region49
                $region54: #{resnet_generator_forward.67} parent=46 // loop_exit
                  _
              $region47: #{resnet_generator_forward.67} parent=31 // pred_fallthru
                _
              // Predicated region
              $region55: #{resnet_generator_forward.67} parent=31 // pred_check
                _
              $region56: #{resnet_generator_forward.67} parent=31 // pred_check_branch
                %331 = sbr.rel target = $region58
              $region57: #{resnet_generator_forward.67} parent=31 // pred_region
                _
              $region58: #{resnet_generator_forward.67} parent=31 // pred_fallthru
                _
            $region32: #{resnet_generator_forward.67} parent=27 // pred_fallthru
              _
            // Predicated region
            $region33: #{resnet_generator_forward.67} parent=27 // pred_check
              _
            $region34: #{resnet_generator_forward.67} parent=27 // pred_check_branch
              %181 = sbr.rel target = $region36
            $region35: #{resnet_generator_forward.67} parent=27 // pred_region
              %s183 = ssub.s32 256, 1
              loop: start=0, step=1, limit=1
              $region37: #{resnet_generator_forward.67} parent=35 // loop_pre_header
                _
              $region38: #{resnet_generator_forward.67} parent=35 // loop_header
                %s185 = sphi 0, %s189
                %p186 = scmp.ge.s32.totalorder %s185, 1
                %s190 = sphi %s175, %s175
                %s191 = sphi %s169, %s169
              $region39: #{resnet_generator_forward.67} parent=35 // loop_header_branch
                %188 = sbr.rel (%p186) target = $region43
              $region40: #{resnet_generator_forward.67} parent=35 // loop_body
                %v192 = vld [vmem:[%s190] sm:%s183]
                %193 = vst [vmem:[%s191] sm:%s183] %v192
                %v194 = vld [vmem:[%s190 + $0x10] sm:%s183]
                %195 = vst [vmem:[%s191 + $0x8] sm:%s183] %v194
                %v196 = vld [vmem:[%s190 + $0x20] sm:%s183]
                %197 = vst [vmem:[%s191 + $0x10] sm:%s183] %v196
                %v198 = vld [vmem:[%s190 + $0x30] sm:%s183]
                %199 = vst [vmem:[%s191 + $0x18] sm:%s183] %v198
                %v200 = vld [vmem:[%s190 + $0x40] sm:%s183]
                %201 = vst [vmem:[%s191 + $0x20] sm:%s183] %v200
                %v202 = vld [vmem:[%s190 + $0x50] sm:%s183]
                %203 = vst [vmem:[%s191 + $0x28] sm:%s183] %v202
                %v204 = vld [vmem:[%s190 + $0x60] sm:%s183]
                %205 = vst [vmem:[%s191 + $0x30] sm:%s183] %v204
                %v206 = vld [vmem:[%s190 + $0x70] sm:%s183]
                %207 = vst [vmem:[%s191 + $0x38] sm:%s183] %v206
                %v208 = vld [vmem:[%s190 + $0x80] sm:%s183]
                %209 = vst [vmem:[%s191 + $0x40] sm:%s183] %v208
                %v210 = vld [vmem:[%s190 + $0x90] sm:%s183]
                %211 = vst [vmem:[%s191 + $0x48] sm:%s183] %v210
                %v212 = vld [vmem:[%s190 + $0xa0] sm:%s183]
                %213 = vst [vmem:[%s191 + $0x50] sm:%s183] %v212
                %v214 = vld [vmem:[%s190 + $0xb0] sm:%s183]
                %215 = vst [vmem:[%s191 + $0x58] sm:%s183] %v214
                %v216 = vld [vmem:[%s190 + $0xc0] sm:%s183]
                %217 = vst [vmem:[%s191 + $0x60] sm:%s183] %v216
                %v218 = vld [vmem:[%s190 + $0xd0] sm:%s183]
                %219 = vst [vmem:[%s191 + $0x68] sm:%s183] %v218
                %v220 = vld [vmem:[%s190 + $0xe0] sm:%s183]
                %221 = vst [vmem:[%s191 + $0x70] sm:%s183] %v220
                %v222 = vld [vmem:[%s190 + $0xf0] sm:%s183]
                %223 = vst [vmem:[%s191 + $0x78] sm:%s183] %v222
                %v224 = vld [vmem:[%s190 + $0x100] sm:%s183]
                %225 = vst [vmem:[%s191 + $0x80] sm:%s183] %v224
                %v226 = vld [vmem:[%s190 + $0x110] sm:%s183]
                %227 = vst [vmem:[%s191 + $0x88] sm:%s183] %v226
                %v228 = vld [vmem:[%s190 + $0x120] sm:%s183]
                %229 = vst [vmem:[%s191 + $0x90] sm:%s183] %v228
                %v230 = vld [vmem:[%s190 + $0x130] sm:%s183]
                %231 = vst [vmem:[%s191 + $0x98] sm:%s183] %v230
                %v232 = vld [vmem:[%s190 + $0x140] sm:%s183]
                %233 = vst [vmem:[%s191 + $0xa0] sm:%s183] %v232
                %v234 = vld [vmem:[%s190 + $0x150] sm:%s183]
                %235 = vst [vmem:[%s191 + $0xa8] sm:%s183] %v234
                %v236 = vld [vmem:[%s190 + $0x160] sm:%s183]
                %237 = vst [vmem:[%s191 + $0xb0] sm:%s183] %v236
                %v238 = vld [vmem:[%s190 + $0x170] sm:%s183]
                %239 = vst [vmem:[%s191 + $0xb8] sm:%s183] %v238
                %v240 = vld [vmem:[%s190 + $0x180] sm:%s183]
                %241 = vst [vmem:[%s191 + $0xc0] sm:%s183] %v240
                %v242 = vld [vmem:[%s190 + $0x190] sm:%s183]
                %243 = vst [vmem:[%s191 + $0xc8] sm:%s183] %v242
                %v244 = vld [vmem:[%s190 + $0x1a0] sm:%s183]
                %245 = vst [vmem:[%s191 + $0xd0] sm:%s183] %v244
                %v246 = vld [vmem:[%s190 + $0x1b0] sm:%s183]
                %247 = vst [vmem:[%s191 + $0xd8] sm:%s183] %v246
                %v248 = vld [vmem:[%s190 + $0x1c0] sm:%s183]
                %249 = vst [vmem:[%s191 + $0xe0] sm:%s183] %v248
                %v250 = vld [vmem:[%s190 + $0x1d0] sm:%s183]
                %251 = vst [vmem:[%s191 + $0xe8] sm:%s183] %v250
                %v252 = vld [vmem:[%s190 + $0x1e0] sm:%s183]
                %253 = vst [vmem:[%s191 + $0xf0] sm:%s183] %v252
                %v254 = vld [vmem:[%s190 + $0x1f0] sm:%s183]
                %255 = vst [vmem:[%s191 + $0xf8] sm:%s183] %v254
              $region41: #{resnet_generator_forward.67} parent=35 // loop_footer
                %s189 = sadd.s32 1, %s185
              $region42: #{resnet_generator_forward.67} parent=35 // loop_footer_branch
                %184 = sbr.rel target = $region38
              $region43: #{resnet_generator_forward.67} parent=35 // loop_exit
                _
            $region36: #{resnet_generator_forward.67} parent=27 // pred_fallthru
              _
          $region28: #{resnet_generator_forward.67} parent=23 // pred_fallthru
            _
          %332 = vnop
        $region24: #{resnet_generator_forward.67} parent=19 // pred_fallthru
          _
        // Predicated region
        $region59: #{resnet_generator_forward.67} parent=19 // pred_check
          %p333 = pneg %p78
        $region60: #{resnet_generator_forward.67} parent=19 // pred_check_branch
          %335 = sbr.rel (%p333) target = $region62
        $region61: #{resnet_generator_forward.67} parent=19 // pred_region
          %s336 = smul.u32 32, %s18
          %p337 = scmp.lt.s32.totalorder %s336, 63
          %s338 = scalar_select %p337, %s336, 63
          %p339 = scmp.lt.s32.totalorder %s17, 0
          %s340 = scalar_select %p339, %s17, 0
          %s341 = sadd.s32 %s340, %s338
          %s342 = smul.addr %s341, 4
          %s343 = scalar_lea.vmem %s1, %s342
          %s344 = smul.u32 32, %s18
        $region62: #{resnet_generator_forward.67} parent=19 // pred_fallthru
          _
      $region20: #{resnet_generator_forward.67} parent=5 // pred_fallthru
        _
      %p345 = scmp.le.s32.totalorder 1, %s9
      %p346 = scmp.lt.s32.totalorder %s9, 5
      %p347 = pnand %p345, %p346
      %p348 = pneg %p347
      // Predicated region
      $region63: #{resnet_generator_forward.67} parent=5 // pred_check
        _
      $region64: #{resnet_generator_forward.67} parent=5 // pred_check_branch
        %350 = sbr.rel (%p347) target = $region66
      $region65: #{resnet_generator_forward.67} parent=5 // pred_region
        %s351 = ssub.s32 %s9, 1
        %s352 = sand.u32 %s43, 1
        %s353 = sand.u32 %s43, 1
        %s354 = smul.addr %s353, 256
        %s355 = scalar_lea.vmem [#allocation3], %s354
        // Predicated region
        $region67: #{resnet_generator_forward.67} parent=65 // pred_check
          %p356 = pneg %p56
        $region68: #{resnet_generator_forward.67} parent=65 // pred_check_branch
          %358 = sbr.rel (%p356) target = $region70
        $region69: #{resnet_generator_forward.67} parent=65 // pred_region
          _
        $region70: #{resnet_generator_forward.67} parent=65 // pred_fallthru
          _
        %s359 = sand.u32 %s43, 1
        %s360 = sand.u32 %s43, 1
        %s361 = smul.addr %s360, 256
        %s362 = scalar_lea.vmem [#allocation3], %s361
        %p363 = pneg %p56
        %p364 = pneg %p53
        %s365 = smul.u32 32, %s21
        %p366 = scmp.lt.s32.totalorder %s365, 63
        %s367 = scalar_select %p366, %s365, 63
        %p368 = scmp.lt.s32.totalorder %s20, 0
        %s369 = scalar_select %p368, %s20, 0
        %s370 = sadd.s32 %s369, %s367
        %s371 = smul.addr %s370, 4
        %s372 = scalar_lea.vmem %s1, %s371
        %p373 = pneg %p84
        %p374 = pneg %p81
        %p375 = scmp.lt.s32.totalorder %s20, 0
        %s376 = scalar_select %p375, %s20, 0
        %s377 = scalar_lea.vmem %s2, %s376
        %p378 = pneg %p110
        %p379 = pneg %p107
        %p380 = pneg %p138
        %p381 = pneg %p135
        %s382 = smul.u32 32, %s19
        %p383 = scmp.lt.s32.totalorder %s382, 63
        %s384 = scalar_select %p383, %s382, 63
        %p385 = scmp.lt.s32.totalorder %s20, 0
        %s386 = scalar_select %p385, %s20, 0
        %s387 = sadd.s32 %s386, %s384
        %s388 = smul.addr %s387, 8
        %s389 = scalar_lea.vmem %s3, %s388
        %s390 = smul.u32 32, %s19
        %s391 = smul.u32 2, %s21
        %s392 = smul.u32 32, %s21
        %p393 = scmp.lt.s32.totalorder %s392, 63
        %s394 = scalar_select %p393, %s392, 63
        %p395 = scmp.lt.s32.totalorder %s20, 0
        %s396 = scalar_select %p395, %s20, 0
        %s397 = sadd.s32 %s396, %s394
        %s398 = smul.addr %s397, 4
        %s399 = scalar_lea.vmem %s1, %s398
        %s400 = smul.u32 32, %s21
        %p401 = scmp.lt.s32.totalorder %s20, 0
        %s402 = scalar_select %p401, %s20, 0
        %s403 = scalar_lea.vmem %s2, %s402
        %s404 = smul.u32 32, %s19
        %p405 = scmp.lt.s32.totalorder %s404, 63
        %s406 = scalar_select %p405, %s404, 63
        %p407 = scmp.lt.s32.totalorder %s20, 0
        %s408 = scalar_select %p407, %s20, 0
        %s409 = sadd.s32 %s408, %s406
        %s410 = smul.addr %s409, 8
        %s411 = scalar_lea.vmem %s3, %s410
        %s412 = smul.u32 32, %s19
        %p413 = scmp.eq.s32.totalorder %s21, 0
        // Predicated region
        $region71: #{resnet_generator_forward.67} parent=65 // pred_check
          %p414 = pneg %p413
        $region72: #{resnet_generator_forward.67} parent=65 // pred_check_branch
          %416 = sbr.rel (%p414) target = $region74
        $region73: #{resnet_generator_forward.67} parent=65 // pred_region
          %417 = vst [vmem:[#allocation2] sm:$0xff] 0.0
          %418 = vst [vmem:[#allocation2 + $0x8] sm:$0xff] 0.0
          %419 = vst [vmem:[#allocation2 + $0x10] sm:$0xff] 0.0
          %420 = vst [vmem:[#allocation2 + $0x18] sm:$0xff] 0.0
          %421 = vst [vmem:[#allocation2 + $0x20] sm:$0xff] 0.0
          %422 = vst [vmem:[#allocation2 + $0x28] sm:$0xff] 0.0
          %423 = vst [vmem:[#allocation2 + $0x30] sm:$0xff] 0.0
          %424 = vst [vmem:[#allocation2 + $0x38] sm:$0xff] 0.0
          %425 = vst [vmem:[#allocation2 + $0x40] sm:$0xff] 0.0
          %426 = vst [vmem:[#allocation2 + $0x48] sm:$0xff] 0.0
          %427 = vst [vmem:[#allocation2 + $0x50] sm:$0xff] 0.0
          %428 = vst [vmem:[#allocation2 + $0x58] sm:$0xff] 0.0
          %429 = vst [vmem:[#allocation2 + $0x60] sm:$0xff] 0.0
          %430 = vst [vmem:[#allocation2 + $0x68] sm:$0xff] 0.0
          %431 = vst [vmem:[#allocation2 + $0x70] sm:$0xff] 0.0
          %432 = vst [vmem:[#allocation2 + $0x78] sm:$0xff] 0.0
          %433 = vst [vmem:[#allocation2 + $0x80] sm:$0xff] 0.0
          %434 = vst [vmem:[#allocation2 + $0x88] sm:$0xff] 0.0
          %435 = vst [vmem:[#allocation2 + $0x90] sm:$0xff] 0.0
          %436 = vst [vmem:[#allocation2 + $0x98] sm:$0xff] 0.0
          %437 = vst [vmem:[#allocation2 + $0xa0] sm:$0xff] 0.0
          %438 = vst [vmem:[#allocation2 + $0xa8] sm:$0xff] 0.0
          %439 = vst [vmem:[#allocation2 + $0xb0] sm:$0xff] 0.0
          %440 = vst [vmem:[#allocation2 + $0xb8] sm:$0xff] 0.0
          %441 = vst [vmem:[#allocation2 + $0xc0] sm:$0xff] 0.0
          %442 = vst [vmem:[#allocation2 + $0xc8] sm:$0xff] 0.0
          %443 = vst [vmem:[#allocation2 + $0xd0] sm:$0xff] 0.0
          %444 = vst [vmem:[#allocation2 + $0xd8] sm:$0xff] 0.0
          %445 = vst [vmem:[#allocation2 + $0xe0] sm:$0xff] 0.0
          %446 = vst [vmem:[#allocation2 + $0xe8] sm:$0xff] 0.0
          %447 = vst [vmem:[#allocation2 + $0xf0] sm:$0xff] 0.0
          %448 = vst [vmem:[#allocation2 + $0xf8] sm:$0xff] 0.0
        $region74: #{resnet_generator_forward.67} parent=65 // pred_fallthru
          _
        %v449 = vld [vmem:[#allocation2] sm:$0xff]
        %v450 = vld [vmem:[#allocation2 + $0x8] sm:$0xff]
        %v451 = vld [vmem:[#allocation2 + $0x10] sm:$0xff]
        %v452 = vld [vmem:[#allocation2 + $0x18] sm:$0xff]
        %v453 = vld [vmem:[#allocation2 + $0x20] sm:$0xff]
        %v454 = vld [vmem:[#allocation2 + $0x28] sm:$0xff]
        %v455 = vld [vmem:[#allocation2 + $0x30] sm:$0xff]
        %v456 = vld [vmem:[#allocation2 + $0x38] sm:$0xff]
        %v457 = vld [vmem:[#allocation2 + $0x40] sm:$0xff]
        %v458 = vld [vmem:[#allocation2 + $0x48] sm:$0xff]
        %v459 = vld [vmem:[#allocation2 + $0x50] sm:$0xff]
        %v460 = vld [vmem:[#allocation2 + $0x58] sm:$0xff]
        %v461 = vld [vmem:[#allocation2 + $0x60] sm:$0xff]
        %v462 = vld [vmem:[#allocation2 + $0x68] sm:$0xff]
        %v463 = vld [vmem:[#allocation2 + $0x70] sm:$0xff]
        %v464 = vld [vmem:[#allocation2 + $0x78] sm:$0xff]
        %v465 = vld [vmem:[#allocation2 + $0x80] sm:$0xff]
        %v466 = vld [vmem:[#allocation2 + $0x88] sm:$0xff]
        %v467 = vld [vmem:[#allocation2 + $0x90] sm:$0xff]
        %v468 = vld [vmem:[#allocation2 + $0x98] sm:$0xff]
        %v469 = vld [vmem:[#allocation2 + $0xa0] sm:$0xff]
        %v470 = vld [vmem:[#allocation2 + $0xa8] sm:$0xff]
        %v471 = vld [vmem:[#allocation2 + $0xb0] sm:$0xff]
        %v472 = vld [vmem:[#allocation2 + $0xb8] sm:$0xff]
        %v473 = vld [vmem:[#allocation2 + $0xc0] sm:$0xff]
        %v474 = vld [vmem:[#allocation2 + $0xc8] sm:$0xff]
        %v475 = vld [vmem:[#allocation2 + $0xd0] sm:$0xff]
        %v476 = vld [vmem:[#allocation2 + $0xd8] sm:$0xff]
        %v477 = vld [vmem:[#allocation2 + $0xe0] sm:$0xff]
        %v478 = vld [vmem:[#allocation2 + $0xe8] sm:$0xff]
        %v479 = vld [vmem:[#allocation2 + $0xf0] sm:$0xff]
        %v480 = vld [vmem:[#allocation2 + $0xf8] sm:$0xff]
        %v481 = vld [vmem:[%s355] sm:$0xff]
        %v482 = vld [vmem:[%s355 + $0x8] sm:$0xff]
        %v483 = vld [vmem:[%s355 + $0x10] sm:$0xff]
        %v484 = vld [vmem:[%s355 + $0x18] sm:$0xff]
        %v485 = vld [vmem:[%s355 + $0x20] sm:$0xff]
        %v486 = vld [vmem:[%s355 + $0x28] sm:$0xff]
        %v487 = vld [vmem:[%s355 + $0x30] sm:$0xff]
        %v488 = vld [vmem:[%s355 + $0x38] sm:$0xff]
        %v489 = vld [vmem:[%s355 + $0x40] sm:$0xff]
        %v490 = vld [vmem:[%s355 + $0x48] sm:$0xff]
        %v491 = vld [vmem:[%s355 + $0x50] sm:$0xff]
        %v492 = vld [vmem:[%s355 + $0x58] sm:$0xff]
        %v493 = vld [vmem:[%s355 + $0x60] sm:$0xff]
        %v494 = vld [vmem:[%s355 + $0x68] sm:$0xff]
        %v495 = vld [vmem:[%s355 + $0x70] sm:$0xff]
        %v496 = vld [vmem:[%s355 + $0x78] sm:$0xff]
        %v497 = vld [vmem:[%s355 + $0x80] sm:$0xff]
        %v498 = vld [vmem:[%s355 + $0x88] sm:$0xff]
        %v499 = vld [vmem:[%s355 + $0x90] sm:$0xff]
        %v500 = vld [vmem:[%s355 + $0x98] sm:$0xff]
        %v501 = vld [vmem:[%s355 + $0xa0] sm:$0xff]
        %v502 = vld [vmem:[%s355 + $0xa8] sm:$0xff]
        %v503 = vld [vmem:[%s355 + $0xb0] sm:$0xff]
        %v504 = vld [vmem:[%s355 + $0xb8] sm:$0xff]
        %v505 = vld [vmem:[%s355 + $0xc0] sm:$0xff]
        %v506 = vld [vmem:[%s355 + $0xc8] sm:$0xff]
        %v507 = vld [vmem:[%s355 + $0xd0] sm:$0xff]
        %v508 = vld [vmem:[%s355 + $0xd8] sm:$0xff]
        %v509 = vld [vmem:[%s355 + $0xe0] sm:$0xff]
        %v510 = vld [vmem:[%s355 + $0xe8] sm:$0xff]
        %v511 = vld [vmem:[%s355 + $0xf0] sm:$0xff]
        %v512 = vld [vmem:[%s355 + $0xf8] sm:$0xff]
        %v513 = vld [vmem:[%s399] sm:$0xf]
        %v514 = vld [vmem:[%s399 + $0x4] sm:$0xf]
        %v515 = vld [vmem:[%s399 + $0x8] sm:$0xf]
        %v516 = vld [vmem:[%s399 + $0xc] sm:$0xf]
        %v517 = vld [vmem:[%s399 + $0x10] sm:$0xf]
        %v518 = vld [vmem:[%s399 + $0x14] sm:$0xf]
        %v519 = vld [vmem:[%s399 + $0x18] sm:$0xf]
        %v520 = vld [vmem:[%s399 + $0x1c] sm:$0xf]
        %v521 = vld [vmem:[%s399 + $0x20] sm:$0xf]
        %v522 = vld [vmem:[%s399 + $0x24] sm:$0xf]
        %v523 = vld [vmem:[%s399 + $0x28] sm:$0xf]
        %v524 = vld [vmem:[%s399 + $0x2c] sm:$0xf]
        %v525 = vld [vmem:[%s399 + $0x30] sm:$0xf]
        %v526 = vld [vmem:[%s399 + $0x34] sm:$0xf]
        %v527 = vld [vmem:[%s399 + $0x38] sm:$0xf]
        %v528 = vld [vmem:[%s399 + $0x3c] sm:$0xf]
        %v529 = vld [vmem:[%s399 + $0x40] sm:$0xf]
        %v530 = vld [vmem:[%s399 + $0x44] sm:$0xf]
        %v531 = vld [vmem:[%s399 + $0x48] sm:$0xf]
        %v532 = vld [vmem:[%s399 + $0x4c] sm:$0xf]
        %v533 = vld [vmem:[%s399 + $0x50] sm:$0xf]
        %v534 = vld [vmem:[%s399 + $0x54] sm:$0xf]
        %v535 = vld [vmem:[%s399 + $0x58] sm:$0xf]
        %v536 = vld [vmem:[%s399 + $0x5c] sm:$0xf]
        %v537 = vld [vmem:[%s399 + $0x60] sm:$0xf]
        %v538 = vld [vmem:[%s399 + $0x64] sm:$0xf]
        %v539 = vld [vmem:[%s399 + $0x68] sm:$0xf]
        %v540 = vld [vmem:[%s399 + $0x6c] sm:$0xf]
        %v541 = vld [vmem:[%s399 + $0x70] sm:$0xf]
        %v542 = vld [vmem:[%s399 + $0x74] sm:$0xf]
        %v543 = vld [vmem:[%s399 + $0x78] sm:$0xf]
        %v544 = vld [vmem:[%s399 + $0x7c] sm:$0xf]
        %v577 = vunpack.c.l.b16 %v481
        %v578 = vunpack.c.h.b16 %v481
        %v579 = vunpack.c.l.b16 %v482
        %v580 = vunpack.c.h.b16 %v482
        %v581 = vunpack.c.l.b16 %v483
        %v582 = vunpack.c.h.b16 %v483
        %v583 = vunpack.c.l.b16 %v484
        %v584 = vunpack.c.h.b16 %v484
        %v585 = vunpack.c.l.b16 %v485
        %v586 = vunpack.c.h.b16 %v485
        %v587 = vunpack.c.l.b16 %v486
        %v588 = vunpack.c.h.b16 %v486
        %v589 = vunpack.c.l.b16 %v487
        %v590 = vunpack.c.h.b16 %v487
        %v591 = vunpack.c.l.b16 %v488
        %v592 = vunpack.c.h.b16 %v488
        %v593 = vunpack.c.l.b16 %v489
        %v594 = vunpack.c.h.b16 %v489
        %v595 = vunpack.c.l.b16 %v490
        %v596 = vunpack.c.h.b16 %v490
        %v597 = vunpack.c.l.b16 %v491
        %v598 = vunpack.c.h.b16 %v491
        %v599 = vunpack.c.l.b16 %v492
        %v600 = vunpack.c.h.b16 %v492
        %v601 = vunpack.c.l.b16 %v493
        %v602 = vunpack.c.h.b16 %v493
        %v603 = vunpack.c.l.b16 %v494
        %v604 = vunpack.c.h.b16 %v494
        %v605 = vunpack.c.l.b16 %v495
        %v606 = vunpack.c.h.b16 %v495
        %v607 = vunpack.c.l.b16 %v496
        %v608 = vunpack.c.h.b16 %v496
        %v609 = vunpack.c.l.b16 %v497
        %v610 = vunpack.c.h.b16 %v497
        %v611 = vunpack.c.l.b16 %v498
        %v612 = vunpack.c.h.b16 %v498
        %v613 = vunpack.c.l.b16 %v499
        %v614 = vunpack.c.h.b16 %v499
        %v615 = vunpack.c.l.b16 %v500
        %v616 = vunpack.c.h.b16 %v500
        %v617 = vunpack.c.l.b16 %v501
        %v618 = vunpack.c.h.b16 %v501
        %v619 = vunpack.c.l.b16 %v502
        %v620 = vunpack.c.h.b16 %v502
        %v621 = vunpack.c.l.b16 %v503
        %v622 = vunpack.c.h.b16 %v503
        %v623 = vunpack.c.l.b16 %v504
        %v624 = vunpack.c.h.b16 %v504
        %v625 = vunpack.c.l.b16 %v505
        %v626 = vunpack.c.h.b16 %v505
        %v627 = vunpack.c.l.b16 %v506
        %v628 = vunpack.c.h.b16 %v506
        %v629 = vunpack.c.l.b16 %v507
        %v630 = vunpack.c.h.b16 %v507
        %v631 = vunpack.c.l.b16 %v508
        %v632 = vunpack.c.h.b16 %v508
        %v633 = vunpack.c.l.b16 %v509
        %v634 = vunpack.c.h.b16 %v509
        %v635 = vunpack.c.l.b16 %v510
        %v636 = vunpack.c.h.b16 %v510
        %v637 = vunpack.c.l.b16 %v511
        %v638 = vunpack.c.h.b16 %v511
        %v639 = vunpack.c.l.b16 %v512
        %v640 = vunpack.c.h.b16 %v512
        %v641 = vpack.c.b16 %v579, %v577
        %v642 = vpack.c.b16 %v580, %v578
        %v643 = vpack.c.b16 %v583, %v581
        %v644 = vpack.c.b16 %v584, %v582
        %v645 = vpack.c.b16 %v587, %v585
        %v646 = vpack.c.b16 %v588, %v586
        %v647 = vpack.c.b16 %v591, %v589
        %v648 = vpack.c.b16 %v592, %v590
        %v649 = vpack.c.b16 %v595, %v593
        %v650 = vpack.c.b16 %v596, %v594
        %v651 = vpack.c.b16 %v599, %v597
        %v652 = vpack.c.b16 %v600, %v598
        %v653 = vpack.c.b16 %v603, %v601
        %v654 = vpack.c.b16 %v604, %v602
        %v655 = vpack.c.b16 %v607, %v605
        %v656 = vpack.c.b16 %v608, %v606
        %v657 = vpack.c.b16 %v611, %v609
        %v658 = vpack.c.b16 %v612, %v610
        %v659 = vpack.c.b16 %v615, %v613
        %v660 = vpack.c.b16 %v616, %v614
        %v661 = vpack.c.b16 %v619, %v617
        %v662 = vpack.c.b16 %v620, %v618
        %v663 = vpack.c.b16 %v623, %v621
        %v664 = vpack.c.b16 %v624, %v622
        %v665 = vpack.c.b16 %v627, %v625
        %v666 = vpack.c.b16 %v628, %v626
        %v667 = vpack.c.b16 %v631, %v629
        %v668 = vpack.c.b16 %v632, %v630
        %v669 = vpack.c.b16 %v635, %v633
        %v670 = vpack.c.b16 %v636, %v634
        %v671 = vpack.c.b16 %v639, %v637
        %v672 = vpack.c.b16 %v640, %v638
        %v737 = vunpack.c.l.b16 %v513
        %v738 = vunpack.c.l.b16 %v514
        %v739 = vunpack.c.l.b16 %v515
        %v740 = vunpack.c.l.b16 %v516
        %v741 = vunpack.c.l.b16 %v517
        %v742 = vunpack.c.l.b16 %v518
        %v743 = vunpack.c.l.b16 %v519
        %v744 = vunpack.c.l.b16 %v520
        %v745 = vunpack.c.l.b16 %v521
        %v746 = vunpack.c.l.b16 %v522
        %v747 = vunpack.c.l.b16 %v523
        %v748 = vunpack.c.l.b16 %v524
        %v749 = vunpack.c.l.b16 %v525
        %v750 = vunpack.c.l.b16 %v526
        %v751 = vunpack.c.l.b16 %v527
        %v752 = vunpack.c.l.b16 %v528
        %v753 = vunpack.c.l.b16 %v529
        %v754 = vunpack.c.l.b16 %v530
        %v755 = vunpack.c.l.b16 %v531
        %v756 = vunpack.c.l.b16 %v532
        %v757 = vunpack.c.l.b16 %v533
        %v758 = vunpack.c.l.b16 %v534
        %v759 = vunpack.c.l.b16 %v535
        %v760 = vunpack.c.l.b16 %v536
        %v761 = vunpack.c.l.b16 %v537
        %v762 = vunpack.c.l.b16 %v538
        %v763 = vunpack.c.l.b16 %v539
        %v764 = vunpack.c.l.b16 %v540
        %v765 = vunpack.c.l.b16 %v541
        %v766 = vunpack.c.l.b16 %v542
        %v767 = vunpack.c.l.b16 %v543
        %v768 = vunpack.c.l.b16 %v544
        %v769 = vpack.c.b16 %v738, %v737
        %v770 = vpack.c.b16 %v740, %v739
        %v771 = vpack.c.b16 %v742, %v741
        %v772 = vpack.c.b16 %v744, %v743
        %v773 = vpack.c.b16 %v746, %v745
        %v774 = vpack.c.b16 %v748, %v747
        %v775 = vpack.c.b16 %v750, %v749
        %v776 = vpack.c.b16 %v752, %v751
        %v777 = vpack.c.b16 %v754, %v753
        %v778 = vpack.c.b16 %v756, %v755
        %v779 = vpack.c.b16 %v758, %v757
        %v780 = vpack.c.b16 %v760, %v759
        %v781 = vpack.c.b16 %v762, %v761
        %v782 = vpack.c.b16 %v764, %v763
        %v783 = vpack.c.b16 %v766, %v765
        %v784 = vpack.c.b16 %v768, %v767
        %801 = vmatpush.bf16.msra.mxu0 %v776
        %802 = vmatpush.bf16.msra.mxu0 %v775
        %803 = vmatpush.bf16.msra.mxu0 %v774
        %804 = vmatpush.bf16.msra.mxu0 %v773
        %805 = vmatpush.bf16.msra.mxu0 %v772
        %806 = vmatpush.bf16.msra.mxu0 %v771
        %807 = vmatpush.bf16.msra.mxu0 %v770
        %808 = vmatpush.bf16.msra.mxu0 %v769
        %809 = vmatmul.bf16.gmra.mxu0 %v641
        %v810 = vpop.f32.mrf.mxu0
        %v811 = vadd.f32 0.0, %v810
        %v812 = vpop.f32.mrf.mxu0
        %v813 = vadd.f32 0.0, %v812
        %814 = vmatmul.bf16.gmra.mxu0 %v643
        %v815 = vpop.f32.mrf.mxu0
        %v816 = vadd.f32 0.0, %v815
        %v817 = vpop.f32.mrf.mxu0
        %v818 = vadd.f32 0.0, %v817
        %819 = vmatmul.bf16.gmra.mxu0 %v645
        %v820 = vpop.f32.mrf.mxu0
        %v821 = vadd.f32 0.0, %v820
        %v822 = vpop.f32.mrf.mxu0
        %v823 = vadd.f32 0.0, %v822
        %824 = vmatmul.bf16.gmra.mxu0 %v647
        %v825 = vpop.f32.mrf.mxu0
        %v826 = vadd.f32 0.0, %v825
        %v827 = vpop.f32.mrf.mxu0
        %v828 = vadd.f32 0.0, %v827
        %829 = vmatmul.bf16.gmra.mxu0 %v649
        %v830 = vpop.f32.mrf.mxu0
        %v831 = vadd.f32 0.0, %v830
        %v832 = vpop.f32.mrf.mxu0
        %v833 = vadd.f32 0.0, %v832
        %834 = vmatmul.bf16.gmra.mxu0 %v651
        %v835 = vpop.f32.mrf.mxu0
        %v836 = vadd.f32 0.0, %v835
        %v837 = vpop.f32.mrf.mxu0
        %v838 = vadd.f32 0.0, %v837
        %839 = vmatmul.bf16.gmra.mxu0 %v653
        %v840 = vpop.f32.mrf.mxu0
        %v841 = vadd.f32 0.0, %v840
        %v842 = vpop.f32.mrf.mxu0
        %v843 = vadd.f32 0.0, %v842
        %844 = vmatmul.bf16.gmra.mxu0 %v655
        %v845 = vpop.f32.mrf.mxu0
        %v846 = vadd.f32 0.0, %v845
        %v847 = vpop.f32.mrf.mxu0
        %v848 = vadd.f32 0.0, %v847
        %849 = vmatmul.bf16.gmra.mxu0 %v657
        %v850 = vpop.f32.mrf.mxu0
        %v851 = vadd.f32 0.0, %v850
        %v852 = vpop.f32.mrf.mxu0
        %v853 = vadd.f32 0.0, %v852
        %854 = vmatmul.bf16.gmra.mxu0 %v659
        %v855 = vpop.f32.mrf.mxu0
        %v856 = vadd.f32 0.0, %v855
        %v857 = vpop.f32.mrf.mxu0
        %v858 = vadd.f32 0.0, %v857
        %859 = vmatmul.bf16.gmra.mxu0 %v661
        %v860 = vpop.f32.mrf.mxu0
        %v861 = vadd.f32 0.0, %v860
        %v862 = vpop.f32.mrf.mxu0
        %v863 = vadd.f32 0.0, %v862
        %864 = vmatmul.bf16.gmra.mxu0 %v663
        %v865 = vpop.f32.mrf.mxu0
        %v866 = vadd.f32 0.0, %v865
        %v867 = vpop.f32.mrf.mxu0
        %v868 = vadd.f32 0.0, %v867
        %869 = vmatmul.bf16.gmra.mxu0 %v665
        %v870 = vpop.f32.mrf.mxu0
        %v871 = vadd.f32 0.0, %v870
        %v872 = vpop.f32.mrf.mxu0
        %v873 = vadd.f32 0.0, %v872
        %874 = vmatmul.bf16.gmra.mxu0 %v667
        %v875 = vpop.f32.mrf.mxu0
        %v876 = vadd.f32 0.0, %v875
        %v877 = vpop.f32.mrf.mxu0
        %v878 = vadd.f32 0.0, %v877
        %879 = vmatmul.bf16.gmra.mxu0 %v669
        %v880 = vpop.f32.mrf.mxu0
        %v881 = vadd.f32 0.0, %v880
        %v882 = vpop.f32.mrf.mxu0
        %v883 = vadd.f32 0.0, %v882
        %884 = vmatmul.bf16.gmra.mxu0 %v671
        %v885 = vpop.f32.mrf.mxu0
        %v886 = vadd.f32 0.0, %v885
        %v887 = vpop.f32.mrf.mxu0
        %v888 = vadd.f32 0.0, %v887
        %889 = vdwg.mxu0
        %890 = vmatpush.bf16.msra.mxu0 %v784
        %891 = vmatpush.bf16.msra.mxu0 %v783
        %892 = vmatpush.bf16.msra.mxu0 %v782
        %893 = vmatpush.bf16.msra.mxu0 %v781
        %894 = vmatpush.bf16.msra.mxu0 %v780
        %895 = vmatpush.bf16.msra.mxu0 %v779
        %896 = vmatpush.bf16.msra.mxu0 %v778
        %897 = vmatpush.bf16.msra.mxu0 %v777
        %898 = vmatmul.bf16.gmra.mxu0 %v642
        %v899 = vpop.f32.mrf.mxu0
        %v900 = vadd.f32 %v811, %v899
        %v901 = vpop.f32.mrf.mxu0
        %v902 = vadd.f32 %v813, %v901
        %903 = vmatmul.bf16.gmra.mxu0 %v644
        %v904 = vpop.f32.mrf.mxu0
        %v905 = vadd.f32 %v816, %v904
        %v906 = vpop.f32.mrf.mxu0
        %v907 = vadd.f32 %v818, %v906
        %908 = vmatmul.bf16.gmra.mxu0 %v646
        %v909 = vpop.f32.mrf.mxu0
        %v910 = vadd.f32 %v821, %v909
        %v911 = vpop.f32.mrf.mxu0
        %v912 = vadd.f32 %v823, %v911
        %913 = vmatmul.bf16.gmra.mxu0 %v648
        %v914 = vpop.f32.mrf.mxu0
        %v915 = vadd.f32 %v826, %v914
        %v916 = vpop.f32.mrf.mxu0
        %v917 = vadd.f32 %v828, %v916
        %918 = vmatmul.bf16.gmra.mxu0 %v650
        %v919 = vpop.f32.mrf.mxu0
        %v920 = vadd.f32 %v831, %v919
        %v921 = vpop.f32.mrf.mxu0
        %v922 = vadd.f32 %v833, %v921
        %923 = vmatmul.bf16.gmra.mxu0 %v652
        %v924 = vpop.f32.mrf.mxu0
        %v925 = vadd.f32 %v836, %v924
        %v926 = vpop.f32.mrf.mxu0
        %v927 = vadd.f32 %v838, %v926
        %928 = vmatmul.bf16.gmra.mxu0 %v654
        %v929 = vpop.f32.mrf.mxu0
        %v930 = vadd.f32 %v841, %v929
        %v931 = vpop.f32.mrf.mxu0
        %v932 = vadd.f32 %v843, %v931
        %933 = vmatmul.bf16.gmra.mxu0 %v656
        %v934 = vpop.f32.mrf.mxu0
        %v935 = vadd.f32 %v846, %v934
        %v936 = vpop.f32.mrf.mxu0
        %v937 = vadd.f32 %v848, %v936
        %938 = vmatmul.bf16.gmra.mxu0 %v658
        %v939 = vpop.f32.mrf.mxu0
        %v940 = vadd.f32 %v851, %v939
        %v941 = vpop.f32.mrf.mxu0
        %v942 = vadd.f32 %v853, %v941
        %943 = vmatmul.bf16.gmra.mxu0 %v660
        %v944 = vpop.f32.mrf.mxu0
        %v945 = vadd.f32 %v856, %v944
        %v946 = vpop.f32.mrf.mxu0
        %v947 = vadd.f32 %v858, %v946
        %948 = vmatmul.bf16.gmra.mxu0 %v662
        %v949 = vpop.f32.mrf.mxu0
        %v950 = vadd.f32 %v861, %v949
        %v951 = vpop.f32.mrf.mxu0
        %v952 = vadd.f32 %v863, %v951
        %953 = vmatmul.bf16.gmra.mxu0 %v664
        %v954 = vpop.f32.mrf.mxu0
        %v955 = vadd.f32 %v866, %v954
        %v956 = vpop.f32.mrf.mxu0
        %v957 = vadd.f32 %v868, %v956
        %958 = vmatmul.bf16.gmra.mxu0 %v666
        %v959 = vpop.f32.mrf.mxu0
        %v960 = vadd.f32 %v871, %v959
        %v961 = vpop.f32.mrf.mxu0
        %v962 = vadd.f32 %v873, %v961
        %963 = vmatmul.bf16.gmra.mxu0 %v668
        %v964 = vpop.f32.mrf.mxu0
        %v965 = vadd.f32 %v876, %v964
        %v966 = vpop.f32.mrf.mxu0
        %v967 = vadd.f32 %v878, %v966
        %968 = vmatmul.bf16.gmra.mxu0 %v670
        %v969 = vpop.f32.mrf.mxu0
        %v970 = vadd.f32 %v881, %v969
        %v971 = vpop.f32.mrf.mxu0
        %v972 = vadd.f32 %v883, %v971
        %973 = vmatmul.bf16.gmra.mxu0 %v672
        %v974 = vpop.f32.mrf.mxu0
        %v975 = vadd.f32 %v886, %v974
        %v976 = vpop.f32.mrf.mxu0
        %v977 = vadd.f32 %v888, %v976
        %978 = vdwg.mxu0
        %v979 = vadd.f32 %v449, %v900
        %v980 = vadd.f32 %v450, %v902
        %v981 = vadd.f32 %v451, %v905
        %v982 = vadd.f32 %v452, %v907
        %v983 = vadd.f32 %v453, %v910
        %v984 = vadd.f32 %v454, %v912
        %v985 = vadd.f32 %v455, %v915
        %v986 = vadd.f32 %v456, %v917
        %v987 = vadd.f32 %v457, %v920
        %v988 = vadd.f32 %v458, %v922
        %v989 = vadd.f32 %v459, %v925
        %v990 = vadd.f32 %v460, %v927
        %v991 = vadd.f32 %v461, %v930
        %v992 = vadd.f32 %v462, %v932
        %v993 = vadd.f32 %v463, %v935
        %v994 = vadd.f32 %v464, %v937
        %v995 = vadd.f32 %v465, %v940
        %v996 = vadd.f32 %v466, %v942
        %v997 = vadd.f32 %v467, %v945
        %v998 = vadd.f32 %v468, %v947
        %v999 = vadd.f32 %v469, %v950
        %v1000 = vadd.f32 %v470, %v952
        %v1001 = vadd.f32 %v471, %v955
        %v1002 = vadd.f32 %v472, %v957
        %v1003 = vadd.f32 %v473, %v960
        %v1004 = vadd.f32 %v474, %v962
        %v1005 = vadd.f32 %v475, %v965
        %v1006 = vadd.f32 %v476, %v967
        %v1007 = vadd.f32 %v477, %v970
        %v1008 = vadd.f32 %v478, %v972
        %v1009 = vadd.f32 %v479, %v975
        %v1010 = vadd.f32 %v480, %v977
        %1011 = vst [vmem:[#allocation2] sm:$0xff] %v979
        %1012 = vst [vmem:[#allocation2 + $0x8] sm:$0xff] %v980
        %1013 = vst [vmem:[#allocation2 + $0x10] sm:$0xff] %v981
        %1014 = vst [vmem:[#allocation2 + $0x18] sm:$0xff] %v982
        %1015 = vst [vmem:[#allocation2 + $0x20] sm:$0xff] %v983
        %1016 = vst [vmem:[#allocation2 + $0x28] sm:$0xff] %v984
        %1017 = vst [vmem:[#allocation2 + $0x30] sm:$0xff] %v985
        %1018 = vst [vmem:[#allocation2 + $0x38] sm:$0xff] %v986
        %1019 = vst [vmem:[#allocation2 + $0x40] sm:$0xff] %v987
        %1020 = vst [vmem:[#allocation2 + $0x48] sm:$0xff] %v988
        %1021 = vst [vmem:[#allocation2 + $0x50] sm:$0xff] %v989
        %1022 = vst [vmem:[#allocation2 + $0x58] sm:$0xff] %v990
        %1023 = vst [vmem:[#allocation2 + $0x60] sm:$0xff] %v991
        %1024 = vst [vmem:[#allocation2 + $0x68] sm:$0xff] %v992
        %1025 = vst [vmem:[#allocation2 + $0x70] sm:$0xff] %v993
        %1026 = vst [vmem:[#allocation2 + $0x78] sm:$0xff] %v994
        %1027 = vst [vmem:[#allocation2 + $0x80] sm:$0xff] %v995
        %1028 = vst [vmem:[#allocation2 + $0x88] sm:$0xff] %v996
        %1029 = vst [vmem:[#allocation2 + $0x90] sm:$0xff] %v997
        %1030 = vst [vmem:[#allocation2 + $0x98] sm:$0xff] %v998
        %1031 = vst [vmem:[#allocation2 + $0xa0] sm:$0xff] %v999
        %1032 = vst [vmem:[#allocation2 + $0xa8] sm:$0xff] %v1000
        %1033 = vst [vmem:[#allocation2 + $0xb0] sm:$0xff] %v1001
        %1034 = vst [vmem:[#allocation2 + $0xb8] sm:$0xff] %v1002
        %1035 = vst [vmem:[#allocation2 + $0xc0] sm:$0xff] %v1003
        %1036 = vst [vmem:[#allocation2 + $0xc8] sm:$0xff] %v1004
        %1037 = vst [vmem:[#allocation2 + $0xd0] sm:$0xff] %v1005
        %1038 = vst [vmem:[#allocation2 + $0xd8] sm:$0xff] %v1006
        %1039 = vst [vmem:[#allocation2 + $0xe0] sm:$0xff] %v1007
        %1040 = vst [vmem:[#allocation2 + $0xe8] sm:$0xff] %v1008
        %1041 = vst [vmem:[#allocation2 + $0xf0] sm:$0xff] %v1009
        %1042 = vst [vmem:[#allocation2 + $0xf8] sm:$0xff] %v1010
        %p1043 = scmp.eq.s32.totalorder %s21, 1
        // Predicated region
        $region75: #{resnet_generator_forward.67} parent=65 // pred_check
          %p1044 = pneg %p1043
        $region76: #{resnet_generator_forward.67} parent=65 // pred_check_branch
          %1046 = sbr.rel (%p1044) target = $region78
        $region77: #{resnet_generator_forward.67} parent=65 // pred_region
          %v1047 = vld [vmem:[#allocation2] sm:$0xff]
          %v1048 = vld [vmem:[#allocation2 + $0x8] sm:$0xff]
          %v1049 = vld [vmem:[#allocation2 + $0x10] sm:$0xff]
          %v1050 = vld [vmem:[#allocation2 + $0x18] sm:$0xff]
          %v1051 = vld [vmem:[#allocation2 + $0x20] sm:$0xff]
          %v1052 = vld [vmem:[#allocation2 + $0x28] sm:$0xff]
          %v1053 = vld [vmem:[#allocation2 + $0x30] sm:$0xff]
          %v1054 = vld [vmem:[#allocation2 + $0x38] sm:$0xff]
          %v1055 = vld [vmem:[#allocation2 + $0x40] sm:$0xff]
          %v1056 = vld [vmem:[#allocation2 + $0x48] sm:$0xff]
          %v1057 = vld [vmem:[#allocation2 + $0x50] sm:$0xff]
          %v1058 = vld [vmem:[#allocation2 + $0x58] sm:$0xff]
          %v1059 = vld [vmem:[#allocation2 + $0x60] sm:$0xff]
          %v1060 = vld [vmem:[#allocation2 + $0x68] sm:$0xff]
          %v1061 = vld [vmem:[#allocation2 + $0x70] sm:$0xff]
          %v1062 = vld [vmem:[#allocation2 + $0x78] sm:$0xff]
          %v1063 = vld [vmem:[#allocation2 + $0x80] sm:$0xff]
          %v1064 = vld [vmem:[#allocation2 + $0x88] sm:$0xff]
          %v1065 = vld [vmem:[#allocation2 + $0x90] sm:$0xff]
          %v1066 = vld [vmem:[#allocation2 + $0x98] sm:$0xff]
          %v1067 = vld [vmem:[#allocation2 + $0xa0] sm:$0xff]
          %v1068 = vld [vmem:[#allocation2 + $0xa8] sm:$0xff]
          %v1069 = vld [vmem:[#allocation2 + $0xb0] sm:$0xff]
          %v1070 = vld [vmem:[#allocation2 + $0xb8] sm:$0xff]
          %v1071 = vld [vmem:[#allocation2 + $0xc0] sm:$0xff]
          %v1072 = vld [vmem:[#allocation2 + $0xc8] sm:$0xff]
          %v1073 = vld [vmem:[#allocation2 + $0xd0] sm:$0xff]
          %v1074 = vld [vmem:[#allocation2 + $0xd8] sm:$0xff]
          %v1075 = vld [vmem:[#allocation2 + $0xe0] sm:$0xff]
          %v1076 = vld [vmem:[#allocation2 + $0xe8] sm:$0xff]
          %v1077 = vld [vmem:[#allocation2 + $0xf0] sm:$0xff]
          %v1078 = vld [vmem:[#allocation2 + $0xf8] sm:$0xff]
          %v1079 = vld [vmem:[%s403] sm:$0x1]
          %v1081 = vperm.slane %v1079, 0
          %v1083 = vadd.f32 %v1047, %v1081
          %v1084 = vadd.f32 %v1048, %v1081
          %v1085 = vadd.f32 %v1049, %v1081
          %v1086 = vadd.f32 %v1050, %v1081
          %v1087 = vadd.f32 %v1051, %v1081
          %v1088 = vadd.f32 %v1052, %v1081
          %v1089 = vadd.f32 %v1053, %v1081
          %v1090 = vadd.f32 %v1054, %v1081
          %v1091 = vadd.f32 %v1055, %v1081
          %v1092 = vadd.f32 %v1056, %v1081
          %v1093 = vadd.f32 %v1057, %v1081
          %v1094 = vadd.f32 %v1058, %v1081
          %v1095 = vadd.f32 %v1059, %v1081
          %v1096 = vadd.f32 %v1060, %v1081
          %v1097 = vadd.f32 %v1061, %v1081
          %v1098 = vadd.f32 %v1062, %v1081
          %v1099 = vadd.f32 %v1063, %v1081
          %v1100 = vadd.f32 %v1064, %v1081
          %v1101 = vadd.f32 %v1065, %v1081
          %v1102 = vadd.f32 %v1066, %v1081
          %v1103 = vadd.f32 %v1067, %v1081
          %v1104 = vadd.f32 %v1068, %v1081
          %v1105 = vadd.f32 %v1069, %v1081
          %v1106 = vadd.f32 %v1070, %v1081
          %v1107 = vadd.f32 %v1071, %v1081
          %v1108 = vadd.f32 %v1072, %v1081
          %v1109 = vadd.f32 %v1073, %v1081
          %v1110 = vadd.f32 %v1074, %v1081
          %v1111 = vadd.f32 %v1075, %v1081
          %v1112 = vadd.f32 %v1076, %v1081
          %v1113 = vadd.f32 %v1077, %v1081
          %v1114 = vadd.f32 %v1078, %v1081
          %v1115 = vtanh.pop %v1083
          %v1116 = vtanh.pop %v1084
          %v1117 = vtanh.pop %v1085
          %v1118 = vtanh.pop %v1086
          %v1119 = vtanh.pop %v1087
          %v1120 = vtanh.pop %v1088
          %v1121 = vtanh.pop %v1089
          %v1122 = vtanh.pop %v1090
          %v1123 = vtanh.pop %v1091
          %v1124 = vtanh.pop %v1092
          %v1125 = vtanh.pop %v1093
          %v1126 = vtanh.pop %v1094
          %v1127 = vtanh.pop %v1095
          %v1128 = vtanh.pop %v1096
          %v1129 = vtanh.pop %v1097
          %v1130 = vtanh.pop %v1098
          %v1131 = vtanh.pop %v1099
          %v1132 = vtanh.pop %v1100
          %v1133 = vtanh.pop %v1101
          %v1134 = vtanh.pop %v1102
          %v1135 = vtanh.pop %v1103
          %v1136 = vtanh.pop %v1104
          %v1137 = vtanh.pop %v1105
          %v1138 = vtanh.pop %v1106
          %v1139 = vtanh.pop %v1107
          %v1140 = vtanh.pop %v1108
          %v1141 = vtanh.pop %v1109
          %v1142 = vtanh.pop %v1110
          %v1143 = vtanh.pop %v1111
          %v1144 = vtanh.pop %v1112
          %v1145 = vtanh.pop %v1113
          %v1146 = vtanh.pop %v1114
          %1147 = vst [vmem:[%s411] sm:$0xff] %v1115
          %1148 = vst [vmem:[%s411 + $0x8] sm:$0xff] %v1116
          %1149 = vst [vmem:[%s411 + $0x10] sm:$0xff] %v1117
          %1150 = vst [vmem:[%s411 + $0x18] sm:$0xff] %v1118
          %1151 = vst [vmem:[%s411 + $0x20] sm:$0xff] %v1119
          %1152 = vst [vmem:[%s411 + $0x28] sm:$0xff] %v1120
          %1153 = vst [vmem:[%s411 + $0x30] sm:$0xff] %v1121
          %1154 = vst [vmem:[%s411 + $0x38] sm:$0xff] %v1122
          %1155 = vst [vmem:[%s411 + $0x40] sm:$0xff] %v1123
          %1156 = vst [vmem:[%s411 + $0x48] sm:$0xff] %v1124
          %1157 = vst [vmem:[%s411 + $0x50] sm:$0xff] %v1125
          %1158 = vst [vmem:[%s411 + $0x58] sm:$0xff] %v1126
          %1159 = vst [vmem:[%s411 + $0x60] sm:$0xff] %v1127
          %1160 = vst [vmem:[%s411 + $0x68] sm:$0xff] %v1128
          %1161 = vst [vmem:[%s411 + $0x70] sm:$0xff] %v1129
          %1162 = vst [vmem:[%s411 + $0x78] sm:$0xff] %v1130
          %1163 = vst [vmem:[%s411 + $0x80] sm:$0xff] %v1131
          %1164 = vst [vmem:[%s411 + $0x88] sm:$0xff] %v1132
          %1165 = vst [vmem:[%s411 + $0x90] sm:$0xff] %v1133
          %1166 = vst [vmem:[%s411 + $0x98] sm:$0xff] %v1134
          %1167 = vst [vmem:[%s411 + $0xa0] sm:$0xff] %v1135
          %1168 = vst [vmem:[%s411 + $0xa8] sm:$0xff] %v1136
          %1169 = vst [vmem:[%s411 + $0xb0] sm:$0xff] %v1137
          %1170 = vst [vmem:[%s411 + $0xb8] sm:$0xff] %v1138
          %1171 = vst [vmem:[%s411 + $0xc0] sm:$0xff] %v1139
          %1172 = vst [vmem:[%s411 + $0xc8] sm:$0xff] %v1140
          %1173 = vst [vmem:[%s411 + $0xd0] sm:$0xff] %v1141
          %1174 = vst [vmem:[%s411 + $0xd8] sm:$0xff] %v1142
          %1175 = vst [vmem:[%s411 + $0xe0] sm:$0xff] %v1143
          %1176 = vst [vmem:[%s411 + $0xe8] sm:$0xff] %v1144
          %1177 = vst [vmem:[%s411 + $0xf0] sm:$0xff] %v1145
          %1178 = vst [vmem:[%s411 + $0xf8] sm:$0xff] %v1146
        $region78: #{resnet_generator_forward.67} parent=65 // pred_fallthru
          _
        %s1179 = smul.u32 32, %s19
        %p1180 = scmp.lt.s32.totalorder %s1179, 63
        %s1181 = scalar_select %p1180, %s1179, 63
        %p1182 = scmp.lt.s32.totalorder %s20, 0
        %s1183 = scalar_select %p1182, %s20, 0
        %s1184 = sadd.s32 %s1183, %s1181
        %s1185 = smul.addr %s1184, 8
        %s1186 = scalar_lea.vmem %s3, %s1185
        // Predicated region
        $region79: #{resnet_generator_forward.67} parent=65 // pred_check
          %p1187 = pneg %p135
        $region80: #{resnet_generator_forward.67} parent=65 // pred_check_branch
          %1189 = sbr.rel (%p1187) target = $region82
        $region81: #{resnet_generator_forward.67} parent=65 // pred_region
          %s1190 = smul.u32 32, %s19
        $region82: #{resnet_generator_forward.67} parent=65 // pred_fallthru
          _
      $region66: #{resnet_generator_forward.67} parent=5 // pred_fallthru
        _
      %p1191 = scmp.le.s32.totalorder 2, %s9
      // Predicated region
      $region83: #{resnet_generator_forward.67} parent=5 // pred_check
        %p1192 = pneg %p1191
      $region84: #{resnet_generator_forward.67} parent=5 // pred_check_branch
        %1194 = sbr.rel (%p1192) target = $region86
      $region85: #{resnet_generator_forward.67} parent=5 // pred_region
        %s1195 = ssub.s32 %s9, 2
        // Predicated region
        $region87: #{resnet_generator_forward.67} parent=85 // pred_check
          %p1196 = pneg %p141
        $region88: #{resnet_generator_forward.67} parent=85 // pred_check_branch
          %1198 = sbr.rel (%p1196) target = $region90
        $region89: #{resnet_generator_forward.67} parent=85 // pred_region
          %s1199 = smul.u32 32, %s22
          %p1200 = scmp.lt.s32.totalorder %s1199, 63
          %s1201 = scalar_select %p1200, %s1199, 63
          %p1202 = scmp.lt.s32.totalorder %s23, 0
          %s1203 = scalar_select %p1202, %s23, 0
          %s1204 = sadd.s32 %s1203, %s1201
          %s1205 = smul.addr %s1204, 8
          %s1206 = scalar_lea.vmem %s3, %s1205
        $region90: #{resnet_generator_forward.67} parent=85 // pred_fallthru
          _
      $region86: #{resnet_generator_forward.67} parent=5 // pred_fallthru
        _
    $region6: #{resnet_generator_forward.67} parent=1 // loop_footer
      %s13 = sadd.s32 1, %s9
    $region7: #{resnet_generator_forward.67} parent=1 // loop_footer_branch
      %8 = sbr.rel target = $region3
    $region8: #{resnet_generator_forward.67} parent=1 // loop_exit
      _

</llo_original>
